<compile_context>
chip_gen: v7x
topology: tpu7x:2x2x1
jax: 0.10.0
libtpu: 0.0.40
codegen_flags: <defaults>
</compile_context>

<pallas_src>
import math
import functools

import jax
import jax.numpy as jnp
from jax.experimental import pallas as pl
from jax.experimental.pallas import tpu as pltpu


# ---------------------------------------------------------------------------
# Pallas SSIM kernel (Gaussian filtering + SSIM map + exact padded-sum fixup)
# ---------------------------------------------------------------------------

def _ssim_kernel(x_ref, y_ref, a_ref, bt_ref, o_ref, *, c1, c2, n_pad, inv_n_valid):
    x = x_ref[...]            # (C*Hk, Wk) f32, lane-padded with zeros
    y = y_ref[...]            # (C*Hk, Wk) f32
    A = a_ref[...]            # (C*Hp, C*Hk) block-diagonal row (height) filter
    Bt = bt_ref[...]          # (Wk, Wp)     column (width) filter, transposed

    def gfilt(img):
        # One MXU matmul per pass; block-diag A applies the height filter to all
        # channels of the slab at once (no per-channel loop, no sublane slices).
        rows = jnp.dot(A, img, preferred_element_type=jnp.float32)      # (C*Hp, Wk)
        return jnp.dot(rows, Bt, preferred_element_type=jnp.float32)    # (C*Hp, Wp)

    mu1 = gfilt(x)
    mu2 = gfilt(y)
    x2m = gfilt(x * x)
    y2m = gfilt(y * y)
    xym = gfilt(x * y)

    # SSIM map, batched across all channels; reassociated so mu12/musq are
    # consumed immediately (fewer live (C*Hp, Wp) intermediates -> less VMEM
    # traffic competing for the store slot).
    mu12 = mu1 * mu2
    musq = mu1 * mu1 + mu2 * mu2
    num = (2.0 * mu12 + c1) * (2.0 * (xym - mu12) + c2)
    den = (musq + c1) * ((x2m + y2m) - musq + c2)

    r = pl.reciprocal(den, approx=True)       # EUP
    r = r * (2.0 - den * r)                   # one Newton-Raphson step (~f32-exact)
    ssim_map = num * r                        # (C*Hp, Wp)

    # Full-tile sum; padded elements all equal the constant below (filters emit
    # exact zeros there), so subtract them out -- exact w.r.t. kernel arithmetic.
    total = jnp.sum(ssim_map, axis=(0, 1), keepdims=True)               # (1, 1)

    cc = jnp.full((1, 1), c1, jnp.float32) * c2     # == num == den in padded region
    pr = pl.reciprocal(cc, approx=True)
    pr = pr * (2.0 - cc * pr)
    pad_val = cc * pr                               # (1, 1)

    o_ref[...] = ((total - float(n_pad) * pad_val) * inv_n_valid)[None, None]


def _round_up(n, m):
    return ((n + m - 1) // m) * m


def _gaussian_1d(size, sigma):
    coords = jnp.arange(size, dtype=jnp.float32) - size // 2
    g = jnp.exp(-(coords ** 2) / (2.0 * sigma ** 2))
    return g / jnp.sum(g)


def _band_matrix(out_n, in_n, g):
    # band[i, j] = g[j - i] for 0 <= j - i < len(g)   (valid cross-correlation)
    win = g.shape[0]
    idx = jnp.arange(in_n)[None, :] - jnp.arange(out_n)[:, None]
    ok = (idx >= 0) & (idx < win)
    return jnp.where(ok, g[jnp.clip(idx, 0, win - 1)], 0.0).astype(jnp.float32)


def ssim_pallas(x, y, data_range=1.0, win_size=11, win_sigma=1.5, k1=0.01, k2=0.03):
    """pytorch_msssim-style SSIM, size-averaged per sample. Returns shape (B,)."""
    B, C, H, W = x.shape
    Ho, Wo = H - win_size + 1, W - win_size + 1
    assert Ho > 0 and Wo > 0, "image smaller than SSIM window"

    Hk, Wk = _round_up(H, 8), _round_up(W, 128)      # input slab padding (sublane, lane)
    Hp, Wp = _round_up(Ho, 8), _round_up(Wo, 128)    # output slab padding

    # Zero-pad inputs to aligned slabs and flatten (C, Hk) -> C*Hk (contiguous,
    # free).  Padded rows/cols meet zero filter rows/cols -> identical results.
    xp = jnp.zeros((B, C, Hk, Wk), jnp.float32).at[:, :, :H, :W].set(x.astype(jnp.float32))
    yp = jnp.zeros((B, C, Hk, Wk), jnp.float32).at[:, :, :H, :W].set(y.astype(jnp.float32))
    xp = xp.reshape(B, C * Hk, Wk)
    yp = yp.reshape(B, C * Hk, Wk)

    g = _gaussian_1d(win_size, win_sigma)

    # Height filter, block-diagonal over channels (zero-padded to (Hp, Hk) per block).
    A = _band_matrix(Ho, H, g)                                        # (Ho, H)
    A_pad = jnp.zeros((Hp, Hk), jnp.float32).at[:Ho, :H].set(A)       # (Hp, Hk)
    A_big = jnp.kron(jnp.eye(C, dtype=jnp.float32), A_pad)            # (C*Hp, C*Hk)

    # Width filter (transposed), zero-padded to (Wk, Wp).
    Bt = _band_matrix(Wo, W, g).T                                     # (W, Wo)
    Bt_pad = jnp.zeros((Wk, Wp), jnp.float32).at[:W, :Wo].set(Bt)     # (Wk, Wp)

    c1 = float((k1 * data_range) ** 2)
    c2 = float((k2 * data_range) ** 2)
    n_valid = C * Ho * Wo
    n_pad = C * Hp * Wp - n_valid

    out = pl.pallas_call(
        functools.partial(_ssim_kernel, c1=c1, c2=c2, n_pad=n_pad,
                          inv_n_valid=1.0 / float(n_valid)),
        out_shape=jax.ShapeDtypeStruct((B, 1, 1, 1), jnp.float32),
        grid=(B,),
        in_specs=[
            pl.BlockSpec((None, C * Hk, Wk), lambda b: (b, 0, 0)),
            pl.BlockSpec((None, C * Hk, Wk), lambda b: (b, 0, 0)),
            pl.BlockSpec((C * Hp, C * Hk), lambda b: (0, 0)),
            pl.BlockSpec((Wk, Wp), lambda b: (0, 0)),
        ],
        out_specs=pl.BlockSpec((1, 1, 1, 1), lambda b: (b, 0, 0, 0)),
        compiler_params=pltpu.CompilerParams(
            dimension_semantics=("parallel",)),
    )(xp, yp, A_big, Bt_pad)
    return out[:, 0, 0, 0]                                            # (B,)


# ---------------------------------------------------------------------------
# Plain-JAX glue: warp, bilinear resize, Gaussian blur, color matching
# ---------------------------------------------------------------------------

def warp(feat, flow):
    """Bilinear warp: sample feat at (x + flow_x, y + flow_y) with zero padding."""
    B, C, H, W = feat.shape
    xs = jnp.broadcast_to(jnp.arange(W, dtype=jnp.float32)[None, :], (H, W))
    ys = jnp.broadcast_to(jnp.arange(H, dtype=jnp.float32)[:, None], (H, W))
    px = xs[None] + flow[:, 0]            # (B, H, W)
    py = ys[None] + flow[:, 1]
    x0 = jnp.floor(px)
    y0 = jnp.floor(py)
    wx = (px - x0)[:, None]               # (B, 1, H, W)
    wy = (py - y0)[:, None]

    flat = feat.reshape(B, C, H * W)

    def sample(yi, xi):
        valid = (xi >= 0) & (xi < W) & (yi >= 0) & (yi < H)
        xi_c = jnp.clip(xi, 0, W - 1).astype(jnp.int32)
        yi_c = jnp.clip(yi, 0, H - 1).astype(jnp.int32)
        idx = (yi_c * W + xi_c).reshape(B, 1, H * W)
        vals = jnp.take_along_axis(flat, jnp.broadcast_to(idx, (B, C, H * W)), axis=2)
        return vals.reshape(B, C, H, W) * valid[:, None].astype(feat.dtype)

    v00 = sample(y0, x0)
    v01 = sample(y0, x0 + 1)
    v10 = sample(y0 + 1, x0)
    v11 = sample(y0 + 1, x0 + 1)
    return (v00 * (1 - wy) * (1 - wx) + v01 * (1 - wy) * wx +
            v10 * wy * (1 - wx) + v11 * wy * wx)


def bilinear_resize(img, out_h, out_w):
    """F.interpolate(mode='bilinear', align_corners=False) equivalent for NCHW."""
    B, C, H, W = img.shape
    sh, sw = H / out_h, W / out_w
    sy = jnp.maximum((jnp.arange(out_h, dtype=jnp.float32) + 0.5) * sh - 0.5, 0.0)
    sx = jnp.maximum((jnp.arange(out_w, dtype=jnp.float32) + 0.5) * sw - 0.5, 0.0)
    y0 = jnp.floor(sy).astype(jnp.int32)
    x0 = jnp.floor(sx).astype(jnp.int32)
    y1 = jnp.minimum(y0 + 1, H - 1)
    x1 = jnp.minimum(x0 + 1, W - 1)
    wy = (sy - y0.astype(jnp.float32))[None, None, :, None]
    wx = (sx - x0.astype(jnp.float32))[None, None, None, :]
    iy = img[:, :, y0, :] * (1.0 - wy) + img[:, :, y1, :] * wy
    return iy[:, :, :, x0] * (1.0 - wx) + iy[:, :, :, x1] * wx


def get_gaussian_kernel(sd=1.5):
    """sca_utils.get_gaussian_kernel(sd=1.5): 7-tap normalized Gaussian (separable)."""
    ksz = int(4 * sd + 1)                 # = 7
    return _gaussian_1d(ksz, sd), ksz


def apply_gauss(im, ksz, g1d):
    """sca_utils.apply_kernel: reflect-pad + separable Gaussian blur, per channel."""
    p = ksz // 2
    imp = jnp.pad(im, ((0, 0), (0, 0), (p, p), (p, p)), mode='reflect')
    H, W = im.shape[-2:]
    Ah = _band_matrix(H, H + 2 * p, g1d)
    Aw = _band_matrix(W, W + 2 * p, g1d)
    return jnp.einsum('ij,bcjk,lk->bcil', Ah, imp, Aw)


def match_colors(im_ref, im_q, im_test, ksz, g1d):
    """Per-sample 3x3 color transform (im_q -> im_ref) fit on blurred,
    boundary-cropped images (batched least squares via pinv), applied to im_test.
    The 'valid' mask of the reference implementation is not consumed by the
    final SSIM in AlignedSSIM, so it is omitted here."""
    bi = 5
    ref_mean = apply_gauss(im_ref, ksz, g1d)[:, :, bi:-bi, bi:-bi]
    q_mean = apply_gauss(im_q, ksz, g1d)[:, :, bi:-bi, bi:-bi]
    B, C = ref_mean.shape[:2]
    ir = ref_mean.reshape(B, C, -1)                          # (B, 3, M)
    iq = q_mean.reshape(B, C, -1)                            # (B, 3, M)

    # Solve iq^T @ c ~= ir^T per sample (batched Moore-Penrose pseudo-inverse).
    c_mat = jnp.matmul(jnp.linalg.pinv(jnp.transpose(iq, (0, 2, 1))),
                       jnp.transpose(ir, (0, 2, 1)))         # (B, 3, 3)

    t = im_test.reshape(B, C, -1)
    t_conv = jnp.einsum('bcm,bck->bkm', t, c_mat)
    return t_conv.reshape(im_test.shape)


# ---------------------------------------------------------------------------
# AlignedSSIM
# ---------------------------------------------------------------------------

class AlignedSSIM:
    # TODO(synk): alignment_net is an external optical-flow network (e.g. PWC-Net)
    # with no clean Pallas equivalent; a deterministic zero-flow stand-in is used.
    def __init__(self, alignment_net=None, sr_factor=4, boundary_ignore=None):
        self.sr_factor = sr_factor
        self.boundary_ignore = boundary_ignore
        self.alignment_net = alignment_net if alignment_net is not None else self._zero_flow
        self.gauss_kernel, self.ksz = get_gaussian_kernel(sd=1.5)
        # Whole batched forward compiled once: one graph, one pallas_call per call.
        self._ssim_jit = jax.jit(self._ssim_batched)

    @staticmethod
    def _zero_flow(a, b):
        B, _, H, W = a.shape
        return jnp.zeros((B, 2, H, W), dtype=a.dtype)

    def _ssim_batched(self, pred, gt, burst_input):
        # Per-sample normalization (matches the per-sample loop of the reference).
        pmax = jnp.max(pred, axis=(1, 2, 3), keepdims=True)
        gmax = jnp.max(gt, axis=(1, 2, 3), keepdims=True)
        flow = self.alignment_net(pred / (pmax + 1e-6), gt / (gmax + 1e-6))
        pred_warped = warp(pred, flow)

        ds_factor = 1.0 / float(2.0 * self.sr_factor)
        H, W = gt.shape[-2:]
        oh, ow = int(math.floor(H * ds_factor)), int(math.floor(W * ds_factor))
        flow_ds = bilinear_resize(flow, oh, ow) * ds_factor

        burst_0 = burst_input[:, 0, jnp.array([0, 1, 3])]        # (B, 3, h, w)
        burst_0_warped = warp(burst_0, flow_ds)
        frame_gt_ds = bilinear_resize(gt, oh, ow)

        pred_warped_m = match_colors(frame_gt_ds, burst_0_warped, pred_warped,
                                     self.ksz, self.gauss_kernel)

        if self.boundary_ignore is not None:
            b = self.boundary_ignore
            pred_warped_m = pred_warped_m[..., b:-b, b:-b]
            gt = gt[..., b:-b, b:-b]

        per_sample = ssim_pallas(pred_warped_m, gt, data_range=1.0)   # (B,)
        return jnp.mean(per_sample)        # == mean of per-sample size-averaged SSIMs

    def __call__(self, pred, gt, burst_input):
        return self._ssim_jit(pred, gt, burst_input)


if __name__ == "__main__":
    key = jax.random.PRNGKey(0)
    k1, k2, k3 = jax.random.split(key, 3)

    # pred / gt: SR RGB frames; burst: low-res 4-channel raw, spatial = gt / (2 * sr_factor)
    B, C, H, W = 2, 3, 96, 96
    n_frames, raw_c = 4, 4
    bh, bw = H // 8, W // 8

    pred = jax.random.uniform(k1, (B, C, H, W), dtype=jnp.float32)
    gt = jax.random.uniform(k2, (B, C, H, W), dtype=jnp.float32)
    burst = jax.random.uniform(k3, (B, n_frames, raw_c, bh, bw), dtype=jnp.float32)

    metric = AlignedSSIM(sr_factor=4)
    out = metric(pred, gt, burst)
    jax.block_until_ready(out)
    print("KERNEL_OK")
</pallas_src>

<mosaic_0001>
module attributes {stable_mosaic.version = 11 : i64} {
  func.func private @main(%arg0: i32) attributes {dimension_semantics = [#tpu.dimension_semantics<core_parallel>], iteration_bounds = array<i64: 2>, tpu.core_type = #tpu.core_type<sc_scalar_subcore>, window_params = []} {
    return
  }
}

module attributes {stable_mosaic.version = 11 : i64} {
  func.func private @main(%arg0: i32) attributes {dimension_semantics = [#tpu.dimension_semantics<core_parallel>], iteration_bounds = array<i64: 2>, tpu.core_type = #tpu.core_type<sc_scalar_subcore>, window_params = []} {
    return
  }
}

module attributes {stable_mosaic.version = 11 : i64} {
  func.func @_ssim_kernel(%arg0: i32, %arg1: memref<1x288x128xf32, #tpu.memory_space<vmem>>, %arg2: memref<1x288x128xf32, #tpu.memory_space<vmem>>, %arg3: memref<264x288xf32, #tpu.memory_space<vmem>>, %arg4: memref<128x128xf32, #tpu.memory_space<vmem>>, %arg5: memref<1x1x1x1xf32, #tpu.memory_space<vmem>>) attributes {dimension_semantics = [#tpu.dimension_semantics<parallel>], iteration_bounds = array<i64: 2>, scalar_prefetch = 0 : i64, scratch_operands = 0 : i64, tpu.core_type = #tpu.core_type<tc>, window_params = [{transform_indices = @transform_0, window_bounds = array<i64: 1, 288, 128>}, {transform_indices = @transform_1, window_bounds = array<i64: 1, 288, 128>}, {pipeline_mode = #tpu.pipeline_mode<synchronous>, transform_indices = @transform_2, window_bounds = array<i64: 264, 288>}, {pipeline_mode = #tpu.pipeline_mode<synchronous>, transform_indices = @transform_3, window_bounds = array<i64: 128, 128>}, {transform_indices = @transform_4, window_bounds = array<i64: 1, 1, 1, 1>}]} {
    %c0 = arith.constant 0 : index
    %c0_0 = arith.constant 0 : index
    %c0_1 = arith.constant 0 : index
    %0 = vector.load %arg1[%c0, %c0_0, %c0_1] : memref<1x288x128xf32, #tpu.memory_space<vmem>>, vector<1x288x128xf32>
    %1 = vector.shape_cast %0 : vector<1x288x128xf32> to vector<288x128xf32>
    %c0_2 = arith.constant 0 : index
    %c0_3 = arith.constant 0 : index
    %c0_4 = arith.constant 0 : index
    %2 = vector.load %arg2[%c0_2, %c0_3, %c0_4] : memref<1x288x128xf32, #tpu.memory_space<vmem>>, vector<1x288x128xf32>
    %3 = vector.shape_cast %2 : vector<1x288x128xf32> to vector<288x128xf32>
    %c0_5 = arith.constant 0 : index
    %c0_6 = arith.constant 0 : index
    %4 = vector.load %arg3[%c0_5, %c0_6] : memref<264x288xf32, #tpu.memory_space<vmem>>, vector<264x288xf32>
    %c0_7 = arith.constant 0 : index
    %c0_8 = arith.constant 0 : index
    %5 = vector.load %arg4[%c0_7, %c0_8] : memref<128x128xf32, #tpu.memory_space<vmem>>, vector<128x128xf32>
    %cst = arith.constant dense<0.000000e+00> : vector<264x128xf32>
    %6 = tpu.matmul %4, %1, %cst {dimension_numbers = #tpu.dot_dimension_numbers<[1], [0], [0], [1], [0, 0, 1, 1], [], []>} : vector<264x288xf32>, vector<288x128xf32>, vector<264x128xf32> -> vector<264x128xf32>
    %cst_9 = arith.constant dense<0.000000e+00> : vector<264x128xf32>
    %7 = tpu.matmul %6, %5, %cst_9 {dimension_numbers = #tpu.dot_dimension_numbers<[1], [0], [0], [1], [0, 0, 1, 1], [], []>} : vector<264x128xf32>, vector<128x128xf32>, vector<264x128xf32> -> vector<264x128xf32>
    %cst_10 = arith.constant dense<0.000000e+00> : vector<264x128xf32>
    %8 = tpu.matmul %4, %3, %cst_10 {dimension_numbers = #tpu.dot_dimension_numbers<[1], [0], [0], [1], [0, 0, 1, 1], [], []>} : vector<264x288xf32>, vector<288x128xf32>, vector<264x128xf32> -> vector<264x128xf32>
    %cst_11 = arith.constant dense<0.000000e+00> : vector<264x128xf32>
    %9 = tpu.matmul %8, %5, %cst_11 {dimension_numbers = #tpu.dot_dimension_numbers<[1], [0], [0], [1], [0, 0, 1, 1], [], []>} : vector<264x128xf32>, vector<128x128xf32>, vector<264x128xf32> -> vector<264x128xf32>
    %10 = arith.mulf %1, %1 : vector<288x128xf32>
    %cst_12 = arith.constant dense<0.000000e+00> : vector<264x128xf32>
    %11 = tpu.matmul %4, %10, %cst_12 {dimension_numbers = #tpu.dot_dimension_numbers<[1], [0], [0], [1], [0, 0, 1, 1], [], []>} : vector<264x288xf32>, vector<288x128xf32>, vector<264x128xf32> -> vector<264x128xf32>
    %cst_13 = arith.constant dense<0.000000e+00> : vector<264x128xf32>
    %12 = tpu.matmul %11, %5, %cst_13 {dimension_numbers = #tpu.dot_dimension_numbers<[1], [0], [0], [1], [0, 0, 1, 1], [], []>} : vector<264x128xf32>, vector<128x128xf32>, vector<264x128xf32> -> vector<264x128xf32>
    %13 = arith.mulf %3, %3 : vector<288x128xf32>
    %cst_14 = arith.constant dense<0.000000e+00> : vector<264x128xf32>
    %14 = tpu.matmul %4, %13, %cst_14 {dimension_numbers = #tpu.dot_dimension_numbers<[1], [0], [0], [1], [0, 0, 1, 1], [], []>} : vector<264x288xf32>, vector<288x128xf32>, vector<264x128xf32> -> vector<264x128xf32>
    %cst_15 = arith.constant dense<0.000000e+00> : vector<264x128xf32>
    %15 = tpu.matmul %14, %5, %cst_15 {dimension_numbers = #tpu.dot_dimension_numbers<[1], [0], [0], [1], [0, 0, 1, 1], [], []>} : vector<264x128xf32>, vector<128x128xf32>, vector<264x128xf32> -> vector<264x128xf32>
    %16 = arith.mulf %1, %3 : vector<288x128xf32>
    %cst_16 = arith.constant dense<0.000000e+00> : vector<264x128xf32>
    %17 = tpu.matmul %4, %16, %cst_16 {dimension_numbers = #tpu.dot_dimension_numbers<[1], [0], [0], [1], [0, 0, 1, 1], [], []>} : vector<264x288xf32>, vector<288x128xf32>, vector<264x128xf32> -> vector<264x128xf32>
    %cst_17 = arith.constant dense<0.000000e+00> : vector<264x128xf32>
    %18 = tpu.matmul %17, %5, %cst_17 {dimension_numbers = #tpu.dot_dimension_numbers<[1], [0], [0], [1], [0, 0, 1, 1], [], []>} : vector<264x128xf32>, vector<128x128xf32>, vector<264x128xf32> -> vector<264x128xf32>
    %19 = arith.mulf %7, %9 : vector<264x128xf32>
    %20 = arith.mulf %7, %7 : vector<264x128xf32>
    %21 = arith.mulf %9, %9 : vector<264x128xf32>
    %22 = arith.addf %20, %21 : vector<264x128xf32>
    %cst_18 = arith.constant 2.000000e+00 : f32
    %23 = vector.broadcast %cst_18 : f32 to vector<264x128xf32>
    %24 = arith.mulf %23, %19 : vector<264x128xf32>
    %cst_19 = arith.constant 9.99999974E-5 : f32
    %25 = vector.broadcast %cst_19 : f32 to vector<264x128xf32>
    %26 = arith.addf %24, %25 : vector<264x128xf32>
    %27 = arith.subf %18, %19 : vector<264x128xf32>
    %cst_20 = arith.constant 2.000000e+00 : f32
    %28 = vector.broadcast %cst_20 : f32 to vector<264x128xf32>
    %29 = arith.mulf %28, %27 : vector<264x128xf32>
    %cst_21 = arith.constant 8.99999984E-4 : f32
    %30 = vector.broadcast %cst_21 : f32 to vector<264x128xf32>
    %31 = arith.addf %29, %30 : vector<264x128xf32>
    %32 = arith.mulf %26, %31 : vector<264x128xf32>
    %cst_22 = arith.constant 9.99999974E-5 : f32
    %33 = vector.broadcast %cst_22 : f32 to vector<264x128xf32>
    %34 = arith.addf %22, %33 : vector<264x128xf32>
    %35 = arith.addf %12, %15 : vector<264x128xf32>
    %36 = arith.subf %35, %22 : vector<264x128xf32>
    %cst_23 = arith.constant 8.99999984E-4 : f32
    %37 = vector.broadcast %cst_23 : f32 to vector<264x128xf32>
    %38 = arith.addf %36, %37 : vector<264x128xf32>
    %39 = arith.mulf %34, %38 : vector<264x128xf32>
    %40 = tpu.reciprocal %39 {approx = true} : vector<264x128xf32> -> vector<264x128xf32>
    %41 = arith.mulf %39, %40 : vector<264x128xf32>
    %cst_24 = arith.constant 2.000000e+00 : f32
    %42 = vector.broadcast %cst_24 : f32 to vector<264x128xf32>
    %43 = arith.subf %42, %41 : vector<264x128xf32>
    %44 = arith.mulf %40, %43 : vector<264x128xf32>
    %45 = arith.mulf %32, %44 : vector<264x128xf32>
    %46 = vector.shape_cast %45 : vector<264x128xf32> to vector<1x264x128xf32>
    %cst_25 = arith.constant dense<0.000000e+00> : vector<1xf32>
    %47 = vector.multi_reduction <add>, %46, %cst_25 [1, 2] : vector<1x264x128xf32> to vector<1xf32>
    %48 = vector.shape_cast %47 : vector<1xf32> to vector<1x1x1xf32>
    %49 = vector.extract %48[0, 0, 0] : f32 from vector<1x1x1xf32>
    %50 = vector.broadcast %49 : f32 to vector<1x1xf32>
    %cst_26 = arith.constant 9.99999974E-5 : f32
    %51 = vector.broadcast %cst_26 : f32 to vector<1x1xf32>
    %cst_27 = arith.constant 8.99999984E-4 : f32
    %52 = vector.broadcast %cst_27 : f32 to vector<1x1xf32>
    %53 = arith.mulf %51, %52 : vector<1x1xf32>
    %54 = tpu.reciprocal %53 {approx = true} : vector<1x1xf32> -> vector<1x1xf32>
    %55 = arith.mulf %53, %54 : vector<1x1xf32>
    %cst_28 = arith.constant 2.000000e+00 : f32
    %56 = vector.broadcast %cst_28 : f32 to vector<1x1xf32>
    %57 = arith.subf %56, %55 : vector<1x1xf32>
    %58 = arith.mulf %54, %57 : vector<1x1xf32>
    %59 = arith.mulf %53, %58 : vector<1x1xf32>
    %cst_29 = arith.constant 1.160400e+04 : f32
    %60 = vector.broadcast %cst_29 : f32 to vector<1x1xf32>
    %61 = arith.mulf %60, %59 : vector<1x1xf32>
    %62 = arith.subf %50, %61 : vector<1x1xf32>
    %cst_30 = arith.constant 4.5069406E-5 : f32
    %63 = vector.broadcast %cst_30 : f32 to vector<1x1xf32>
    %64 = arith.mulf %62, %63 : vector<1x1xf32>
    %65 = vector.shape_cast %64 : vector<1x1xf32> to vector<1x1x1x1xf32>
    %c0_31 = arith.constant 0 : index
    %c0_32 = arith.constant 0 : index
    %c0_33 = arith.constant 0 : index
    %c0_34 = arith.constant 0 : index
    %66 = vector.load %arg5[%c0_31, %c0_32, %c0_33, %c0_34] : memref<1x1x1x1xf32, #tpu.memory_space<vmem>>, vector<1x1x1x1xf32>
    tpu.vector_store %arg5[%c0_31, %c0_32, %c0_33, %c0_34], %65 {strides = array<i32>} : memref<1x1x1x1xf32, #tpu.memory_space<vmem>>, vector<1x1x1x1xf32>,
    return
  }
  func.func @transform_0(%arg0: i32) -> (i32, i32, i32) {
    %c0_i32 = arith.constant 0 : i32
    %c0_i32_0 = arith.constant 0 : i32
    %c0_i32_1 = arith.constant 0 : i32
    return %arg0, %c0_i32, %c0_i32_0 : i32, i32, i32
  }
  func.func @transform_1(%arg0: i32) -> (i32, i32, i32) {
    %c0_i32 = arith.constant 0 : i32
    %c0_i32_0 = arith.constant 0 : i32
    %c0_i32_1 = arith.constant 0 : i32
    return %arg0, %c0_i32, %c0_i32_0 : i32, i32, i32
  }
  func.func @transform_2(%arg0: i32) -> (i32, i32) {
    %c0_i32 = arith.constant 0 : i32
    %c0_i32_0 = arith.constant 0 : i32
    %c0_i32_1 = arith.constant 0 : i32
    return %c0_i32, %c0_i32_0 : i32, i32
  }
  func.func @transform_3(%arg0: i32) -> (i32, i32) {
    %c0_i32 = arith.constant 0 : i32
    %c0_i32_0 = arith.constant 0 : i32
    %c0_i32_1 = arith.constant 0 : i32
    return %c0_i32, %c0_i32_0 : i32, i32
  }
  func.func @transform_4(%arg0: i32) -> (i32, i32, i32, i32) {
    %c0_i32 = arith.constant 0 : i32
    %c0_i32_0 = arith.constant 0 : i32
    %c0_i32_1 = arith.constant 0 : i32
    %c0_i32_2 = arith.constant 0 : i32
    return %arg0, %c0_i32, %c0_i32_0, %c0_i32_1 : i32, i32, i32, i32
  }
}

</mosaic_0001>

<llo_original>
// kernel: custom-call.110
$region0: #{custom-call.110}
  %s0 = inlined_call_operand.hbm [shape: pred[2], index: 0, kind: output, shape index: {}]

// kernel: custom-call.35
$region0: #{custom-call.35}
  %s0 = inlined_call_operand.vmem [shape: f32[2,4,3], index: 0, kind: input, shape index: {}]
  %s1 = inlined_call_operand.vmem [shape: f32[2,4,3], index: 1, kind: output, shape index: {0}]
  %s2 = inlined_call_operand.vmem [shape: f32[2,3], index: 2, kind: output, shape index: {1}]
  %3 = xla_tuple %s1, %s2
  $region1: #{custom-call.35} parent=0
    #allocation0 [shape = 'u8[4096]{0}', space=vmem, size = 0x1000, scoped, tag = 'operand span for operand 0']
    #allocation1 [shape = 'u8[4096]{0}', space=vmem, size = 0x1000, scoped, tag = 'packed  for operand 0']
    #allocation2 [shape = 'u8[4096]{0}', space=vmem, size = 0x1000, scoped, tag = 'operand span for operand 1']
    #allocation3 [shape = 'u8[4096]{0}', space=vmem, size = 0x1000, scoped, tag = 'packed  for operand 1']
    #allocation4 [shape = 'u8[4096]{0}', space=vmem, size = 0x1000, scoped, tag = 'operand span for operand 2']
    #allocation5 [shape = 'u8[2048]{0}', space=vmem, size = 0x800, scoped, tag = 'packed  for operand 2']
    loop: start=0, step=1, limit=4
    $region2: #{custom-call.35} parent=1 // loop_pre_header
      _
    $region3: #{custom-call.35} parent=1 // loop_header
      %s5 = sphi 0, %s9
      %p6 = scmp.ge.s32.totalorder %s5, 4
      %s12 = sphi 0, %s31
      %s13 = sphi 0, %s27
      %s14 = sphi 0, %s23
      %s15 = sphi 0, %s12
      %s16 = sphi 0, %s13
      %s17 = sphi 0, %s14
      %s18 = sphi 0, %s15
      %s19 = sphi 0, %s16
      %s20 = sphi 0, %s17
      %s46 = sphi 0, %s48
      %s49 = sphi 0, %s46
      %s50 = sphi 0, %s49
      %s66 = sphi 0, %s50
    $region4: #{custom-call.35} parent=1 // loop_header_branch
      %8 = sbr.rel (%p6) target = $region8
    $region5: #{custom-call.35} parent=1 // loop_body
      %s10 = ssub.s32 %s5, 1
      %s11 = ssub.s32 %s5, 2
      %s21 = sadd.s32 1, %s14
      %p22 = scmp.ge.s32.totalorder %s21, 1
      %s23 = scalar_select %p22, 0, %s21
      %s24 = sadd.s32 1, %s13
      %s25 = scalar_select %p22, %s24, %s13
      %p26 = scmp.ge.s32.totalorder %s25, 1
      %s27 = scalar_select %p26, 0, %s25
      %s28 = sadd.s32 1, %s12
      %s29 = scalar_select %p26, %s28, %s12
      %p30 = scmp.ge.s32.totalorder %s29, 2
      %s31 = scalar_select %p30, 0, %s29
      %p32 = scmp.lt.s32.totalorder %s12, 0
      %s33 = ssub.s32 0, %s12
      %s34 = scalar_select %p32, %s33, %s12
      %s35 = sshrl.u32 %s34, 3
      %s36 = ssub.s32 0, %s35
      %s37 = scalar_select %p32, %s36, %s35
      %p38 = scmp.lt.s32.totalorder %s31, 0
      %s39 = ssub.s32 0, %s31
      %s40 = scalar_select %p38, %s39, %s31
      %s41 = sshrl.u32 %s40, 3
      %s42 = ssub.s32 0, %s41
      %s43 = scalar_select %p38, %s42, %s41
      %s44 = ssub.s32 %s37, %s43
      %p45 = scmp.eq.s32.totalorder %s44, 0
      %s47 = sadd.s32 %s46, 1
      %s48 = scalar_select %p45, %s46, %s47
      %p51 = pneg %p45
      %p52 = scmp.eq.s32.totalorder %s5, 1
      %p53 = por %p51, %p52
      %p54 = scmp.ne.s32.totalorder %s46, %s49
      %p55 = scmp.eq.s32.totalorder %s5, 0
      %p56 = por %p54, %p55
      %p57 = scmp.ne.s32.totalorder %s46, %s49
      %p58 = scmp.eq.s32.totalorder %s10, 1
      %p59 = por %p57, %p58
      %p60 = scmp.ne.s32.totalorder %s49, %s50
      %p61 = scmp.eq.s32.totalorder %s10, 0
      %p62 = por %p60, %p61
      %p63 = scmp.ne.s32.totalorder %s49, %s50
      %p64 = scmp.eq.s32.totalorder %s11, 1
      %p65 = por %p63, %p64
      %p67 = scmp.ne.s32.totalorder %s50, %s66
      %p68 = scmp.eq.s32.totalorder %s11, 0
      %p69 = por %p67, %p68
      %p70 = scmp.le.s32.totalorder 1, %s5
      %p71 = scmp.lt.s32.totalorder %s5, 3
      %p72 = pnand %p70, %p71
      %p73 = pneg %p72
      // Predicated region
      $region9: #{custom-call.35} parent=5 // pred_check
        _
      $region10: #{custom-call.35} parent=5 // pred_check_branch
        %75 = sbr.rel (%p72) target = $region12
      $region11: #{custom-call.35} parent=5 // pred_region
        %s76 = ssub.s32 %s5, 1
      $region12: #{custom-call.35} parent=5 // pred_fallthru
        _
      %p77 = scmp.lt.s32.totalorder %s5, 2
      // Predicated region
      $region13: #{custom-call.35} parent=5 // pred_check
        %p78 = pneg %p77
      $region14: #{custom-call.35} parent=5 // pred_check_branch
        %80 = sbr.rel (%p78) target = $region16
      $region15: #{custom-call.35} parent=5 // pred_region
        %s81 = sand.u32 %s5, 1
        %s82 = sand.u32 %s5, 1
        %s83 = smul.addr %s82, 4
        %s84 = scalar_lea.vmem [#allocation1], %s83
        %s85 = sadd.s32 %s14, %s13
        %s86 = sadd.s32 %s85, %s12
        %s87 = smul.addr %s86, 4
        %s88 = scalar_lea.vmem %s0, %s87
        // Predicated region
        $region17: #{custom-call.35} parent=15 // pred_check
          _
        $region18: #{custom-call.35} parent=15 // pred_check_branch
          %90 = sbr.rel (0) target = $region20
        $region19: #{custom-call.35} parent=15 // pred_region
          // Predicated region
          $region21: #{custom-call.35} parent=19 // pred_check
            _
          $region22: #{custom-call.35} parent=19 // pred_check_branch
            %92 = sbr.rel target = $region24
          $region23: #{custom-call.35} parent=19 // pred_region
            // Predicated region
            $region36: #{custom-call.35} parent=23 // pred_check
              _
            $region37: #{custom-call.35} parent=23 // pred_check_branch
              %107 = sbr.rel (0) target = $region39
            $region38: #{custom-call.35} parent=23 // pred_region
              loop: start=0, step=1, limit=1
              $region40: #{custom-call.35} parent=38 // loop_pre_header
                _
              $region41: #{custom-call.35} parent=38 // loop_header
                %s110 = sphi 0, %s114
                %p111 = scmp.ge.s32.totalorder %s110, 1
                %s115 = sphi %s88, %s88
                %s116 = sphi %s84, %s84
              $region42: #{custom-call.35} parent=38 // loop_header_branch
                %113 = sbr.rel (%p111) target = $region46
              $region43: #{custom-call.35} parent=38 // loop_body
                %v117 = vld [vmem:[%s115] sm:$0xf]
                %118 = vst [vmem:[%s116] sm:$0xf] %v117
              $region44: #{custom-call.35} parent=38 // loop_footer
                %s114 = sadd.s32 1, %s110
              $region45: #{custom-call.35} parent=38 // loop_footer_branch
                %109 = sbr.rel target = $region41
              $region46: #{custom-call.35} parent=38 // loop_exit
                _
            $region39: #{custom-call.35} parent=23 // pred_fallthru
              _
          $region24: #{custom-call.35} parent=19 // pred_fallthru
            _
          // Predicated region
          $region25: #{custom-call.35} parent=19 // pred_check
            _
          $region26: #{custom-call.35} parent=19 // pred_check_branch
            %94 = sbr.rel (0) target = $region28
          $region27: #{custom-call.35} parent=19 // pred_region
            loop: start=0, step=1, limit=1
            $region29: #{custom-call.35} parent=27 // loop_pre_header
              _
            $region30: #{custom-call.35} parent=27 // loop_header
              %s97 = sphi 0, %s101
              %p98 = scmp.ge.s32.totalorder %s97, 1
              %s102 = sphi %s88, %s88
              %s103 = sphi %s84, %s84
            $region31: #{custom-call.35} parent=27 // loop_header_branch
              %100 = sbr.rel (%p98) target = $region35
            $region32: #{custom-call.35} parent=27 // loop_body
              %v104 = vld [vmem:[%s102] sm:$0xf]
              %105 = vst [vmem:[%s103] sm:$0xf] %v104
            $region33: #{custom-call.35} parent=27 // loop_footer
              %s101 = sadd.s32 1, %s97
            $region34: #{custom-call.35} parent=27 // loop_footer_branch
              %96 = sbr.rel target = $region30
            $region35: #{custom-call.35} parent=27 // loop_exit
              _
          $region28: #{custom-call.35} parent=19 // pred_fallthru
            _
        $region20: #{custom-call.35} parent=15 // pred_fallthru
          _
        %119 = vnop
      $region16: #{custom-call.35} parent=5 // pred_fallthru
        _
      %p120 = scmp.le.s32.totalorder 1, %s5
      %p121 = scmp.lt.s32.totalorder %s5, 3
      %p122 = pnand %p120, %p121
      %p123 = pneg %p122
      // Predicated region
      $region47: #{custom-call.35} parent=5 // pred_check
        _
      $region48: #{custom-call.35} parent=5 // pred_check_branch
        %125 = sbr.rel (%p122) target = $region50
      $region49: #{custom-call.35} parent=5 // pred_region
        #allocation6 [shape = 'f32[4,128]{1,0}', space=vmem, size = 0x1000, scoped, tag = 'scratch for Householder reflectors']
        %s126 = ssub.s32 %s5, 1
        %s127 = sand.u32 %s10, 1
        %s128 = sand.u32 %s10, 1
        %s129 = smul.addr %s128, 4
        %s130 = scalar_lea.vmem [#allocation1], %s129
        %s131 = sand.u32 %s10, 1
        %s132 = sand.u32 %s10, 1
        %s133 = smul.addr %s132, 4
        %s134 = scalar_lea.vmem [#allocation1], %s133
        %s135 = sand.u32 %s10, 1
        %s136 = sand.u32 %s10, 1
        %s137 = smul.addr %s136, 4
        %s138 = scalar_lea.vmem [#allocation3], %s137
        %p139 = pneg %p62
        %p140 = pneg %p59
        %s141 = sand.u32 %s49, 1
        %s142 = sand.u32 %s49, 1
        %s143 = smul.addr %s142, 2
        %s144 = scalar_lea.vmem [#allocation5], %s143
        %s146 = sshllo.u32 0, 4
        %v147 = vld [vmem:[%s134] sm:%s146]
        %148 = vst [vmem:[#allocation0] sm:%s146] %v147
        %p149 = scmp.lt.s32.totalorder %s15, 0
        %s150 = ssub.s32 0, %s15
        %s151 = scalar_select %p149, %s150, %s15
        %s152 = sshrl.u32 %s151, 3
        %s153 = ssub.s32 0, %s152
        %s154 = scalar_select %p149, %s153, %s152
        %s155 = sand.u32 %s15, 7
        %s156 = scalar_lea.vmem [#allocation4], %s155
        %v157 = vld [vmem:[#allocation0] sm:$0xff]
        %158 = vst [vmem:[#allocation2] sm:$0xff] %v157
        %159 = vst [vmem:[%s156] sm:$0x1] 0.0
        loop: start=0, step=1, limit=3
        $region51: #{custom-call.35} parent=49 // loop_pre_header
          _
        $region52: #{custom-call.35} parent=49 // loop_header
          %s161 = sphi 0, %s165
          %p162 = scmp.ge.s32.totalorder %s161, 3
        $region53: #{custom-call.35} parent=49 // loop_header_branch
          %164 = sbr.rel (%p162) target = $region57
        $region54: #{custom-call.35} parent=49 // loop_body
          %v166 = vld [vmem:[#allocation2] sm:$0xff]
          %v167 = vlaneseq
          %v168 = vshrl.u32 %v167, 7
          %v170 = vstv %s161
          %vm171 = vcmp.gt.s32.totalorder %v168, %v170
          %vm172 = vcmp.lt.s32.totalorder %v168, 4
          %vm173 = vmand %vm171, %vm172
          %v174 = vsel %vm173, %v166, 0.0
          %v175 = vmul.f32 %v174, %v174
          %v176 = vrot.slane %v175, 4
          %v177 = vadd.f32 %v175, %v176
          %v178 = vrot.slane %v177, 2
          %v179 = vadd.f32 %v177, %v178
          %v180 = vrot.slane %v179, 1
          %v181 = vadd.f32 %v179, %v180
          %v182 = vrsqrt.pop %v181
          %v183 = vmul.f32 %v181, %v182
          %vm184 = vcmp.eq.f32.partialorder %v181, inf
          %v185 = vsel %vm184, %v181, %v183
          %vm186 = vcmp.eq.f32.partialorder %v181, 0.0
          %v187 = vand.u32 %v181, 2147483648
          %v188 = vsel %vm186, %v187, %v185
          %vm189 = vcmp.eq.f32.partialorder %v181, 0.0
          %s190 = sshrl.u32 %s161, 3
          %s191 = sand.u32 %s161, 7
          %s192 = smul.addr %s190, 8
          %s193 = sadd.s32 %s191, %s192
          %s194 = scalar_lea.vmem [#allocation2], %s193
          %v195 = vld [vmem:[%s194] ss:$0 sm:$0xff]
          %v196 = vand.u32 2147483647, %v195
          %v197 = vmax.f32 %v196, 0.0
          %v198 = vand.u32 2147483647, %v188
          %v199 = vmax.f32 %v197, %v198
          %v200 = vrcp.pop %v199
          %v201 = vmul.f32 %v196, %v200
          %v202 = vmul.f32 %v201, %v201
          %v203 = vrcp.pop %v199
          %v204 = vmul.f32 0.0, %v203
          %v205 = vmul.f32 %v204, %v204
          %v206 = vadd.f32 %v202, %v205
          %v207 = vrcp.pop %v199
          %v208 = vmul.f32 %v198, %v207
          %v209 = vmul.f32 %v208, %v208
          %v210 = vadd.f32 %v206, %v209
          %vm211 = vcmp.eq.f32.partialorder %v199, 0.0
          %v212 = vrsqrt.pop %v210
          %v213 = vmul.f32 %v210, %v212
          %vm214 = vcmp.eq.f32.partialorder %v210, inf
          %v215 = vsel %vm214, %v210, %v213
          %vm216 = vcmp.eq.f32.partialorder %v210, 0.0
          %v217 = vand.u32 %v210, 2147483648
          %v218 = vsel %vm216, %v217, %v215
          %v219 = vmul.f32 %v199, %v218
          %v220 = vsel %vm211, 0.0, %v219
          %vm221 = vcmp.lt.f32.partialorder %v195, 0.0
          %v222 = vxor.u32 %v220, 2147483648
          %v223 = vsel %vm221, %v220, %v222
          %v224 = vsub.f32 %v223, %v195
          %v225 = vrcp.pop %v223
          %v226 = vmul.f32 %v224, %v225
          %v227 = vsel %vm189, %v195, %v223
          %v228 = vsel %vm189, 0.0, %v226
          %v229 = vsub.f32 %v195, %v227
          %s230 = smov [#allocation2]
          %v231 = vlaneseq
          %v232 = vshrl.u32 %v231, 7
          %v233 = vmov %v232
          %v234 = vld [vmem:[%s230] sm:$0xff]
          %v236 = vstv %s161
          %vm237 = vcmp.gt.s32.totalorder %v233, %v236
          %vm238 = vcmp.lt.s32.totalorder %v233, 4
          %vm239 = vmand %vm237, %vm238
          %v240 = vsel %vm239, %v234, 0.0
          %v241 = vrcp.pop %v229
          %v242 = vmul.f32 %v240, %v241
          %v243 = vsel %vm189, 0.0, %v242
          %v244 = vstv %s161
          %v245 = vlaneseq
          %v246 = vand.u32 %v245, 127
          %vm247 = vcmp.eq.s32.totalorder %v246, %v244
          %v248 = vsel %vm247, %v243, 0.0
          %249 = vadd.xlane.f32.xlu0 %v248
          %v250 = vpop.xlane.xlu0 %249
          %251 = vst [vmem:[#allocation6] sm:$0xff] %v250
          %s252 = scalar_lea.vmem [#allocation6], %s161
          %253 = vst [vmem:[%s252] sm:$0x1] 1.0
          %v254 = vstv %s161
          %v255 = vlaneseq
          %v256 = vand.u32 %v255, 127
          %vm257 = vcmp.eq.s32.totalorder %v256, %v254
          %v258 = vsel %vm257, %v228, 0.0
          %259 = vadd.xlane.f32.xlu0 %v258
          %v260 = vpop.xlane.xlu0 %259
          %v261 = vstv %s161
          %v262 = vlaneseq
          %v263 = vand.u32 %v262, 127
          %vm264 = vcmp.eq.s32.totalorder %v263, %v261
          %v265 = vld [vmem:[%s156] ss:$0 sm:$0xff]
          %v266 = vsel %vm264, %v260, %v265
          %267 = vst [vmem:[%s156] sm:$0x1] %v266
          %s268 = smov [#allocation2]
          %s269 = smov [#allocation6]
          %v270 = vlaneseq
          %v271 = vshrl.u32 %v270, 7
          %v272 = vmov %v271
          %v274 = vld [vmem:[%s269] sm:$0xff]
          %v275 = vld [vmem:[%s268] sm:$0xff]
          %v276 = vmul.f32 %v274, %v275
          %vm277 = vcmp.lt.s32.totalorder %v272, 4
          %v278 = vsel %vm277, %v276, 0.0
          %v279 = vrot.slane %v278, 4
          %v280 = vadd.f32 %v278, %v279
          %v281 = vrot.slane %v280, 2
          %v282 = vadd.f32 %v280, %v281
          %v283 = vrot.slane %v282, 1
          %v284 = vadd.f32 %v282, %v283
          %s285 = smov %s268
          %s286 = smov %s269
          %v287 = vlaneseq
          %v288 = vshrl.u32 %v287, 7
          %v289 = vmov %v288
          %v290 = vmul.f32 %v284, %v260
          %v292 = vlaneseq
          %v293 = vand.u32 %v292, 127
          %v294 = vld [vmem:[%s286] sm:$0xff]
          %v295 = vmul.f32 %v294, %v290
          %v296 = vld [vmem:[%s285] sm:$0xff]
          %v297 = vstv %s161
          %vm298 = vcmp.gt.s32.totalorder %v293, %v297
          %v299 = vsub.f32 %v296, %v295
          %v300 = vsel %vm298, %v299, %v296
          %v301 = vstv %s161
          %v302 = vlaneseq
          %v303 = vand.u32 %v302, 127
          %vm304 = vcmp.eq.s32.totalorder %v303, %v301
          %v305 = vstv %s161
          %vm306 = vcmp.ge.s32.totalorder %v289, %v305
          %vm307 = vmand %vm304, %vm306
          %v308 = vsel %vm307, %v294, %v300
          %309 = vst [vmem:[%s285] sm:$0xff] %v308
          %s310 = scalar_lea.vmem %s285, %s161
          %v311 = vld [vmem:[%s310] ss:$0 sm:$0xff]
          %v312 = vstv %s161
          %v313 = vlaneseq
          %v314 = vand.u32 %v313, 127
          %vm315 = vcmp.eq.s32.totalorder %v314, %v312
          %v316 = vsel %vm315, %v227, %v311
          %317 = vst [vmem:[%s310] sm:$0x1] %v316
        $region55: #{custom-call.35} parent=49 // loop_footer
          %s165 = sadd.s32 1, %s161
        $region56: #{custom-call.35} parent=49 // loop_footer_branch
          %160 = sbr.rel target = $region52
        $region57: #{custom-call.35} parent=49 // loop_exit
          _
        %s319 = sshllo.u32 0, 4
        %v321 = vld [vmem:[#allocation2] sm:%s319]
        %s322 = sshllo.u32 0, 4
        %323 = vst [vmem:[%s138] sm:%s322] %v321
        %s325 = sshllo.u32 0, 2
        %v327 = vld [vmem:[#allocation4] sm:%s325]
        %s328 = sshllo.u32 0, 2
        %329 = vst [vmem:[%s144] sm:%s328] %v327
        %s330 = sand.u32 %s10, 1
        %s331 = sand.u32 %s10, 1
        %s332 = smul.addr %s331, 4
        %s333 = scalar_lea.vmem [#allocation3], %s332
        %s334 = sand.u32 %s49, 1
        %s335 = sand.u32 %s49, 1
        %s336 = smul.addr %s335, 2
        %s337 = scalar_lea.vmem [#allocation5], %s336
        %s338 = sadd.s32 %s17, %s16
        %s339 = sadd.s32 %s338, %s15
        %s340 = smul.addr %s339, 4
        %s341 = scalar_lea.vmem %s1, %s340
        // Predicated region
        $region58: #{custom-call.35} parent=49 // pred_check
          _
        $region59: #{custom-call.35} parent=49 // pred_check_branch
          %343 = sbr.rel (0) target = $region61
        $region60: #{custom-call.35} parent=49 // pred_region
          // Predicated region
          $region62: #{custom-call.35} parent=60 // pred_check
            _
          $region63: #{custom-call.35} parent=60 // pred_check_branch
            %345 = sbr.rel target = $region65
          $region64: #{custom-call.35} parent=60 // pred_region
            // Predicated region
            $region77: #{custom-call.35} parent=64 // pred_check
              _
            $region78: #{custom-call.35} parent=64 // pred_check_branch
              %360 = sbr.rel (0) target = $region80
            $region79: #{custom-call.35} parent=64 // pred_region
              loop: start=0, step=1, limit=1
              $region81: #{custom-call.35} parent=79 // loop_pre_header
                _
              $region82: #{custom-call.35} parent=79 // loop_header
                %s363 = sphi 0, %s367
                %p364 = scmp.ge.s32.totalorder %s363, 1
                %s368 = sphi %s333, %s333
                %s369 = sphi %s341, %s341
              $region83: #{custom-call.35} parent=79 // loop_header_branch
                %366 = sbr.rel (%p364) target = $region87
              $region84: #{custom-call.35} parent=79 // loop_body
                %v370 = vld [vmem:[%s368] sm:$0xf]
                %371 = vst [vmem:[%s369] sm:$0xf] %v370
              $region85: #{custom-call.35} parent=79 // loop_footer
                %s367 = sadd.s32 1, %s363
              $region86: #{custom-call.35} parent=79 // loop_footer_branch
                %362 = sbr.rel target = $region82
              $region87: #{custom-call.35} parent=79 // loop_exit
                _
            $region80: #{custom-call.35} parent=64 // pred_fallthru
              _
          $region65: #{custom-call.35} parent=60 // pred_fallthru
            _
          // Predicated region
          $region66: #{custom-call.35} parent=60 // pred_check
            _
          $region67: #{custom-call.35} parent=60 // pred_check_branch
            %347 = sbr.rel (0) target = $region69
          $region68: #{custom-call.35} parent=60 // pred_region
            loop: start=0, step=1, limit=1
            $region70: #{custom-call.35} parent=68 // loop_pre_header
              _
            $region71: #{custom-call.35} parent=68 // loop_header
              %s350 = sphi 0, %s354
              %p351 = scmp.ge.s32.totalorder %s350, 1
              %s355 = sphi %s333, %s333
              %s356 = sphi %s341, %s341
            $region72: #{custom-call.35} parent=68 // loop_header_branch
              %353 = sbr.rel (%p351) target = $region76
            $region73: #{custom-call.35} parent=68 // loop_body
              %v357 = vld [vmem:[%s355] sm:$0xf]
              %358 = vst [vmem:[%s356] sm:$0xf] %v357
            $region74: #{custom-call.35} parent=68 // loop_footer
              %s354 = sadd.s32 1, %s350
            $region75: #{custom-call.35} parent=68 // loop_footer_branch
              %349 = sbr.rel target = $region71
            $region76: #{custom-call.35} parent=68 // loop_exit
              _
          $region69: #{custom-call.35} parent=60 // pred_fallthru
            _
        $region61: #{custom-call.35} parent=49 // pred_fallthru
          _
        %372 = vnop
        // Predicated region
        $region88: #{custom-call.35} parent=49 // pred_check
          %p373 = pneg %p59
        $region89: #{custom-call.35} parent=49 // pred_check_branch
          %375 = sbr.rel (%p373) target = $region91
        $region90: #{custom-call.35} parent=49 // pred_region
          %p376 = scmp.lt.s32.totalorder %s15, 0
          %s377 = ssub.s32 0, %s15
          %s378 = scalar_select %p376, %s377, %s15
          %s379 = sshrl.u32 %s378, 3
          %s380 = ssub.s32 0, %s379
          %s381 = scalar_select %p376, %s380, %s379
          %s382 = smul.addr %s381, 2
          %s383 = scalar_lea.vmem %s2, %s382
          // Predicated region
          $region92: #{custom-call.35} parent=90 // pred_check
            _
          $region93: #{custom-call.35} parent=90 // pred_check_branch
            %385 = sbr.rel (0) target = $region95
          $region94: #{custom-call.35} parent=90 // pred_region
            // Predicated region
            $region96: #{custom-call.35} parent=94 // pred_check
              _
            $region97: #{custom-call.35} parent=94 // pred_check_branch
              %387 = sbr.rel target = $region99
            $region98: #{custom-call.35} parent=94 // pred_region
              // Predicated region
              $region111: #{custom-call.35} parent=98 // pred_check
                _
              $region112: #{custom-call.35} parent=98 // pred_check_branch
                %402 = sbr.rel (0) target = $region114
              $region113: #{custom-call.35} parent=98 // pred_region
                loop: start=0, step=1, limit=1
                $region115: #{custom-call.35} parent=113 // loop_pre_header
                  _
                $region116: #{custom-call.35} parent=113 // loop_header
                  %s405 = sphi 0, %s409
                  %p406 = scmp.ge.s32.totalorder %s405, 1
                  %s410 = sphi %s337, %s337
                  %s411 = sphi %s383, %s383
                $region117: #{custom-call.35} parent=113 // loop_header_branch
                  %408 = sbr.rel (%p406) target = $region121
                $region118: #{custom-call.35} parent=113 // loop_body
                  %v412 = vld [vmem:[%s410] sm:$0x3]
                  %413 = vst [vmem:[%s411] sm:$0x3] %v412
                $region119: #{custom-call.35} parent=113 // loop_footer
                  %s409 = sadd.s32 1, %s405
                $region120: #{custom-call.35} parent=113 // loop_footer_branch
                  %404 = sbr.rel target = $region116
                $region121: #{custom-call.35} parent=113 // loop_exit
                  _
              $region114: #{custom-call.35} parent=98 // pred_fallthru
                _
            $region99: #{custom-call.35} parent=94 // pred_fallthru
              _
            // Predicated region
            $region100: #{custom-call.35} parent=94 // pred_check
              _
            $region101: #{custom-call.35} parent=94 // pred_check_branch
              %389 = sbr.rel (0) target = $region103
            $region102: #{custom-call.35} parent=94 // pred_region
              loop: start=0, step=1, limit=1
              $region104: #{custom-call.35} parent=102 // loop_pre_header
                _
              $region105: #{custom-call.35} parent=102 // loop_header
                %s392 = sphi 0, %s396
                %p393 = scmp.ge.s32.totalorder %s392, 1
                %s397 = sphi %s337, %s337
                %s398 = sphi %s383, %s383
              $region106: #{custom-call.35} parent=102 // loop_header_branch
                %395 = sbr.rel (%p393) target = $region110
              $region107: #{custom-call.35} parent=102 // loop_body
                %v399 = vld [vmem:[%s397] sm:$0x3]
                %400 = vst [vmem:[%s398] sm:$0x3] %v399
              $region108: #{custom-call.35} parent=102 // loop_footer
                %s396 = sadd.s32 1, %s392
              $region109: #{custom-call.35} parent=102 // loop_footer_branch
                %391 = sbr.rel target = $region105
              $region110: #{custom-call.35} parent=102 // loop_exit
                _
            $region103: #{custom-call.35} parent=94 // pred_fallthru
              _
          $region95: #{custom-call.35} parent=90 // pred_fallthru
            _
          %414 = vnop
        $region91: #{custom-call.35} parent=49 // pred_fallthru
          _
      $region50: #{custom-call.35} parent=5 // pred_fallthru
        _
      %p415 = scmp.le.s32.totalorder 2, %s5
      // Predicated region
      $region122: #{custom-call.35} parent=5 // pred_check
        %p416 = pneg %p415
      $region123: #{custom-call.35} parent=5 // pred_check_branch
        %418 = sbr.rel (%p416) target = $region125
      $region124: #{custom-call.35} parent=5 // pred_region
        %s419 = ssub.s32 %s5, 2
        %s420 = sand.u32 %s11, 1
        %s421 = sand.u32 %s11, 1
        %s422 = smul.addr %s421, 4
        %s423 = scalar_lea.vmem [#allocation3], %s422
        // Predicated region
        $region126: #{custom-call.35} parent=124 // pred_check
          %p424 = pneg %p65
        $region127: #{custom-call.35} parent=124 // pred_check_branch
          %426 = sbr.rel (%p424) target = $region129
        $region128: #{custom-call.35} parent=124 // pred_region
          %s427 = sand.u32 %s50, 1
          %s428 = sand.u32 %s50, 1
          %s429 = smul.addr %s428, 2
          %s430 = scalar_lea.vmem [#allocation5], %s429
        $region129: #{custom-call.35} parent=124 // pred_fallthru
          _
      $region125: #{custom-call.35} parent=5 // pred_fallthru
        _
    $region6: #{custom-call.35} parent=1 // loop_footer
      %s9 = sadd.s32 1, %s5
    $region7: #{custom-call.35} parent=1 // loop_footer_branch
      %4 = sbr.rel target = $region3
    $region8: #{custom-call.35} parent=1 // loop_exit
      _

// kernel: custom-call.117
$region0: #{custom-call.117}
  %s0 = inlined_call_operand.vmem [shape: f32[2,6,3], index: 0, kind: input, shape index: {}]
  %s1 = inlined_call_operand.vmem [shape: f32[2,6,3], index: 1, kind: output, shape index: {0}]
  %s2 = inlined_call_operand.vmem [shape: f32[2,3], index: 2, kind: output, shape index: {1}]
  %3 = xla_tuple %s1, %s2
  $region1: #{custom-call.117} parent=0
    #allocation0 [shape = 'u8[8192]{0}', space=vmem, size = 0x2000, scoped, tag = 'operand span for operand 0']
    #allocation1 [shape = 'u8[8192]{0}', space=vmem, size = 0x2000, scoped, tag = 'operand span for operand 1']
    #allocation2 [shape = 'u8[4096]{0}', space=vmem, size = 0x1000, scoped, tag = 'operand span for operand 2']
    #allocation3 [shape = 'u8[2048]{0}', space=vmem, size = 0x800, scoped, tag = 'packed  for operand 2']
    loop: start=0, step=1, limit=4
    $region2: #{custom-call.117} parent=1 // loop_pre_header
      _
    $region3: #{custom-call.117} parent=1 // loop_header
      %s5 = sphi 0, %s9
      %p6 = scmp.ge.s32.totalorder %s5, 4
      %s12 = sphi 0, %s31
      %s13 = sphi 0, %s27
      %s14 = sphi 0, %s23
      %s15 = sphi 0, %s12
      %s16 = sphi 0, %s13
      %s17 = sphi 0, %s14
      %s18 = sphi 0, %s15
      %s19 = sphi 0, %s16
      %s20 = sphi 0, %s17
      %s46 = sphi 0, %s48
      %s49 = sphi 0, %s46
      %s50 = sphi 0, %s49
      %s66 = sphi 0, %s50
    $region4: #{custom-call.117} parent=1 // loop_header_branch
      %8 = sbr.rel (%p6) target = $region8
    $region5: #{custom-call.117} parent=1 // loop_body
      %s10 = ssub.s32 %s5, 1
      %s11 = ssub.s32 %s5, 2
      %s21 = sadd.s32 1, %s14
      %p22 = scmp.ge.s32.totalorder %s21, 1
      %s23 = scalar_select %p22, 0, %s21
      %s24 = sadd.s32 1, %s13
      %s25 = scalar_select %p22, %s24, %s13
      %p26 = scmp.ge.s32.totalorder %s25, 1
      %s27 = scalar_select %p26, 0, %s25
      %s28 = sadd.s32 1, %s12
      %s29 = scalar_select %p26, %s28, %s12
      %p30 = scmp.ge.s32.totalorder %s29, 2
      %s31 = scalar_select %p30, 0, %s29
      %p32 = scmp.lt.s32.totalorder %s12, 0
      %s33 = ssub.s32 0, %s12
      %s34 = scalar_select %p32, %s33, %s12
      %s35 = sshrl.u32 %s34, 3
      %s36 = ssub.s32 0, %s35
      %s37 = scalar_select %p32, %s36, %s35
      %p38 = scmp.lt.s32.totalorder %s31, 0
      %s39 = ssub.s32 0, %s31
      %s40 = scalar_select %p38, %s39, %s31
      %s41 = sshrl.u32 %s40, 3
      %s42 = ssub.s32 0, %s41
      %s43 = scalar_select %p38, %s42, %s41
      %s44 = ssub.s32 %s37, %s43
      %p45 = scmp.eq.s32.totalorder %s44, 0
      %s47 = sadd.s32 %s46, 1
      %s48 = scalar_select %p45, %s46, %s47
      %p51 = pneg %p45
      %p52 = scmp.eq.s32.totalorder %s5, 1
      %p53 = por %p51, %p52
      %p54 = scmp.ne.s32.totalorder %s46, %s49
      %p55 = scmp.eq.s32.totalorder %s5, 0
      %p56 = por %p54, %p55
      %p57 = scmp.ne.s32.totalorder %s46, %s49
      %p58 = scmp.eq.s32.totalorder %s10, 1
      %p59 = por %p57, %p58
      %p60 = scmp.ne.s32.totalorder %s49, %s50
      %p61 = scmp.eq.s32.totalorder %s10, 0
      %p62 = por %p60, %p61
      %p63 = scmp.ne.s32.totalorder %s49, %s50
      %p64 = scmp.eq.s32.totalorder %s11, 1
      %p65 = por %p63, %p64
      %p67 = scmp.ne.s32.totalorder %s50, %s66
      %p68 = scmp.eq.s32.totalorder %s11, 0
      %p69 = por %p67, %p68
      %p70 = scmp.le.s32.totalorder 1, %s5
      %p71 = scmp.lt.s32.totalorder %s5, 3
      %p72 = pnand %p70, %p71
      %p73 = pneg %p72
      // Predicated region
      $region9: #{custom-call.117} parent=5 // pred_check
        _
      $region10: #{custom-call.117} parent=5 // pred_check_branch
        %75 = sbr.rel (%p72) target = $region12
      $region11: #{custom-call.117} parent=5 // pred_region
        %s76 = ssub.s32 %s5, 1
      $region12: #{custom-call.117} parent=5 // pred_fallthru
        _
      %p77 = scmp.lt.s32.totalorder %s5, 2
      // Predicated region
      $region13: #{custom-call.117} parent=5 // pred_check
        %p78 = pneg %p77
      $region14: #{custom-call.117} parent=5 // pred_check_branch
        %80 = sbr.rel (%p78) target = $region16
      $region15: #{custom-call.117} parent=5 // pred_region
        %s81 = sand.u32 %s5, 1
        %s82 = sand.u32 %s5, 1
        %s83 = smul.addr %s82, 8
        %s84 = scalar_lea.vmem [#allocation0], %s83
        %s85 = sadd.s32 %s14, %s13
        %s86 = sadd.s32 %s85, %s12
        %s87 = smul.addr %s86, 8
        %s88 = scalar_lea.vmem %s0, %s87
        // Predicated region
        $region17: #{custom-call.117} parent=15 // pred_check
          _
        $region18: #{custom-call.117} parent=15 // pred_check_branch
          %90 = sbr.rel (0) target = $region20
        $region19: #{custom-call.117} parent=15 // pred_region
          // Predicated region
          $region21: #{custom-call.117} parent=19 // pred_check
            _
          $region22: #{custom-call.117} parent=19 // pred_check_branch
            %92 = sbr.rel (0) target = $region24
          $region23: #{custom-call.117} parent=19 // pred_region
            // Predicated region
            $region36: #{custom-call.117} parent=23 // pred_check
              _
            $region37: #{custom-call.117} parent=23 // pred_check_branch
              %107 = sbr.rel (0) target = $region39
            $region38: #{custom-call.117} parent=23 // pred_region
              loop: start=0, step=1, limit=1
              $region40: #{custom-call.117} parent=38 // loop_pre_header
                _
              $region41: #{custom-call.117} parent=38 // loop_header
                %s109 = sphi 0, %s113
                %p110 = scmp.ge.s32.totalorder %s109, 1
                %s114 = sphi %s88, %s88
                %s115 = sphi %s84, %s84
              $region42: #{custom-call.117} parent=38 // loop_header_branch
                %112 = sbr.rel (%p110) target = $region46
              $region43: #{custom-call.117} parent=38 // loop_body
                %v116 = vld [vmem:[%s114] sm:$0xff]
                %117 = vst [vmem:[%s115] sm:$0xff] %v116
              $region44: #{custom-call.117} parent=38 // loop_footer
                %s113 = sadd.s32 1, %s109
              $region45: #{custom-call.117} parent=38 // loop_footer_branch
                %108 = sbr.rel target = $region41
              $region46: #{custom-call.117} parent=38 // loop_exit
                _
            $region39: #{custom-call.117} parent=23 // pred_fallthru
              _
            // Predicated region
            $region47: #{custom-call.117} parent=23 // pred_check
              _
            $region48: #{custom-call.117} parent=23 // pred_check_branch
              %119 = sbr.rel target = $region50
            $region49: #{custom-call.117} parent=23 // pred_region
              _
            $region50: #{custom-call.117} parent=23 // pred_fallthru
              _
          $region24: #{custom-call.117} parent=19 // pred_fallthru
            _
          // Predicated region
          $region25: #{custom-call.117} parent=19 // pred_check
            _
          $region26: #{custom-call.117} parent=19 // pred_check_branch
            %94 = sbr.rel target = $region28
          $region27: #{custom-call.117} parent=19 // pred_region
            loop: start=0, step=1, limit=1
            $region29: #{custom-call.117} parent=27 // loop_pre_header
              _
            $region30: #{custom-call.117} parent=27 // loop_header
              %s97 = sphi 0, %s101
              %p98 = scmp.ge.s32.totalorder %s97, 1
              %s102 = sphi %s88, %s88
              %s103 = sphi %s84, %s84
            $region31: #{custom-call.117} parent=27 // loop_header_branch
              %100 = sbr.rel (%p98) target = $region35
            $region32: #{custom-call.117} parent=27 // loop_body
              %v104 = vld [vmem:[%s102] sm:$0xff]
              %105 = vst [vmem:[%s103] sm:$0xff] %v104
            $region33: #{custom-call.117} parent=27 // loop_footer
              %s101 = sadd.s32 1, %s97
            $region34: #{custom-call.117} parent=27 // loop_footer_branch
              %96 = sbr.rel target = $region30
            $region35: #{custom-call.117} parent=27 // loop_exit
              _
          $region28: #{custom-call.117} parent=19 // pred_fallthru
            _
        $region20: #{custom-call.117} parent=15 // pred_fallthru
          _
        %120 = vnop
      $region16: #{custom-call.117} parent=5 // pred_fallthru
        _
      %p121 = scmp.le.s32.totalorder 1, %s5
      %p122 = scmp.lt.s32.totalorder %s5, 3
      %p123 = pnand %p121, %p122
      %p124 = pneg %p123
      // Predicated region
      $region51: #{custom-call.117} parent=5 // pred_check
        _
      $region52: #{custom-call.117} parent=5 // pred_check_branch
        %126 = sbr.rel (%p123) target = $region54
      $region53: #{custom-call.117} parent=5 // pred_region
        #allocation4 [shape = 'f32[6,128]{1,0}', space=vmem, size = 0x1000, scoped, tag = 'scratch for Householder reflectors']
        %s127 = ssub.s32 %s5, 1
        %s128 = sand.u32 %s10, 1
        %s129 = sand.u32 %s10, 1
        %s130 = smul.addr %s129, 8
        %s131 = scalar_lea.vmem [#allocation0], %s130
        %s132 = sand.u32 %s10, 1
        %s133 = sand.u32 %s10, 1
        %s134 = smul.addr %s133, 8
        %s135 = scalar_lea.vmem [#allocation0], %s134
        %s136 = sand.u32 %s10, 1
        %s137 = sand.u32 %s10, 1
        %s138 = smul.addr %s137, 8
        %s139 = scalar_lea.vmem [#allocation1], %s138
        %p140 = pneg %p62
        %p141 = pneg %p59
        %s142 = sand.u32 %s49, 1
        %s143 = sand.u32 %s49, 1
        %s144 = smul.addr %s143, 2
        %s145 = scalar_lea.vmem [#allocation3], %s144
        %p146 = scmp.lt.s32.totalorder %s15, 0
        %s147 = ssub.s32 0, %s15
        %s148 = scalar_select %p146, %s147, %s15
        %s149 = sshrl.u32 %s148, 3
        %s150 = ssub.s32 0, %s149
        %s151 = scalar_select %p146, %s150, %s149
        %s152 = sand.u32 %s15, 7
        %s153 = scalar_lea.vmem [#allocation2], %s152
        %v154 = vld [vmem:[%s131] sm:$0xff]
        %155 = vst [vmem:[%s139] sm:$0xff] %v154
        %156 = vst [vmem:[%s153] sm:$0x1] 0.0
        loop: start=0, step=1, limit=3
        $region55: #{custom-call.117} parent=53 // loop_pre_header
          _
        $region56: #{custom-call.117} parent=53 // loop_header
          %s158 = sphi 0, %s162
          %p159 = scmp.ge.s32.totalorder %s158, 3
        $region57: #{custom-call.117} parent=53 // loop_header_branch
          %161 = sbr.rel (%p159) target = $region61
        $region58: #{custom-call.117} parent=53 // loop_body
          %v163 = vld [vmem:[%s139] sm:$0xff]
          %v164 = vlaneseq
          %v165 = vshrl.u32 %v164, 7
          %v167 = vstv %s158
          %vm168 = vcmp.gt.s32.totalorder %v165, %v167
          %vm169 = vcmp.lt.s32.totalorder %v165, 6
          %vm170 = vmand %vm168, %vm169
          %v171 = vsel %vm170, %v163, 0.0
          %v172 = vmul.f32 %v171, %v171
          %v173 = vrot.slane %v172, 4
          %v174 = vadd.f32 %v172, %v173
          %v175 = vrot.slane %v174, 2
          %v176 = vadd.f32 %v174, %v175
          %v177 = vrot.slane %v176, 1
          %v178 = vadd.f32 %v176, %v177
          %v179 = vrsqrt.pop %v178
          %v180 = vmul.f32 %v178, %v179
          %vm181 = vcmp.eq.f32.partialorder %v178, inf
          %v182 = vsel %vm181, %v178, %v180
          %vm183 = vcmp.eq.f32.partialorder %v178, 0.0
          %v184 = vand.u32 %v178, 2147483648
          %v185 = vsel %vm183, %v184, %v182
          %vm186 = vcmp.eq.f32.partialorder %v178, 0.0
          %s187 = sshrl.u32 %s158, 3
          %s188 = sand.u32 %s158, 7
          %s189 = smul.addr %s187, 8
          %s190 = sadd.s32 %s188, %s189
          %s191 = scalar_lea.vmem %s139, %s190 [#allocation1]
          %v192 = vld [vmem:[%s191] ss:$0 sm:$0xff]
          %v193 = vand.u32 2147483647, %v192
          %v194 = vmax.f32 %v193, 0.0
          %v195 = vand.u32 2147483647, %v185
          %v196 = vmax.f32 %v194, %v195
          %v197 = vrcp.pop %v196
          %v198 = vmul.f32 %v193, %v197
          %v199 = vmul.f32 %v198, %v198
          %v200 = vrcp.pop %v196
          %v201 = vmul.f32 0.0, %v200
          %v202 = vmul.f32 %v201, %v201
          %v203 = vadd.f32 %v199, %v202
          %v204 = vrcp.pop %v196
          %v205 = vmul.f32 %v195, %v204
          %v206 = vmul.f32 %v205, %v205
          %v207 = vadd.f32 %v203, %v206
          %vm208 = vcmp.eq.f32.partialorder %v196, 0.0
          %v209 = vrsqrt.pop %v207
          %v210 = vmul.f32 %v207, %v209
          %vm211 = vcmp.eq.f32.partialorder %v207, inf
          %v212 = vsel %vm211, %v207, %v210
          %vm213 = vcmp.eq.f32.partialorder %v207, 0.0
          %v214 = vand.u32 %v207, 2147483648
          %v215 = vsel %vm213, %v214, %v212
          %v216 = vmul.f32 %v196, %v215
          %v217 = vsel %vm208, 0.0, %v216
          %vm218 = vcmp.lt.f32.partialorder %v192, 0.0
          %v219 = vxor.u32 %v217, 2147483648
          %v220 = vsel %vm218, %v217, %v219
          %v221 = vsub.f32 %v220, %v192
          %v222 = vrcp.pop %v220
          %v223 = vmul.f32 %v221, %v222
          %v224 = vsel %vm186, %v192, %v220
          %v225 = vsel %vm186, 0.0, %v223
          %v226 = vsub.f32 %v192, %v224
          %s227 = smov %s139
          %v228 = vlaneseq
          %v229 = vshrl.u32 %v228, 7
          %v230 = vmov %v229
          %v231 = vld [vmem:[%s227] sm:$0xff]
          %v233 = vstv %s158
          %vm234 = vcmp.gt.s32.totalorder %v230, %v233
          %vm235 = vcmp.lt.s32.totalorder %v230, 6
          %vm236 = vmand %vm234, %vm235
          %v237 = vsel %vm236, %v231, 0.0
          %v238 = vrcp.pop %v226
          %v239 = vmul.f32 %v237, %v238
          %v240 = vsel %vm186, 0.0, %v239
          %v241 = vstv %s158
          %v242 = vlaneseq
          %v243 = vand.u32 %v242, 127
          %vm244 = vcmp.eq.s32.totalorder %v243, %v241
          %v245 = vsel %vm244, %v240, 0.0
          %246 = vadd.xlane.f32.xlu0 %v245
          %v247 = vpop.xlane.xlu0 %246
          %248 = vst [vmem:[#allocation4] sm:$0xff] %v247
          %s249 = scalar_lea.vmem [#allocation4], %s158
          %250 = vst [vmem:[%s249] sm:$0x1] 1.0
          %v251 = vstv %s158
          %v252 = vlaneseq
          %v253 = vand.u32 %v252, 127
          %vm254 = vcmp.eq.s32.totalorder %v253, %v251
          %v255 = vsel %vm254, %v225, 0.0
          %256 = vadd.xlane.f32.xlu0 %v255
          %v257 = vpop.xlane.xlu0 %256
          %v258 = vstv %s158
          %v259 = vlaneseq
          %v260 = vand.u32 %v259, 127
          %vm261 = vcmp.eq.s32.totalorder %v260, %v258
          %v262 = vld [vmem:[%s153] ss:$0 sm:$0xff]
          %v263 = vsel %vm261, %v257, %v262
          %264 = vst [vmem:[%s153] sm:$0x1] %v263
          %s265 = smov %s139
          %s266 = smov [#allocation4]
          %v267 = vlaneseq
          %v268 = vshrl.u32 %v267, 7
          %v269 = vmov %v268
          %v271 = vld [vmem:[%s266] sm:$0xff]
          %v272 = vld [vmem:[%s265] sm:$0xff]
          %v273 = vmul.f32 %v271, %v272
          %vm274 = vcmp.lt.s32.totalorder %v269, 6
          %v275 = vsel %vm274, %v273, 0.0
          %v276 = vrot.slane %v275, 4
          %v277 = vadd.f32 %v275, %v276
          %v278 = vrot.slane %v277, 2
          %v279 = vadd.f32 %v277, %v278
          %v280 = vrot.slane %v279, 1
          %v281 = vadd.f32 %v279, %v280
          %s282 = smov %s265
          %s283 = smov %s266
          %v284 = vlaneseq
          %v285 = vshrl.u32 %v284, 7
          %v286 = vmov %v285
          %v287 = vmul.f32 %v281, %v257
          %v289 = vlaneseq
          %v290 = vand.u32 %v289, 127
          %v291 = vld [vmem:[%s283] sm:$0xff]
          %v292 = vmul.f32 %v291, %v287
          %v293 = vld [vmem:[%s282] sm:$0xff]
          %v294 = vstv %s158
          %vm295 = vcmp.gt.s32.totalorder %v290, %v294
          %v296 = vsub.f32 %v293, %v292
          %v297 = vsel %vm295, %v296, %v293
          %v298 = vstv %s158
          %v299 = vlaneseq
          %v300 = vand.u32 %v299, 127
          %vm301 = vcmp.eq.s32.totalorder %v300, %v298
          %v302 = vstv %s158
          %vm303 = vcmp.ge.s32.totalorder %v286, %v302
          %vm304 = vmand %vm301, %vm303
          %v305 = vsel %vm304, %v291, %v297
          %306 = vst [vmem:[%s282] sm:$0xff] %v305
          %s307 = scalar_lea.vmem %s282, %s158
          %v308 = vld [vmem:[%s307] ss:$0 sm:$0xff]
          %v309 = vstv %s158
          %v310 = vlaneseq
          %v311 = vand.u32 %v310, 127
          %vm312 = vcmp.eq.s32.totalorder %v311, %v309
          %v313 = vsel %vm312, %v224, %v308
          %314 = vst [vmem:[%s307] sm:$0x1] %v313
        $region59: #{custom-call.117} parent=53 // loop_footer
          %s162 = sadd.s32 1, %s158
        $region60: #{custom-call.117} parent=53 // loop_footer_branch
          %157 = sbr.rel target = $region56
        $region61: #{custom-call.117} parent=53 // loop_exit
          _
        %s316 = sshllo.u32 0, 2
        %v318 = vld [vmem:[#allocation2] sm:%s316]
        %s319 = sshllo.u32 0, 2
        %320 = vst [vmem:[%s145] sm:%s319] %v318
        %s321 = sand.u32 %s10, 1
        %s322 = sand.u32 %s10, 1
        %s323 = smul.addr %s322, 8
        %s324 = scalar_lea.vmem [#allocation1], %s323
        %s325 = sand.u32 %s49, 1
        %s326 = sand.u32 %s49, 1
        %s327 = smul.addr %s326, 2
        %s328 = scalar_lea.vmem [#allocation3], %s327
        %s329 = sadd.s32 %s17, %s16
        %s330 = sadd.s32 %s329, %s15
        %s331 = smul.addr %s330, 8
        %s332 = scalar_lea.vmem %s1, %s331
        // Predicated region
        $region62: #{custom-call.117} parent=53 // pred_check
          _
        $region63: #{custom-call.117} parent=53 // pred_check_branch
          %334 = sbr.rel (0) target = $region65
        $region64: #{custom-call.117} parent=53 // pred_region
          // Predicated region
          $region66: #{custom-call.117} parent=64 // pred_check
            _
          $region67: #{custom-call.117} parent=64 // pred_check_branch
            %336 = sbr.rel (0) target = $region69
          $region68: #{custom-call.117} parent=64 // pred_region
            // Predicated region
            $region81: #{custom-call.117} parent=68 // pred_check
              _
            $region82: #{custom-call.117} parent=68 // pred_check_branch
              %351 = sbr.rel (0) target = $region84
            $region83: #{custom-call.117} parent=68 // pred_region
              loop: start=0, step=1, limit=1
              $region85: #{custom-call.117} parent=83 // loop_pre_header
                _
              $region86: #{custom-call.117} parent=83 // loop_header
                %s353 = sphi 0, %s357
                %p354 = scmp.ge.s32.totalorder %s353, 1
                %s358 = sphi %s324, %s324
                %s359 = sphi %s332, %s332
              $region87: #{custom-call.117} parent=83 // loop_header_branch
                %356 = sbr.rel (%p354) target = $region91
              $region88: #{custom-call.117} parent=83 // loop_body
                %v360 = vld [vmem:[%s358] sm:$0xff]
                %361 = vst [vmem:[%s359] sm:$0xff] %v360
              $region89: #{custom-call.117} parent=83 // loop_footer
                %s357 = sadd.s32 1, %s353
              $region90: #{custom-call.117} parent=83 // loop_footer_branch
                %352 = sbr.rel target = $region86
              $region91: #{custom-call.117} parent=83 // loop_exit
                _
            $region84: #{custom-call.117} parent=68 // pred_fallthru
              _
            // Predicated region
            $region92: #{custom-call.117} parent=68 // pred_check
              _
            $region93: #{custom-call.117} parent=68 // pred_check_branch
              %363 = sbr.rel target = $region95
            $region94: #{custom-call.117} parent=68 // pred_region
              _
            $region95: #{custom-call.117} parent=68 // pred_fallthru
              _
          $region69: #{custom-call.117} parent=64 // pred_fallthru
            _
          // Predicated region
          $region70: #{custom-call.117} parent=64 // pred_check
            _
          $region71: #{custom-call.117} parent=64 // pred_check_branch
            %338 = sbr.rel target = $region73
          $region72: #{custom-call.117} parent=64 // pred_region
            loop: start=0, step=1, limit=1
            $region74: #{custom-call.117} parent=72 // loop_pre_header
              _
            $region75: #{custom-call.117} parent=72 // loop_header
              %s341 = sphi 0, %s345
              %p342 = scmp.ge.s32.totalorder %s341, 1
              %s346 = sphi %s324, %s324
              %s347 = sphi %s332, %s332
            $region76: #{custom-call.117} parent=72 // loop_header_branch
              %344 = sbr.rel (%p342) target = $region80
            $region77: #{custom-call.117} parent=72 // loop_body
              %v348 = vld [vmem:[%s346] sm:$0xff]
              %349 = vst [vmem:[%s347] sm:$0xff] %v348
            $region78: #{custom-call.117} parent=72 // loop_footer
              %s345 = sadd.s32 1, %s341
            $region79: #{custom-call.117} parent=72 // loop_footer_branch
              %340 = sbr.rel target = $region75
            $region80: #{custom-call.117} parent=72 // loop_exit
              _
          $region73: #{custom-call.117} parent=64 // pred_fallthru
            _
        $region65: #{custom-call.117} parent=53 // pred_fallthru
          _
        %364 = vnop
        // Predicated region
        $region96: #{custom-call.117} parent=53 // pred_check
          %p365 = pneg %p59
        $region97: #{custom-call.117} parent=53 // pred_check_branch
          %367 = sbr.rel (%p365) target = $region99
        $region98: #{custom-call.117} parent=53 // pred_region
          %p368 = scmp.lt.s32.totalorder %s15, 0
          %s369 = ssub.s32 0, %s15
          %s370 = scalar_select %p368, %s369, %s15
          %s371 = sshrl.u32 %s370, 3
          %s372 = ssub.s32 0, %s371
          %s373 = scalar_select %p368, %s372, %s371
          %s374 = smul.addr %s373, 2
          %s375 = scalar_lea.vmem %s2, %s374
          // Predicated region
          $region100: #{custom-call.117} parent=98 // pred_check
            _
          $region101: #{custom-call.117} parent=98 // pred_check_branch
            %377 = sbr.rel (0) target = $region103
          $region102: #{custom-call.117} parent=98 // pred_region
            // Predicated region
            $region104: #{custom-call.117} parent=102 // pred_check
              _
            $region105: #{custom-call.117} parent=102 // pred_check_branch
              %379 = sbr.rel target = $region107
            $region106: #{custom-call.117} parent=102 // pred_region
              // Predicated region
              $region119: #{custom-call.117} parent=106 // pred_check
                _
              $region120: #{custom-call.117} parent=106 // pred_check_branch
                %394 = sbr.rel (0) target = $region122
              $region121: #{custom-call.117} parent=106 // pred_region
                loop: start=0, step=1, limit=1
                $region123: #{custom-call.117} parent=121 // loop_pre_header
                  _
                $region124: #{custom-call.117} parent=121 // loop_header
                  %s397 = sphi 0, %s401
                  %p398 = scmp.ge.s32.totalorder %s397, 1
                  %s402 = sphi %s328, %s328
                  %s403 = sphi %s375, %s375
                $region125: #{custom-call.117} parent=121 // loop_header_branch
                  %400 = sbr.rel (%p398) target = $region129
                $region126: #{custom-call.117} parent=121 // loop_body
                  %v404 = vld [vmem:[%s402] sm:$0x3]
                  %405 = vst [vmem:[%s403] sm:$0x3] %v404
                $region127: #{custom-call.117} parent=121 // loop_footer
                  %s401 = sadd.s32 1, %s397
                $region128: #{custom-call.117} parent=121 // loop_footer_branch
                  %396 = sbr.rel target = $region124
                $region129: #{custom-call.117} parent=121 // loop_exit
                  _
              $region122: #{custom-call.117} parent=106 // pred_fallthru
                _
            $region107: #{custom-call.117} parent=102 // pred_fallthru
              _
            // Predicated region
            $region108: #{custom-call.117} parent=102 // pred_check
              _
            $region109: #{custom-call.117} parent=102 // pred_check_branch
              %381 = sbr.rel (0) target = $region111
            $region110: #{custom-call.117} parent=102 // pred_region
              loop: start=0, step=1, limit=1
              $region112: #{custom-call.117} parent=110 // loop_pre_header
                _
              $region113: #{custom-call.117} parent=110 // loop_header
                %s384 = sphi 0, %s388
                %p385 = scmp.ge.s32.totalorder %s384, 1
                %s389 = sphi %s328, %s328
                %s390 = sphi %s375, %s375
              $region114: #{custom-call.117} parent=110 // loop_header_branch
                %387 = sbr.rel (%p385) target = $region118
              $region115: #{custom-call.117} parent=110 // loop_body
                %v391 = vld [vmem:[%s389] sm:$0x3]
                %392 = vst [vmem:[%s390] sm:$0x3] %v391
              $region116: #{custom-call.117} parent=110 // loop_footer
                %s388 = sadd.s32 1, %s384
              $region117: #{custom-call.117} parent=110 // loop_footer_branch
                %383 = sbr.rel target = $region113
              $region118: #{custom-call.117} parent=110 // loop_exit
                _
            $region111: #{custom-call.117} parent=102 // pred_fallthru
              _
          $region103: #{custom-call.117} parent=98 // pred_fallthru
            _
          %406 = vnop
        $region99: #{custom-call.117} parent=53 // pred_fallthru
          _
      $region54: #{custom-call.117} parent=5 // pred_fallthru
        _
      %p407 = scmp.le.s32.totalorder 2, %s5
      // Predicated region
      $region130: #{custom-call.117} parent=5 // pred_check
        %p408 = pneg %p407
      $region131: #{custom-call.117} parent=5 // pred_check_branch
        %410 = sbr.rel (%p408) target = $region133
      $region132: #{custom-call.117} parent=5 // pred_region
        %s411 = ssub.s32 %s5, 2
        %s412 = sand.u32 %s11, 1
        %s413 = sand.u32 %s11, 1
        %s414 = smul.addr %s413, 8
        %s415 = scalar_lea.vmem [#allocation1], %s414
        // Predicated region
        $region134: #{custom-call.117} parent=132 // pred_check
          %p416 = pneg %p65
        $region135: #{custom-call.117} parent=132 // pred_check_branch
          %418 = sbr.rel (%p416) target = $region137
        $region136: #{custom-call.117} parent=132 // pred_region
          %s419 = sand.u32 %s50, 1
          %s420 = sand.u32 %s50, 1
          %s421 = smul.addr %s420, 2
          %s422 = scalar_lea.vmem [#allocation3], %s421
        $region137: #{custom-call.117} parent=132 // pred_fallthru
          _
      $region133: #{custom-call.117} parent=5 // pred_fallthru
        _
    $region6: #{custom-call.117} parent=1 // loop_footer
      %s9 = sadd.s32 1, %s5
    $region7: #{custom-call.117} parent=1 // loop_footer_branch
      %4 = sbr.rel target = $region3
    $region8: #{custom-call.117} parent=1 // loop_exit
      _

// kernel: custom-call.118
$region0: #{custom-call.118}
  %s0 = inlined_call_operand.vmem [shape: f32[2,3,3], index: 0, kind: input, shape index: {}]
  %s1 = inlined_call_operand.vmem [shape: f32[2,3,3], index: 1, kind: output, shape index: {}]
  $region1: #{custom-call.118} parent=0
    #allocation0 [shape = 'u8[4096]{0}', space=vmem, size = 0x1000, scoped, tag = 'operand span for operand 0']
    #allocation1 [shape = 'u8[4096]{0}', space=vmem, size = 0x1000, scoped, tag = 'packed  for operand 0']
    #allocation2 [shape = 'u8[4096]{0}', space=vmem, size = 0x1000, scoped, tag = 'operand span for operand 1']
    #allocation3 [shape = 'u8[4096]{0}', space=vmem, size = 0x1000, scoped, tag = 'packed  for operand 1']
    loop: start=0, step=1, limit=4
    $region2: #{custom-call.118} parent=1 // loop_pre_header
      _
    $region3: #{custom-call.118} parent=1 // loop_header
      %s3 = sphi 0, %s7
      %p4 = scmp.ge.s32.totalorder %s3, 4
    $region4: #{custom-call.118} parent=1 // loop_header_branch
      %6 = sbr.rel (%p4) target = $region8
    $region5: #{custom-call.118} parent=1 // loop_body
      %s8 = ssub.s32 %s3, 1
      %s9 = ssub.s32 %s3, 2
      %s10 = sadd.s32 %s3, 1
      %p11 = scmp.le.s32.totalorder 1, %s3
      %p12 = scmp.lt.s32.totalorder %s3, 3
      %p13 = pnand %p11, %p12
      %p14 = pneg %p13
      // Predicated region
      $region9: #{custom-call.118} parent=5 // pred_check
        _
      $region10: #{custom-call.118} parent=5 // pred_check_branch
        %16 = sbr.rel (%p13) target = $region12
      $region11: #{custom-call.118} parent=5 // pred_region
        %s17 = ssub.s32 %s3, 1
      $region12: #{custom-call.118} parent=5 // pred_fallthru
        _
      %p18 = scmp.lt.s32.totalorder %s3, 2
      // Predicated region
      $region13: #{custom-call.118} parent=5 // pred_check
        %p19 = pneg %p18
      $region14: #{custom-call.118} parent=5 // pred_check_branch
        %21 = sbr.rel (%p19) target = $region16
      $region15: #{custom-call.118} parent=5 // pred_region
        %s22 = sand.u32 %s3, 1
        %s23 = sand.u32 %s3, 1
        %s24 = smul.addr %s23, 4
        %s25 = scalar_lea.vmem [#allocation1], %s24
        %s26 = smul.addr %s3, 4
        %s27 = scalar_lea.vmem %s0, %s26
        // Predicated region
        $region17: #{custom-call.118} parent=15 // pred_check
          _
        $region18: #{custom-call.118} parent=15 // pred_check_branch
          %29 = sbr.rel (0) target = $region20
        $region19: #{custom-call.118} parent=15 // pred_region
          // Predicated region
          $region21: #{custom-call.118} parent=19 // pred_check
            _
          $region22: #{custom-call.118} parent=19 // pred_check_branch
            %31 = sbr.rel target = $region24
          $region23: #{custom-call.118} parent=19 // pred_region
            // Predicated region
            $region36: #{custom-call.118} parent=23 // pred_check
              _
            $region37: #{custom-call.118} parent=23 // pred_check_branch
              %46 = sbr.rel (0) target = $region39
            $region38: #{custom-call.118} parent=23 // pred_region
              loop: start=0, step=1, limit=1
              $region40: #{custom-call.118} parent=38 // loop_pre_header
                _
              $region41: #{custom-call.118} parent=38 // loop_header
                %s49 = sphi 0, %s53
                %p50 = scmp.ge.s32.totalorder %s49, 1
                %s54 = sphi %s27, %s27
                %s55 = sphi %s25, %s25
              $region42: #{custom-call.118} parent=38 // loop_header_branch
                %52 = sbr.rel (%p50) target = $region46
              $region43: #{custom-call.118} parent=38 // loop_body
                %v56 = vld [vmem:[%s54] sm:$0xf]
                %57 = vst [vmem:[%s55] sm:$0xf] %v56
              $region44: #{custom-call.118} parent=38 // loop_footer
                %s53 = sadd.s32 1, %s49
              $region45: #{custom-call.118} parent=38 // loop_footer_branch
                %48 = sbr.rel target = $region41
              $region46: #{custom-call.118} parent=38 // loop_exit
                _
            $region39: #{custom-call.118} parent=23 // pred_fallthru
              _
          $region24: #{custom-call.118} parent=19 // pred_fallthru
            _
          // Predicated region
          $region25: #{custom-call.118} parent=19 // pred_check
            _
          $region26: #{custom-call.118} parent=19 // pred_check_branch
            %33 = sbr.rel (0) target = $region28
          $region27: #{custom-call.118} parent=19 // pred_region
            loop: start=0, step=1, limit=1
            $region29: #{custom-call.118} parent=27 // loop_pre_header
              _
            $region30: #{custom-call.118} parent=27 // loop_header
              %s36 = sphi 0, %s40
              %p37 = scmp.ge.s32.totalorder %s36, 1
              %s41 = sphi %s27, %s27
              %s42 = sphi %s25, %s25
            $region31: #{custom-call.118} parent=27 // loop_header_branch
              %39 = sbr.rel (%p37) target = $region35
            $region32: #{custom-call.118} parent=27 // loop_body
              %v43 = vld [vmem:[%s41] sm:$0xf]
              %44 = vst [vmem:[%s42] sm:$0xf] %v43
            $region33: #{custom-call.118} parent=27 // loop_footer
              %s40 = sadd.s32 1, %s36
            $region34: #{custom-call.118} parent=27 // loop_footer_branch
              %35 = sbr.rel target = $region30
            $region35: #{custom-call.118} parent=27 // loop_exit
              _
          $region28: #{custom-call.118} parent=19 // pred_fallthru
            _
        $region20: #{custom-call.118} parent=15 // pred_fallthru
          _
        %58 = vnop
      $region16: #{custom-call.118} parent=5 // pred_fallthru
        _
      %p59 = scmp.le.s32.totalorder 1, %s3
      %p60 = scmp.lt.s32.totalorder %s3, 3
      %p61 = pnand %p59, %p60
      %p62 = pneg %p61
      // Predicated region
      $region47: #{custom-call.118} parent=5 // pred_check
        _
      $region48: #{custom-call.118} parent=5 // pred_check_branch
        %64 = sbr.rel (%p61) target = $region50
      $region49: #{custom-call.118} parent=5 // pred_region
        %s65 = ssub.s32 %s3, 1
        %s66 = sand.u32 %s8, 1
        %s67 = sand.u32 %s8, 1
        %s68 = smul.addr %s67, 4
        %s69 = scalar_lea.vmem [#allocation1], %s68
        %s70 = sand.u32 %s8, 1
        %s71 = sand.u32 %s8, 1
        %s72 = smul.addr %s71, 4
        %s73 = scalar_lea.vmem [#allocation1], %s72
        %s74 = sand.u32 %s8, 1
        %s75 = sand.u32 %s8, 1
        %s76 = smul.addr %s75, 4
        %s77 = scalar_lea.vmem [#allocation3], %s76
        %s79 = sshllo.u32 0, 4
        %v80 = vld [vmem:[%s73] sm:%s79]
        %81 = vst [vmem:[#allocation0] sm:%s79] %v80
        %v82 = vlaneseq
        %v83 = vand.u32 %v82, 127
        %v84 = vlaneseq
        %v85 = vshrl.u32 %v84, 7
        %vm87 = vcmp.eq.s32.totalorder %v83, %v85
        %v88 = vld [vmem:[#allocation0] sm:$0xff]
        %v89 = vlaneseq
        %v90 = vand.u32 %v89, 127
        %vm91 = vcmp.eq.s32.totalorder %v90, 0
        %v92 = vsel %vm91, %v88, 1.0
        %v93 = vsel %vm87, %v92, 0.0
        %s94 = scalar_lea.vmem [#allocation0], 1
        %v95 = vld [vmem:[%s94] ss:$0 sm:$0xff]
        %vm96 = vcmask 23552
        %v97 = vsel %vm96, %v95, 0.0
        %v98 = vlaneseq
        %v99 = vand.u32 %v98, 127
        %vm100 = vcmp.eq.s32.totalorder %v99, 1
        %v101 = vmul.f32 %v97, %v93
        %102 = vadd.xlane.f32.xlu0 %v101
        %v103 = vpop.xlane.xlu0 %102
        %v104 = vsel %vm100, %v103, %v93
        %s105 = scalar_lea.vmem [#allocation0], 2
        %v106 = vld [vmem:[%s105] ss:$0 sm:$0xff]
        %vm107 = vcmask 23552
        %v108 = vsel %vm107, %v106, 0.0
        %v109 = vlaneseq
        %v110 = vand.u32 %v109, 127
        %vm111 = vcmp.eq.s32.totalorder %v110, 2
        %v112 = vmul.f32 %v108, %v104
        %113 = vadd.xlane.f32.xlu0 %v112
        %v114 = vpop.xlane.xlu0 %113
        %v115 = vsel %vm111, %v114, %v104
        %116 = vst [vmem:[#allocation2] sm:$0xff] %v115
        %s118 = sshllo.u32 0, 4
        %v120 = vld [vmem:[#allocation2] sm:%s118]
        %s121 = sshllo.u32 0, 4
        %122 = vst [vmem:[%s77] sm:%s121] %v120
        %s123 = sand.u32 %s8, 1
        %s124 = sand.u32 %s8, 1
        %s125 = smul.addr %s124, 4
        %s126 = scalar_lea.vmem [#allocation3], %s125
        %s127 = smul.addr %s8, 4
        %s128 = scalar_lea.vmem %s1, %s127
        // Predicated region
        $region51: #{custom-call.118} parent=49 // pred_check
          _
        $region52: #{custom-call.118} parent=49 // pred_check_branch
          %130 = sbr.rel (0) target = $region54
        $region53: #{custom-call.118} parent=49 // pred_region
          // Predicated region
          $region55: #{custom-call.118} parent=53 // pred_check
            _
          $region56: #{custom-call.118} parent=53 // pred_check_branch
            %132 = sbr.rel target = $region58
          $region57: #{custom-call.118} parent=53 // pred_region
            // Predicated region
            $region70: #{custom-call.118} parent=57 // pred_check
              _
            $region71: #{custom-call.118} parent=57 // pred_check_branch
              %147 = sbr.rel (0) target = $region73
            $region72: #{custom-call.118} parent=57 // pred_region
              loop: start=0, step=1, limit=1
              $region74: #{custom-call.118} parent=72 // loop_pre_header
                _
              $region75: #{custom-call.118} parent=72 // loop_header
                %s150 = sphi 0, %s154
                %p151 = scmp.ge.s32.totalorder %s150, 1
                %s155 = sphi %s126, %s126
                %s156 = sphi %s128, %s128
              $region76: #{custom-call.118} parent=72 // loop_header_branch
                %153 = sbr.rel (%p151) target = $region80
              $region77: #{custom-call.118} parent=72 // loop_body
                %v157 = vld [vmem:[%s155] sm:$0xf]
                %158 = vst [vmem:[%s156] sm:$0xf] %v157
              $region78: #{custom-call.118} parent=72 // loop_footer
                %s154 = sadd.s32 1, %s150
              $region79: #{custom-call.118} parent=72 // loop_footer_branch
                %149 = sbr.rel target = $region75
              $region80: #{custom-call.118} parent=72 // loop_exit
                _
            $region73: #{custom-call.118} parent=57 // pred_fallthru
              _
          $region58: #{custom-call.118} parent=53 // pred_fallthru
            _
          // Predicated region
          $region59: #{custom-call.118} parent=53 // pred_check
            _
          $region60: #{custom-call.118} parent=53 // pred_check_branch
            %134 = sbr.rel (0) target = $region62
          $region61: #{custom-call.118} parent=53 // pred_region
            loop: start=0, step=1, limit=1
            $region63: #{custom-call.118} parent=61 // loop_pre_header
              _
            $region64: #{custom-call.118} parent=61 // loop_header
              %s137 = sphi 0, %s141
              %p138 = scmp.ge.s32.totalorder %s137, 1
              %s142 = sphi %s126, %s126
              %s143 = sphi %s128, %s128
            $region65: #{custom-call.118} parent=61 // loop_header_branch
              %140 = sbr.rel (%p138) target = $region69
            $region66: #{custom-call.118} parent=61 // loop_body
              %v144 = vld [vmem:[%s142] sm:$0xf]
              %145 = vst [vmem:[%s143] sm:$0xf] %v144
            $region67: #{custom-call.118} parent=61 // loop_footer
              %s141 = sadd.s32 1, %s137
            $region68: #{custom-call.118} parent=61 // loop_footer_branch
              %136 = sbr.rel target = $region64
            $region69: #{custom-call.118} parent=61 // loop_exit
              _
          $region62: #{custom-call.118} parent=53 // pred_fallthru
            _
        $region54: #{custom-call.118} parent=49 // pred_fallthru
          _
        %159 = vnop
      $region50: #{custom-call.118} parent=5 // pred_fallthru
        _
      %p160 = scmp.le.s32.totalorder 2, %s3
      // Predicated region
      $region81: #{custom-call.118} parent=5 // pred_check
        %p161 = pneg %p160
      $region82: #{custom-call.118} parent=5 // pred_check_branch
        %163 = sbr.rel (%p161) target = $region84
      $region83: #{custom-call.118} parent=5 // pred_region
        %s164 = ssub.s32 %s3, 2
        %s165 = sand.u32 %s9, 1
        %s166 = sand.u32 %s9, 1
        %s167 = smul.addr %s166, 4
        %s168 = scalar_lea.vmem [#allocation3], %s167
      $region84: #{custom-call.118} parent=5 // pred_fallthru
        _
    $region6: #{custom-call.118} parent=1 // loop_footer
      %s7 = sadd.s32 1, %s3
    $region7: #{custom-call.118} parent=1 // loop_footer_branch
      %2 = sbr.rel target = $region3
    $region8: #{custom-call.118} parent=1 // loop_exit
      _

// kernel: custom-call.115
$region0: #{custom-call.115}
  %s0 = inlined_call_operand.vmem [shape: f32[2,3,3], index: 0, kind: input, shape index: {}]
  %s1 = inlined_call_operand.vmem [shape: f32[2,3,3], index: 1, kind: output, shape index: {}]
  $region1: #{custom-call.115} parent=0
    #allocation0 [shape = 'u8[4096]{0}', space=vmem, size = 0x1000, scoped, tag = 'operand span for operand 0']
    #allocation1 [shape = 'u8[4096]{0}', space=vmem, size = 0x1000, scoped, tag = 'packed  for operand 0']
    #allocation2 [shape = 'u8[4096]{0}', space=vmem, size = 0x1000, scoped, tag = 'operand span for operand 1']
    #allocation3 [shape = 'u8[4096]{0}', space=vmem, size = 0x1000, scoped, tag = 'packed  for operand 1']
    loop: start=0, step=1, limit=4
    $region2: #{custom-call.115} parent=1 // loop_pre_header
      _
    $region3: #{custom-call.115} parent=1 // loop_header
      %s3 = sphi 0, %s7
      %p4 = scmp.ge.s32.totalorder %s3, 4
      %s10 = sphi 0, %s29
      %s11 = sphi 0, %s25
      %s12 = sphi 0, %s21
      %s13 = sphi 0, %s10
      %s14 = sphi 0, %s11
      %s15 = sphi 0, %s12
      %s16 = sphi 0, %s13
      %s17 = sphi 0, %s14
      %s18 = sphi 0, %s15
    $region4: #{custom-call.115} parent=1 // loop_header_branch
      %6 = sbr.rel (%p4) target = $region8
    $region5: #{custom-call.115} parent=1 // loop_body
      %s8 = ssub.s32 %s3, 1
      %s9 = ssub.s32 %s3, 2
      %s19 = sadd.s32 1, %s12
      %p20 = scmp.ge.s32.totalorder %s19, 1
      %s21 = scalar_select %p20, 0, %s19
      %s22 = sadd.s32 1, %s11
      %s23 = scalar_select %p20, %s22, %s11
      %p24 = scmp.ge.s32.totalorder %s23, 1
      %s25 = scalar_select %p24, 0, %s23
      %s26 = sadd.s32 1, %s10
      %s27 = scalar_select %p24, %s26, %s10
      %p28 = scmp.ge.s32.totalorder %s27, 2
      %s29 = scalar_select %p28, 0, %s27
      %p30 = scmp.le.s32.totalorder 1, %s3
      %p31 = scmp.lt.s32.totalorder %s3, 3
      %p32 = pnand %p30, %p31
      %p33 = pneg %p32
      // Predicated region
      $region9: #{custom-call.115} parent=5 // pred_check
        _
      $region10: #{custom-call.115} parent=5 // pred_check_branch
        %35 = sbr.rel (%p32) target = $region12
      $region11: #{custom-call.115} parent=5 // pred_region
        %s36 = ssub.s32 %s3, 1
      $region12: #{custom-call.115} parent=5 // pred_fallthru
        _
      %p37 = scmp.lt.s32.totalorder %s3, 2
      // Predicated region
      $region13: #{custom-call.115} parent=5 // pred_check
        %p38 = pneg %p37
      $region14: #{custom-call.115} parent=5 // pred_check_branch
        %40 = sbr.rel (%p38) target = $region16
      $region15: #{custom-call.115} parent=5 // pred_region
        %s41 = sand.u32 %s3, 1
        %s42 = sand.u32 %s3, 1
        %s43 = smul.addr %s42, 4
        %s44 = scalar_lea.vmem [#allocation1], %s43
        %s45 = sadd.s32 %s12, %s11
        %s46 = sadd.s32 %s45, %s10
        %s47 = smul.addr %s46, 4
        %s48 = scalar_lea.vmem %s0, %s47
        // Predicated region
        $region17: #{custom-call.115} parent=15 // pred_check
          _
        $region18: #{custom-call.115} parent=15 // pred_check_branch
          %50 = sbr.rel (0) target = $region20
        $region19: #{custom-call.115} parent=15 // pred_region
          // Predicated region
          $region21: #{custom-call.115} parent=19 // pred_check
            _
          $region22: #{custom-call.115} parent=19 // pred_check_branch
            %52 = sbr.rel target = $region24
          $region23: #{custom-call.115} parent=19 // pred_region
            // Predicated region
            $region36: #{custom-call.115} parent=23 // pred_check
              _
            $region37: #{custom-call.115} parent=23 // pred_check_branch
              %67 = sbr.rel (0) target = $region39
            $region38: #{custom-call.115} parent=23 // pred_region
              loop: start=0, step=1, limit=1
              $region40: #{custom-call.115} parent=38 // loop_pre_header
                _
              $region41: #{custom-call.115} parent=38 // loop_header
                %s70 = sphi 0, %s74
                %p71 = scmp.ge.s32.totalorder %s70, 1
                %s75 = sphi %s48, %s48
                %s76 = sphi %s44, %s44
              $region42: #{custom-call.115} parent=38 // loop_header_branch
                %73 = sbr.rel (%p71) target = $region46
              $region43: #{custom-call.115} parent=38 // loop_body
                %v77 = vld [vmem:[%s75] sm:$0xf]
                %78 = vst [vmem:[%s76] sm:$0xf] %v77
              $region44: #{custom-call.115} parent=38 // loop_footer
                %s74 = sadd.s32 1, %s70
              $region45: #{custom-call.115} parent=38 // loop_footer_branch
                %69 = sbr.rel target = $region41
              $region46: #{custom-call.115} parent=38 // loop_exit
                _
            $region39: #{custom-call.115} parent=23 // pred_fallthru
              _
          $region24: #{custom-call.115} parent=19 // pred_fallthru
            _
          // Predicated region
          $region25: #{custom-call.115} parent=19 // pred_check
            _
          $region26: #{custom-call.115} parent=19 // pred_check_branch
            %54 = sbr.rel (0) target = $region28
          $region27: #{custom-call.115} parent=19 // pred_region
            loop: start=0, step=1, limit=1
            $region29: #{custom-call.115} parent=27 // loop_pre_header
              _
            $region30: #{custom-call.115} parent=27 // loop_header
              %s57 = sphi 0, %s61
              %p58 = scmp.ge.s32.totalorder %s57, 1
              %s62 = sphi %s48, %s48
              %s63 = sphi %s44, %s44
            $region31: #{custom-call.115} parent=27 // loop_header_branch
              %60 = sbr.rel (%p58) target = $region35
            $region32: #{custom-call.115} parent=27 // loop_body
              %v64 = vld [vmem:[%s62] sm:$0xf]
              %65 = vst [vmem:[%s63] sm:$0xf] %v64
            $region33: #{custom-call.115} parent=27 // loop_footer
              %s61 = sadd.s32 1, %s57
            $region34: #{custom-call.115} parent=27 // loop_footer_branch
              %56 = sbr.rel target = $region30
            $region35: #{custom-call.115} parent=27 // loop_exit
              _
          $region28: #{custom-call.115} parent=19 // pred_fallthru
            _
        $region20: #{custom-call.115} parent=15 // pred_fallthru
          _
        %79 = vnop
      $region16: #{custom-call.115} parent=5 // pred_fallthru
        _
      %p80 = scmp.le.s32.totalorder 1, %s3
      %p81 = scmp.lt.s32.totalorder %s3, 3
      %p82 = pnand %p80, %p81
      %p83 = pneg %p82
      // Predicated region
      $region47: #{custom-call.115} parent=5 // pred_check
        _
      $region48: #{custom-call.115} parent=5 // pred_check_branch
        %85 = sbr.rel (%p82) target = $region50
      $region49: #{custom-call.115} parent=5 // pred_region
        %s86 = ssub.s32 %s3, 1
        %s87 = sand.u32 %s8, 1
        %s88 = sand.u32 %s8, 1
        %s89 = smul.addr %s88, 4
        %s90 = scalar_lea.vmem [#allocation1], %s89
        %s91 = sand.u32 %s8, 1
        %s92 = sand.u32 %s8, 1
        %s93 = smul.addr %s92, 4
        %s94 = scalar_lea.vmem [#allocation1], %s93
        %s95 = sand.u32 %s8, 1
        %s96 = sand.u32 %s8, 1
        %s97 = smul.addr %s96, 4
        %s98 = scalar_lea.vmem [#allocation3], %s97
        %s100 = sshllo.u32 0, 4
        %v101 = vld [vmem:[%s94] sm:%s100]
        %102 = vst [vmem:[#allocation0] sm:%s100] %v101
        %103 = vst [vmem:[#allocation2] sm:$0xff] 0.0
        %vm104 = vcmask 7168
        %v105 = vld [vmem:[#allocation2] ss:$0 sm:$0xff]
        %v106 = vld [vmem:[#allocation0] ss:$0 sm:$0xff]
        %v107 = vmul.f32 %v105, %v105
        %108 = vadd.xlane.f32.xlu0 %v107
        %v109 = vpop.xlane.xlu0 %108
        %v110 = vsub.f32 %v106, %v109
        %v111 = vrsqrt.pop %v110
        %v112 = vld [vmem:[#allocation0] sm:$0xff]
        %v113 = vld [vmem:[#allocation2] sm:$0xff]
        %v114 = vmul.f32 %v113, %v105
        %115 = vadd.xlane.f32.xlu0 %v114
        %v116 = vpop.xlane.xlu0 %115
        %v117 = vsub.f32 %v112, %v116
        %v118 = vmul.f32 %v117, %v111
        %v119 = vsel %vm104, %v118, 0.0
        %v120 = vadd.f32 %v113, %v119
        %121 = vst [vmem:[#allocation2] sm:$0xff] %v120
        %vm122 = vcmask 15368
        %s123 = scalar_lea.vmem [#allocation2], 1
        %v124 = vld [vmem:[%s123] ss:$0 sm:$0xff]
        %s125 = scalar_lea.vmem [#allocation0], 1
        %v126 = vld [vmem:[%s125] ss:$0 sm:$0xff]
        %v127 = vmul.f32 %v124, %v124
        %128 = vadd.xlane.f32.xlu0 %v127
        %v129 = vpop.xlane.xlu0 %128
        %v130 = vsub.f32 %v126, %v129
        %v131 = vrsqrt.pop %v130
        %v132 = vld [vmem:[#allocation0] sm:$0xff]
        %v133 = vld [vmem:[#allocation2] sm:$0xff]
        %v134 = vmul.f32 %v133, %v124
        %135 = vadd.xlane.f32.xlu0 %v134
        %v136 = vpop.xlane.xlu0 %135
        %v137 = vsub.f32 %v132, %v136
        %v138 = vmul.f32 %v137, %v131
        %vm139 = vcmask 1047553
        %vm140 = vmand %vm122, %vm139
        %v141 = vsel %vm140, %v138, 0.0
        %v142 = vadd.f32 %v133, %v141
        %143 = vst [vmem:[#allocation2] sm:$0xff] %v142
        %vm144 = vcmask 23568
        %s145 = scalar_lea.vmem [#allocation2], 2
        %v146 = vld [vmem:[%s145] ss:$0 sm:$0xff]
        %s147 = scalar_lea.vmem [#allocation0], 2
        %v148 = vld [vmem:[%s147] ss:$0 sm:$0xff]
        %v149 = vmul.f32 %v146, %v146
        %150 = vadd.xlane.f32.xlu0 %v149
        %v151 = vpop.xlane.xlu0 %150
        %v152 = vsub.f32 %v148, %v151
        %v153 = vrsqrt.pop %v152
        %v154 = vld [vmem:[#allocation0] sm:$0xff]
        %v155 = vld [vmem:[#allocation2] sm:$0xff]
        %v156 = vmul.f32 %v155, %v146
        %157 = vadd.xlane.f32.xlu0 %v156
        %v158 = vpop.xlane.xlu0 %157
        %v159 = vsub.f32 %v154, %v158
        %v160 = vmul.f32 %v159, %v153
        %vm161 = vcmask 1047554
        %vm162 = vmand %vm144, %vm161
        %v163 = vsel %vm162, %v160, 0.0
        %v164 = vadd.f32 %v155, %v163
        %165 = vst [vmem:[#allocation2] sm:$0xff] %v164
        %s167 = sshllo.u32 0, 4
        %v169 = vld [vmem:[#allocation2] sm:%s167]
        %s170 = sshllo.u32 0, 4
        %171 = vst [vmem:[%s98] sm:%s170] %v169
        %s172 = sand.u32 %s8, 1
        %s173 = sand.u32 %s8, 1
        %s174 = smul.addr %s173, 4
        %s175 = scalar_lea.vmem [#allocation3], %s174
        %s176 = sadd.s32 %s15, %s14
        %s177 = sadd.s32 %s176, %s13
        %s178 = smul.addr %s177, 4
        %s179 = scalar_lea.vmem %s1, %s178
        // Predicated region
        $region51: #{custom-call.115} parent=49 // pred_check
          _
        $region52: #{custom-call.115} parent=49 // pred_check_branch
          %181 = sbr.rel (0) target = $region54
        $region53: #{custom-call.115} parent=49 // pred_region
          // Predicated region
          $region55: #{custom-call.115} parent=53 // pred_check
            _
          $region56: #{custom-call.115} parent=53 // pred_check_branch
            %183 = sbr.rel target = $region58
          $region57: #{custom-call.115} parent=53 // pred_region
            // Predicated region
            $region70: #{custom-call.115} parent=57 // pred_check
              _
            $region71: #{custom-call.115} parent=57 // pred_check_branch
              %198 = sbr.rel (0) target = $region73
            $region72: #{custom-call.115} parent=57 // pred_region
              loop: start=0, step=1, limit=1
              $region74: #{custom-call.115} parent=72 // loop_pre_header
                _
              $region75: #{custom-call.115} parent=72 // loop_header
                %s201 = sphi 0, %s205
                %p202 = scmp.ge.s32.totalorder %s201, 1
                %s206 = sphi %s175, %s175
                %s207 = sphi %s179, %s179
              $region76: #{custom-call.115} parent=72 // loop_header_branch
                %204 = sbr.rel (%p202) target = $region80
              $region77: #{custom-call.115} parent=72 // loop_body
                %v208 = vld [vmem:[%s206] sm:$0xf]
                %209 = vst [vmem:[%s207] sm:$0xf] %v208
              $region78: #{custom-call.115} parent=72 // loop_footer
                %s205 = sadd.s32 1, %s201
              $region79: #{custom-call.115} parent=72 // loop_footer_branch
                %200 = sbr.rel target = $region75
              $region80: #{custom-call.115} parent=72 // loop_exit
                _
            $region73: #{custom-call.115} parent=57 // pred_fallthru
              _
          $region58: #{custom-call.115} parent=53 // pred_fallthru
            _
          // Predicated region
          $region59: #{custom-call.115} parent=53 // pred_check
            _
          $region60: #{custom-call.115} parent=53 // pred_check_branch
            %185 = sbr.rel (0) target = $region62
          $region61: #{custom-call.115} parent=53 // pred_region
            loop: start=0, step=1, limit=1
            $region63: #{custom-call.115} parent=61 // loop_pre_header
              _
            $region64: #{custom-call.115} parent=61 // loop_header
              %s188 = sphi 0, %s192
              %p189 = scmp.ge.s32.totalorder %s188, 1
              %s193 = sphi %s175, %s175
              %s194 = sphi %s179, %s179
            $region65: #{custom-call.115} parent=61 // loop_header_branch
              %191 = sbr.rel (%p189) target = $region69
            $region66: #{custom-call.115} parent=61 // loop_body
              %v195 = vld [vmem:[%s193] sm:$0xf]
              %196 = vst [vmem:[%s194] sm:$0xf] %v195
            $region67: #{custom-call.115} parent=61 // loop_footer
              %s192 = sadd.s32 1, %s188
            $region68: #{custom-call.115} parent=61 // loop_footer_branch
              %187 = sbr.rel target = $region64
            $region69: #{custom-call.115} parent=61 // loop_exit
              _
          $region62: #{custom-call.115} parent=53 // pred_fallthru
            _
        $region54: #{custom-call.115} parent=49 // pred_fallthru
          _
        %210 = vnop
      $region50: #{custom-call.115} parent=5 // pred_fallthru
        _
      %p211 = scmp.le.s32.totalorder 2, %s3
      // Predicated region
      $region81: #{custom-call.115} parent=5 // pred_check
        %p212 = pneg %p211
      $region82: #{custom-call.115} parent=5 // pred_check_branch
        %214 = sbr.rel (%p212) target = $region84
      $region83: #{custom-call.115} parent=5 // pred_region
        %s215 = ssub.s32 %s3, 2
        %s216 = sand.u32 %s9, 1
        %s217 = sand.u32 %s9, 1
        %s218 = smul.addr %s217, 4
        %s219 = scalar_lea.vmem [#allocation3], %s218
      $region84: #{custom-call.115} parent=5 // pred_fallthru
        _
    $region6: #{custom-call.115} parent=1 // loop_footer
      %s7 = sadd.s32 1, %s3
    $region7: #{custom-call.115} parent=1 // loop_footer_branch
      %2 = sbr.rel target = $region3
    $region8: #{custom-call.115} parent=1 // loop_exit
      _

// kernel: custom-call.116
$region0: #{custom-call.116}
  %s0 = inlined_call_operand.vmem [shape: f32[2,1,3,3], index: 0, kind: input, shape index: {}]
  %s1 = inlined_call_operand.vmem [shape: f32[2,1,3,3], index: 1, kind: output, shape index: {}]
  $region1: #{custom-call.116} parent=0
    #allocation0 [shape = 'u8[4096]{0}', space=vmem, size = 0x1000, scoped, tag = 'operand span for operand 0']
    #allocation1 [shape = 'u8[4096]{0}', space=vmem, size = 0x1000, scoped, tag = 'packed  for operand 0']
    #allocation2 [shape = 'u8[4096]{0}', space=vmem, size = 0x1000, scoped, tag = 'operand span for operand 1']
    #allocation3 [shape = 'u8[4096]{0}', space=vmem, size = 0x1000, scoped, tag = 'packed  for operand 1']
    loop: start=0, step=1, limit=4
    $region2: #{custom-call.116} parent=1 // loop_pre_header
      _
    $region3: #{custom-call.116} parent=1 // loop_header
      %s3 = sphi 0, %s7
      %p4 = scmp.ge.s32.totalorder %s3, 4
      %s10 = sphi 0, %s36
      %s11 = sphi 0, %s32
      %s12 = sphi 0, %s28
      %s13 = sphi 0, %s24
      %s14 = sphi 0, %s10
      %s15 = sphi 0, %s11
      %s16 = sphi 0, %s12
      %s17 = sphi 0, %s13
      %s18 = sphi 0, %s14
      %s19 = sphi 0, %s15
      %s20 = sphi 0, %s16
      %s21 = sphi 0, %s17
    $region4: #{custom-call.116} parent=1 // loop_header_branch
      %6 = sbr.rel (%p4) target = $region8
    $region5: #{custom-call.116} parent=1 // loop_body
      %s8 = ssub.s32 %s3, 1
      %s9 = ssub.s32 %s3, 2
      %s22 = sadd.s32 1, %s13
      %p23 = scmp.ge.s32.totalorder %s22, 1
      %s24 = scalar_select %p23, 0, %s22
      %s25 = sadd.s32 1, %s12
      %s26 = scalar_select %p23, %s25, %s12
      %p27 = scmp.ge.s32.totalorder %s26, 1
      %s28 = scalar_select %p27, 0, %s26
      %s29 = sadd.s32 1, %s11
      %s30 = scalar_select %p27, %s29, %s11
      %p31 = scmp.ge.s32.totalorder %s30, 1
      %s32 = scalar_select %p31, 0, %s30
      %s33 = sadd.s32 1, %s10
      %s34 = scalar_select %p31, %s33, %s10
      %p35 = scmp.ge.s32.totalorder %s34, 2
      %s36 = scalar_select %p35, 0, %s34
      %p37 = scmp.le.s32.totalorder 1, %s3
      %p38 = scmp.lt.s32.totalorder %s3, 3
      %p39 = pnand %p37, %p38
      %p40 = pneg %p39
      // Predicated region
      $region9: #{custom-call.116} parent=5 // pred_check
        _
      $region10: #{custom-call.116} parent=5 // pred_check_branch
        %42 = sbr.rel (%p39) target = $region12
      $region11: #{custom-call.116} parent=5 // pred_region
        %s43 = ssub.s32 %s3, 1
      $region12: #{custom-call.116} parent=5 // pred_fallthru
        _
      %p44 = scmp.lt.s32.totalorder %s3, 2
      // Predicated region
      $region13: #{custom-call.116} parent=5 // pred_check
        %p45 = pneg %p44
      $region14: #{custom-call.116} parent=5 // pred_check_branch
        %47 = sbr.rel (%p45) target = $region16
      $region15: #{custom-call.116} parent=5 // pred_region
        %s48 = sand.u32 %s3, 1
        %s49 = sand.u32 %s3, 1
        %s50 = smul.addr %s49, 4
        %s51 = scalar_lea.vmem [#allocation1], %s50
        %s52 = sadd.s32 %s13, %s12
        %s53 = sadd.s32 %s52, %s11
        %s54 = sadd.s32 %s53, %s10
        %s55 = smul.addr %s54, 4
        %s56 = scalar_lea.vmem %s0, %s55
        // Predicated region
        $region17: #{custom-call.116} parent=15 // pred_check
          _
        $region18: #{custom-call.116} parent=15 // pred_check_branch
          %58 = sbr.rel (0) target = $region20
        $region19: #{custom-call.116} parent=15 // pred_region
          // Predicated region
          $region21: #{custom-call.116} parent=19 // pred_check
            _
          $region22: #{custom-call.116} parent=19 // pred_check_branch
            %60 = sbr.rel target = $region24
          $region23: #{custom-call.116} parent=19 // pred_region
            // Predicated region
            $region36: #{custom-call.116} parent=23 // pred_check
              _
            $region37: #{custom-call.116} parent=23 // pred_check_branch
              %75 = sbr.rel (0) target = $region39
            $region38: #{custom-call.116} parent=23 // pred_region
              loop: start=0, step=1, limit=1
              $region40: #{custom-call.116} parent=38 // loop_pre_header
                _
              $region41: #{custom-call.116} parent=38 // loop_header
                %s78 = sphi 0, %s82
                %p79 = scmp.ge.s32.totalorder %s78, 1
                %s83 = sphi %s56, %s56
                %s84 = sphi %s51, %s51
              $region42: #{custom-call.116} parent=38 // loop_header_branch
                %81 = sbr.rel (%p79) target = $region46
              $region43: #{custom-call.116} parent=38 // loop_body
                %v85 = vld [vmem:[%s83] sm:$0xf]
                %86 = vst [vmem:[%s84] sm:$0xf] %v85
              $region44: #{custom-call.116} parent=38 // loop_footer
                %s82 = sadd.s32 1, %s78
              $region45: #{custom-call.116} parent=38 // loop_footer_branch
                %77 = sbr.rel target = $region41
              $region46: #{custom-call.116} parent=38 // loop_exit
                _
            $region39: #{custom-call.116} parent=23 // pred_fallthru
              _
          $region24: #{custom-call.116} parent=19 // pred_fallthru
            _
          // Predicated region
          $region25: #{custom-call.116} parent=19 // pred_check
            _
          $region26: #{custom-call.116} parent=19 // pred_check_branch
            %62 = sbr.rel (0) target = $region28
          $region27: #{custom-call.116} parent=19 // pred_region
            loop: start=0, step=1, limit=1
            $region29: #{custom-call.116} parent=27 // loop_pre_header
              _
            $region30: #{custom-call.116} parent=27 // loop_header
              %s65 = sphi 0, %s69
              %p66 = scmp.ge.s32.totalorder %s65, 1
              %s70 = sphi %s56, %s56
              %s71 = sphi %s51, %s51
            $region31: #{custom-call.116} parent=27 // loop_header_branch
              %68 = sbr.rel (%p66) target = $region35
            $region32: #{custom-call.116} parent=27 // loop_body
              %v72 = vld [vmem:[%s70] sm:$0xf]
              %73 = vst [vmem:[%s71] sm:$0xf] %v72
            $region33: #{custom-call.116} parent=27 // loop_footer
              %s69 = sadd.s32 1, %s65
            $region34: #{custom-call.116} parent=27 // loop_footer_branch
              %64 = sbr.rel target = $region30
            $region35: #{custom-call.116} parent=27 // loop_exit
              _
          $region28: #{custom-call.116} parent=19 // pred_fallthru
            _
        $region20: #{custom-call.116} parent=15 // pred_fallthru
          _
        %87 = vnop
      $region16: #{custom-call.116} parent=5 // pred_fallthru
        _
      %p88 = scmp.le.s32.totalorder 1, %s3
      %p89 = scmp.lt.s32.totalorder %s3, 3
      %p90 = pnand %p88, %p89
      %p91 = pneg %p90
      // Predicated region
      $region47: #{custom-call.116} parent=5 // pred_check
        _
      $region48: #{custom-call.116} parent=5 // pred_check_branch
        %93 = sbr.rel (%p90) target = $region50
      $region49: #{custom-call.116} parent=5 // pred_region
        #allocation4 [shape = 'f32[3,3]{1,0}', space=vmem, size = 0x1000, scoped, tag = 'rescaled input a']
        %s94 = ssub.s32 %s3, 1
        %s95 = sand.u32 %s8, 1
        %s96 = sand.u32 %s8, 1
        %s97 = smul.addr %s96, 4
        %s98 = scalar_lea.vmem [#allocation1], %s97
        %s99 = sand.u32 %s8, 1
        %s100 = sand.u32 %s8, 1
        %s101 = smul.addr %s100, 4
        %s102 = scalar_lea.vmem [#allocation1], %s101
        %s103 = sand.u32 %s8, 1
        %s104 = sand.u32 %s8, 1
        %s105 = smul.addr %s104, 4
        %s106 = scalar_lea.vmem [#allocation3], %s105
        %s108 = sshllo.u32 0, 4
        %v109 = vld [vmem:[%s102] sm:%s108]
        %110 = vst [vmem:[#allocation0] sm:%s108] %v109
        %v111 = vlaneseq
        %v112 = vand.u32 %v111, 127
        %vm113 = vcmp.lt.s32.totalorder %v112, 3
        %v114 = vlaneseq
        %v115 = vshrl.u32 %v114, 7
        %vm117 = vcmp.eq.s32.totalorder %v115, %v112
        %v118 = vld [vmem:[#allocation0] sm:$0xff]
        %v119 = vsel %vm117, %v118, 0.0
        %120 = vadd.xlane.f32.xlu0 %v119
        %v121 = vpop.xlane.xlu0 %120
        %vm122 = vcmp.ge.s32.totalorder %v115, %v112
        %vm123 = vmand %vm122, %vm113
        %v124 = vsel %vm123, %v118, 0.0
        %v125 = vrcp.pop %v121
        %v126 = vmul.f32 %v124, %v125
        %127 = vst [vmem:[#allocation4] sm:$0xff] %v126
        %v128 = vlaneseq
        %v129 = vand.u32 %v128, 127
        %v130 = vlaneseq
        %v131 = vshrl.u32 %v130, 7
        %vm133 = vcmp.eq.s32.totalorder %v129, %v131
        %v134 = vlaneseq
        %v135 = vand.u32 %v134, 127
        %vm136 = vcmp.eq.s32.totalorder %v135, 0
        %v137 = vsel %vm136, 1.0, -1.0
        %v138 = vsel %vm133, %v137, 0.0
        %s139 = scalar_lea.vmem [#allocation4], 1
        %v140 = vld [vmem:[%s139] ss:$0 sm:$0xff]
        %v141 = vxor.u32 %v140, 2147483648
        %v142 = vlaneseq
        %v143 = vand.u32 %v142, 127
        %vm144 = vcmp.eq.s32.totalorder %v143, 1
        %v145 = vmul.f32 %v141, %v138
        %146 = vadd.xlane.f32.xlu0 %v145
        %v147 = vpop.xlane.xlu0 %146
        %v148 = vsel %vm144, %v147, %v138
        %s149 = scalar_lea.vmem [#allocation4], 2
        %v150 = vld [vmem:[%s149] ss:$0 sm:$0xff]
        %v151 = vxor.u32 %v150, 2147483648
        %v152 = vlaneseq
        %v153 = vand.u32 %v152, 127
        %vm154 = vcmp.eq.s32.totalorder %v153, 2
        %v155 = vmul.f32 %v151, %v148
        %156 = vadd.xlane.f32.xlu0 %v155
        %v157 = vpop.xlane.xlu0 %156
        %v158 = vsel %vm154, %v157, %v148
        %v159 = vrcp.pop %v121
        %v160 = vmul.f32 %v158, %v159
        %vm161 = vweird.f32 %v121
        %v162 = vsel %vm161, %v158, %v160
        %163 = vst [vmem:[#allocation2] sm:$0xff] %v162
        %s165 = sshllo.u32 0, 4
        %v167 = vld [vmem:[#allocation2] sm:%s165]
        %s168 = sshllo.u32 0, 4
        %169 = vst [vmem:[%s106] sm:%s168] %v167
        %s170 = sand.u32 %s8, 1
        %s171 = sand.u32 %s8, 1
        %s172 = smul.addr %s171, 4
        %s173 = scalar_lea.vmem [#allocation3], %s172
        %s174 = sadd.s32 %s17, %s16
        %s175 = sadd.s32 %s174, %s15
        %s176 = sadd.s32 %s175, %s14
        %s177 = smul.addr %s176, 4
        %s178 = scalar_lea.vmem %s1, %s177
        // Predicated region
        $region51: #{custom-call.116} parent=49 // pred_check
          _
        $region52: #{custom-call.116} parent=49 // pred_check_branch
          %180 = sbr.rel (0) target = $region54
        $region53: #{custom-call.116} parent=49 // pred_region
          // Predicated region
          $region55: #{custom-call.116} parent=53 // pred_check
            _
          $region56: #{custom-call.116} parent=53 // pred_check_branch
            %182 = sbr.rel target = $region58
          $region57: #{custom-call.116} parent=53 // pred_region
            // Predicated region
            $region70: #{custom-call.116} parent=57 // pred_check
              _
            $region71: #{custom-call.116} parent=57 // pred_check_branch
              %197 = sbr.rel (0) target = $region73
            $region72: #{custom-call.116} parent=57 // pred_region
              loop: start=0, step=1, limit=1
              $region74: #{custom-call.116} parent=72 // loop_pre_header
                _
              $region75: #{custom-call.116} parent=72 // loop_header
                %s200 = sphi 0, %s204
                %p201 = scmp.ge.s32.totalorder %s200, 1
                %s205 = sphi %s173, %s173
                %s206 = sphi %s178, %s178
              $region76: #{custom-call.116} parent=72 // loop_header_branch
                %203 = sbr.rel (%p201) target = $region80
              $region77: #{custom-call.116} parent=72 // loop_body
                %v207 = vld [vmem:[%s205] sm:$0xf]
                %208 = vst [vmem:[%s206] sm:$0xf] %v207
              $region78: #{custom-call.116} parent=72 // loop_footer
                %s204 = sadd.s32 1, %s200
              $region79: #{custom-call.116} parent=72 // loop_footer_branch
                %199 = sbr.rel target = $region75
              $region80: #{custom-call.116} parent=72 // loop_exit
                _
            $region73: #{custom-call.116} parent=57 // pred_fallthru
              _
          $region58: #{custom-call.116} parent=53 // pred_fallthru
            _
          // Predicated region
          $region59: #{custom-call.116} parent=53 // pred_check
            _
          $region60: #{custom-call.116} parent=53 // pred_check_branch
            %184 = sbr.rel (0) target = $region62
          $region61: #{custom-call.116} parent=53 // pred_region
            loop: start=0, step=1, limit=1
            $region63: #{custom-call.116} parent=61 // loop_pre_header
              _
            $region64: #{custom-call.116} parent=61 // loop_header
              %s187 = sphi 0, %s191
              %p188 = scmp.ge.s32.totalorder %s187, 1
              %s192 = sphi %s173, %s173
              %s193 = sphi %s178, %s178
            $region65: #{custom-call.116} parent=61 // loop_header_branch
              %190 = sbr.rel (%p188) target = $region69
            $region66: #{custom-call.116} parent=61 // loop_body
              %v194 = vld [vmem:[%s192] sm:$0xf]
              %195 = vst [vmem:[%s193] sm:$0xf] %v194
            $region67: #{custom-call.116} parent=61 // loop_footer
              %s191 = sadd.s32 1, %s187
            $region68: #{custom-call.116} parent=61 // loop_footer_branch
              %186 = sbr.rel target = $region64
            $region69: #{custom-call.116} parent=61 // loop_exit
              _
          $region62: #{custom-call.116} parent=53 // pred_fallthru
            _
        $region54: #{custom-call.116} parent=49 // pred_fallthru
          _
        %209 = vnop
      $region50: #{custom-call.116} parent=5 // pred_fallthru
        _
      %p210 = scmp.le.s32.totalorder 2, %s3
      // Predicated region
      $region81: #{custom-call.116} parent=5 // pred_check
        %p211 = pneg %p210
      $region82: #{custom-call.116} parent=5 // pred_check_branch
        %213 = sbr.rel (%p211) target = $region84
      $region83: #{custom-call.116} parent=5 // pred_region
        %s214 = ssub.s32 %s3, 2
        %s215 = sand.u32 %s9, 1
        %s216 = sand.u32 %s9, 1
        %s217 = smul.addr %s216, 4
        %s218 = scalar_lea.vmem [#allocation3], %s217
      $region84: #{custom-call.116} parent=5 // pred_fallthru
        _
    $region6: #{custom-call.116} parent=1 // loop_footer
      %s7 = sadd.s32 1, %s3
    $region7: #{custom-call.116} parent=1 // loop_footer_branch
      %2 = sbr.rel target = $region3
    $region8: #{custom-call.116} parent=1 // loop_exit
      _

// kernel: custom-call.38
$region0: #{custom-call.38}
  %s0 = inlined_call_operand.vmem [shape: f32[2,2,2], index: 0, kind: input, shape index: {}]
  %s1 = inlined_call_operand.vmem [shape: f32[2,2,2], index: 1, kind: input, shape index: {}]
  %s2 = inlined_call_operand.vmem [shape: f32[2,2,2], index: 2, kind: input, shape index: {}]
  %s3 = inlined_call_operand.vmem [shape: f32[2,2,2], index: 3, kind: input, shape index: {}]
  %s4 = inlined_call_operand.vmem [shape: f32[2,2], index: 4, kind: output, shape index: {0}]
  %s5 = inlined_call_operand.vmem [shape: f32[2,2], index: 5, kind: output, shape index: {1}]
  %s6 = inlined_call_operand.vmem [shape: f32[2,2,2], index: 6, kind: output, shape index: {2}]
  %s7 = inlined_call_operand.vmem [shape: f32[2,2,2], index: 7, kind: output, shape index: {3}]
  %s8 = inlined_call_operand.vmem [shape: f32[2,2,2], index: 8, kind: output, shape index: {4}]
  %s9 = inlined_call_operand.vmem [shape: f32[2,2,2], index: 9, kind: output, shape index: {5}]
  %10 = xla_tuple %s4, %s5, %s6, %s7, %s8, %s9
  $region1: #{custom-call.38} parent=0
    #allocation0 [shape = 'u8[4096]{0}', space=vmem, size = 0x1000, scoped, tag = 'operand span for operand 0']
    #allocation1 [shape = 'u8[2048]{0}', space=vmem, size = 0x800, scoped, tag = 'packed  for operand 0']
    #allocation2 [shape = 'u8[4096]{0}', space=vmem, size = 0x1000, scoped, tag = 'operand span for operand 1']
    #allocation3 [shape = 'u8[2048]{0}', space=vmem, size = 0x800, scoped, tag = 'packed  for operand 1']
    #allocation4 [shape = 'u8[4096]{0}', space=vmem, size = 0x1000, scoped, tag = 'operand span for operand 2']
    #allocation5 [shape = 'u8[2048]{0}', space=vmem, size = 0x800, scoped, tag = 'packed  for operand 2']
    #allocation6 [shape = 'u8[4096]{0}', space=vmem, size = 0x1000, scoped, tag = 'operand span for operand 3']
    #allocation7 [shape = 'u8[2048]{0}', space=vmem, size = 0x800, scoped, tag = 'packed  for operand 3']
    #allocation8 [shape = 'u8[4096]{0}', space=vmem, size = 0x1000, scoped, tag = 'operand span for operand 4']
    #allocation9 [shape = 'u8[2048]{0}', space=vmem, size = 0x800, scoped, tag = 'packed  for operand 4']
    #allocation10 [shape = 'u8[4096]{0}', space=vmem, size = 0x1000, scoped, tag = 'operand span for operand 5']
    #allocation11 [shape = 'u8[2048]{0}', space=vmem, size = 0x800, scoped, tag = 'packed  for operand 5']
    #allocation12 [shape = 'u8[4096]{0}', space=vmem, size = 0x1000, scoped, tag = 'operand span for operand 6']
    #allocation13 [shape = 'u8[2048]{0}', space=vmem, size = 0x800, scoped, tag = 'packed  for operand 6']
    #allocation14 [shape = 'u8[4096]{0}', space=vmem, size = 0x1000, scoped, tag = 'operand span for operand 7']
    #allocation15 [shape = 'u8[2048]{0}', space=vmem, size = 0x800, scoped, tag = 'packed  for operand 7']
    #allocation16 [shape = 'u8[4096]{0}', space=vmem, size = 0x1000, scoped, tag = 'operand span for operand 8']
    #allocation17 [shape = 'u8[2048]{0}', space=vmem, size = 0x800, scoped, tag = 'packed  for operand 8']
    #allocation18 [shape = 'u8[4096]{0}', space=vmem, size = 0x1000, scoped, tag = 'operand span for operand 9']
    #allocation19 [shape = 'u8[2048]{0}', space=vmem, size = 0x800, scoped, tag = 'packed  for operand 9']
    loop: start=0, step=1, limit=4
    $region2: #{custom-call.38} parent=1 // loop_pre_header
      _
    $region3: #{custom-call.38} parent=1 // loop_header
      %s12 = sphi 0, %s16
      %p13 = scmp.ge.s32.totalorder %s12, 4
      %s24 = sphi 0, %s26
      %s27 = sphi 0, %s24
      %s28 = sphi 0, %s27
      %s44 = sphi 0, %s28
      %s52 = sphi 0, %s54
      %s55 = sphi 0, %s52
      %s56 = sphi 0, %s55
      %s72 = sphi 0, %s56
    $region4: #{custom-call.38} parent=1 // loop_header_branch
      %15 = sbr.rel (%p13) target = $region8
    $region5: #{custom-call.38} parent=1 // loop_body
      %s17 = ssub.s32 %s12, 1
      %s18 = ssub.s32 %s12, 2
      %s19 = sadd.s32 %s12, 1
      %s20 = sshrl.u32 %s12, 3
      %s21 = sshrl.u32 %s19, 3
      %s22 = ssub.s32 %s20, %s21
      %p23 = scmp.eq.s32.totalorder %s22, 0
      %s25 = sadd.s32 %s24, 1
      %s26 = scalar_select %p23, %s24, %s25
      %p29 = pneg %p23
      %p30 = scmp.eq.s32.totalorder %s12, 1
      %p31 = por %p29, %p30
      %p32 = scmp.ne.s32.totalorder %s24, %s27
      %p33 = scmp.eq.s32.totalorder %s12, 0
      %p34 = por %p32, %p33
      %p35 = scmp.ne.s32.totalorder %s24, %s27
      %p36 = scmp.eq.s32.totalorder %s17, 1
      %p37 = por %p35, %p36
      %p38 = scmp.ne.s32.totalorder %s27, %s28
      %p39 = scmp.eq.s32.totalorder %s17, 0
      %p40 = por %p38, %p39
      %p41 = scmp.ne.s32.totalorder %s27, %s28
      %p42 = scmp.eq.s32.totalorder %s18, 1
      %p43 = por %p41, %p42
      %p45 = scmp.ne.s32.totalorder %s28, %s44
      %p46 = scmp.eq.s32.totalorder %s18, 0
      %p47 = por %p45, %p46
      %s48 = sshrl.u32 %s12, 3
      %s49 = sshrl.u32 %s19, 3
      %s50 = ssub.s32 %s48, %s49
      %p51 = scmp.eq.s32.totalorder %s50, 0
      %s53 = sadd.s32 %s52, 1
      %s54 = scalar_select %p51, %s52, %s53
      %p57 = pneg %p51
      %p58 = scmp.eq.s32.totalorder %s12, 1
      %p59 = por %p57, %p58
      %p60 = scmp.ne.s32.totalorder %s52, %s55
      %p61 = scmp.eq.s32.totalorder %s12, 0
      %p62 = por %p60, %p61
      %p63 = scmp.ne.s32.totalorder %s52, %s55
      %p64 = scmp.eq.s32.totalorder %s17, 1
      %p65 = por %p63, %p64
      %p66 = scmp.ne.s32.totalorder %s55, %s56
      %p67 = scmp.eq.s32.totalorder %s17, 0
      %p68 = por %p66, %p67
      %p69 = scmp.ne.s32.totalorder %s55, %s56
      %p70 = scmp.eq.s32.totalorder %s18, 1
      %p71 = por %p69, %p70
      %p73 = scmp.ne.s32.totalorder %s56, %s72
      %p74 = scmp.eq.s32.totalorder %s18, 0
      %p75 = por %p73, %p74
      %p76 = scmp.le.s32.totalorder 1, %s12
      %p77 = scmp.lt.s32.totalorder %s12, 3
      %p78 = pnand %p76, %p77
      %p79 = pneg %p78
      // Predicated region
      $region9: #{custom-call.38} parent=5 // pred_check
        _
      $region10: #{custom-call.38} parent=5 // pred_check_branch
        %81 = sbr.rel (%p78) target = $region12
      $region11: #{custom-call.38} parent=5 // pred_region
        %s82 = ssub.s32 %s12, 1
      $region12: #{custom-call.38} parent=5 // pred_fallthru
        _
      %p83 = scmp.lt.s32.totalorder %s12, 2
      // Predicated region
      $region13: #{custom-call.38} parent=5 // pred_check
        %p84 = pneg %p83
      $region14: #{custom-call.38} parent=5 // pred_check_branch
        %86 = sbr.rel (%p84) target = $region16
      $region15: #{custom-call.38} parent=5 // pred_region
        %s87 = sand.u32 %s12, 1
        %s88 = sand.u32 %s12, 1
        %s89 = smul.addr %s88, 2
        %s90 = scalar_lea.vmem [#allocation1], %s89
        %s91 = smul.addr %s12, 2
        %s92 = scalar_lea.vmem %s0, %s91
        // Predicated region
        $region17: #{custom-call.38} parent=15 // pred_check
          _
        $region18: #{custom-call.38} parent=15 // pred_check_branch
          %94 = sbr.rel (0) target = $region20
        $region19: #{custom-call.38} parent=15 // pred_region
          // Predicated region
          $region21: #{custom-call.38} parent=19 // pred_check
            _
          $region22: #{custom-call.38} parent=19 // pred_check_branch
            %96 = sbr.rel target = $region24
          $region23: #{custom-call.38} parent=19 // pred_region
            // Predicated region
            $region36: #{custom-call.38} parent=23 // pred_check
              _
            $region37: #{custom-call.38} parent=23 // pred_check_branch
              %111 = sbr.rel (0) target = $region39
            $region38: #{custom-call.38} parent=23 // pred_region
              loop: start=0, step=1, limit=1
              $region40: #{custom-call.38} parent=38 // loop_pre_header
                _
              $region41: #{custom-call.38} parent=38 // loop_header
                %s114 = sphi 0, %s118
                %p115 = scmp.ge.s32.totalorder %s114, 1
                %s119 = sphi %s92, %s92
                %s120 = sphi %s90, %s90
              $region42: #{custom-call.38} parent=38 // loop_header_branch
                %117 = sbr.rel (%p115) target = $region46
              $region43: #{custom-call.38} parent=38 // loop_body
                %v121 = vld [vmem:[%s119] sm:$0x3]
                %122 = vst [vmem:[%s120] sm:$0x3] %v121
              $region44: #{custom-call.38} parent=38 // loop_footer
                %s118 = sadd.s32 1, %s114
              $region45: #{custom-call.38} parent=38 // loop_footer_branch
                %113 = sbr.rel target = $region41
              $region46: #{custom-call.38} parent=38 // loop_exit
                _
            $region39: #{custom-call.38} parent=23 // pred_fallthru
              _
          $region24: #{custom-call.38} parent=19 // pred_fallthru
            _
          // Predicated region
          $region25: #{custom-call.38} parent=19 // pred_check
            _
          $region26: #{custom-call.38} parent=19 // pred_check_branch
            %98 = sbr.rel (0) target = $region28
          $region27: #{custom-call.38} parent=19 // pred_region
            loop: start=0, step=1, limit=1
            $region29: #{custom-call.38} parent=27 // loop_pre_header
              _
            $region30: #{custom-call.38} parent=27 // loop_header
              %s101 = sphi 0, %s105
              %p102 = scmp.ge.s32.totalorder %s101, 1
              %s106 = sphi %s92, %s92
              %s107 = sphi %s90, %s90
            $region31: #{custom-call.38} parent=27 // loop_header_branch
              %104 = sbr.rel (%p102) target = $region35
            $region32: #{custom-call.38} parent=27 // loop_body
              %v108 = vld [vmem:[%s106] sm:$0x3]
              %109 = vst [vmem:[%s107] sm:$0x3] %v108
            $region33: #{custom-call.38} parent=27 // loop_footer
              %s105 = sadd.s32 1, %s101
            $region34: #{custom-call.38} parent=27 // loop_footer_branch
              %100 = sbr.rel target = $region30
            $region35: #{custom-call.38} parent=27 // loop_exit
              _
          $region28: #{custom-call.38} parent=19 // pred_fallthru
            _
        $region20: #{custom-call.38} parent=15 // pred_fallthru
          _
        %123 = vnop
        %s124 = sand.u32 %s12, 1
        %s125 = sand.u32 %s12, 1
        %s126 = smul.addr %s125, 2
        %s127 = scalar_lea.vmem [#allocation3], %s126
        %s128 = smul.addr %s12, 2
        %s129 = scalar_lea.vmem %s1, %s128
        // Predicated region
        $region47: #{custom-call.38} parent=15 // pred_check
          _
        $region48: #{custom-call.38} parent=15 // pred_check_branch
          %131 = sbr.rel (0) target = $region50
        $region49: #{custom-call.38} parent=15 // pred_region
          // Predicated region
          $region51: #{custom-call.38} parent=49 // pred_check
            _
          $region52: #{custom-call.38} parent=49 // pred_check_branch
            %133 = sbr.rel target = $region54
          $region53: #{custom-call.38} parent=49 // pred_region
            // Predicated region
            $region66: #{custom-call.38} parent=53 // pred_check
              _
            $region67: #{custom-call.38} parent=53 // pred_check_branch
              %148 = sbr.rel (0) target = $region69
            $region68: #{custom-call.38} parent=53 // pred_region
              loop: start=0, step=1, limit=1
              $region70: #{custom-call.38} parent=68 // loop_pre_header
                _
              $region71: #{custom-call.38} parent=68 // loop_header
                %s151 = sphi 0, %s155
                %p152 = scmp.ge.s32.totalorder %s151, 1
                %s156 = sphi %s129, %s129
                %s157 = sphi %s127, %s127
              $region72: #{custom-call.38} parent=68 // loop_header_branch
                %154 = sbr.rel (%p152) target = $region76
              $region73: #{custom-call.38} parent=68 // loop_body
                %v158 = vld [vmem:[%s156] sm:$0x3]
                %159 = vst [vmem:[%s157] sm:$0x3] %v158
              $region74: #{custom-call.38} parent=68 // loop_footer
                %s155 = sadd.s32 1, %s151
              $region75: #{custom-call.38} parent=68 // loop_footer_branch
                %150 = sbr.rel target = $region71
              $region76: #{custom-call.38} parent=68 // loop_exit
                _
            $region69: #{custom-call.38} parent=53 // pred_fallthru
              _
          $region54: #{custom-call.38} parent=49 // pred_fallthru
            _
          // Predicated region
          $region55: #{custom-call.38} parent=49 // pred_check
            _
          $region56: #{custom-call.38} parent=49 // pred_check_branch
            %135 = sbr.rel (0) target = $region58
          $region57: #{custom-call.38} parent=49 // pred_region
            loop: start=0, step=1, limit=1
            $region59: #{custom-call.38} parent=57 // loop_pre_header
              _
            $region60: #{custom-call.38} parent=57 // loop_header
              %s138 = sphi 0, %s142
              %p139 = scmp.ge.s32.totalorder %s138, 1
              %s143 = sphi %s129, %s129
              %s144 = sphi %s127, %s127
            $region61: #{custom-call.38} parent=57 // loop_header_branch
              %141 = sbr.rel (%p139) target = $region65
            $region62: #{custom-call.38} parent=57 // loop_body
              %v145 = vld [vmem:[%s143] sm:$0x3]
              %146 = vst [vmem:[%s144] sm:$0x3] %v145
            $region63: #{custom-call.38} parent=57 // loop_footer
              %s142 = sadd.s32 1, %s138
            $region64: #{custom-call.38} parent=57 // loop_footer_branch
              %137 = sbr.rel target = $region60
            $region65: #{custom-call.38} parent=57 // loop_exit
              _
          $region58: #{custom-call.38} parent=49 // pred_fallthru
            _
        $region50: #{custom-call.38} parent=15 // pred_fallthru
          _
        %160 = vnop
        %s161 = sand.u32 %s12, 1
        %s162 = sand.u32 %s12, 1
        %s163 = smul.addr %s162, 2
        %s164 = scalar_lea.vmem [#allocation5], %s163
        %s165 = smul.addr %s12, 2
        %s166 = scalar_lea.vmem %s2, %s165
        // Predicated region
        $region77: #{custom-call.38} parent=15 // pred_check
          _
        $region78: #{custom-call.38} parent=15 // pred_check_branch
          %168 = sbr.rel (0) target = $region80
        $region79: #{custom-call.38} parent=15 // pred_region
          // Predicated region
          $region81: #{custom-call.38} parent=79 // pred_check
            _
          $region82: #{custom-call.38} parent=79 // pred_check_branch
            %170 = sbr.rel target = $region84
          $region83: #{custom-call.38} parent=79 // pred_region
            // Predicated region
            $region96: #{custom-call.38} parent=83 // pred_check
              _
            $region97: #{custom-call.38} parent=83 // pred_check_branch
              %185 = sbr.rel (0) target = $region99
            $region98: #{custom-call.38} parent=83 // pred_region
              loop: start=0, step=1, limit=1
              $region100: #{custom-call.38} parent=98 // loop_pre_header
                _
              $region101: #{custom-call.38} parent=98 // loop_header
                %s188 = sphi 0, %s192
                %p189 = scmp.ge.s32.totalorder %s188, 1
                %s193 = sphi %s166, %s166
                %s194 = sphi %s164, %s164
              $region102: #{custom-call.38} parent=98 // loop_header_branch
                %191 = sbr.rel (%p189) target = $region106
              $region103: #{custom-call.38} parent=98 // loop_body
                %v195 = vld [vmem:[%s193] sm:$0x3]
                %196 = vst [vmem:[%s194] sm:$0x3] %v195
              $region104: #{custom-call.38} parent=98 // loop_footer
                %s192 = sadd.s32 1, %s188
              $region105: #{custom-call.38} parent=98 // loop_footer_branch
                %187 = sbr.rel target = $region101
              $region106: #{custom-call.38} parent=98 // loop_exit
                _
            $region99: #{custom-call.38} parent=83 // pred_fallthru
              _
          $region84: #{custom-call.38} parent=79 // pred_fallthru
            _
          // Predicated region
          $region85: #{custom-call.38} parent=79 // pred_check
            _
          $region86: #{custom-call.38} parent=79 // pred_check_branch
            %172 = sbr.rel (0) target = $region88
          $region87: #{custom-call.38} parent=79 // pred_region
            loop: start=0, step=1, limit=1
            $region89: #{custom-call.38} parent=87 // loop_pre_header
              _
            $region90: #{custom-call.38} parent=87 // loop_header
              %s175 = sphi 0, %s179
              %p176 = scmp.ge.s32.totalorder %s175, 1
              %s180 = sphi %s166, %s166
              %s181 = sphi %s164, %s164
            $region91: #{custom-call.38} parent=87 // loop_header_branch
              %178 = sbr.rel (%p176) target = $region95
            $region92: #{custom-call.38} parent=87 // loop_body
              %v182 = vld [vmem:[%s180] sm:$0x3]
              %183 = vst [vmem:[%s181] sm:$0x3] %v182
            $region93: #{custom-call.38} parent=87 // loop_footer
              %s179 = sadd.s32 1, %s175
            $region94: #{custom-call.38} parent=87 // loop_footer_branch
              %174 = sbr.rel target = $region90
            $region95: #{custom-call.38} parent=87 // loop_exit
              _
          $region88: #{custom-call.38} parent=79 // pred_fallthru
            _
        $region80: #{custom-call.38} parent=15 // pred_fallthru
          _
        %197 = vnop
        %s198 = sand.u32 %s12, 1
        %s199 = sand.u32 %s12, 1
        %s200 = smul.addr %s199, 2
        %s201 = scalar_lea.vmem [#allocation7], %s200
        %s202 = smul.addr %s12, 2
        %s203 = scalar_lea.vmem %s3, %s202
        // Predicated region
        $region107: #{custom-call.38} parent=15 // pred_check
          _
        $region108: #{custom-call.38} parent=15 // pred_check_branch
          %205 = sbr.rel (0) target = $region110
        $region109: #{custom-call.38} parent=15 // pred_region
          // Predicated region
          $region111: #{custom-call.38} parent=109 // pred_check
            _
          $region112: #{custom-call.38} parent=109 // pred_check_branch
            %207 = sbr.rel target = $region114
          $region113: #{custom-call.38} parent=109 // pred_region
            // Predicated region
            $region126: #{custom-call.38} parent=113 // pred_check
              _
            $region127: #{custom-call.38} parent=113 // pred_check_branch
              %222 = sbr.rel (0) target = $region129
            $region128: #{custom-call.38} parent=113 // pred_region
              loop: start=0, step=1, limit=1
              $region130: #{custom-call.38} parent=128 // loop_pre_header
                _
              $region131: #{custom-call.38} parent=128 // loop_header
                %s225 = sphi 0, %s229
                %p226 = scmp.ge.s32.totalorder %s225, 1
                %s230 = sphi %s203, %s203
                %s231 = sphi %s201, %s201
              $region132: #{custom-call.38} parent=128 // loop_header_branch
                %228 = sbr.rel (%p226) target = $region136
              $region133: #{custom-call.38} parent=128 // loop_body
                %v232 = vld [vmem:[%s230] sm:$0x3]
                %233 = vst [vmem:[%s231] sm:$0x3] %v232
              $region134: #{custom-call.38} parent=128 // loop_footer
                %s229 = sadd.s32 1, %s225
              $region135: #{custom-call.38} parent=128 // loop_footer_branch
                %224 = sbr.rel target = $region131
              $region136: #{custom-call.38} parent=128 // loop_exit
                _
            $region129: #{custom-call.38} parent=113 // pred_fallthru
              _
          $region114: #{custom-call.38} parent=109 // pred_fallthru
            _
          // Predicated region
          $region115: #{custom-call.38} parent=109 // pred_check
            _
          $region116: #{custom-call.38} parent=109 // pred_check_branch
            %209 = sbr.rel (0) target = $region118
          $region117: #{custom-call.38} parent=109 // pred_region
            loop: start=0, step=1, limit=1
            $region119: #{custom-call.38} parent=117 // loop_pre_header
              _
            $region120: #{custom-call.38} parent=117 // loop_header
              %s212 = sphi 0, %s216
              %p213 = scmp.ge.s32.totalorder %s212, 1
              %s217 = sphi %s203, %s203
              %s218 = sphi %s201, %s201
            $region121: #{custom-call.38} parent=117 // loop_header_branch
              %215 = sbr.rel (%p213) target = $region125
            $region122: #{custom-call.38} parent=117 // loop_body
              %v219 = vld [vmem:[%s217] sm:$0x3]
              %220 = vst [vmem:[%s218] sm:$0x3] %v219
            $region123: #{custom-call.38} parent=117 // loop_footer
              %s216 = sadd.s32 1, %s212
            $region124: #{custom-call.38} parent=117 // loop_footer_branch
              %211 = sbr.rel target = $region120
            $region125: #{custom-call.38} parent=117 // loop_exit
              _
          $region118: #{custom-call.38} parent=109 // pred_fallthru
            _
        $region110: #{custom-call.38} parent=15 // pred_fallthru
          _
        %234 = vnop
      $region16: #{custom-call.38} parent=5 // pred_fallthru
        _
      %p235 = scmp.le.s32.totalorder 1, %s12
      %p236 = scmp.lt.s32.totalorder %s12, 3
      %p237 = pnand %p235, %p236
      %p238 = pneg %p237
      // Predicated region
      $region137: #{custom-call.38} parent=5 // pred_check
        _
      $region138: #{custom-call.38} parent=5 // pred_check_branch
        %240 = sbr.rel (%p237) target = $region140
      $region139: #{custom-call.38} parent=5 // pred_region
        #allocation20 [shape = 'f32[2,2]{1,0}', space=vmem, size = 0x1000, scoped, tag = 'a top-left matrix']
        #allocation21 [shape = 'f32[2,2]{1,0}', space=vmem, size = 0x1000, scoped, tag = 'a top-right matrix']
        #allocation22 [shape = 'f32[2,2]{1,0}', space=vmem, size = 0x1000, scoped, tag = 'a bottom-left matrix']
        #allocation23 [shape = 'f32[2,2]{1,0}', space=vmem, size = 0x1000, scoped, tag = 'a bottom-right matrix']
        %s241 = ssub.s32 %s12, 1
        %s242 = sand.u32 %s17, 1
        %s243 = sand.u32 %s17, 1
        %s244 = smul.addr %s243, 2
        %s245 = scalar_lea.vmem [#allocation1], %s244
        %s246 = sand.u32 %s17, 1
        %s247 = sand.u32 %s17, 1
        %s248 = smul.addr %s247, 2
        %s249 = scalar_lea.vmem [#allocation3], %s248
        %s250 = sand.u32 %s17, 1
        %s251 = sand.u32 %s17, 1
        %s252 = smul.addr %s251, 2
        %s253 = scalar_lea.vmem [#allocation5], %s252
        %s254 = sand.u32 %s17, 1
        %s255 = sand.u32 %s17, 1
        %s256 = smul.addr %s255, 2
        %s257 = scalar_lea.vmem [#allocation7], %s256
        %s258 = sand.u32 %s17, 1
        %s259 = sand.u32 %s17, 1
        %s260 = smul.addr %s259, 2
        %s261 = scalar_lea.vmem [#allocation1], %s260
        %s262 = sand.u32 %s17, 1
        %s263 = sand.u32 %s17, 1
        %s264 = smul.addr %s263, 2
        %s265 = scalar_lea.vmem [#allocation3], %s264
        %s266 = sand.u32 %s17, 1
        %s267 = sand.u32 %s17, 1
        %s268 = smul.addr %s267, 2
        %s269 = scalar_lea.vmem [#allocation5], %s268
        %s270 = sand.u32 %s17, 1
        %s271 = sand.u32 %s17, 1
        %s272 = smul.addr %s271, 2
        %s273 = scalar_lea.vmem [#allocation7], %s272
        %p274 = pneg %p40
        %p275 = pneg %p37
        %s276 = sand.u32 %s27, 1
        %s277 = sand.u32 %s27, 1
        %s278 = smul.addr %s277, 2
        %s279 = scalar_lea.vmem [#allocation9], %s278
        %p280 = pneg %p68
        %p281 = pneg %p65
        %s282 = sand.u32 %s55, 1
        %s283 = sand.u32 %s55, 1
        %s284 = smul.addr %s283, 2
        %s285 = scalar_lea.vmem [#allocation11], %s284
        %s286 = sand.u32 %s17, 1
        %s287 = sand.u32 %s17, 1
        %s288 = smul.addr %s287, 2
        %s289 = scalar_lea.vmem [#allocation13], %s288
        %s290 = sand.u32 %s17, 1
        %s291 = sand.u32 %s17, 1
        %s292 = smul.addr %s291, 2
        %s293 = scalar_lea.vmem [#allocation15], %s292
        %s294 = sand.u32 %s17, 1
        %s295 = sand.u32 %s17, 1
        %s296 = smul.addr %s295, 2
        %s297 = scalar_lea.vmem [#allocation17], %s296
        %s298 = sand.u32 %s17, 1
        %s299 = sand.u32 %s17, 1
        %s300 = smul.addr %s299, 2
        %s301 = scalar_lea.vmem [#allocation19], %s300
        %s303 = sshllo.u32 0, 2
        %v304 = vld [vmem:[%s261] sm:%s303]
        %305 = vst [vmem:[#allocation0] sm:%s303] %v304
        %s307 = sshllo.u32 0, 2
        %v308 = vld [vmem:[%s265] sm:%s307]
        %309 = vst [vmem:[#allocation2] sm:%s307] %v308
        %s311 = sshllo.u32 0, 2
        %v312 = vld [vmem:[%s269] sm:%s311]
        %313 = vst [vmem:[#allocation4] sm:%s311] %v312
        %s315 = sshllo.u32 0, 2
        %v316 = vld [vmem:[%s273] sm:%s315]
        %317 = vst [vmem:[#allocation6] sm:%s315] %v316
        %s318 = sshrl.u32 %s17, 3
        %s319 = sshrl.u32 %s17, 3
        %s320 = smov [#allocation20]
        %v321 = vld [vmem:[#allocation0] sm:$0xff]
        %322 = vst [vmem:[%s320] sm:$0xff] %v321
        %s323 = smov [#allocation21]
        %v324 = vld [vmem:[#allocation2] sm:$0xff]
        %325 = vst [vmem:[%s323] sm:$0xff] %v324
        %s326 = smov [#allocation22]
        %v327 = vld [vmem:[#allocation4] sm:$0xff]
        %328 = vst [vmem:[%s326] sm:$0xff] %v327
        %s329 = smov [#allocation23]
        %v330 = vld [vmem:[#allocation6] sm:$0xff]
        %331 = vst [vmem:[%s329] sm:$0xff] %v330
        %332 = vst [vmem:[#allocation12] sm:$0xff] 0.0
        %333 = vst [vmem:[#allocation14] sm:$0xff] 0.0
        %334 = vst [vmem:[#allocation16] sm:$0xff] 0.0
        %335 = vst [vmem:[#allocation18] sm:$0xff] 0.0
        %s336 = smov [#allocation12]
        %v337 = vlaneseq
        %v338 = vand.u32 %v337, 127
        %v339 = vmov %v338
        %v340 = vlaneseq
        %v341 = vshrl.u32 %v340, 7
        %v342 = vmov %v341
        %v343 = vld [vmem:[%s336] sm:$0x3]
        %vm346 = vcmp.eq.s32.totalorder %v342, %v339
        %v347 = vsel %vm346, 1.0, %v343
        %348 = vst [vmem:[%s336] sm:$0x3] %v347
        %s349 = smov [#allocation18]
        %v350 = vlaneseq
        %v351 = vand.u32 %v350, 127
        %v352 = vmov %v351
        %v353 = vlaneseq
        %v354 = vshrl.u32 %v353, 7
        %v355 = vmov %v354
        %v356 = vld [vmem:[%s349] sm:$0x3]
        %vm359 = vcmp.eq.s32.totalorder %v355, %v352
        %v360 = vsel %vm359, 1.0, %v356
        %361 = vst [vmem:[%s349] sm:$0x3] %v360
        // While loop
        $region141: #{custom-call.38} parent=139 // loop_pre_header
          _
        $region142: #{custom-call.38} parent=139 // loop_header
          %s363 = sphi 0, %s905
          %v364 = vlaneseq
          %v365 = vand.u32 %v364, 127
          %v366 = vmov %v365
          %v367 = vlaneseq
          %v368 = vshrl.u32 %v367, 7
          %v369 = vmov %v368
          %s370 = smov [#allocation20]
          %v371 = vlaneseq
          %v372 = vand.u32 %v371, 127
          %vm373 = vcmp.ge.s32.totalorder %v372, 0
          %vm374 = vcmp.lt.s32.totalorder %v372, 2
          %vm375 = vmand %vm373, %vm374
          %v376 = vld [vmem:[%s370] sm:$0x3]
          %v377 = vsel %vm375, %v376, 0.0
          %v378 = vmul.f32 %v377, %v377
          %vm381 = vcmp.eq.s32.totalorder %v369, %v366
          %v382 = vsel %vm381, 0.0, %v378
          %v383 = vlaneseq
          %v384 = vand.u32 %v383, 127
          %v385 = vmov %v384
          %v386 = vlaneseq
          %v387 = vshrl.u32 %v386, 7
          %v388 = vmov %v387
          %s389 = smov [#allocation21]
          %v390 = vlaneseq
          %v391 = vand.u32 %v390, 127
          %vm392 = vcmp.ge.s32.totalorder %v391, 0
          %vm393 = vcmp.lt.s32.totalorder %v391, 2
          %vm394 = vmand %vm392, %vm393
          %v395 = vld [vmem:[%s389] sm:$0x3]
          %v396 = vsel %vm394, %v395, 0.0
          %v397 = vmul.f32 %v396, %v396
          %v398 = vadd.f32 %v382, %v397
          %v399 = vadd.f32 %v378, %v397
          %v400 = vlaneseq
          %v401 = vand.u32 %v400, 127
          %v402 = vmov %v401
          %v403 = vlaneseq
          %v404 = vshrl.u32 %v403, 7
          %v405 = vmov %v404
          %s406 = smov [#allocation22]
          %v407 = vlaneseq
          %v408 = vand.u32 %v407, 127
          %vm409 = vcmp.ge.s32.totalorder %v408, 0
          %vm410 = vcmp.lt.s32.totalorder %v408, 2
          %vm411 = vmand %vm409, %vm410
          %v412 = vld [vmem:[%s406] sm:$0x3]
          %v413 = vsel %vm411, %v412, 0.0
          %v414 = vmul.f32 %v413, %v413
          %v415 = vadd.f32 %v398, %v414
          %v416 = vadd.f32 %v399, %v414
          %v417 = vlaneseq
          %v418 = vand.u32 %v417, 127
          %v419 = vmov %v418
          %v420 = vlaneseq
          %v421 = vshrl.u32 %v420, 7
          %v422 = vmov %v421
          %s423 = smov [#allocation23]
          %v424 = vlaneseq
          %v425 = vand.u32 %v424, 127
          %vm426 = vcmp.ge.s32.totalorder %v425, 0
          %vm427 = vcmp.lt.s32.totalorder %v425, 2
          %vm428 = vmand %vm426, %vm427
          %v429 = vld [vmem:[%s423] sm:$0x3]
          %v430 = vsel %vm428, %v429, 0.0
          %v431 = vmul.f32 %v430, %v430
          %vm434 = vcmp.eq.s32.totalorder %v422, %v419
          %v435 = vsel %vm434, 0.0, %v431
          %v436 = vadd.f32 %v415, %v435
          %v437 = vadd.f32 %v416, %v431
          %438 = vadd.xlane.f32.xlu0 %v437
          %v439 = vpop.xlane.xlu0 %438
          %v440 = vrot.slane %v439, 4
          %v441 = vadd.f32 %v439, %v440
          %v442 = vrot.slane %v441, 2
          %v443 = vadd.f32 %v441, %v442
          %v444 = vrot.slane %v443, 1
          %v445 = vadd.f32 %v443, %v444
          %446 = vadd.xlane.f32.xlu0 %v436
          %v447 = vpop.xlane.xlu0 %446
          %v448 = vrot.slane %v447, 4
          %v449 = vadd.f32 %v447, %v448
          %v450 = vrot.slane %v449, 2
          %v451 = vadd.f32 %v449, %v450
          %v452 = vrot.slane %v451, 1
          %v453 = vadd.f32 %v451, %v452
          %s454 = vtos %v453
          %s455 = vtos %v445
          %s456 = smul.f32 1e-10, %s455
          %p457 = scmp.le.f32.partialorder %s454, %s456
          %p458 = scmp.ge.s32.totalorder %s363, 15
          %p459 = por %p457, %p458
        $region143: #{custom-call.38} parent=139 // loop_header_branch
          %907 = sbr.rel (%p459) target = $region147
        $region144: #{custom-call.38} parent=139 // loop_body
          loop: start=0, step=1, limit=3
          $region148: #{custom-call.38} parent=144 // loop_pre_header
            _
          $region149: #{custom-call.38} parent=144 // loop_header
            %s461 = sphi 0, %s465
            %p462 = scmp.ge.s32.totalorder %s461, 3
          $region150: #{custom-call.38} parent=144 // loop_header_branch
            %464 = sbr.rel (%p462) target = $region154
          $region151: #{custom-call.38} parent=144 // loop_body
            #allocation24 [shape = 'f32[1024]{0}', space=vmem, size = 0x1000, scoped, tag = 'a_tl_diag vmem']
            #allocation25 [shape = 'f32[1024]{0}', space=vmem, size = 0x1000, scoped, tag = 'a_tr_diag vmem']
            #allocation26 [shape = 'f32[1024]{0}', space=vmem, size = 0x1000, scoped, tag = 'a_br_diag vmem']
            #allocation27 [shape = 'f32[1024]{0}', space=vmem, size = 0x1000, scoped, tag = 'rt1 vmem']
            #allocation28 [shape = 'f32[1024]{0}', space=vmem, size = 0x1000, scoped, tag = 'rt2 vmem']
            #allocation29 [shape = 'f32[1024]{0}', space=vmem, size = 0x1000, scoped, tag = 'c vmem']
            #allocation30 [shape = 'f32[1024]{0}', space=vmem, size = 0x1000, scoped, tag = 's vmem']
            #allocation31 [shape = 'f32[4096]{0}', space=vmem, size = 0x4000, scoped, tag = 'c broadcast']
            #allocation32 [shape = 'f32[4096]{0}', space=vmem, size = 0x4000, scoped, tag = 's broadcast']
            %s466 = smov [#allocation20]
            %s467 = smov [#allocation24]
            %v468 = vlaneseq
            %v469 = vand.u32 %v468, 127
            %v470 = vmov %v469
            %v471 = vlaneseq
            %v472 = vshrl.u32 %v471, 7
            %v473 = vmov %v472
            %v474 = vld [vmem:[%s466] sm:$0x3]
            %vm477 = vcmp.eq.s32.totalorder %v473, %v470
            %v478 = vsel %vm477, %v474, 0.0
            %v479 = vrot.slane %v478, 4
            %v480 = vadd.f32 %v478, %v479
            %v481 = vrot.slane %v480, 2
            %v482 = vadd.f32 %v480, %v481
            %v483 = vrot.slane %v482, 1
            %v484 = vadd.f32 %v482, %v483
            %485 = vst [vmem:[%s467] sm:$0x1] %v484
            %s486 = smov [#allocation21]
            %s487 = smov [#allocation25]
            %v488 = vlaneseq
            %v489 = vand.u32 %v488, 127
            %v490 = vmov %v489
            %v491 = vlaneseq
            %v492 = vshrl.u32 %v491, 7
            %v493 = vmov %v492
            %v494 = vld [vmem:[%s486] sm:$0x3]
            %vm497 = vcmp.eq.s32.totalorder %v493, %v490
            %v498 = vsel %vm497, %v494, 0.0
            %v499 = vrot.slane %v498, 4
            %v500 = vadd.f32 %v498, %v499
            %v501 = vrot.slane %v500, 2
            %v502 = vadd.f32 %v500, %v501
            %v503 = vrot.slane %v502, 1
            %v504 = vadd.f32 %v502, %v503
            %505 = vst [vmem:[%s487] sm:$0x1] %v504
            %s506 = smov [#allocation23]
            %s507 = smov [#allocation26]
            %v508 = vlaneseq
            %v509 = vand.u32 %v508, 127
            %v510 = vmov %v509
            %v511 = vlaneseq
            %v512 = vshrl.u32 %v511, 7
            %v513 = vmov %v512
            %v514 = vld [vmem:[%s506] sm:$0x3]
            %vm517 = vcmp.eq.s32.totalorder %v513, %v510
            %v518 = vsel %vm517, %v514, 0.0
            %v519 = vrot.slane %v518, 4
            %v520 = vadd.f32 %v518, %v519
            %v521 = vrot.slane %v520, 2
            %v522 = vadd.f32 %v520, %v521
            %v523 = vrot.slane %v522, 1
            %v524 = vadd.f32 %v522, %v523
            %525 = vst [vmem:[%s507] sm:$0x1] %v524
            %s526 = smov [#allocation29]
            %s527 = smov [#allocation30]
            %s528 = smov [#allocation24]
            %v529 = vld [vmem:[%s528] sm:$0xff]
            %s530 = smov [#allocation25]
            %v531 = vld [vmem:[%s530] sm:$0xff]
            %s532 = smov [#allocation26]
            %v533 = vld [vmem:[%s532] sm:$0xff]
            %v534 = vsub.f32 %v533, %v529
            %v535 = vmul.f32 2.0, %v531
            %v536 = vrcp.pop %v535
            %v537 = vmul.f32 %v534, %v536
            %vm538 = vcmp.ge.f32.partialorder %v537, 0.0
            %v539 = vmul.f32 %v537, %v537
            %v540 = vadd.f32 1.0, %v539
            %v541 = vrsqrt.pop %v540
            %v542 = vmul.f32 %v540, %v541
            %vm543 = vcmp.eq.f32.partialorder %v540, inf
            %v544 = vsel %vm543, %v540, %v542
            %vm545 = vcmp.eq.f32.partialorder %v540, 0.0
            %v546 = vand.u32 %v540, 2147483648
            %v547 = vsel %vm545, %v546, %v544
            %v548 = vxor.u32 %v547, 2147483648
            %v549 = vsel %vm538, %v547, %v548
            %v550 = vadd.f32 %v537, %v549
            %v551 = vrcp.pop %v550
            %v552 = vand.u32 2147483647, %v529
            %v553 = vand.u32 2147483647, %v531
            %v554 = vand.u32 2147483647, %v533
            %v555 = vmin.f32 %v552, %v554
            %v556 = vmul.f32 1.1920929e-08, %v555
            %vm557 = vcmp.le.f32.partialorder %v553, %v556
            %v558 = vsel %vm557, 0.0, %v551
            %v559 = vmul.f32 %v558, %v558
            %v560 = vadd.f32 1.0, %v559
            %v561 = vrsqrt.pop %v560
            %v562 = vmul.f32 %v558, %v561
            %v563 = vmul.f32 %v558, %v531
            %v564 = vsub.f32 %v529, %v563
            %v565 = vmul.f32 %v558, %v531
            %v566 = vadd.f32 %v533, %v565
            %s567 = smov [#allocation27]
            %568 = vst [vmem:[%s567] sm:$0xff] %v564
            %s569 = smov [#allocation28]
            %570 = vst [vmem:[%s569] sm:$0xff] %v566
            %s571 = smov %s526
            %572 = vst [vmem:[%s571] sm:$0xff] %v561
            %s573 = smov %s527
            %574 = vst [vmem:[%s573] sm:$0xff] %v562
            %s575 = smov [#allocation29]
            %v576 = vld [vmem:[%s575] ss:$0 sm:$0xff]
            %v577 = vlaneseq
            %v578 = vand.u32 %v577, 127
            %v579 = vmov %v578
            %v580 = vlaneseq
            %v581 = vshrl.u32 %v580, 7
            %v582 = vmov %v581
            %vm584 = vcmp.eq.s32.totalorder %v582, %v579
            %v585 = vsel %vm584, %v576, 0.0
            %586 = vadd.xlane.f32.xlu0 %v585
            %v587 = vpop.xlane.xlu0 %586
            %s588 = smov [#allocation31]
            %589 = vst [vmem:[%s588] sm:$0xff] %v587
            %s590 = smov [#allocation30]
            %v591 = vld [vmem:[%s590] ss:$0 sm:$0xff]
            %v592 = vlaneseq
            %v593 = vand.u32 %v592, 127
            %v594 = vmov %v593
            %v595 = vlaneseq
            %v596 = vshrl.u32 %v595, 7
            %v597 = vmov %v596
            %vm599 = vcmp.eq.s32.totalorder %v597, %v594
            %v600 = vsel %vm599, %v591, 0.0
            %601 = vadd.xlane.f32.xlu0 %v600
            %v602 = vpop.xlane.xlu0 %601
            %s603 = smov [#allocation32]
            %604 = vst [vmem:[%s603] sm:$0xff] %v602
            %s605 = smov [#allocation31]
            %v606 = vld [vmem:[%s605] sm:$0xff]
            %s607 = smov [#allocation32]
            %v608 = vld [vmem:[%s607] sm:$0xff]
            %s609 = smov [#allocation20]
            %s610 = smov [#allocation21]
            %s611 = smov [#allocation22]
            %s612 = smov [#allocation23]
            %v613 = vld [vmem:[%s609] sm:$0x3]
            %v614 = vld [vmem:[%s610] sm:$0x3]
            %v615 = vld [vmem:[%s611] sm:$0x3]
            %v616 = vld [vmem:[%s612] sm:$0x3]
            %v617 = vmul.f32 %v606, %v613
            %v618 = vmul.f32 %v608, %v615
            %v619 = vsub.f32 %v617, %v618
            %v620 = vmul.f32 %v606, %v614
            %v621 = vmul.f32 %v608, %v616
            %v622 = vsub.f32 %v620, %v621
            %v623 = vmul.f32 %v608, %v613
            %v624 = vmul.f32 %v606, %v615
            %v625 = vadd.f32 %v623, %v624
            %v626 = vmul.f32 %v608, %v614
            %v627 = vmul.f32 %v606, %v616
            %v628 = vadd.f32 %v626, %v627
            %629 = vst [vmem:[%s609] sm:$0x3] %v619
            %630 = vst [vmem:[%s610] sm:$0x3] %v622
            %631 = vst [vmem:[%s611] sm:$0x3] %v625
            %632 = vst [vmem:[%s612] sm:$0x3] %v628
            %s633 = smov [#allocation29]
            %v634 = vld [vmem:[%s633] ss:$0 sm:$0xff]
            %s635 = smov [#allocation30]
            %v636 = vld [vmem:[%s635] ss:$0 sm:$0xff]
            %s637 = smov [#allocation20]
            %s638 = smov [#allocation21]
            %s639 = smov [#allocation22]
            %s640 = smov [#allocation23]
            %v641 = vld [vmem:[%s637] sm:$0x3]
            %v642 = vld [vmem:[%s638] sm:$0x3]
            %v643 = vld [vmem:[%s639] sm:$0x3]
            %v644 = vld [vmem:[%s640] sm:$0x3]
            %v645 = vmul.f32 %v634, %v641
            %v646 = vmul.f32 %v636, %v642
            %v647 = vsub.f32 %v645, %v646
            %v648 = vmul.f32 %v636, %v641
            %v649 = vmul.f32 %v634, %v642
            %v650 = vadd.f32 %v648, %v649
            %v651 = vmul.f32 %v634, %v643
            %v652 = vmul.f32 %v636, %v644
            %v653 = vsub.f32 %v651, %v652
            %v654 = vmul.f32 %v636, %v643
            %v655 = vmul.f32 %v634, %v644
            %v656 = vadd.f32 %v654, %v655
            %657 = vst [vmem:[%s637] sm:$0x3] %v647
            %658 = vst [vmem:[%s638] sm:$0x3] %v650
            %659 = vst [vmem:[%s639] sm:$0x3] %v653
            %660 = vst [vmem:[%s640] sm:$0x3] %v656
            %s661 = smov [#allocation20]
            %s662 = smov [#allocation27]
            %v663 = vlaneseq
            %v664 = vand.u32 %v663, 127
            %v665 = vmov %v664
            %v666 = vlaneseq
            %v667 = vshrl.u32 %v666, 7
            %v668 = vmov %v667
            %v669 = vld [vmem:[%s662] ss:$0 sm:$0xff]
            %v670 = vld [vmem:[%s661] sm:$0x3]
            %vm673 = vcmp.eq.s32.totalorder %v668, %v665
            %v674 = vsel %vm673, %v669, %v670
            %675 = vst [vmem:[%s661] sm:$0x3] %v674
            %s676 = smov [#allocation21]
            %v677 = vlaneseq
            %v678 = vand.u32 %v677, 127
            %v679 = vmov %v678
            %v680 = vlaneseq
            %v681 = vshrl.u32 %v680, 7
            %v682 = vmov %v681
            %v683 = vld [vmem:[%s676] sm:$0x3]
            %vm686 = vcmp.eq.s32.totalorder %v682, %v679
            %v687 = vsel %vm686, 0.0, %v683
            %688 = vst [vmem:[%s676] sm:$0x3] %v687
            %s689 = smov [#allocation22]
            %v690 = vlaneseq
            %v691 = vand.u32 %v690, 127
            %v692 = vmov %v691
            %v693 = vlaneseq
            %v694 = vshrl.u32 %v693, 7
            %v695 = vmov %v694
            %v696 = vld [vmem:[%s689] sm:$0x3]
            %vm699 = vcmp.eq.s32.totalorder %v695, %v692
            %v700 = vsel %vm699, 0.0, %v696
            %701 = vst [vmem:[%s689] sm:$0x3] %v700
            %s702 = smov [#allocation23]
            %s703 = smov [#allocation28]
            %v704 = vlaneseq
            %v705 = vand.u32 %v704, 127
            %v706 = vmov %v705
            %v707 = vlaneseq
            %v708 = vshrl.u32 %v707, 7
            %v709 = vmov %v708
            %v710 = vld [vmem:[%s703] ss:$0 sm:$0xff]
            %v711 = vld [vmem:[%s702] sm:$0x3]
            %vm714 = vcmp.eq.s32.totalorder %v709, %v706
            %v715 = vsel %vm714, %v710, %v711
            %716 = vst [vmem:[%s702] sm:$0x3] %v715
            %s717 = smov [#allocation20]
            %s718 = smov [#allocation21]
            %v719 = vld [vmem:[%s718] sm:$0x3]
            %720 = vrot.lane.b32.xlu0 %v719, 1
            %v721 = vpop.permute.xlu0 %720
            %v722 = vld [vmem:[%s717] sm:$0x3]
            %v723 = vld [vmem:[%s717] sm:$0x3]
            %724 = vrot.lane.b32.xlu0 %v723, 1
            %v725 = vpop.permute.xlu0 %724
            %v726 = vlaneseq
            %v727 = vand.u32 %v726, 127
            %vm728 = vcmp.eq.s32.totalorder %v727, 0
            %v729 = vsel %vm728, %v723, %v725
            %v730 = vlaneseq
            %v731 = vand.u32 %v730, 127
            %vm732 = vcmp.eq.s32.totalorder %v731, 1
            %v733 = vsel %vm732, %v721, %v729
            %v734 = vlaneseq
            %v735 = vand.u32 %v734, 127
            %vm736 = vcmp.ge.s32.totalorder %v735, 0
            %vm737 = vcmp.lt.s32.totalorder %v735, 2
            %vm738 = vmand %vm736, %vm737
            %v739 = vsel %vm738, %v733, 0.0
            %v740 = vld [vmem:[%s718] sm:$0x3]
            %741 = vrot.lane.b32.xlu0 %v740, 127
            %v742 = vpop.permute.xlu0 %741
            %v743 = vlaneseq
            %v744 = vand.u32 %v743, 127
            %vm745 = vcmp.eq.s32.totalorder %v744, 1
            %v746 = vsel %vm745, %v722, %v742
            %747 = vst [vmem:[%s717] sm:$0x3] %v739
            %748 = vst [vmem:[%s718] sm:$0x3] %v746
            %s749 = smov [#allocation22]
            %s750 = smov [#allocation23]
            %v751 = vld [vmem:[%s750] sm:$0x3]
            %752 = vrot.lane.b32.xlu0 %v751, 1
            %v753 = vpop.permute.xlu0 %752
            %v754 = vld [vmem:[%s749] sm:$0x3]
            %v755 = vld [vmem:[%s749] sm:$0x3]
            %756 = vrot.lane.b32.xlu0 %v755, 1
            %v757 = vpop.permute.xlu0 %756
            %v758 = vlaneseq
            %v759 = vand.u32 %v758, 127
            %vm760 = vcmp.eq.s32.totalorder %v759, 0
            %v761 = vsel %vm760, %v755, %v757
            %v762 = vlaneseq
            %v763 = vand.u32 %v762, 127
            %vm764 = vcmp.eq.s32.totalorder %v763, 1
            %v765 = vsel %vm764, %v753, %v761
            %v766 = vlaneseq
            %v767 = vand.u32 %v766, 127
            %vm768 = vcmp.ge.s32.totalorder %v767, 0
            %vm769 = vcmp.lt.s32.totalorder %v767, 2
            %vm770 = vmand %vm768, %vm769
            %v771 = vsel %vm770, %v765, 0.0
            %v772 = vld [vmem:[%s750] sm:$0x3]
            %773 = vrot.lane.b32.xlu0 %v772, 127
            %v774 = vpop.permute.xlu0 %773
            %v775 = vlaneseq
            %v776 = vand.u32 %v775, 127
            %vm777 = vcmp.eq.s32.totalorder %v776, 1
            %v778 = vsel %vm777, %v754, %v774
            %779 = vst [vmem:[%s749] sm:$0x3] %v771
            %780 = vst [vmem:[%s750] sm:$0x3] %v778
            %s781 = smov [#allocation20]
            %s782 = smov [#allocation22]
            %v783 = vld [vmem:[%s781] ss:$0 sm:$0xff]
            %s785 = scalar_lea.vmem %s781, 4294967295
            %v786 = vld [vmem:[%s785] sm:$0x2]
            %v787 = vlaneseq
            %v788 = vshrl.u32 %v787, 7
            %vm789 = vcmp.eq.s32.totalorder %v788, 0
            %v790 = vsel %vm789, %v783, %v786
            %s791 = scalar_lea.vmem %s781, 1
            %v792 = vld [vmem:[%s791] ss:$0 sm:$0xff]
            %793 = vst [vmem:[%s781] sm:$0x3] %v790
            %v794 = vld [vmem:[%s782] ss:$0 sm:$0xff]
            %s795 = scalar_lea.vmem %s781, 1
            %796 = vst [vmem:[%s795] sm:$0x1] %v794
            %s797 = scalar_lea.vmem %s782, 1
            %v798 = vld [vmem:[%s797] sm:$0x1]
            %v799 = vlaneseq
            %v800 = vshrl.u32 %v799, 7
            %vm801 = vcmp.eq.s32.totalorder %v800, 1
            %v802 = vsel %vm801, %v792, %v798
            %v803 = vld [vmem:[%s782] ss:$0 sm:$0xff]
            %804 = vst [vmem:[%s782] sm:$0x3] %v802
            %s805 = smov [#allocation21]
            %s806 = smov [#allocation23]
            %v807 = vld [vmem:[%s805] ss:$0 sm:$0xff]
            %s809 = scalar_lea.vmem %s805, 4294967295
            %v810 = vld [vmem:[%s809] sm:$0x2]
            %v811 = vlaneseq
            %v812 = vshrl.u32 %v811, 7
            %vm813 = vcmp.eq.s32.totalorder %v812, 0
            %v814 = vsel %vm813, %v807, %v810
            %s815 = scalar_lea.vmem %s805, 1
            %v816 = vld [vmem:[%s815] ss:$0 sm:$0xff]
            %817 = vst [vmem:[%s805] sm:$0x3] %v814
            %v818 = vld [vmem:[%s806] ss:$0 sm:$0xff]
            %s819 = scalar_lea.vmem %s805, 1
            %820 = vst [vmem:[%s819] sm:$0x1] %v818
            %s821 = scalar_lea.vmem %s806, 1
            %v822 = vld [vmem:[%s821] sm:$0x1]
            %v823 = vlaneseq
            %v824 = vshrl.u32 %v823, 7
            %vm825 = vcmp.eq.s32.totalorder %v824, 1
            %v826 = vsel %vm825, %v816, %v822
            %v827 = vld [vmem:[%s806] ss:$0 sm:$0xff]
            %828 = vst [vmem:[%s806] sm:$0x3] %v826
            %s829 = smov [#allocation31]
            %v830 = vld [vmem:[%s829] sm:$0xff]
            %s831 = smov [#allocation32]
            %v832 = vld [vmem:[%s831] sm:$0xff]
            %s833 = smov [#allocation12]
            %s834 = smov [#allocation14]
            %s835 = smov [#allocation16]
            %s836 = smov [#allocation18]
            %v837 = vld [vmem:[%s833] sm:$0x3]
            %v838 = vld [vmem:[%s834] sm:$0x3]
            %v839 = vld [vmem:[%s835] sm:$0x3]
            %v840 = vld [vmem:[%s836] sm:$0x3]
            %v841 = vmul.f32 %v830, %v837
            %v842 = vmul.f32 %v832, %v839
            %v843 = vsub.f32 %v841, %v842
            %v844 = vmul.f32 %v830, %v838
            %v845 = vmul.f32 %v832, %v840
            %v846 = vsub.f32 %v844, %v845
            %v847 = vmul.f32 %v832, %v837
            %v848 = vmul.f32 %v830, %v839
            %v849 = vadd.f32 %v847, %v848
            %v850 = vmul.f32 %v832, %v838
            %v851 = vmul.f32 %v830, %v840
            %v852 = vadd.f32 %v850, %v851
            %853 = vst [vmem:[%s833] sm:$0x3] %v843
            %854 = vst [vmem:[%s834] sm:$0x3] %v846
            %855 = vst [vmem:[%s835] sm:$0x3] %v849
            %856 = vst [vmem:[%s836] sm:$0x3] %v852
            %s857 = smov [#allocation12]
            %s858 = smov [#allocation16]
            %v859 = vld [vmem:[%s857] ss:$0 sm:$0xff]
            %s861 = scalar_lea.vmem %s857, 4294967295
            %v862 = vld [vmem:[%s861] sm:$0x2]
            %v863 = vlaneseq
            %v864 = vshrl.u32 %v863, 7
            %vm865 = vcmp.eq.s32.totalorder %v864, 0
            %v866 = vsel %vm865, %v859, %v862
            %s867 = scalar_lea.vmem %s857, 1
            %v868 = vld [vmem:[%s867] ss:$0 sm:$0xff]
            %869 = vst [vmem:[%s857] sm:$0x3] %v866
            %v870 = vld [vmem:[%s858] ss:$0 sm:$0xff]
            %s871 = scalar_lea.vmem %s857, 1
            %872 = vst [vmem:[%s871] sm:$0x1] %v870
            %s873 = scalar_lea.vmem %s858, 1
            %v874 = vld [vmem:[%s873] sm:$0x1]
            %v875 = vlaneseq
            %v876 = vshrl.u32 %v875, 7
            %vm877 = vcmp.eq.s32.totalorder %v876, 1
            %v878 = vsel %vm877, %v868, %v874
            %v879 = vld [vmem:[%s858] ss:$0 sm:$0xff]
            %880 = vst [vmem:[%s858] sm:$0x3] %v878
            %s881 = smov [#allocation14]
            %s882 = smov [#allocation18]
            %v883 = vld [vmem:[%s881] ss:$0 sm:$0xff]
            %s885 = scalar_lea.vmem %s881, 4294967295
            %v886 = vld [vmem:[%s885] sm:$0x2]
            %v887 = vlaneseq
            %v888 = vshrl.u32 %v887, 7
            %vm889 = vcmp.eq.s32.totalorder %v888, 0
            %v890 = vsel %vm889, %v883, %v886
            %s891 = scalar_lea.vmem %s881, 1
            %v892 = vld [vmem:[%s891] ss:$0 sm:$0xff]
            %893 = vst [vmem:[%s881] sm:$0x3] %v890
            %v894 = vld [vmem:[%s882] ss:$0 sm:$0xff]
            %s895 = scalar_lea.vmem %s881, 1
            %896 = vst [vmem:[%s895] sm:$0x1] %v894
            %s897 = scalar_lea.vmem %s882, 1
            %v898 = vld [vmem:[%s897] sm:$0x1]
            %v899 = vlaneseq
            %v900 = vshrl.u32 %v899, 7
            %vm901 = vcmp.eq.s32.totalorder %v900, 1
            %v902 = vsel %vm901, %v892, %v898
            %v903 = vld [vmem:[%s882] ss:$0 sm:$0xff]
            %904 = vst [vmem:[%s882] sm:$0x3] %v902
          $region152: #{custom-call.38} parent=144 // loop_footer
            %s465 = sadd.s32 1, %s461
          $region153: #{custom-call.38} parent=144 // loop_footer_branch
            %460 = sbr.rel target = $region149
          $region154: #{custom-call.38} parent=144 // loop_exit
            _
          %s905 = sadd.s32 %s363, 1
        $region145: #{custom-call.38} parent=139 // loop_footer
          _
        $region146: #{custom-call.38} parent=139 // loop_footer_branch
          %362 = sbr.rel target = $region142
        $region147: #{custom-call.38} parent=139 // loop_exit
          _
        %s908 = sand.u32 %s17, 7
        %s909 = scalar_lea.vmem [#allocation8], %s908
        %s910 = sand.u32 %s17, 7
        %s911 = scalar_lea.vmem [#allocation10], %s910
        %s912 = smov [#allocation20]
        %s913 = smov %s909
        %v914 = vlaneseq
        %v915 = vand.u32 %v914, 127
        %v916 = vmov %v915
        %v917 = vlaneseq
        %v918 = vshrl.u32 %v917, 7
        %v919 = vmov %v918
        %v920 = vld [vmem:[%s912] sm:$0x3]
        %vm923 = vcmp.eq.s32.totalorder %v919, %v916
        %v924 = vsel %vm923, %v920, 0.0
        %v925 = vrot.slane %v924, 4
        %v926 = vadd.f32 %v924, %v925
        %v927 = vrot.slane %v926, 2
        %v928 = vadd.f32 %v926, %v927
        %v929 = vrot.slane %v928, 1
        %v930 = vadd.f32 %v928, %v929
        %931 = vst [vmem:[%s913] sm:$0x1] %v930
        %s932 = smov [#allocation23]
        %s933 = smov %s911
        %v934 = vlaneseq
        %v935 = vand.u32 %v934, 127
        %v936 = vmov %v935
        %v937 = vlaneseq
        %v938 = vshrl.u32 %v937, 7
        %v939 = vmov %v938
        %v940 = vld [vmem:[%s932] sm:$0x3]
        %vm943 = vcmp.eq.s32.totalorder %v939, %v936
        %v944 = vsel %vm943, %v940, 0.0
        %v945 = vrot.slane %v944, 4
        %v946 = vadd.f32 %v944, %v945
        %v947 = vrot.slane %v946, 2
        %v948 = vadd.f32 %v946, %v947
        %v949 = vrot.slane %v948, 1
        %v950 = vadd.f32 %v948, %v949
        %951 = vst [vmem:[%s933] sm:$0x1] %v950
        %s953 = sshllo.u32 0, 2
        %v955 = vld [vmem:[#allocation8] sm:%s953]
        %s956 = sshllo.u32 0, 2
        %957 = vst [vmem:[%s279] sm:%s956] %v955
        %s959 = sshllo.u32 0, 2
        %v961 = vld [vmem:[#allocation10] sm:%s959]
        %s962 = sshllo.u32 0, 2
        %963 = vst [vmem:[%s285] sm:%s962] %v961
        %s965 = sshllo.u32 0, 2
        %v967 = vld [vmem:[#allocation12] sm:%s965]
        %s968 = sshllo.u32 0, 2
        %969 = vst [vmem:[%s289] sm:%s968] %v967
        %s971 = sshllo.u32 0, 2
        %v973 = vld [vmem:[#allocation14] sm:%s971]
        %s974 = sshllo.u32 0, 2
        %975 = vst [vmem:[%s293] sm:%s974] %v973
        %s977 = sshllo.u32 0, 2
        %v979 = vld [vmem:[#allocation16] sm:%s977]
        %s980 = sshllo.u32 0, 2
        %981 = vst [vmem:[%s297] sm:%s980] %v979
        %s983 = sshllo.u32 0, 2
        %v985 = vld [vmem:[#allocation18] sm:%s983]
        %s986 = sshllo.u32 0, 2
        %987 = vst [vmem:[%s301] sm:%s986] %v985
        %s988 = sand.u32 %s27, 1
        %s989 = sand.u32 %s27, 1
        %s990 = smul.addr %s989, 2
        %s991 = scalar_lea.vmem [#allocation9], %s990
        %s992 = sand.u32 %s55, 1
        %s993 = sand.u32 %s55, 1
        %s994 = smul.addr %s993, 2
        %s995 = scalar_lea.vmem [#allocation11], %s994
        %s996 = sand.u32 %s17, 1
        %s997 = sand.u32 %s17, 1
        %s998 = smul.addr %s997, 2
        %s999 = scalar_lea.vmem [#allocation13], %s998
        %s1000 = sand.u32 %s17, 1
        %s1001 = sand.u32 %s17, 1
        %s1002 = smul.addr %s1001, 2
        %s1003 = scalar_lea.vmem [#allocation15], %s1002
        %s1004 = sand.u32 %s17, 1
        %s1005 = sand.u32 %s17, 1
        %s1006 = smul.addr %s1005, 2
        %s1007 = scalar_lea.vmem [#allocation17], %s1006
        %s1008 = sand.u32 %s17, 1
        %s1009 = sand.u32 %s17, 1
        %s1010 = smul.addr %s1009, 2
        %s1011 = scalar_lea.vmem [#allocation19], %s1010
        // Predicated region
        $region155: #{custom-call.38} parent=139 // pred_check
          %p1012 = pneg %p37
        $region156: #{custom-call.38} parent=139 // pred_check_branch
          %1014 = sbr.rel (%p1012) target = $region158
        $region157: #{custom-call.38} parent=139 // pred_region
          %s1015 = sshrl.u32 %s17, 3
          %s1016 = smul.addr %s1015, 2
          %s1017 = scalar_lea.vmem %s4, %s1016
          // Predicated region
          $region159: #{custom-call.38} parent=157 // pred_check
            _
          $region160: #{custom-call.38} parent=157 // pred_check_branch
            %1019 = sbr.rel (0) target = $region162
          $region161: #{custom-call.38} parent=157 // pred_region
            // Predicated region
            $region163: #{custom-call.38} parent=161 // pred_check
              _
            $region164: #{custom-call.38} parent=161 // pred_check_branch
              %1021 = sbr.rel target = $region166
            $region165: #{custom-call.38} parent=161 // pred_region
              // Predicated region
              $region178: #{custom-call.38} parent=165 // pred_check
                _
              $region179: #{custom-call.38} parent=165 // pred_check_branch
                %1036 = sbr.rel (0) target = $region181
              $region180: #{custom-call.38} parent=165 // pred_region
                loop: start=0, step=1, limit=1
                $region182: #{custom-call.38} parent=180 // loop_pre_header
                  _
                $region183: #{custom-call.38} parent=180 // loop_header
                  %s1039 = sphi 0, %s1043
                  %p1040 = scmp.ge.s32.totalorder %s1039, 1
                  %s1044 = sphi %s991, %s991
                  %s1045 = sphi %s1017, %s1017
                $region184: #{custom-call.38} parent=180 // loop_header_branch
                  %1042 = sbr.rel (%p1040) target = $region188
                $region185: #{custom-call.38} parent=180 // loop_body
                  %v1046 = vld [vmem:[%s1044] sm:$0x3]
                  %1047 = vst [vmem:[%s1045] sm:$0x3] %v1046
                $region186: #{custom-call.38} parent=180 // loop_footer
                  %s1043 = sadd.s32 1, %s1039
                $region187: #{custom-call.38} parent=180 // loop_footer_branch
                  %1038 = sbr.rel target = $region183
                $region188: #{custom-call.38} parent=180 // loop_exit
                  _
              $region181: #{custom-call.38} parent=165 // pred_fallthru
                _
            $region166: #{custom-call.38} parent=161 // pred_fallthru
              _
            // Predicated region
            $region167: #{custom-call.38} parent=161 // pred_check
              _
            $region168: #{custom-call.38} parent=161 // pred_check_branch
              %1023 = sbr.rel (0) target = $region170
            $region169: #{custom-call.38} parent=161 // pred_region
              loop: start=0, step=1, limit=1
              $region171: #{custom-call.38} parent=169 // loop_pre_header
                _
              $region172: #{custom-call.38} parent=169 // loop_header
                %s1026 = sphi 0, %s1030
                %p1027 = scmp.ge.s32.totalorder %s1026, 1
                %s1031 = sphi %s991, %s991
                %s1032 = sphi %s1017, %s1017
              $region173: #{custom-call.38} parent=169 // loop_header_branch
                %1029 = sbr.rel (%p1027) target = $region177
              $region174: #{custom-call.38} parent=169 // loop_body
                %v1033 = vld [vmem:[%s1031] sm:$0x3]
                %1034 = vst [vmem:[%s1032] sm:$0x3] %v1033
              $region175: #{custom-call.38} parent=169 // loop_footer
                %s1030 = sadd.s32 1, %s1026
              $region176: #{custom-call.38} parent=169 // loop_footer_branch
                %1025 = sbr.rel target = $region172
              $region177: #{custom-call.38} parent=169 // loop_exit
                _
            $region170: #{custom-call.38} parent=161 // pred_fallthru
              _
          $region162: #{custom-call.38} parent=157 // pred_fallthru
            _
          %1048 = vnop
        $region158: #{custom-call.38} parent=139 // pred_fallthru
          _
        // Predicated region
        $region189: #{custom-call.38} parent=139 // pred_check
          %p1049 = pneg %p65
        $region190: #{custom-call.38} parent=139 // pred_check_branch
          %1051 = sbr.rel (%p1049) target = $region192
        $region191: #{custom-call.38} parent=139 // pred_region
          %s1052 = sshrl.u32 %s17, 3
          %s1053 = smul.addr %s1052, 2
          %s1054 = scalar_lea.vmem %s5, %s1053
          // Predicated region
          $region193: #{custom-call.38} parent=191 // pred_check
            _
          $region194: #{custom-call.38} parent=191 // pred_check_branch
            %1056 = sbr.rel (0) target = $region196
          $region195: #{custom-call.38} parent=191 // pred_region
            // Predicated region
            $region197: #{custom-call.38} parent=195 // pred_check
              _
            $region198: #{custom-call.38} parent=195 // pred_check_branch
              %1058 = sbr.rel target = $region200
            $region199: #{custom-call.38} parent=195 // pred_region
              // Predicated region
              $region212: #{custom-call.38} parent=199 // pred_check
                _
              $region213: #{custom-call.38} parent=199 // pred_check_branch
                %1073 = sbr.rel (0) target = $region215
              $region214: #{custom-call.38} parent=199 // pred_region
                loop: start=0, step=1, limit=1
                $region216: #{custom-call.38} parent=214 // loop_pre_header
                  _
                $region217: #{custom-call.38} parent=214 // loop_header
                  %s1076 = sphi 0, %s1080
                  %p1077 = scmp.ge.s32.totalorder %s1076, 1
                  %s1081 = sphi %s995, %s995
                  %s1082 = sphi %s1054, %s1054
                $region218: #{custom-call.38} parent=214 // loop_header_branch
                  %1079 = sbr.rel (%p1077) target = $region222
                $region219: #{custom-call.38} parent=214 // loop_body
                  %v1083 = vld [vmem:[%s1081] sm:$0x3]
                  %1084 = vst [vmem:[%s1082] sm:$0x3] %v1083
                $region220: #{custom-call.38} parent=214 // loop_footer
                  %s1080 = sadd.s32 1, %s1076
                $region221: #{custom-call.38} parent=214 // loop_footer_branch
                  %1075 = sbr.rel target = $region217
                $region222: #{custom-call.38} parent=214 // loop_exit
                  _
              $region215: #{custom-call.38} parent=199 // pred_fallthru
                _
            $region200: #{custom-call.38} parent=195 // pred_fallthru
              _
            // Predicated region
            $region201: #{custom-call.38} parent=195 // pred_check
              _
            $region202: #{custom-call.38} parent=195 // pred_check_branch
              %1060 = sbr.rel (0) target = $region204
            $region203: #{custom-call.38} parent=195 // pred_region
              loop: start=0, step=1, limit=1
              $region205: #{custom-call.38} parent=203 // loop_pre_header
                _
              $region206: #{custom-call.38} parent=203 // loop_header
                %s1063 = sphi 0, %s1067
                %p1064 = scmp.ge.s32.totalorder %s1063, 1
                %s1068 = sphi %s995, %s995
                %s1069 = sphi %s1054, %s1054
              $region207: #{custom-call.38} parent=203 // loop_header_branch
                %1066 = sbr.rel (%p1064) target = $region211
              $region208: #{custom-call.38} parent=203 // loop_body
                %v1070 = vld [vmem:[%s1068] sm:$0x3]
                %1071 = vst [vmem:[%s1069] sm:$0x3] %v1070
              $region209: #{custom-call.38} parent=203 // loop_footer
                %s1067 = sadd.s32 1, %s1063
              $region210: #{custom-call.38} parent=203 // loop_footer_branch
                %1062 = sbr.rel target = $region206
              $region211: #{custom-call.38} parent=203 // loop_exit
                _
            $region204: #{custom-call.38} parent=195 // pred_fallthru
              _
          $region196: #{custom-call.38} parent=191 // pred_fallthru
            _
          %1085 = vnop
        $region192: #{custom-call.38} parent=139 // pred_fallthru
          _
        %s1086 = smul.addr %s17, 2
        %s1087 = scalar_lea.vmem %s6, %s1086
        // Predicated region
        $region223: #{custom-call.38} parent=139 // pred_check
          _
        $region224: #{custom-call.38} parent=139 // pred_check_branch
          %1089 = sbr.rel (0) target = $region226
        $region225: #{custom-call.38} parent=139 // pred_region
          // Predicated region
          $region227: #{custom-call.38} parent=225 // pred_check
            _
          $region228: #{custom-call.38} parent=225 // pred_check_branch
            %1091 = sbr.rel target = $region230
          $region229: #{custom-call.38} parent=225 // pred_region
            // Predicated region
            $region242: #{custom-call.38} parent=229 // pred_check
              _
            $region243: #{custom-call.38} parent=229 // pred_check_branch
              %1106 = sbr.rel (0) target = $region245
            $region244: #{custom-call.38} parent=229 // pred_region
              loop: start=0, step=1, limit=1
              $region246: #{custom-call.38} parent=244 // loop_pre_header
                _
              $region247: #{custom-call.38} parent=244 // loop_header
                %s1109 = sphi 0, %s1113
                %p1110 = scmp.ge.s32.totalorder %s1109, 1
                %s1114 = sphi %s999, %s999
                %s1115 = sphi %s1087, %s1087
              $region248: #{custom-call.38} parent=244 // loop_header_branch
                %1112 = sbr.rel (%p1110) target = $region252
              $region249: #{custom-call.38} parent=244 // loop_body
                %v1116 = vld [vmem:[%s1114] sm:$0x3]
                %1117 = vst [vmem:[%s1115] sm:$0x3] %v1116
              $region250: #{custom-call.38} parent=244 // loop_footer
                %s1113 = sadd.s32 1, %s1109
              $region251: #{custom-call.38} parent=244 // loop_footer_branch
                %1108 = sbr.rel target = $region247
              $region252: #{custom-call.38} parent=244 // loop_exit
                _
            $region245: #{custom-call.38} parent=229 // pred_fallthru
              _
          $region230: #{custom-call.38} parent=225 // pred_fallthru
            _
          // Predicated region
          $region231: #{custom-call.38} parent=225 // pred_check
            _
          $region232: #{custom-call.38} parent=225 // pred_check_branch
            %1093 = sbr.rel (0) target = $region234
          $region233: #{custom-call.38} parent=225 // pred_region
            loop: start=0, step=1, limit=1
            $region235: #{custom-call.38} parent=233 // loop_pre_header
              _
            $region236: #{custom-call.38} parent=233 // loop_header
              %s1096 = sphi 0, %s1100
              %p1097 = scmp.ge.s32.totalorder %s1096, 1
              %s1101 = sphi %s999, %s999
              %s1102 = sphi %s1087, %s1087
            $region237: #{custom-call.38} parent=233 // loop_header_branch
              %1099 = sbr.rel (%p1097) target = $region241
            $region238: #{custom-call.38} parent=233 // loop_body
              %v1103 = vld [vmem:[%s1101] sm:$0x3]
              %1104 = vst [vmem:[%s1102] sm:$0x3] %v1103
            $region239: #{custom-call.38} parent=233 // loop_footer
              %s1100 = sadd.s32 1, %s1096
            $region240: #{custom-call.38} parent=233 // loop_footer_branch
              %1095 = sbr.rel target = $region236
            $region241: #{custom-call.38} parent=233 // loop_exit
              _
          $region234: #{custom-call.38} parent=225 // pred_fallthru
            _
        $region226: #{custom-call.38} parent=139 // pred_fallthru
          _
        %1118 = vnop
        %s1119 = smul.addr %s17, 2
        %s1120 = scalar_lea.vmem %s7, %s1119
        // Predicated region
        $region253: #{custom-call.38} parent=139 // pred_check
          _
        $region254: #{custom-call.38} parent=139 // pred_check_branch
          %1122 = sbr.rel (0) target = $region256
        $region255: #{custom-call.38} parent=139 // pred_region
          // Predicated region
          $region257: #{custom-call.38} parent=255 // pred_check
            _
          $region258: #{custom-call.38} parent=255 // pred_check_branch
            %1124 = sbr.rel target = $region260
          $region259: #{custom-call.38} parent=255 // pred_region
            // Predicated region
            $region272: #{custom-call.38} parent=259 // pred_check
              _
            $region273: #{custom-call.38} parent=259 // pred_check_branch
              %1139 = sbr.rel (0) target = $region275
            $region274: #{custom-call.38} parent=259 // pred_region
              loop: start=0, step=1, limit=1
              $region276: #{custom-call.38} parent=274 // loop_pre_header
                _
              $region277: #{custom-call.38} parent=274 // loop_header
                %s1142 = sphi 0, %s1146
                %p1143 = scmp.ge.s32.totalorder %s1142, 1
                %s1147 = sphi %s1003, %s1003
                %s1148 = sphi %s1120, %s1120
              $region278: #{custom-call.38} parent=274 // loop_header_branch
                %1145 = sbr.rel (%p1143) target = $region282
              $region279: #{custom-call.38} parent=274 // loop_body
                %v1149 = vld [vmem:[%s1147] sm:$0x3]
                %1150 = vst [vmem:[%s1148] sm:$0x3] %v1149
              $region280: #{custom-call.38} parent=274 // loop_footer
                %s1146 = sadd.s32 1, %s1142
              $region281: #{custom-call.38} parent=274 // loop_footer_branch
                %1141 = sbr.rel target = $region277
              $region282: #{custom-call.38} parent=274 // loop_exit
                _
            $region275: #{custom-call.38} parent=259 // pred_fallthru
              _
          $region260: #{custom-call.38} parent=255 // pred_fallthru
            _
          // Predicated region
          $region261: #{custom-call.38} parent=255 // pred_check
            _
          $region262: #{custom-call.38} parent=255 // pred_check_branch
            %1126 = sbr.rel (0) target = $region264
          $region263: #{custom-call.38} parent=255 // pred_region
            loop: start=0, step=1, limit=1
            $region265: #{custom-call.38} parent=263 // loop_pre_header
              _
            $region266: #{custom-call.38} parent=263 // loop_header
              %s1129 = sphi 0, %s1133
              %p1130 = scmp.ge.s32.totalorder %s1129, 1
              %s1134 = sphi %s1003, %s1003
              %s1135 = sphi %s1120, %s1120
            $region267: #{custom-call.38} parent=263 // loop_header_branch
              %1132 = sbr.rel (%p1130) target = $region271
            $region268: #{custom-call.38} parent=263 // loop_body
              %v1136 = vld [vmem:[%s1134] sm:$0x3]
              %1137 = vst [vmem:[%s1135] sm:$0x3] %v1136
            $region269: #{custom-call.38} parent=263 // loop_footer
              %s1133 = sadd.s32 1, %s1129
            $region270: #{custom-call.38} parent=263 // loop_footer_branch
              %1128 = sbr.rel target = $region266
            $region271: #{custom-call.38} parent=263 // loop_exit
              _
          $region264: #{custom-call.38} parent=255 // pred_fallthru
            _
        $region256: #{custom-call.38} parent=139 // pred_fallthru
          _
        %1151 = vnop
        %s1152 = smul.addr %s17, 2
        %s1153 = scalar_lea.vmem %s8, %s1152
        // Predicated region
        $region283: #{custom-call.38} parent=139 // pred_check
          _
        $region284: #{custom-call.38} parent=139 // pred_check_branch
          %1155 = sbr.rel (0) target = $region286
        $region285: #{custom-call.38} parent=139 // pred_region
          // Predicated region
          $region287: #{custom-call.38} parent=285 // pred_check
            _
          $region288: #{custom-call.38} parent=285 // pred_check_branch
            %1157 = sbr.rel target = $region290
          $region289: #{custom-call.38} parent=285 // pred_region
            // Predicated region
            $region302: #{custom-call.38} parent=289 // pred_check
              _
            $region303: #{custom-call.38} parent=289 // pred_check_branch
              %1172 = sbr.rel (0) target = $region305
            $region304: #{custom-call.38} parent=289 // pred_region
              loop: start=0, step=1, limit=1
              $region306: #{custom-call.38} parent=304 // loop_pre_header
                _
              $region307: #{custom-call.38} parent=304 // loop_header
                %s1175 = sphi 0, %s1179
                %p1176 = scmp.ge.s32.totalorder %s1175, 1
                %s1180 = sphi %s1007, %s1007
                %s1181 = sphi %s1153, %s1153
              $region308: #{custom-call.38} parent=304 // loop_header_branch
                %1178 = sbr.rel (%p1176) target = $region312
              $region309: #{custom-call.38} parent=304 // loop_body
                %v1182 = vld [vmem:[%s1180] sm:$0x3]
                %1183 = vst [vmem:[%s1181] sm:$0x3] %v1182
              $region310: #{custom-call.38} parent=304 // loop_footer
                %s1179 = sadd.s32 1, %s1175
              $region311: #{custom-call.38} parent=304 // loop_footer_branch
                %1174 = sbr.rel target = $region307
              $region312: #{custom-call.38} parent=304 // loop_exit
                _
            $region305: #{custom-call.38} parent=289 // pred_fallthru
              _
          $region290: #{custom-call.38} parent=285 // pred_fallthru
            _
          // Predicated region
          $region291: #{custom-call.38} parent=285 // pred_check
            _
          $region292: #{custom-call.38} parent=285 // pred_check_branch
            %1159 = sbr.rel (0) target = $region294
          $region293: #{custom-call.38} parent=285 // pred_region
            loop: start=0, step=1, limit=1
            $region295: #{custom-call.38} parent=293 // loop_pre_header
              _
            $region296: #{custom-call.38} parent=293 // loop_header
              %s1162 = sphi 0, %s1166
              %p1163 = scmp.ge.s32.totalorder %s1162, 1
              %s1167 = sphi %s1007, %s1007
              %s1168 = sphi %s1153, %s1153
            $region297: #{custom-call.38} parent=293 // loop_header_branch
              %1165 = sbr.rel (%p1163) target = $region301
            $region298: #{custom-call.38} parent=293 // loop_body
              %v1169 = vld [vmem:[%s1167] sm:$0x3]
              %1170 = vst [vmem:[%s1168] sm:$0x3] %v1169
            $region299: #{custom-call.38} parent=293 // loop_footer
              %s1166 = sadd.s32 1, %s1162
            $region300: #{custom-call.38} parent=293 // loop_footer_branch
              %1161 = sbr.rel target = $region296
            $region301: #{custom-call.38} parent=293 // loop_exit
              _
          $region294: #{custom-call.38} parent=285 // pred_fallthru
            _
        $region286: #{custom-call.38} parent=139 // pred_fallthru
          _
        %1184 = vnop
        %s1185 = smul.addr %s17, 2
        %s1186 = scalar_lea.vmem %s9, %s1185
        // Predicated region
        $region313: #{custom-call.38} parent=139 // pred_check
          _
        $region314: #{custom-call.38} parent=139 // pred_check_branch
          %1188 = sbr.rel (0) target = $region316
        $region315: #{custom-call.38} parent=139 // pred_region
          // Predicated region
          $region317: #{custom-call.38} parent=315 // pred_check
            _
          $region318: #{custom-call.38} parent=315 // pred_check_branch
            %1190 = sbr.rel target = $region320
          $region319: #{custom-call.38} parent=315 // pred_region
            // Predicated region
            $region332: #{custom-call.38} parent=319 // pred_check
              _
            $region333: #{custom-call.38} parent=319 // pred_check_branch
              %1205 = sbr.rel (0) target = $region335
            $region334: #{custom-call.38} parent=319 // pred_region
              loop: start=0, step=1, limit=1
              $region336: #{custom-call.38} parent=334 // loop_pre_header
                _
              $region337: #{custom-call.38} parent=334 // loop_header
                %s1208 = sphi 0, %s1212
                %p1209 = scmp.ge.s32.totalorder %s1208, 1
                %s1213 = sphi %s1011, %s1011
                %s1214 = sphi %s1186, %s1186
              $region338: #{custom-call.38} parent=334 // loop_header_branch
                %1211 = sbr.rel (%p1209) target = $region342
              $region339: #{custom-call.38} parent=334 // loop_body
                %v1215 = vld [vmem:[%s1213] sm:$0x3]
                %1216 = vst [vmem:[%s1214] sm:$0x3] %v1215
              $region340: #{custom-call.38} parent=334 // loop_footer
                %s1212 = sadd.s32 1, %s1208
              $region341: #{custom-call.38} parent=334 // loop_footer_branch
                %1207 = sbr.rel target = $region337
              $region342: #{custom-call.38} parent=334 // loop_exit
                _
            $region335: #{custom-call.38} parent=319 // pred_fallthru
              _
          $region320: #{custom-call.38} parent=315 // pred_fallthru
            _
          // Predicated region
          $region321: #{custom-call.38} parent=315 // pred_check
            _
          $region322: #{custom-call.38} parent=315 // pred_check_branch
            %1192 = sbr.rel (0) target = $region324
          $region323: #{custom-call.38} parent=315 // pred_region
            loop: start=0, step=1, limit=1
            $region325: #{custom-call.38} parent=323 // loop_pre_header
              _
            $region326: #{custom-call.38} parent=323 // loop_header
              %s1195 = sphi 0, %s1199
              %p1196 = scmp.ge.s32.totalorder %s1195, 1
              %s1200 = sphi %s1011, %s1011
              %s1201 = sphi %s1186, %s1186
            $region327: #{custom-call.38} parent=323 // loop_header_branch
              %1198 = sbr.rel (%p1196) target = $region331
            $region328: #{custom-call.38} parent=323 // loop_body
              %v1202 = vld [vmem:[%s1200] sm:$0x3]
              %1203 = vst [vmem:[%s1201] sm:$0x3] %v1202
            $region329: #{custom-call.38} parent=323 // loop_footer
              %s1199 = sadd.s32 1, %s1195
            $region330: #{custom-call.38} parent=323 // loop_footer_branch
              %1194 = sbr.rel target = $region326
            $region331: #{custom-call.38} parent=323 // loop_exit
              _
          $region324: #{custom-call.38} parent=315 // pred_fallthru
            _
        $region316: #{custom-call.38} parent=139 // pred_fallthru
          _
        %1217 = vnop
      $region140: #{custom-call.38} parent=5 // pred_fallthru
        _
      %p1218 = scmp.le.s32.totalorder 2, %s12
      // Predicated region
      $region343: #{custom-call.38} parent=5 // pred_check
        %p1219 = pneg %p1218
      $region344: #{custom-call.38} parent=5 // pred_check_branch
        %1221 = sbr.rel (%p1219) target = $region346
      $region345: #{custom-call.38} parent=5 // pred_region
        %s1222 = ssub.s32 %s12, 2
        // Predicated region
        $region347: #{custom-call.38} parent=345 // pred_check
          %p1223 = pneg %p43
        $region348: #{custom-call.38} parent=345 // pred_check_branch
          %1225 = sbr.rel (%p1223) target = $region350
        $region349: #{custom-call.38} parent=345 // pred_region
          %s1226 = sand.u32 %s28, 1
          %s1227 = sand.u32 %s28, 1
          %s1228 = smul.addr %s1227, 2
          %s1229 = scalar_lea.vmem [#allocation9], %s1228
        $region350: #{custom-call.38} parent=345 // pred_fallthru
          _
        // Predicated region
        $region351: #{custom-call.38} parent=345 // pred_check
          %p1230 = pneg %p71
        $region352: #{custom-call.38} parent=345 // pred_check_branch
          %1232 = sbr.rel (%p1230) target = $region354
        $region353: #{custom-call.38} parent=345 // pred_region
          %s1233 = sand.u32 %s56, 1
          %s1234 = sand.u32 %s56, 1
          %s1235 = smul.addr %s1234, 2
          %s1236 = scalar_lea.vmem [#allocation11], %s1235
        $region354: #{custom-call.38} parent=345 // pred_fallthru
          _
        %s1237 = sand.u32 %s18, 1
        %s1238 = sand.u32 %s18, 1
        %s1239 = smul.addr %s1238, 2
        %s1240 = scalar_lea.vmem [#allocation13], %s1239
        %s1241 = sand.u32 %s18, 1
        %s1242 = sand.u32 %s18, 1
        %s1243 = smul.addr %s1242, 2
        %s1244 = scalar_lea.vmem [#allocation15], %s1243
        %s1245 = sand.u32 %s18, 1
        %s1246 = sand.u32 %s18, 1
        %s1247 = smul.addr %s1246, 2
        %s1248 = scalar_lea.vmem [#allocation17], %s1247
        %s1249 = sand.u32 %s18, 1
        %s1250 = sand.u32 %s18, 1
        %s1251 = smul.addr %s1250, 2
        %s1252 = scalar_lea.vmem [#allocation19], %s1251
      $region346: #{custom-call.38} parent=5 // pred_fallthru
        _
    $region6: #{custom-call.38} parent=1 // loop_footer
      %s16 = sadd.s32 1, %s12
    $region7: #{custom-call.38} parent=1 // loop_footer_branch
      %11 = sbr.rel target = $region3
    $region8: #{custom-call.38} parent=1 // loop_exit
      _

// kernel: reverse
$region0: #{reverse}
  %s0 = inlined_call_operand.vmem [shape: f32[2,3], index: 0, kind: input, shape index: {}]
  %s1 = inlined_call_operand.vmem [shape: f32[2,3], index: 1, kind: output, shape index: {}]
  %v2 = vlaneseq
  %v3 = vsub.s32 2, %v2
  %4 = vset.pattern.permute.xlu0 %v3
  $region1: #{reverse} parent=0
    #allocation0 [shape = 'u8[4096]{0}', space=vmem, size = 0x1000, scoped, tag = 'operand span for operand 0']
    #allocation1 [shape = 'u8[1024]{0}', space=vmem, size = 0x400, scoped, tag = 'packed  for operand 0']
    #allocation2 [shape = 'u8[4096]{0}', space=vmem, size = 0x1000, scoped, tag = 'operand span for operand 1']
    #allocation3 [shape = 'u8[1024]{0}', space=vmem, size = 0x400, scoped, tag = 'packed  for operand 1']
    // Predicated region
    $region2: #{reverse} parent=1 // pred_check
      _
    $region3: #{reverse} parent=1 // pred_check_branch
      %6 = sbr.rel (0) target = $region5
    $region4: #{reverse} parent=1 // pred_region
      // Predicated region
      $region6: #{reverse} parent=4 // pred_check
        _
      $region7: #{reverse} parent=4 // pred_check_branch
        %8 = sbr.rel target = $region9
      $region8: #{reverse} parent=4 // pred_region
        // Predicated region
        $region21: #{reverse} parent=8 // pred_check
          _
        $region22: #{reverse} parent=8 // pred_check_branch
          %23 = sbr.rel (0) target = $region24
        $region23: #{reverse} parent=8 // pred_region
          loop: start=0, step=1, limit=1
          $region25: #{reverse} parent=23 // loop_pre_header
            _
          $region26: #{reverse} parent=23 // loop_header
            %s26 = sphi 0, %s30
            %p27 = scmp.ge.s32.totalorder %s26, 1
            %s31 = sphi %s0, %s0
            %s32 = sphi [#allocation1], [#allocation1]
          $region27: #{reverse} parent=23 // loop_header_branch
            %29 = sbr.rel (%p27) target = $region31
          $region28: #{reverse} parent=23 // loop_body
            %v33 = vld [vmem:[%s31] sm:$0x3]
            %34 = vst [vmem:[%s32] sm:$0x3] %v33
          $region29: #{reverse} parent=23 // loop_footer
            %s30 = sadd.s32 1, %s26
          $region30: #{reverse} parent=23 // loop_footer_branch
            %25 = sbr.rel target = $region26
          $region31: #{reverse} parent=23 // loop_exit
            _
        $region24: #{reverse} parent=8 // pred_fallthru
          _
      $region9: #{reverse} parent=4 // pred_fallthru
        _
      // Predicated region
      $region10: #{reverse} parent=4 // pred_check
        _
      $region11: #{reverse} parent=4 // pred_check_branch
        %10 = sbr.rel (0) target = $region13
      $region12: #{reverse} parent=4 // pred_region
        loop: start=0, step=1, limit=1
        $region14: #{reverse} parent=12 // loop_pre_header
          _
        $region15: #{reverse} parent=12 // loop_header
          %s13 = sphi 0, %s17
          %p14 = scmp.ge.s32.totalorder %s13, 1
          %s18 = sphi %s0, %s0
          %s19 = sphi [#allocation1], [#allocation1]
        $region16: #{reverse} parent=12 // loop_header_branch
          %16 = sbr.rel (%p14) target = $region20
        $region17: #{reverse} parent=12 // loop_body
          %v20 = vld [vmem:[%s18] sm:$0x3]
          %21 = vst [vmem:[%s19] sm:$0x3] %v20
        $region18: #{reverse} parent=12 // loop_footer
          %s17 = sadd.s32 1, %s13
        $region19: #{reverse} parent=12 // loop_footer_branch
          %12 = sbr.rel target = $region15
        $region20: #{reverse} parent=12 // loop_exit
          _
      $region13: #{reverse} parent=4 // pred_fallthru
        _
    $region5: #{reverse} parent=1 // pred_fallthru
      _
    %35 = vnop
    %s37 = sshllo.u32 0, 2
    %v38 = vld [vmem:[#allocation1] sm:%s37]
    %39 = vst [vmem:[#allocation0] sm:%s37] %v38
    %v40 = vld [vmem:[#allocation0] sm:$0xff]
    %41 = vperm.xlu0 %4, %v40
    %v42 = vpop.permute.xlu0 %41
    %43 = vst [vmem:[#allocation2] sm:$0xff] %v42
    %s45 = sshllo.u32 0, 2
    %v47 = vld [vmem:[#allocation2] sm:%s45]
    %s48 = sshllo.u32 0, 2
    %49 = vst [vmem:[#allocation3] sm:%s48] %v47
    // Predicated region
    $region32: #{reverse} parent=1 // pred_check
      _
    $region33: #{reverse} parent=1 // pred_check_branch
      %51 = sbr.rel (0) target = $region35
    $region34: #{reverse} parent=1 // pred_region
      // Predicated region
      $region36: #{reverse} parent=34 // pred_check
        _
      $region37: #{reverse} parent=34 // pred_check_branch
        %53 = sbr.rel target = $region39
      $region38: #{reverse} parent=34 // pred_region
        // Predicated region
        $region51: #{reverse} parent=38 // pred_check
          _
        $region52: #{reverse} parent=38 // pred_check_branch
          %68 = sbr.rel (0) target = $region54
        $region53: #{reverse} parent=38 // pred_region
          loop: start=0, step=1, limit=1
          $region55: #{reverse} parent=53 // loop_pre_header
            _
          $region56: #{reverse} parent=53 // loop_header
            %s71 = sphi 0, %s75
            %p72 = scmp.ge.s32.totalorder %s71, 1
            %s76 = sphi [#allocation3], [#allocation3]
            %s77 = sphi %s1, %s1
          $region57: #{reverse} parent=53 // loop_header_branch
            %74 = sbr.rel (%p72) target = $region61
          $region58: #{reverse} parent=53 // loop_body
            %v78 = vld [vmem:[%s76] sm:$0x3]
            %79 = vst [vmem:[%s77] sm:$0x3] %v78
          $region59: #{reverse} parent=53 // loop_footer
            %s75 = sadd.s32 1, %s71
          $region60: #{reverse} parent=53 // loop_footer_branch
            %70 = sbr.rel target = $region56
          $region61: #{reverse} parent=53 // loop_exit
            _
        $region54: #{reverse} parent=38 // pred_fallthru
          _
      $region39: #{reverse} parent=34 // pred_fallthru
        _
      // Predicated region
      $region40: #{reverse} parent=34 // pred_check
        _
      $region41: #{reverse} parent=34 // pred_check_branch
        %55 = sbr.rel (0) target = $region43
      $region42: #{reverse} parent=34 // pred_region
        loop: start=0, step=1, limit=1
        $region44: #{reverse} parent=42 // loop_pre_header
          _
        $region45: #{reverse} parent=42 // loop_header
          %s58 = sphi 0, %s62
          %p59 = scmp.ge.s32.totalorder %s58, 1
          %s63 = sphi [#allocation3], [#allocation3]
          %s64 = sphi %s1, %s1
        $region46: #{reverse} parent=42 // loop_header_branch
          %61 = sbr.rel (%p59) target = $region50
        $region47: #{reverse} parent=42 // loop_body
          %v65 = vld [vmem:[%s63] sm:$0x3]
          %66 = vst [vmem:[%s64] sm:$0x3] %v65
        $region48: #{reverse} parent=42 // loop_footer
          %s62 = sadd.s32 1, %s58
        $region49: #{reverse} parent=42 // loop_footer_branch
          %57 = sbr.rel target = $region45
        $region50: #{reverse} parent=42 // loop_exit
          _
      $region43: #{reverse} parent=34 // pred_fallthru
        _
    $region35: #{reverse} parent=1 // pred_fallthru
      _
    %80 = vnop

// kernel: custom-call.19
$region0: #{custom-call.19}
  %s0 = inlined_call_operand.vmem [shape: f32[2,3,3], index: 0, kind: input, shape index: {}]
  %s1 = inlined_call_operand.vmem [shape: f32[2,3,3], index: 1, kind: output, shape index: {0}]
  %s2 = inlined_call_operand.vmem [shape: f32[2,3], index: 2, kind: output, shape index: {1}]
  %3 = xla_tuple %s1, %s2
  $region1: #{custom-call.19} parent=0
    #allocation0 [shape = 'u8[4096]{0}', space=vmem, size = 0x1000, scoped, tag = 'operand span for operand 0']
    #allocation1 [shape = 'u8[4096]{0}', space=vmem, size = 0x1000, scoped, tag = 'packed  for operand 0']
    #allocation2 [shape = 'u8[4096]{0}', space=vmem, size = 0x1000, scoped, tag = 'operand span for operand 1']
    #allocation3 [shape = 'u8[4096]{0}', space=vmem, size = 0x1000, scoped, tag = 'packed  for operand 1']
    #allocation4 [shape = 'u8[4096]{0}', space=vmem, size = 0x1000, scoped, tag = 'operand span for operand 2']
    #allocation5 [shape = 'u8[2048]{0}', space=vmem, size = 0x800, scoped, tag = 'packed  for operand 2']
    loop: start=0, step=1, limit=4
    $region2: #{custom-call.19} parent=1 // loop_pre_header
      _
    $region3: #{custom-call.19} parent=1 // loop_header
      %s5 = sphi 0, %s9
      %p6 = scmp.ge.s32.totalorder %s5, 4
      %s12 = sphi 0, %s31
      %s13 = sphi 0, %s27
      %s14 = sphi 0, %s23
      %s15 = sphi 0, %s12
      %s16 = sphi 0, %s13
      %s17 = sphi 0, %s14
      %s18 = sphi 0, %s15
      %s19 = sphi 0, %s16
      %s20 = sphi 0, %s17
      %s46 = sphi 0, %s48
      %s49 = sphi 0, %s46
      %s50 = sphi 0, %s49
      %s66 = sphi 0, %s50
    $region4: #{custom-call.19} parent=1 // loop_header_branch
      %8 = sbr.rel (%p6) target = $region8
    $region5: #{custom-call.19} parent=1 // loop_body
      %s10 = ssub.s32 %s5, 1
      %s11 = ssub.s32 %s5, 2
      %s21 = sadd.s32 1, %s14
      %p22 = scmp.ge.s32.totalorder %s21, 1
      %s23 = scalar_select %p22, 0, %s21
      %s24 = sadd.s32 1, %s13
      %s25 = scalar_select %p22, %s24, %s13
      %p26 = scmp.ge.s32.totalorder %s25, 1
      %s27 = scalar_select %p26, 0, %s25
      %s28 = sadd.s32 1, %s12
      %s29 = scalar_select %p26, %s28, %s12
      %p30 = scmp.ge.s32.totalorder %s29, 2
      %s31 = scalar_select %p30, 0, %s29
      %p32 = scmp.lt.s32.totalorder %s12, 0
      %s33 = ssub.s32 0, %s12
      %s34 = scalar_select %p32, %s33, %s12
      %s35 = sshrl.u32 %s34, 3
      %s36 = ssub.s32 0, %s35
      %s37 = scalar_select %p32, %s36, %s35
      %p38 = scmp.lt.s32.totalorder %s31, 0
      %s39 = ssub.s32 0, %s31
      %s40 = scalar_select %p38, %s39, %s31
      %s41 = sshrl.u32 %s40, 3
      %s42 = ssub.s32 0, %s41
      %s43 = scalar_select %p38, %s42, %s41
      %s44 = ssub.s32 %s37, %s43
      %p45 = scmp.eq.s32.totalorder %s44, 0
      %s47 = sadd.s32 %s46, 1
      %s48 = scalar_select %p45, %s46, %s47
      %p51 = pneg %p45
      %p52 = scmp.eq.s32.totalorder %s5, 1
      %p53 = por %p51, %p52
      %p54 = scmp.ne.s32.totalorder %s46, %s49
      %p55 = scmp.eq.s32.totalorder %s5, 0
      %p56 = por %p54, %p55
      %p57 = scmp.ne.s32.totalorder %s46, %s49
      %p58 = scmp.eq.s32.totalorder %s10, 1
      %p59 = por %p57, %p58
      %p60 = scmp.ne.s32.totalorder %s49, %s50
      %p61 = scmp.eq.s32.totalorder %s10, 0
      %p62 = por %p60, %p61
      %p63 = scmp.ne.s32.totalorder %s49, %s50
      %p64 = scmp.eq.s32.totalorder %s11, 1
      %p65 = por %p63, %p64
      %p67 = scmp.ne.s32.totalorder %s50, %s66
      %p68 = scmp.eq.s32.totalorder %s11, 0
      %p69 = por %p67, %p68
      %p70 = scmp.le.s32.totalorder 1, %s5
      %p71 = scmp.lt.s32.totalorder %s5, 3
      %p72 = pnand %p70, %p71
      %p73 = pneg %p72
      // Predicated region
      $region9: #{custom-call.19} parent=5 // pred_check
        _
      $region10: #{custom-call.19} parent=5 // pred_check_branch
        %75 = sbr.rel (%p72) target = $region12
      $region11: #{custom-call.19} parent=5 // pred_region
        %s76 = ssub.s32 %s5, 1
      $region12: #{custom-call.19} parent=5 // pred_fallthru
        _
      %p77 = scmp.lt.s32.totalorder %s5, 2
      // Predicated region
      $region13: #{custom-call.19} parent=5 // pred_check
        %p78 = pneg %p77
      $region14: #{custom-call.19} parent=5 // pred_check_branch
        %80 = sbr.rel (%p78) target = $region16
      $region15: #{custom-call.19} parent=5 // pred_region
        %s81 = sand.u32 %s5, 1
        %s82 = sand.u32 %s5, 1
        %s83 = smul.addr %s82, 4
        %s84 = scalar_lea.vmem [#allocation1], %s83
        %s85 = sadd.s32 %s14, %s13
        %s86 = sadd.s32 %s85, %s12
        %s87 = smul.addr %s86, 4
        %s88 = scalar_lea.vmem %s0, %s87
        // Predicated region
        $region17: #{custom-call.19} parent=15 // pred_check
          _
        $region18: #{custom-call.19} parent=15 // pred_check_branch
          %90 = sbr.rel (0) target = $region20
        $region19: #{custom-call.19} parent=15 // pred_region
          // Predicated region
          $region21: #{custom-call.19} parent=19 // pred_check
            _
          $region22: #{custom-call.19} parent=19 // pred_check_branch
            %92 = sbr.rel target = $region24
          $region23: #{custom-call.19} parent=19 // pred_region
            // Predicated region
            $region36: #{custom-call.19} parent=23 // pred_check
              _
            $region37: #{custom-call.19} parent=23 // pred_check_branch
              %107 = sbr.rel (0) target = $region39
            $region38: #{custom-call.19} parent=23 // pred_region
              loop: start=0, step=1, limit=1
              $region40: #{custom-call.19} parent=38 // loop_pre_header
                _
              $region41: #{custom-call.19} parent=38 // loop_header
                %s110 = sphi 0, %s114
                %p111 = scmp.ge.s32.totalorder %s110, 1
                %s115 = sphi %s88, %s88
                %s116 = sphi %s84, %s84
              $region42: #{custom-call.19} parent=38 // loop_header_branch
                %113 = sbr.rel (%p111) target = $region46
              $region43: #{custom-call.19} parent=38 // loop_body
                %v117 = vld [vmem:[%s115] sm:$0xf]
                %118 = vst [vmem:[%s116] sm:$0xf] %v117
              $region44: #{custom-call.19} parent=38 // loop_footer
                %s114 = sadd.s32 1, %s110
              $region45: #{custom-call.19} parent=38 // loop_footer_branch
                %109 = sbr.rel target = $region41
              $region46: #{custom-call.19} parent=38 // loop_exit
                _
            $region39: #{custom-call.19} parent=23 // pred_fallthru
              _
          $region24: #{custom-call.19} parent=19 // pred_fallthru
            _
          // Predicated region
          $region25: #{custom-call.19} parent=19 // pred_check
            _
          $region26: #{custom-call.19} parent=19 // pred_check_branch
            %94 = sbr.rel (0) target = $region28
          $region27: #{custom-call.19} parent=19 // pred_region
            loop: start=0, step=1, limit=1
            $region29: #{custom-call.19} parent=27 // loop_pre_header
              _
            $region30: #{custom-call.19} parent=27 // loop_header
              %s97 = sphi 0, %s101
              %p98 = scmp.ge.s32.totalorder %s97, 1
              %s102 = sphi %s88, %s88
              %s103 = sphi %s84, %s84
            $region31: #{custom-call.19} parent=27 // loop_header_branch
              %100 = sbr.rel (%p98) target = $region35
            $region32: #{custom-call.19} parent=27 // loop_body
              %v104 = vld [vmem:[%s102] sm:$0xf]
              %105 = vst [vmem:[%s103] sm:$0xf] %v104
            $region33: #{custom-call.19} parent=27 // loop_footer
              %s101 = sadd.s32 1, %s97
            $region34: #{custom-call.19} parent=27 // loop_footer_branch
              %96 = sbr.rel target = $region30
            $region35: #{custom-call.19} parent=27 // loop_exit
              _
          $region28: #{custom-call.19} parent=19 // pred_fallthru
            _
        $region20: #{custom-call.19} parent=15 // pred_fallthru
          _
        %119 = vnop
      $region16: #{custom-call.19} parent=5 // pred_fallthru
        _
      %p120 = scmp.le.s32.totalorder 1, %s5
      %p121 = scmp.lt.s32.totalorder %s5, 3
      %p122 = pnand %p120, %p121
      %p123 = pneg %p122
      // Predicated region
      $region47: #{custom-call.19} parent=5 // pred_check
        _
      $region48: #{custom-call.19} parent=5 // pred_check_branch
        %125 = sbr.rel (%p122) target = $region50
      $region49: #{custom-call.19} parent=5 // pred_region
        #allocation6 [shape = 'f32[3,128]{1,0}', space=vmem, size = 0x1000, scoped, tag = 'scratch for Householder reflectors']
        %s126 = ssub.s32 %s5, 1
        %s127 = sand.u32 %s10, 1
        %s128 = sand.u32 %s10, 1
        %s129 = smul.addr %s128, 4
        %s130 = scalar_lea.vmem [#allocation1], %s129
        %s131 = sand.u32 %s10, 1
        %s132 = sand.u32 %s10, 1
        %s133 = smul.addr %s132, 4
        %s134 = scalar_lea.vmem [#allocation1], %s133
        %s135 = sand.u32 %s10, 1
        %s136 = sand.u32 %s10, 1
        %s137 = smul.addr %s136, 4
        %s138 = scalar_lea.vmem [#allocation3], %s137
        %p139 = pneg %p62
        %p140 = pneg %p59
        %s141 = sand.u32 %s49, 1
        %s142 = sand.u32 %s49, 1
        %s143 = smul.addr %s142, 2
        %s144 = scalar_lea.vmem [#allocation5], %s143
        %s146 = sshllo.u32 0, 4
        %v147 = vld [vmem:[%s134] sm:%s146]
        %148 = vst [vmem:[#allocation0] sm:%s146] %v147
        %p149 = scmp.lt.s32.totalorder %s15, 0
        %s150 = ssub.s32 0, %s15
        %s151 = scalar_select %p149, %s150, %s15
        %s152 = sshrl.u32 %s151, 3
        %s153 = ssub.s32 0, %s152
        %s154 = scalar_select %p149, %s153, %s152
        %s155 = sand.u32 %s15, 7
        %s156 = scalar_lea.vmem [#allocation4], %s155
        %v157 = vld [vmem:[#allocation0] sm:$0xff]
        %158 = vst [vmem:[#allocation2] sm:$0xff] %v157
        %159 = vst [vmem:[%s156] sm:$0x1] 0.0
        loop: start=0, step=1, limit=3
        $region51: #{custom-call.19} parent=49 // loop_pre_header
          _
        $region52: #{custom-call.19} parent=49 // loop_header
          %s161 = sphi 0, %s165
          %p162 = scmp.ge.s32.totalorder %s161, 3
        $region53: #{custom-call.19} parent=49 // loop_header_branch
          %164 = sbr.rel (%p162) target = $region57
        $region54: #{custom-call.19} parent=49 // loop_body
          %v166 = vld [vmem:[#allocation2] sm:$0xff]
          %v167 = vlaneseq
          %v168 = vshrl.u32 %v167, 7
          %v170 = vstv %s161
          %vm171 = vcmp.gt.s32.totalorder %v168, %v170
          %vm172 = vcmp.lt.s32.totalorder %v168, 3
          %vm173 = vmand %vm171, %vm172
          %v174 = vsel %vm173, %v166, 0.0
          %v175 = vmul.f32 %v174, %v174
          %v176 = vrot.slane %v175, 4
          %v177 = vadd.f32 %v175, %v176
          %v178 = vrot.slane %v177, 2
          %v179 = vadd.f32 %v177, %v178
          %v180 = vrot.slane %v179, 1
          %v181 = vadd.f32 %v179, %v180
          %v182 = vrsqrt.pop %v181
          %v183 = vmul.f32 %v181, %v182
          %vm184 = vcmp.eq.f32.partialorder %v181, inf
          %v185 = vsel %vm184, %v181, %v183
          %vm186 = vcmp.eq.f32.partialorder %v181, 0.0
          %v187 = vand.u32 %v181, 2147483648
          %v188 = vsel %vm186, %v187, %v185
          %vm189 = vcmp.eq.f32.partialorder %v181, 0.0
          %s190 = sshrl.u32 %s161, 3
          %s191 = sand.u32 %s161, 7
          %s192 = smul.addr %s190, 8
          %s193 = sadd.s32 %s191, %s192
          %s194 = scalar_lea.vmem [#allocation2], %s193
          %v195 = vld [vmem:[%s194] ss:$0 sm:$0xff]
          %v196 = vand.u32 2147483647, %v195
          %v197 = vmax.f32 %v196, 0.0
          %v198 = vand.u32 2147483647, %v188
          %v199 = vmax.f32 %v197, %v198
          %v200 = vrcp.pop %v199
          %v201 = vmul.f32 %v196, %v200
          %v202 = vmul.f32 %v201, %v201
          %v203 = vrcp.pop %v199
          %v204 = vmul.f32 0.0, %v203
          %v205 = vmul.f32 %v204, %v204
          %v206 = vadd.f32 %v202, %v205
          %v207 = vrcp.pop %v199
          %v208 = vmul.f32 %v198, %v207
          %v209 = vmul.f32 %v208, %v208
          %v210 = vadd.f32 %v206, %v209
          %vm211 = vcmp.eq.f32.partialorder %v199, 0.0
          %v212 = vrsqrt.pop %v210
          %v213 = vmul.f32 %v210, %v212
          %vm214 = vcmp.eq.f32.partialorder %v210, inf
          %v215 = vsel %vm214, %v210, %v213
          %vm216 = vcmp.eq.f32.partialorder %v210, 0.0
          %v217 = vand.u32 %v210, 2147483648
          %v218 = vsel %vm216, %v217, %v215
          %v219 = vmul.f32 %v199, %v218
          %v220 = vsel %vm211, 0.0, %v219
          %vm221 = vcmp.lt.f32.partialorder %v195, 0.0
          %v222 = vxor.u32 %v220, 2147483648
          %v223 = vsel %vm221, %v220, %v222
          %v224 = vsub.f32 %v223, %v195
          %v225 = vrcp.pop %v223
          %v226 = vmul.f32 %v224, %v225
          %v227 = vsel %vm189, %v195, %v223
          %v228 = vsel %vm189, 0.0, %v226
          %v229 = vsub.f32 %v195, %v227
          %s230 = smov [#allocation2]
          %v231 = vlaneseq
          %v232 = vshrl.u32 %v231, 7
          %v233 = vmov %v232
          %v234 = vld [vmem:[%s230] sm:$0xff]
          %v236 = vstv %s161
          %vm237 = vcmp.gt.s32.totalorder %v233, %v236
          %vm238 = vcmp.lt.s32.totalorder %v233, 3
          %vm239 = vmand %vm237, %vm238
          %v240 = vsel %vm239, %v234, 0.0
          %v241 = vrcp.pop %v229
          %v242 = vmul.f32 %v240, %v241
          %v243 = vsel %vm189, 0.0, %v242
          %v244 = vstv %s161
          %v245 = vlaneseq
          %v246 = vand.u32 %v245, 127
          %vm247 = vcmp.eq.s32.totalorder %v246, %v244
          %v248 = vsel %vm247, %v243, 0.0
          %249 = vadd.xlane.f32.xlu0 %v248
          %v250 = vpop.xlane.xlu0 %249
          %251 = vst [vmem:[#allocation6] sm:$0xff] %v250
          %s252 = scalar_lea.vmem [#allocation6], %s161
          %253 = vst [vmem:[%s252] sm:$0x1] 1.0
          %v254 = vstv %s161
          %v255 = vlaneseq
          %v256 = vand.u32 %v255, 127
          %vm257 = vcmp.eq.s32.totalorder %v256, %v254
          %v258 = vsel %vm257, %v228, 0.0
          %259 = vadd.xlane.f32.xlu0 %v258
          %v260 = vpop.xlane.xlu0 %259
          %v261 = vstv %s161
          %v262 = vlaneseq
          %v263 = vand.u32 %v262, 127
          %vm264 = vcmp.eq.s32.totalorder %v263, %v261
          %v265 = vld [vmem:[%s156] ss:$0 sm:$0xff]
          %v266 = vsel %vm264, %v260, %v265
          %267 = vst [vmem:[%s156] sm:$0x1] %v266
          %s268 = smov [#allocation2]
          %s269 = smov [#allocation6]
          %v270 = vlaneseq
          %v271 = vshrl.u32 %v270, 7
          %v272 = vmov %v271
          %v274 = vld [vmem:[%s269] sm:$0xff]
          %v275 = vld [vmem:[%s268] sm:$0xff]
          %v276 = vmul.f32 %v274, %v275
          %vm277 = vcmp.lt.s32.totalorder %v272, 3
          %v278 = vsel %vm277, %v276, 0.0
          %v279 = vrot.slane %v278, 4
          %v280 = vadd.f32 %v278, %v279
          %v281 = vrot.slane %v280, 2
          %v282 = vadd.f32 %v280, %v281
          %v283 = vrot.slane %v282, 1
          %v284 = vadd.f32 %v282, %v283
          %s285 = smov %s268
          %s286 = smov %s269
          %v287 = vlaneseq
          %v288 = vshrl.u32 %v287, 7
          %v289 = vmov %v288
          %v290 = vmul.f32 %v284, %v260
          %v292 = vlaneseq
          %v293 = vand.u32 %v292, 127
          %v294 = vld [vmem:[%s286] sm:$0xff]
          %v295 = vmul.f32 %v294, %v290
          %v296 = vld [vmem:[%s285] sm:$0xff]
          %v297 = vstv %s161
          %vm298 = vcmp.gt.s32.totalorder %v293, %v297
          %v299 = vsub.f32 %v296, %v295
          %v300 = vsel %vm298, %v299, %v296
          %v301 = vstv %s161
          %v302 = vlaneseq
          %v303 = vand.u32 %v302, 127
          %vm304 = vcmp.eq.s32.totalorder %v303, %v301
          %v305 = vstv %s161
          %vm306 = vcmp.ge.s32.totalorder %v289, %v305
          %vm307 = vmand %vm304, %vm306
          %v308 = vsel %vm307, %v294, %v300
          %309 = vst [vmem:[%s285] sm:$0xff] %v308
          %s310 = scalar_lea.vmem %s285, %s161
          %v311 = vld [vmem:[%s310] ss:$0 sm:$0xff]
          %v312 = vstv %s161
          %v313 = vlaneseq
          %v314 = vand.u32 %v313, 127
          %vm315 = vcmp.eq.s32.totalorder %v314, %v312
          %v316 = vsel %vm315, %v227, %v311
          %317 = vst [vmem:[%s310] sm:$0x1] %v316
        $region55: #{custom-call.19} parent=49 // loop_footer
          %s165 = sadd.s32 1, %s161
        $region56: #{custom-call.19} parent=49 // loop_footer_branch
          %160 = sbr.rel target = $region52
        $region57: #{custom-call.19} parent=49 // loop_exit
          _
        %s319 = sshllo.u32 0, 4
        %v321 = vld [vmem:[#allocation2] sm:%s319]
        %s322 = sshllo.u32 0, 4
        %323 = vst [vmem:[%s138] sm:%s322] %v321
        %s325 = sshllo.u32 0, 2
        %v327 = vld [vmem:[#allocation4] sm:%s325]
        %s328 = sshllo.u32 0, 2
        %329 = vst [vmem:[%s144] sm:%s328] %v327
        %s330 = sand.u32 %s10, 1
        %s331 = sand.u32 %s10, 1
        %s332 = smul.addr %s331, 4
        %s333 = scalar_lea.vmem [#allocation3], %s332
        %s334 = sand.u32 %s49, 1
        %s335 = sand.u32 %s49, 1
        %s336 = smul.addr %s335, 2
        %s337 = scalar_lea.vmem [#allocation5], %s336
        %s338 = sadd.s32 %s17, %s16
        %s339 = sadd.s32 %s338, %s15
        %s340 = smul.addr %s339, 4
        %s341 = scalar_lea.vmem %s1, %s340
        // Predicated region
        $region58: #{custom-call.19} parent=49 // pred_check
          _
        $region59: #{custom-call.19} parent=49 // pred_check_branch
          %343 = sbr.rel (0) target = $region61
        $region60: #{custom-call.19} parent=49 // pred_region
          // Predicated region
          $region62: #{custom-call.19} parent=60 // pred_check
            _
          $region63: #{custom-call.19} parent=60 // pred_check_branch
            %345 = sbr.rel target = $region65
          $region64: #{custom-call.19} parent=60 // pred_region
            // Predicated region
            $region77: #{custom-call.19} parent=64 // pred_check
              _
            $region78: #{custom-call.19} parent=64 // pred_check_branch
              %360 = sbr.rel (0) target = $region80
            $region79: #{custom-call.19} parent=64 // pred_region
              loop: start=0, step=1, limit=1
              $region81: #{custom-call.19} parent=79 // loop_pre_header
                _
              $region82: #{custom-call.19} parent=79 // loop_header
                %s363 = sphi 0, %s367
                %p364 = scmp.ge.s32.totalorder %s363, 1
                %s368 = sphi %s333, %s333
                %s369 = sphi %s341, %s341
              $region83: #{custom-call.19} parent=79 // loop_header_branch
                %366 = sbr.rel (%p364) target = $region87
              $region84: #{custom-call.19} parent=79 // loop_body
                %v370 = vld [vmem:[%s368] sm:$0xf]
                %371 = vst [vmem:[%s369] sm:$0xf] %v370
              $region85: #{custom-call.19} parent=79 // loop_footer
                %s367 = sadd.s32 1, %s363
              $region86: #{custom-call.19} parent=79 // loop_footer_branch
                %362 = sbr.rel target = $region82
              $region87: #{custom-call.19} parent=79 // loop_exit
                _
            $region80: #{custom-call.19} parent=64 // pred_fallthru
              _
          $region65: #{custom-call.19} parent=60 // pred_fallthru
            _
          // Predicated region
          $region66: #{custom-call.19} parent=60 // pred_check
            _
          $region67: #{custom-call.19} parent=60 // pred_check_branch
            %347 = sbr.rel (0) target = $region69
          $region68: #{custom-call.19} parent=60 // pred_region
            loop: start=0, step=1, limit=1
            $region70: #{custom-call.19} parent=68 // loop_pre_header
              _
            $region71: #{custom-call.19} parent=68 // loop_header
              %s350 = sphi 0, %s354
              %p351 = scmp.ge.s32.totalorder %s350, 1
              %s355 = sphi %s333, %s333
              %s356 = sphi %s341, %s341
            $region72: #{custom-call.19} parent=68 // loop_header_branch
              %353 = sbr.rel (%p351) target = $region76
            $region73: #{custom-call.19} parent=68 // loop_body
              %v357 = vld [vmem:[%s355] sm:$0xf]
              %358 = vst [vmem:[%s356] sm:$0xf] %v357
            $region74: #{custom-call.19} parent=68 // loop_footer
              %s354 = sadd.s32 1, %s350
            $region75: #{custom-call.19} parent=68 // loop_footer_branch
              %349 = sbr.rel target = $region71
            $region76: #{custom-call.19} parent=68 // loop_exit
              _
          $region69: #{custom-call.19} parent=60 // pred_fallthru
            _
        $region61: #{custom-call.19} parent=49 // pred_fallthru
          _
        %372 = vnop
        // Predicated region
        $region88: #{custom-call.19} parent=49 // pred_check
          %p373 = pneg %p59
        $region89: #{custom-call.19} parent=49 // pred_check_branch
          %375 = sbr.rel (%p373) target = $region91
        $region90: #{custom-call.19} parent=49 // pred_region
          %p376 = scmp.lt.s32.totalorder %s15, 0
          %s377 = ssub.s32 0, %s15
          %s378 = scalar_select %p376, %s377, %s15
          %s379 = sshrl.u32 %s378, 3
          %s380 = ssub.s32 0, %s379
          %s381 = scalar_select %p376, %s380, %s379
          %s382 = smul.addr %s381, 2
          %s383 = scalar_lea.vmem %s2, %s382
          // Predicated region
          $region92: #{custom-call.19} parent=90 // pred_check
            _
          $region93: #{custom-call.19} parent=90 // pred_check_branch
            %385 = sbr.rel (0) target = $region95
          $region94: #{custom-call.19} parent=90 // pred_region
            // Predicated region
            $region96: #{custom-call.19} parent=94 // pred_check
              _
            $region97: #{custom-call.19} parent=94 // pred_check_branch
              %387 = sbr.rel target = $region99
            $region98: #{custom-call.19} parent=94 // pred_region
              // Predicated region
              $region111: #{custom-call.19} parent=98 // pred_check
                _
              $region112: #{custom-call.19} parent=98 // pred_check_branch
                %402 = sbr.rel (0) target = $region114
              $region113: #{custom-call.19} parent=98 // pred_region
                loop: start=0, step=1, limit=1
                $region115: #{custom-call.19} parent=113 // loop_pre_header
                  _
                $region116: #{custom-call.19} parent=113 // loop_header
                  %s405 = sphi 0, %s409
                  %p406 = scmp.ge.s32.totalorder %s405, 1
                  %s410 = sphi %s337, %s337
                  %s411 = sphi %s383, %s383
                $region117: #{custom-call.19} parent=113 // loop_header_branch
                  %408 = sbr.rel (%p406) target = $region121
                $region118: #{custom-call.19} parent=113 // loop_body
                  %v412 = vld [vmem:[%s410] sm:$0x3]
                  %413 = vst [vmem:[%s411] sm:$0x3] %v412
                $region119: #{custom-call.19} parent=113 // loop_footer
                  %s409 = sadd.s32 1, %s405
                $region120: #{custom-call.19} parent=113 // loop_footer_branch
                  %404 = sbr.rel target = $region116
                $region121: #{custom-call.19} parent=113 // loop_exit
                  _
              $region114: #{custom-call.19} parent=98 // pred_fallthru
                _
            $region99: #{custom-call.19} parent=94 // pred_fallthru
              _
            // Predicated region
            $region100: #{custom-call.19} parent=94 // pred_check
              _
            $region101: #{custom-call.19} parent=94 // pred_check_branch
              %389 = sbr.rel (0) target = $region103
            $region102: #{custom-call.19} parent=94 // pred_region
              loop: start=0, step=1, limit=1
              $region104: #{custom-call.19} parent=102 // loop_pre_header
                _
              $region105: #{custom-call.19} parent=102 // loop_header
                %s392 = sphi 0, %s396
                %p393 = scmp.ge.s32.totalorder %s392, 1
                %s397 = sphi %s337, %s337
                %s398 = sphi %s383, %s383
              $region106: #{custom-call.19} parent=102 // loop_header_branch
                %395 = sbr.rel (%p393) target = $region110
              $region107: #{custom-call.19} parent=102 // loop_body
                %v399 = vld [vmem:[%s397] sm:$0x3]
                %400 = vst [vmem:[%s398] sm:$0x3] %v399
              $region108: #{custom-call.19} parent=102 // loop_footer
                %s396 = sadd.s32 1, %s392
              $region109: #{custom-call.19} parent=102 // loop_footer_branch
                %391 = sbr.rel target = $region105
              $region110: #{custom-call.19} parent=102 // loop_exit
                _
            $region103: #{custom-call.19} parent=94 // pred_fallthru
              _
          $region95: #{custom-call.19} parent=90 // pred_fallthru
            _
          %414 = vnop
        $region91: #{custom-call.19} parent=49 // pred_fallthru
          _
      $region50: #{custom-call.19} parent=5 // pred_fallthru
        _
      %p415 = scmp.le.s32.totalorder 2, %s5
      // Predicated region
      $region122: #{custom-call.19} parent=5 // pred_check
        %p416 = pneg %p415
      $region123: #{custom-call.19} parent=5 // pred_check_branch
        %418 = sbr.rel (%p416) target = $region125
      $region124: #{custom-call.19} parent=5 // pred_region
        %s419 = ssub.s32 %s5, 2
        %s420 = sand.u32 %s11, 1
        %s421 = sand.u32 %s11, 1
        %s422 = smul.addr %s421, 4
        %s423 = scalar_lea.vmem [#allocation3], %s422
        // Predicated region
        $region126: #{custom-call.19} parent=124 // pred_check
          %p424 = pneg %p65
        $region127: #{custom-call.19} parent=124 // pred_check_branch
          %426 = sbr.rel (%p424) target = $region129
        $region128: #{custom-call.19} parent=124 // pred_region
          %s427 = sand.u32 %s50, 1
          %s428 = sand.u32 %s50, 1
          %s429 = smul.addr %s428, 2
          %s430 = scalar_lea.vmem [#allocation5], %s429
        $region129: #{custom-call.19} parent=124 // pred_fallthru
          _
      $region125: #{custom-call.19} parent=5 // pred_fallthru
        _
    $region6: #{custom-call.19} parent=1 // loop_footer
      %s9 = sadd.s32 1, %s5
    $region7: #{custom-call.19} parent=1 // loop_footer_branch
      %4 = sbr.rel target = $region3
    $region8: #{custom-call.19} parent=1 // loop_exit
      _

// kernel: _ssim_batched.1
$region0: #{_ssim_batched.1}
  #allocation0 [shape = 'u32[]', space=smem, size = 0x4, offset = 0x4, fixed_abs, tag = 'smem constant byte address 0x4 - core index']
  #allocation1 [shape = 'u32[144,128]{1,0:T(1,128)}', space=vmem, size = 0x12000, scoped, tag = 'internal scratch']
  %s0 = inlined_call_operand.vmem [shape: f32[2,288,128], index: 0, kind: input, shape index: {}]
  %s1 = inlined_call_operand.vmem [shape: f32[2,288,128], index: 1, kind: input, shape index: {}]
  %s2 = inlined_call_operand.vmem [shape: f32[264,288], index: 2, kind: input, shape index: {}]
  %s3 = inlined_call_operand.vmem [shape: f32[128,128], index: 3, kind: input, shape index: {}]
  %s4 = inlined_call_operand.vmem [shape: f32[2,1,1,1], index: 4, kind: output, shape index: {}]
  %s5 = sld [smem:[#allocation0]]
  $region49: #{_ssim_batched.1} parent=0
    _
  %s7 = ssub.s32 1, %s5
  %s8 = scalar_select 0, %s7, %s5
  loop: start=0, step=1, limit=4
  $region2: #{_ssim_batched.1} parent=0 // loop_pre_header
    _
  $region3: #{_ssim_batched.1} parent=0 // loop_header
    %s10 = sphi 0, %s14
    %p11 = scmp.ge.s32.totalorder %s10, 4
    %s20 = sphi 0, %s22
    %s23 = sphi 0, %s20
    %s24 = sphi 0, %s23
    %s40 = sphi 0, %s24
    %s46 = sphi 0, %s48
    %s49 = sphi 0, %s46
    %s50 = sphi 0, %s49
    %s66 = sphi 0, %s50
    %s70 = sphi 0, %s70
    %s72 = sphi 0, %s70
    %s73 = sphi 0, %s72
    %s87 = sphi 0, %s73
    %s91 = sphi 0, %s91
    %s93 = sphi 0, %s91
    %s94 = sphi 0, %s93
    %s108 = sphi 0, %s94
    %s114 = sphi 0, %s116
    %s117 = sphi 0, %s114
    %s118 = sphi 0, %s117
    %s134 = sphi 0, %s118
  $region4: #{_ssim_batched.1} parent=0 // loop_header_branch
    %13 = sbr.rel (%p11) target = $region8
  $region5: #{_ssim_batched.1} parent=0 // loop_body
    %s15 = ssub.s32 %s10, 1
    %s16 = ssub.s32 %s10, 2
    %s17 = sadd.s32 %s10, 1
    %s18 = ssub.s32 %s10, %s17
    %p19 = scmp.eq.s32.totalorder %s18, 0
    %s21 = sadd.s32 %s20, 1
    %s22 = scalar_select %p19, %s20, %s21
    %p25 = pneg %p19
    %p26 = scmp.eq.s32.totalorder %s10, 1
    %p27 = por %p25, %p26
    %p28 = scmp.ne.s32.totalorder %s20, %s23
    %p29 = scmp.eq.s32.totalorder %s10, 0
    %p30 = por %p28, %p29
    %p31 = scmp.ne.s32.totalorder %s20, %s23
    %p32 = scmp.eq.s32.totalorder %s15, 1
    %p33 = por %p31, %p32
    %p34 = scmp.ne.s32.totalorder %s23, %s24
    %p35 = scmp.eq.s32.totalorder %s15, 0
    %p36 = por %p34, %p35
    %p37 = scmp.ne.s32.totalorder %s23, %s24
    %p38 = scmp.eq.s32.totalorder %s16, 1
    %p39 = por %p37, %p38
    %p41 = scmp.ne.s32.totalorder %s24, %s40
    %p42 = scmp.eq.s32.totalorder %s16, 0
    %p43 = por %p41, %p42
    %s44 = ssub.s32 %s10, %s17
    %p45 = scmp.eq.s32.totalorder %s44, 0
    %s47 = sadd.s32 %s46, 1
    %s48 = scalar_select %p45, %s46, %s47
    %p51 = pneg %p45
    %p52 = scmp.eq.s32.totalorder %s10, 1
    %p53 = por %p51, %p52
    %p54 = scmp.ne.s32.totalorder %s46, %s49
    %p55 = scmp.eq.s32.totalorder %s10, 0
    %p56 = por %p54, %p55
    %p57 = scmp.ne.s32.totalorder %s46, %s49
    %p58 = scmp.eq.s32.totalorder %s15, 1
    %p59 = por %p57, %p58
    %p60 = scmp.ne.s32.totalorder %s49, %s50
    %p61 = scmp.eq.s32.totalorder %s15, 0
    %p62 = por %p60, %p61
    %p63 = scmp.ne.s32.totalorder %s49, %s50
    %p64 = scmp.eq.s32.totalorder %s16, 1
    %p65 = por %p63, %p64
    %p67 = scmp.ne.s32.totalorder %s50, %s66
    %p68 = scmp.eq.s32.totalorder %s16, 0
    %p69 = por %p67, %p68
    %s71 = sadd.s32 %s70, 1
    %p74 = scmp.eq.s32.totalorder %s10, 1
    %p75 = scmp.ne.s32.totalorder %s70, %s72
    %p76 = scmp.eq.s32.totalorder %s10, 0
    %p77 = por %p75, %p76
    %p78 = scmp.ne.s32.totalorder %s70, %s72
    %p79 = scmp.eq.s32.totalorder %s15, 1
    %p80 = por %p78, %p79
    %p81 = scmp.ne.s32.totalorder %s72, %s73
    %p82 = scmp.eq.s32.totalorder %s15, 0
    %p83 = por %p81, %p82
    %p84 = scmp.ne.s32.totalorder %s72, %s73
    %p85 = scmp.eq.s32.totalorder %s16, 1
    %p86 = por %p84, %p85
    %p88 = scmp.ne.s32.totalorder %s73, %s87
    %p89 = scmp.eq.s32.totalorder %s16, 0
    %p90 = por %p88, %p89
    %s92 = sadd.s32 %s91, 1
    %p95 = scmp.eq.s32.totalorder %s10, 1
    %p96 = scmp.ne.s32.totalorder %s91, %s93
    %p97 = scmp.eq.s32.totalorder %s10, 0
    %p98 = por %p96, %p97
    %p99 = scmp.ne.s32.totalorder %s91, %s93
    %p100 = scmp.eq.s32.totalorder %s15, 1
    %p101 = por %p99, %p100
    %p102 = scmp.ne.s32.totalorder %s93, %s94
    %p103 = scmp.eq.s32.totalorder %s15, 0
    %p104 = por %p102, %p103
    %p105 = scmp.ne.s32.totalorder %s93, %s94
    %p106 = scmp.eq.s32.totalorder %s16, 1
    %p107 = por %p105, %p106
    %p109 = scmp.ne.s32.totalorder %s94, %s108
    %p110 = scmp.eq.s32.totalorder %s16, 0
    %p111 = por %p109, %p110
    %s112 = ssub.s32 %s10, %s17
    %p113 = scmp.eq.s32.totalorder %s112, 0
    %s115 = sadd.s32 %s114, 1
    %s116 = scalar_select %p113, %s114, %s115
    %p119 = pneg %p113
    %p120 = scmp.eq.s32.totalorder %s10, 1
    %p121 = por %p119, %p120
    %p122 = scmp.ne.s32.totalorder %s114, %s117
    %p123 = scmp.eq.s32.totalorder %s10, 0
    %p124 = por %p122, %p123
    %p125 = scmp.ne.s32.totalorder %s114, %s117
    %p126 = scmp.eq.s32.totalorder %s15, 1
    %p127 = por %p125, %p126
    %p128 = scmp.ne.s32.totalorder %s117, %s118
    %p129 = scmp.eq.s32.totalorder %s15, 0
    %p130 = por %p128, %p129
    %p131 = scmp.ne.s32.totalorder %s117, %s118
    %p132 = scmp.eq.s32.totalorder %s16, 1
    %p133 = por %p131, %p132
    %p135 = scmp.ne.s32.totalorder %s118, %s134
    %p136 = scmp.eq.s32.totalorder %s16, 0
    %p137 = por %p135, %p136
    %p138 = scmp.le.s32.totalorder 1, %s10
    %p139 = scmp.lt.s32.totalorder %s10, 3
    %p140 = pnand %p138, %p139
    %p141 = pneg %p140
    // Predicated region
    $region9: #{_ssim_batched.1} parent=5 // pred_check
      _
    $region10: #{_ssim_batched.1} parent=5 // pred_check_branch
      %143 = sbr.rel (%p140) target = $region12
    $region11: #{_ssim_batched.1} parent=5 // pred_region
      %s144 = ssub.s32 %s10, 1
      // Predicated region
      $region13: #{_ssim_batched.1} parent=11 // pred_check
        %p145 = pneg %p83
      $region14: #{_ssim_batched.1} parent=11 // pred_check_branch
        %147 = sbr.rel (%p145) target = $region16
      $region15: #{_ssim_batched.1} parent=11 // pred_region
        _
      $region16: #{_ssim_batched.1} parent=11 // pred_fallthru
        _
      // Predicated region
      $region17: #{_ssim_batched.1} parent=11 // pred_check
        %p148 = pneg %p104
      $region18: #{_ssim_batched.1} parent=11 // pred_check_branch
        %150 = sbr.rel (%p148) target = $region20
      $region19: #{_ssim_batched.1} parent=11 // pred_region
        _
      $region20: #{_ssim_batched.1} parent=11 // pred_fallthru
        _
    $region12: #{_ssim_batched.1} parent=5 // pred_fallthru
      _
    %p151 = scmp.lt.s32.totalorder %s10, 2
    // Predicated region
    $region21: #{_ssim_batched.1} parent=5 // pred_check
      %p152 = pneg %p151
    $region22: #{_ssim_batched.1} parent=5 // pred_check_branch
      %154 = sbr.rel (%p152) target = $region24
    $region23: #{_ssim_batched.1} parent=5 // pred_region
      // Predicated region
      $region25: #{_ssim_batched.1} parent=23 // pred_check
        %p155 = pneg %p30
      $region26: #{_ssim_batched.1} parent=23 // pred_check_branch
        %157 = sbr.rel (%p155) target = $region28
      $region27: #{_ssim_batched.1} parent=23 // pred_region
        %p158 = scmp.lt.s32.totalorder %s10, 1
        %s159 = scalar_select %p158, %s10, 1
        %s160 = smul.addr %s159, 36
        %s161 = smul.addr %s160, 8
        %s162 = scalar_lea.vmem %s0, %s161
      $region28: #{_ssim_batched.1} parent=23 // pred_fallthru
        _
      // Predicated region
      $region29: #{_ssim_batched.1} parent=23 // pred_check
        %p163 = pneg %p56
      $region30: #{_ssim_batched.1} parent=23 // pred_check_branch
        %165 = sbr.rel (%p163) target = $region32
      $region31: #{_ssim_batched.1} parent=23 // pred_region
        %p166 = scmp.lt.s32.totalorder %s10, 1
        %s167 = scalar_select %p166, %s10, 1
        %s168 = smul.addr %s167, 36
        %s169 = smul.addr %s168, 8
        %s170 = scalar_lea.vmem %s1, %s169
      $region32: #{_ssim_batched.1} parent=23 // pred_fallthru
        _
    $region24: #{_ssim_batched.1} parent=5 // pred_fallthru
      _
    %p171 = scmp.le.s32.totalorder 1, %s10
    %p172 = scmp.lt.s32.totalorder %s10, 3
    %p173 = pnand %p171, %p172
    %p174 = pneg %p173
    // Predicated region
    $region33: #{_ssim_batched.1} parent=5 // pred_check
      _
    $region34: #{_ssim_batched.1} parent=5 // pred_check_branch
      %176 = sbr.rel (%p173) target = $region36
    $region35: #{_ssim_batched.1} parent=5 // pred_region
      %s177 = ssub.s32 %s10, 1
      %p178 = scmp.lt.s32.totalorder %s15, 1
      %s179 = scalar_select %p178, %s15, 1
      %s180 = smul.addr %s179, 36
      %s181 = smul.addr %s180, 8
      %s182 = scalar_lea.vmem %s0, %s181
      %p183 = pneg %p36
      %p184 = pneg %p33
      %p185 = scmp.lt.s32.totalorder %s15, 1
      %s186 = scalar_select %p185, %s15, 1
      %s187 = smul.addr %s186, 36
      %s188 = smul.addr %s187, 8
      %s189 = scalar_lea.vmem %s1, %s188
      %p190 = pneg %p62
      %p191 = pneg %p59
      %p192 = pneg %p83
      %p193 = pneg %p80
      %p194 = pneg %p104
      %p195 = pneg %p101
      %p196 = pneg %p130
      %p197 = pneg %p127
      %p198 = scmp.lt.s32.totalorder %s15, 1
      %s199 = scalar_select %p198, %s15, 1
      %s200 = scalar_lea.vmem %s4, %s199
      %p201 = scmp.lt.s32.totalorder %s15, 1
      %s202 = scalar_select %p201, %s15, 1
      %s203 = smul.addr %s202, 36
      %s204 = smul.addr %s203, 8
      %s205 = scalar_lea.vmem %s0, %s204
      %p206 = scmp.lt.s32.totalorder %s15, 1
      %s207 = scalar_select %p206, %s15, 1
      %s208 = smul.addr %s207, 36
      %s209 = smul.addr %s208, 8
      %s210 = scalar_lea.vmem %s1, %s209
      %p211 = scmp.lt.s32.totalorder %s15, 1
      %s212 = scalar_select %p211, %s15, 1
      %s213 = scalar_lea.vmem %s4, %s212
      %v214 = vld [vmem:[%s205] sm:$0xff]
      %v215 = vld [vmem:[%s205 + $0x8] sm:$0xff]
      %v216 = vld [vmem:[%s205 + $0x10] sm:$0xff]
      %v217 = vld [vmem:[%s205 + $0x18] sm:$0xff]
      %v218 = vld [vmem:[%s205 + $0x20] sm:$0xff]
      %v219 = vld [vmem:[%s205 + $0x28] sm:$0xff]
      %v220 = vld [vmem:[%s205 + $0x30] sm:$0xff]
      %v221 = vld [vmem:[%s205 + $0x38] sm:$0xff]
      %v222 = vld [vmem:[%s205 + $0x40] sm:$0xff]
      %v223 = vld [vmem:[%s205 + $0x48] sm:$0xff]
      %v224 = vld [vmem:[%s205 + $0x50] sm:$0xff]
      %v225 = vld [vmem:[%s205 + $0x58] sm:$0xff]
      %v226 = vld [vmem:[%s205 + $0x60] sm:$0xff]
      %v227 = vld [vmem:[%s205 + $0x68] sm:$0xff]
      %v228 = vld [vmem:[%s205 + $0x70] sm:$0xff]
      %v229 = vld [vmem:[%s205 + $0x78] sm:$0xff]
      %v230 = vld [vmem:[%s205 + $0x80] sm:$0xff]
      %v231 = vld [vmem:[%s205 + $0x88] sm:$0xff]
      %v232 = vld [vmem:[%s205 + $0x90] sm:$0xff]
      %v233 = vld [vmem:[%s205 + $0x98] sm:$0xff]
      %v234 = vld [vmem:[%s205 + $0xa0] sm:$0xff]
      %v235 = vld [vmem:[%s205 + $0xa8] sm:$0xff]
      %v236 = vld [vmem:[%s205 + $0xb0] sm:$0xff]
      %v237 = vld [vmem:[%s205 + $0xb8] sm:$0xff]
      %v238 = vld [vmem:[%s205 + $0xc0] sm:$0xff]
      %v239 = vld [vmem:[%s205 + $0xc8] sm:$0xff]
      %v240 = vld [vmem:[%s205 + $0xd0] sm:$0xff]
      %v241 = vld [vmem:[%s205 + $0xd8] sm:$0xff]
      %v242 = vld [vmem:[%s205 + $0xe0] sm:$0xff]
      %v243 = vld [vmem:[%s205 + $0xe8] sm:$0xff]
      %v244 = vld [vmem:[%s205 + $0xf0] sm:$0xff]
      %v245 = vld [vmem:[%s205 + $0xf8] sm:$0xff]
      %v246 = vld [vmem:[%s205 + $0x100] sm:$0xff]
      %v247 = vld [vmem:[%s205 + $0x108] sm:$0xff]
      %v248 = vld [vmem:[%s205 + $0x110] sm:$0xff]
      %v249 = vld [vmem:[%s205 + $0x118] sm:$0xff]
      %v250 = vld [vmem:[%s210] sm:$0xff]
      %v251 = vld [vmem:[%s210 + $0x8] sm:$0xff]
      %v252 = vld [vmem:[%s210 + $0x10] sm:$0xff]
      %v253 = vld [vmem:[%s210 + $0x18] sm:$0xff]
      %v254 = vld [vmem:[%s210 + $0x20] sm:$0xff]
      %v255 = vld [vmem:[%s210 + $0x28] sm:$0xff]
      %v256 = vld [vmem:[%s210 + $0x30] sm:$0xff]
      %v257 = vld [vmem:[%s210 + $0x38] sm:$0xff]
      %v258 = vld [vmem:[%s210 + $0x40] sm:$0xff]
      %v259 = vld [vmem:[%s210 + $0x48] sm:$0xff]
      %v260 = vld [vmem:[%s210 + $0x50] sm:$0xff]
      %v261 = vld [vmem:[%s210 + $0x58] sm:$0xff]
      %v262 = vld [vmem:[%s210 + $0x60] sm:$0xff]
      %v263 = vld [vmem:[%s210 + $0x68] sm:$0xff]
      %v264 = vld [vmem:[%s210 + $0x70] sm:$0xff]
      %v265 = vld [vmem:[%s210 + $0x78] sm:$0xff]
      %v266 = vld [vmem:[%s210 + $0x80] sm:$0xff]
      %v267 = vld [vmem:[%s210 + $0x88] sm:$0xff]
      %v268 = vld [vmem:[%s210 + $0x90] sm:$0xff]
      %v269 = vld [vmem:[%s210 + $0x98] sm:$0xff]
      %v270 = vld [vmem:[%s210 + $0xa0] sm:$0xff]
      %v271 = vld [vmem:[%s210 + $0xa8] sm:$0xff]
      %v272 = vld [vmem:[%s210 + $0xb0] sm:$0xff]
      %v273 = vld [vmem:[%s210 + $0xb8] sm:$0xff]
      %v274 = vld [vmem:[%s210 + $0xc0] sm:$0xff]
      %v275 = vld [vmem:[%s210 + $0xc8] sm:$0xff]
      %v276 = vld [vmem:[%s210 + $0xd0] sm:$0xff]
      %v277 = vld [vmem:[%s210 + $0xd8] sm:$0xff]
      %v278 = vld [vmem:[%s210 + $0xe0] sm:$0xff]
      %v279 = vld [vmem:[%s210 + $0xe8] sm:$0xff]
      %v280 = vld [vmem:[%s210 + $0xf0] sm:$0xff]
      %v281 = vld [vmem:[%s210 + $0xf8] sm:$0xff]
      %v282 = vld [vmem:[%s210 + $0x100] sm:$0xff]
      %v283 = vld [vmem:[%s210 + $0x108] sm:$0xff]
      %v284 = vld [vmem:[%s210 + $0x110] sm:$0xff]
      %v285 = vld [vmem:[%s210 + $0x118] sm:$0xff]
      %v286 = vld [vmem:[%s2] sm:$0xff]
      %v287 = vld [vmem:[%s2 + $0x8] sm:$0xff]
      %v288 = vld [vmem:[%s2 + $0x10] sm:$0xff]
      %v289 = vld [vmem:[%s2 + $0x18] sm:$0xff]
      %v290 = vld [vmem:[%s2 + $0x20] sm:$0xff]
      %v291 = vld [vmem:[%s2 + $0x28] sm:$0xff]
      %v292 = vld [vmem:[%s2 + $0x30] sm:$0xff]
      %v293 = vld [vmem:[%s2 + $0x38] sm:$0xff]
      %v294 = vld [vmem:[%s2 + $0x40] sm:$0xff]
      %v295 = vld [vmem:[%s2 + $0x48] sm:$0xff]
      %v296 = vld [vmem:[%s2 + $0x50] sm:$0xff]
      %v297 = vld [vmem:[%s2 + $0x58] sm:$0xff]
      %v298 = vld [vmem:[%s2 + $0x60] sm:$0xff]
      %v299 = vld [vmem:[%s2 + $0x68] sm:$0xff]
      %v300 = vld [vmem:[%s2 + $0x70] sm:$0xff]
      %v301 = vld [vmem:[%s2 + $0x78] sm:$0xff]
      %v302 = vld [vmem:[%s2 + $0x80] sm:$0xff]
      %v303 = vld [vmem:[%s2 + $0x88] sm:$0xff]
      %v304 = vld [vmem:[%s2 + $0x90] sm:$0xff]
      %v305 = vld [vmem:[%s2 + $0x98] sm:$0xff]
      %v306 = vld [vmem:[%s2 + $0xa0] sm:$0xff]
      %v307 = vld [vmem:[%s2 + $0xa8] sm:$0xff]
      %v308 = vld [vmem:[%s2 + $0xb0] sm:$0xff]
      %v309 = vld [vmem:[%s2 + $0xb8] sm:$0xff]
      %v310 = vld [vmem:[%s2 + $0xc0] sm:$0xff]
      %v311 = vld [vmem:[%s2 + $0xc8] sm:$0xff]
      %v312 = vld [vmem:[%s2 + $0xd0] sm:$0xff]
      %v313 = vld [vmem:[%s2 + $0xd8] sm:$0xff]
      %v314 = vld [vmem:[%s2 + $0xe0] sm:$0xff]
      %v315 = vld [vmem:[%s2 + $0xe8] sm:$0xff]
      %v316 = vld [vmem:[%s2 + $0xf0] sm:$0xff]
      %v317 = vld [vmem:[%s2 + $0xf8] sm:$0xff]
      %v318 = vld [vmem:[%s2 + $0x100] sm:$0xff]
      %v319 = vld [vmem:[%s2 + $0x108] sm:$0xff]
      %v320 = vld [vmem:[%s2 + $0x110] sm:$0xff]
      %v321 = vld [vmem:[%s2 + $0x118] sm:$0xff]
      %v322 = vld [vmem:[%s2 + $0x120] sm:$0xff]
      %v323 = vld [vmem:[%s2 + $0x128] sm:$0xff]
      %v324 = vld [vmem:[%s2 + $0x130] sm:$0xff]
      %v325 = vld [vmem:[%s2 + $0x138] sm:$0xff]
      %v326 = vld [vmem:[%s2 + $0x140] sm:$0xff]
      %v327 = vld [vmem:[%s2 + $0x148] sm:$0xff]
      %v328 = vld [vmem:[%s2 + $0x150] sm:$0xff]
      %v329 = vld [vmem:[%s2 + $0x158] sm:$0xff]
      %v330 = vld [vmem:[%s2 + $0x160] sm:$0xff]
      %v331 = vld [vmem:[%s2 + $0x168] sm:$0xff]
      %v332 = vld [vmem:[%s2 + $0x170] sm:$0xff]
      %v333 = vld [vmem:[%s2 + $0x178] sm:$0xff]
      %v334 = vld [vmem:[%s2 + $0x180] sm:$0xff]
      %v335 = vld [vmem:[%s2 + $0x188] sm:$0xff]
      %v336 = vld [vmem:[%s2 + $0x190] sm:$0xff]
      %v337 = vld [vmem:[%s2 + $0x198] sm:$0xff]
      %v338 = vld [vmem:[%s2 + $0x1a0] sm:$0xff]
      %v339 = vld [vmem:[%s2 + $0x1a8] sm:$0xff]
      %v340 = vld [vmem:[%s2 + $0x1b0] sm:$0xff]
      %v341 = vld [vmem:[%s2 + $0x1b8] sm:$0xff]
      %v342 = vld [vmem:[%s2 + $0x1c0] sm:$0xff]
      %v343 = vld [vmem:[%s2 + $0x1c8] sm:$0xff]
      %v344 = vld [vmem:[%s2 + $0x1d0] sm:$0xff]
      %v345 = vld [vmem:[%s2 + $0x1d8] sm:$0xff]
      %v346 = vld [vmem:[%s2 + $0x1e0] sm:$0xff]
      %v347 = vld [vmem:[%s2 + $0x1e8] sm:$0xff]
      %v348 = vld [vmem:[%s2 + $0x1f0] sm:$0xff]
      %v349 = vld [vmem:[%s2 + $0x1f8] sm:$0xff]
      %v350 = vld [vmem:[%s2 + $0x200] sm:$0xff]
      %v351 = vld [vmem:[%s2 + $0x208] sm:$0xff]
      %v352 = vld [vmem:[%s2 + $0x210] sm:$0xff]
      %v353 = vld [vmem:[%s2 + $0x218] sm:$0xff]
      %v354 = vld [vmem:[%s2 + $0x220] sm:$0xff]
      %v355 = vld [vmem:[%s2 + $0x228] sm:$0xff]
      %v356 = vld [vmem:[%s2 + $0x230] sm:$0xff]
      %v357 = vld [vmem:[%s2 + $0x238] sm:$0xff]
      %v358 = vld [vmem:[%s2 + $0x240] sm:$0xff]
      %v359 = vld [vmem:[%s2 + $0x248] sm:$0xff]
      %v360 = vld [vmem:[%s2 + $0x250] sm:$0xff]
      %v361 = vld [vmem:[%s2 + $0x258] sm:$0xff]
      %v362 = vld [vmem:[%s2 + $0x260] sm:$0xff]
      %v363 = vld [vmem:[%s2 + $0x268] sm:$0xff]
      %v364 = vld [vmem:[%s2 + $0x270] sm:$0xff]
      %v365 = vld [vmem:[%s2 + $0x278] sm:$0xff]
      %v366 = vld [vmem:[%s2 + $0x280] sm:$0xff]
      %v367 = vld [vmem:[%s2 + $0x288] sm:$0xff]
      %v368 = vld [vmem:[%s2 + $0x290] sm:$0xff]
      %v369 = vld [vmem:[%s2 + $0x298] sm:$0xff]
      %v370 = vld [vmem:[%s2 + $0x2a0] sm:$0xff]
      %v371 = vld [vmem:[%s2 + $0x2a8] sm:$0xff]
      %v372 = vld [vmem:[%s2 + $0x2b0] sm:$0xff]
      %v373 = vld [vmem:[%s2 + $0x2b8] sm:$0xff]
      %v374 = vld [vmem:[%s2 + $0x2c0] sm:$0xff]
      %v375 = vld [vmem:[%s2 + $0x2c8] sm:$0xff]
      %v376 = vld [vmem:[%s2 + $0x2d0] sm:$0xff]
      %v377 = vld [vmem:[%s2 + $0x2d8] sm:$0xff]
      %v378 = vld [vmem:[%s2 + $0x2e0] sm:$0xff]
      %v379 = vld [vmem:[%s2 + $0x2e8] sm:$0xff]
      %v380 = vld [vmem:[%s2 + $0x2f0] sm:$0xff]
      %v381 = vld [vmem:[%s2 + $0x2f8] sm:$0xff]
      %v382 = vld [vmem:[%s2 + $0x300] sm:$0xff]
      %v383 = vld [vmem:[%s2 + $0x308] sm:$0xff]
      %v384 = vld [vmem:[%s2 + $0x310] sm:$0xff]
      %v385 = vld [vmem:[%s3] sm:$0xff]
      %v386 = vld [vmem:[%s3 + $0x8] sm:$0xff]
      %v387 = vld [vmem:[%s3 + $0x10] sm:$0xff]
      %v388 = vld [vmem:[%s3 + $0x18] sm:$0xff]
      %v389 = vld [vmem:[%s3 + $0x20] sm:$0xff]
      %v390 = vld [vmem:[%s3 + $0x28] sm:$0xff]
      %v391 = vld [vmem:[%s3 + $0x30] sm:$0xff]
      %v392 = vld [vmem:[%s3 + $0x38] sm:$0xff]
      %v393 = vld [vmem:[%s3 + $0x40] sm:$0xff]
      %v394 = vld [vmem:[%s3 + $0x48] sm:$0xff]
      %v395 = vld [vmem:[%s3 + $0x50] sm:$0xff]
      %v396 = vld [vmem:[%s3 + $0x58] sm:$0xff]
      %v397 = vld [vmem:[%s3 + $0x60] sm:$0xff]
      %v398 = vld [vmem:[%s3 + $0x68] sm:$0xff]
      %v399 = vld [vmem:[%s3 + $0x70] sm:$0xff]
      %v400 = vld [vmem:[%s3 + $0x78] sm:$0xff]
      %vm401 = vcmask 261120
      %v403 = vsel %vm401, %v288, 0
      %v406 = vsel %vm401, %v291, 0
      %v409 = vsel %vm401, %v294, 0
      %v412 = vsel %vm401, %v297, 0
      %v415 = vsel %vm401, %v300, 0
      %v418 = vsel %vm401, %v303, 0
      %v421 = vsel %vm401, %v306, 0
      %v424 = vsel %vm401, %v309, 0
      %v427 = vsel %vm401, %v312, 0
      %v430 = vsel %vm401, %v315, 0
      %v433 = vsel %vm401, %v318, 0
      %v436 = vsel %vm401, %v321, 0
      %v439 = vsel %vm401, %v324, 0
      %v442 = vsel %vm401, %v327, 0
      %v445 = vsel %vm401, %v330, 0
      %v448 = vsel %vm401, %v333, 0
      %v451 = vsel %vm401, %v336, 0
      %v454 = vsel %vm401, %v339, 0
      %v457 = vsel %vm401, %v342, 0
      %v460 = vsel %vm401, %v345, 0
      %v463 = vsel %vm401, %v348, 0
      %v466 = vsel %vm401, %v351, 0
      %v469 = vsel %vm401, %v354, 0
      %v472 = vsel %vm401, %v357, 0
      %v475 = vsel %vm401, %v360, 0
      %v478 = vsel %vm401, %v363, 0
      %v481 = vsel %vm401, %v366, 0
      %v484 = vsel %vm401, %v369, 0
      %v487 = vsel %vm401, %v372, 0
      %v490 = vsel %vm401, %v375, 0
      %v493 = vsel %vm401, %v378, 0
      %v496 = vsel %vm401, %v381, 0
      %v499 = vsel %vm401, %v384, 0
      %501 = vmatprep.subr.mxu0 0.0
      %502 = vmatpush1.msra.mxu0 %v214
      %503 = vmatprep.subr.mxu0 0.0
      %504 = vmatpush1.msra.mxu0 %v215
      %505 = vmatprep.subr.mxu0 0.0
      %506 = vmatpush1.msra.mxu0 %v216
      %507 = vmatprep.subr.mxu0 0.0
      %508 = vmatpush1.msra.mxu0 %v217
      %509 = vmatprep.subr.mxu0 0.0
      %510 = vmatpush1.msra.mxu0 %v218
      %511 = vmatprep.subr.mxu0 0.0
      %512 = vmatpush1.msra.mxu0 %v219
      %513 = vmatprep.subr.mxu0 0.0
      %514 = vmatpush1.msra.mxu0 %v220
      %515 = vmatprep.subr.mxu0 0.0
      %516 = vmatpush1.msra.mxu0 %v221
      %517 = vmatprep.subr.mxu0 0.0
      %518 = vmatpush1.msra.mxu0 %v222
      %519 = vmatprep.subr.mxu0 0.0
      %520 = vmatpush1.msra.mxu0 %v223
      %521 = vmatprep.subr.mxu0 0.0
      %522 = vmatpush1.msra.mxu0 %v224
      %523 = vmatprep.subr.mxu0 0.0
      %524 = vmatpush1.msra.mxu0 %v225
      %525 = vmatprep.subr.mxu0 0.0
      %526 = vmatpush1.msra.mxu0 %v226
      %527 = vmatprep.subr.mxu0 0.0
      %528 = vmatpush1.msra.mxu0 %v227
      %529 = vmatprep.subr.mxu0 0.0
      %530 = vmatpush1.msra.mxu0 %v228
      %531 = vmatprep.subr.mxu0 0.0
      %532 = vmatpush1.msra.mxu0 %v229
      %533 = vmatprep.subr.mxu0 0.0
      %534 = vmatpush1.msra.mxu0 %v230
      %535 = vmatprep.subr.mxu0 0.0
      %536 = vmatpush1.msra.mxu0 %v231
      %537 = vmatprep.subr.mxu0 0.0
      %538 = vmatpush1.msra.mxu0 %v232
      %539 = vmatprep.subr.mxu0 0.0
      %540 = vmatpush1.msra.mxu0 %v233
      %541 = vmatprep.subr.mxu0 0.0
      %542 = vmatpush1.msra.mxu0 %v234
      %543 = vmatprep.subr.mxu0 0.0
      %544 = vmatpush1.msra.mxu0 %v235
      %545 = vmatprep.subr.mxu0 0.0
      %546 = vmatpush1.msra.mxu0 %v236
      %547 = vmatprep.subr.mxu0 0.0
      %548 = vmatpush1.msra.mxu0 %v237
      %549 = vmatprep.subr.mxu0 0.0
      %550 = vmatpush1.msra.mxu0 %v238
      %551 = vmatprep.subr.mxu0 0.0
      %552 = vmatpush1.msra.mxu0 %v239
      %553 = vmatprep.subr.mxu0 0.0
      %554 = vmatpush1.msra.mxu0 %v240
      %555 = vmatprep.subr.mxu0 0.0
      %556 = vmatpush1.msra.mxu0 %v241
      %557 = vmatprep.subr.mxu0 0.0
      %558 = vmatpush1.msra.mxu0 %v242
      %559 = vmatprep.subr.mxu0 0.0
      %560 = vmatpush1.msra.mxu0 %v243
      %561 = vmatprep.subr.mxu0 0.0
      %562 = vmatpush1.msra.mxu0 %v244
      %563 = vmatprep.subr.mxu0 0.0
      %564 = vmatpush1.msra.mxu0 %v245
      %565 = vmatprep.mubr.f32.mxu0 %v287
      %566 = vmatmul.mubr.f32.gmra.mrb[0].mxu0 %v286
      %v567 = vpop.f32.mrb[0].mxu0
      %v568 = vadd.f32 0.0, %v567
      %v569 = vpop.f32.mrb[0].mxu0
      %570 = vmatprep.mubr.f32.mxu0 %v290
      %571 = vmatmul.mubr.f32.gmra.mrb[0].mxu0 %v289
      %v572 = vpop.f32.mrb[0].mxu0
      %v573 = vadd.f32 0.0, %v572
      %v574 = vpop.f32.mrb[0].mxu0
      %575 = vmatprep.mubr.f32.mxu0 %v293
      %576 = vmatmul.mubr.f32.gmra.mrb[0].mxu0 %v292
      %v577 = vpop.f32.mrb[0].mxu0
      %v578 = vadd.f32 0.0, %v577
      %v579 = vpop.f32.mrb[0].mxu0
      %580 = vmatprep.mubr.f32.mxu0 %v296
      %581 = vmatmul.mubr.f32.gmra.mrb[0].mxu0 %v295
      %v582 = vpop.f32.mrb[0].mxu0
      %v583 = vadd.f32 0.0, %v582
      %v584 = vpop.f32.mrb[0].mxu0
      %585 = vmatprep.mubr.f32.mxu0 %v299
      %586 = vmatmul.mubr.f32.gmra.mrb[0].mxu0 %v298
      %v587 = vpop.f32.mrb[0].mxu0
      %v588 = vadd.f32 0.0, %v587
      %v589 = vpop.f32.mrb[0].mxu0
      %590 = vmatprep.mubr.f32.mxu0 %v302
      %591 = vmatmul.mubr.f32.gmra.mrb[0].mxu0 %v301
      %v592 = vpop.f32.mrb[0].mxu0
      %v593 = vadd.f32 0.0, %v592
      %v594 = vpop.f32.mrb[0].mxu0
      %595 = vmatprep.mubr.f32.mxu0 %v305
      %596 = vmatmul.mubr.f32.gmra.mrb[0].mxu0 %v304
      %v597 = vpop.f32.mrb[0].mxu0
      %v598 = vadd.f32 0.0, %v597
      %v599 = vpop.f32.mrb[0].mxu0
      %600 = vmatprep.mubr.f32.mxu0 %v308
      %601 = vmatmul.mubr.f32.gmra.mrb[0].mxu0 %v307
      %v602 = vpop.f32.mrb[0].mxu0
      %v603 = vadd.f32 0.0, %v602
      %v604 = vpop.f32.mrb[0].mxu0
      %605 = vmatprep.mubr.f32.mxu0 %v311
      %606 = vmatmul.mubr.f32.gmra.mrb[0].mxu0 %v310
      %v607 = vpop.f32.mrb[0].mxu0
      %v608 = vadd.f32 0.0, %v607
      %v609 = vpop.f32.mrb[0].mxu0
      %610 = vmatprep.mubr.f32.mxu0 %v314
      %611 = vmatmul.mubr.f32.gmra.mrb[0].mxu0 %v313
      %v612 = vpop.f32.mrb[0].mxu0
      %v613 = vadd.f32 0.0, %v612
      %v614 = vpop.f32.mrb[0].mxu0
      %615 = vmatprep.mubr.f32.mxu0 %v317
      %616 = vmatmul.mubr.f32.gmra.mrb[0].mxu0 %v316
      %v617 = vpop.f32.mrb[0].mxu0
      %v618 = vadd.f32 0.0, %v617
      %v619 = vpop.f32.mrb[0].mxu0
      %620 = vmatprep.mubr.f32.mxu0 %v320
      %621 = vmatmul.mubr.f32.gmra.mrb[0].mxu0 %v319
      %v622 = vpop.f32.mrb[0].mxu0
      %v623 = vadd.f32 0.0, %v622
      %v624 = vpop.f32.mrb[0].mxu0
      %625 = vmatprep.mubr.f32.mxu0 %v323
      %626 = vmatmul.mubr.f32.gmra.mrb[0].mxu0 %v322
      %v627 = vpop.f32.mrb[0].mxu0
      %v628 = vadd.f32 0.0, %v627
      %v629 = vpop.f32.mrb[0].mxu0
      %630 = vmatprep.mubr.f32.mxu0 %v326
      %631 = vmatmul.mubr.f32.gmra.mrb[0].mxu0 %v325
      %v632 = vpop.f32.mrb[0].mxu0
      %v633 = vadd.f32 0.0, %v632
      %v634 = vpop.f32.mrb[0].mxu0
      %635 = vmatprep.mubr.f32.mxu0 %v329
      %636 = vmatmul.mubr.f32.gmra.mrb[0].mxu0 %v328
      %v637 = vpop.f32.mrb[0].mxu0
      %v638 = vadd.f32 0.0, %v637
      %v639 = vpop.f32.mrb[0].mxu0
      %640 = vmatprep.mubr.f32.mxu0 %v332
      %641 = vmatmul.mubr.f32.gmra.mrb[0].mxu0 %v331
      %v642 = vpop.f32.mrb[0].mxu0
      %v643 = vadd.f32 0.0, %v642
      %v644 = vpop.f32.mrb[0].mxu0
      %645 = vmatprep.mubr.f32.mxu0 %v335
      %646 = vmatmul.mubr.f32.gmra.mrb[0].mxu0 %v334
      %v647 = vpop.f32.mrb[0].mxu0
      %v648 = vadd.f32 0.0, %v647
      %v649 = vpop.f32.mrb[0].mxu0
      %650 = vmatprep.mubr.f32.mxu0 %v338
      %651 = vmatmul.mubr.f32.gmra.mrb[0].mxu0 %v337
      %v652 = vpop.f32.mrb[0].mxu0
      %v653 = vadd.f32 0.0, %v652
      %v654 = vpop.f32.mrb[0].mxu0
      %655 = vmatprep.mubr.f32.mxu0 %v341
      %656 = vmatmul.mubr.f32.gmra.mrb[0].mxu0 %v340
      %v657 = vpop.f32.mrb[0].mxu0
      %v658 = vadd.f32 0.0, %v657
      %v659 = vpop.f32.mrb[0].mxu0
      %660 = vmatprep.mubr.f32.mxu0 %v344
      %661 = vmatmul.mubr.f32.gmra.mrb[0].mxu0 %v343
      %v662 = vpop.f32.mrb[0].mxu0
      %v663 = vadd.f32 0.0, %v662
      %v664 = vpop.f32.mrb[0].mxu0
      %665 = vmatprep.mubr.f32.mxu0 %v347
      %666 = vmatmul.mubr.f32.gmra.mrb[0].mxu0 %v346
      %v667 = vpop.f32.mrb[0].mxu0
      %v668 = vadd.f32 0.0, %v667
      %v669 = vpop.f32.mrb[0].mxu0
      %670 = vmatprep.mubr.f32.mxu0 %v350
      %671 = vmatmul.mubr.f32.gmra.mrb[0].mxu0 %v349
      %v672 = vpop.f32.mrb[0].mxu0
      %v673 = vadd.f32 0.0, %v672
      %v674 = vpop.f32.mrb[0].mxu0
      %675 = vmatprep.mubr.f32.mxu0 %v353
      %676 = vmatmul.mubr.f32.gmra.mrb[0].mxu0 %v352
      %v677 = vpop.f32.mrb[0].mxu0
      %v678 = vadd.f32 0.0, %v677
      %v679 = vpop.f32.mrb[0].mxu0
      %680 = vmatprep.mubr.f32.mxu0 %v356
      %681 = vmatmul.mubr.f32.gmra.mrb[0].mxu0 %v355
      %v682 = vpop.f32.mrb[0].mxu0
      %v683 = vadd.f32 0.0, %v682
      %v684 = vpop.f32.mrb[0].mxu0
      %685 = vmatprep.mubr.f32.mxu0 %v359
      %686 = vmatmul.mubr.f32.gmra.mrb[0].mxu0 %v358
      %v687 = vpop.f32.mrb[0].mxu0
      %v688 = vadd.f32 0.0, %v687
      %v689 = vpop.f32.mrb[0].mxu0
      %690 = vmatprep.mubr.f32.mxu0 %v362
      %691 = vmatmul.mubr.f32.gmra.mrb[0].mxu0 %v361
      %v692 = vpop.f32.mrb[0].mxu0
      %v693 = vadd.f32 0.0, %v692
      %v694 = vpop.f32.mrb[0].mxu0
      %695 = vmatprep.mubr.f32.mxu0 %v365
      %696 = vmatmul.mubr.f32.gmra.mrb[0].mxu0 %v364
      %v697 = vpop.f32.mrb[0].mxu0
      %v698 = vadd.f32 0.0, %v697
      %v699 = vpop.f32.mrb[0].mxu0
      %700 = vmatprep.mubr.f32.mxu0 %v368
      %701 = vmatmul.mubr.f32.gmra.mrb[0].mxu0 %v367
      %v702 = vpop.f32.mrb[0].mxu0
      %v703 = vadd.f32 0.0, %v702
      %v704 = vpop.f32.mrb[0].mxu0
      %705 = vmatprep.mubr.f32.mxu0 %v371
      %706 = vmatmul.mubr.f32.gmra.mrb[0].mxu0 %v370
      %v707 = vpop.f32.mrb[0].mxu0
      %v708 = vadd.f32 0.0, %v707
      %v709 = vpop.f32.mrb[0].mxu0
      %710 = vmatprep.mubr.f32.mxu0 %v374
      %711 = vmatmul.mubr.f32.gmra.mrb[0].mxu0 %v373
      %v712 = vpop.f32.mrb[0].mxu0
      %v713 = vadd.f32 0.0, %v712
      %v714 = vpop.f32.mrb[0].mxu0
      %715 = vmatprep.mubr.f32.mxu0 %v377
      %716 = vmatmul.mubr.f32.gmra.mrb[0].mxu0 %v376
      %v717 = vpop.f32.mrb[0].mxu0
      %v718 = vadd.f32 0.0, %v717
      %v719 = vpop.f32.mrb[0].mxu0
      %720 = vmatprep.mubr.f32.mxu0 %v380
      %721 = vmatmul.mubr.f32.gmra.mrb[0].mxu0 %v379
      %v722 = vpop.f32.mrb[0].mxu0
      %v723 = vadd.f32 0.0, %v722
      %v724 = vpop.f32.mrb[0].mxu0
      %725 = vmatprep.mubr.f32.mxu0 %v383
      %726 = vmatmul.mubr.f32.gmra.mrb[0].mxu0 %v382
      %v727 = vpop.f32.mrb[0].mxu0
      %v728 = vadd.f32 0.0, %v727
      %v729 = vpop.f32.mrb[0].mxu0
      %730 = vdwg.mxu0
      %731 = vmatprep.subr.mxu0 0.0
      %732 = vmatpush1.msra.mxu0 %v246
      %733 = vmatprep.subr.mxu0 0.0
      %734 = vmatpush1.msra.mxu0 %v247
      %735 = vmatprep.subr.mxu0 0.0
      %736 = vmatpush1.msra.mxu0 %v248
      %737 = vmatprep.subr.mxu0 0.0
      %738 = vmatpush1.msra.mxu0 %v249
      %739 = vmatprep.subr.mxu0 0.0
      %740 = vmatpush1.msra.mxu0 0.0
      %741 = vmatprep.subr.mxu0 0.0
      %742 = vmatpush1.msra.mxu0 0.0
      %743 = vmatprep.subr.mxu0 0.0
      %744 = vmatpush1.msra.mxu0 0.0
      %745 = vmatprep.subr.mxu0 0.0
      %746 = vmatpush1.msra.mxu0 0.0
      %747 = vmatprep.subr.mxu0 0.0
      %748 = vmatpush1.msra.mxu0 0.0
      %749 = vmatprep.subr.mxu0 0.0
      %750 = vmatpush1.msra.mxu0 0.0
      %751 = vmatprep.subr.mxu0 0.0
      %752 = vmatpush1.msra.mxu0 0.0
      %753 = vmatprep.subr.mxu0 0.0
      %754 = vmatpush1.msra.mxu0 0.0
      %755 = vmatprep.subr.mxu0 0.0
      %756 = vmatpush1.msra.mxu0 0.0
      %757 = vmatprep.subr.mxu0 0.0
      %758 = vmatpush1.msra.mxu0 0.0
      %759 = vmatprep.subr.mxu0 0.0
      %760 = vmatpush1.msra.mxu0 0.0
      %761 = vmatprep.subr.mxu0 0.0
      %762 = vmatpush1.msra.mxu0 0.0
      %763 = vmatprep.subr.mxu0 0.0
      %764 = vmatpush1.msra.mxu0 0.0
      %765 = vmatprep.subr.mxu0 0.0
      %766 = vmatpush1.msra.mxu0 0.0
      %767 = vmatprep.subr.mxu0 0.0
      %768 = vmatpush1.msra.mxu0 0.0
      %769 = vmatprep.subr.mxu0 0.0
      %770 = vmatpush1.msra.mxu0 0.0
      %771 = vmatprep.subr.mxu0 0.0
      %772 = vmatpush1.msra.mxu0 0.0
      %773 = vmatprep.subr.mxu0 0.0
      %774 = vmatpush1.msra.mxu0 0.0
      %775 = vmatprep.subr.mxu0 0.0
      %776 = vmatpush1.msra.mxu0 0.0
      %777 = vmatprep.subr.mxu0 0.0
      %778 = vmatpush1.msra.mxu0 0.0
      %779 = vmatprep.subr.mxu0 0.0
      %780 = vmatpush1.msra.mxu0 0.0
      %781 = vmatprep.subr.mxu0 0.0
      %782 = vmatpush1.msra.mxu0 0.0
      %783 = vmatprep.subr.mxu0 0.0
      %784 = vmatpush1.msra.mxu0 0.0
      %785 = vmatprep.subr.mxu0 0.0
      %786 = vmatpush1.msra.mxu0 0.0
      %787 = vmatprep.subr.mxu0 0.0
      %788 = vmatpush1.msra.mxu0 0.0
      %789 = vmatprep.subr.mxu0 0.0
      %790 = vmatpush1.msra.mxu0 0.0
      %791 = vmatprep.subr.mxu0 0.0
      %792 = vmatpush1.msra.mxu0 0.0
      %793 = vmatprep.subr.mxu0 0.0
      %794 = vmatpush1.msra.mxu0 0.0
      %795 = vmatprep.mubr.f32.mxu0 0.0
      %796 = vmatmul.mubr.f32.gmra.mrb[0].mxu0 %v403
      %v797 = vpop.f32.mrb[0].mxu0
      %v798 = vadd.f32 %v568, %v797
      %v799 = vpop.f32.mrb[0].mxu0
      %800 = vmatprep.mubr.f32.mxu0 0.0
      %801 = vmatmul.mubr.f32.gmra.mrb[0].mxu0 %v406
      %v802 = vpop.f32.mrb[0].mxu0
      %v803 = vadd.f32 %v573, %v802
      %v804 = vpop.f32.mrb[0].mxu0
      %805 = vmatprep.mubr.f32.mxu0 0.0
      %806 = vmatmul.mubr.f32.gmra.mrb[0].mxu0 %v409
      %v807 = vpop.f32.mrb[0].mxu0
      %v808 = vadd.f32 %v578, %v807
      %v809 = vpop.f32.mrb[0].mxu0
      %810 = vmatprep.mubr.f32.mxu0 0.0
      %811 = vmatmul.mubr.f32.gmra.mrb[0].mxu0 %v412
      %v812 = vpop.f32.mrb[0].mxu0
      %v813 = vadd.f32 %v583, %v812
      %v814 = vpop.f32.mrb[0].mxu0
      %815 = vmatprep.mubr.f32.mxu0 0.0
      %816 = vmatmul.mubr.f32.gmra.mrb[0].mxu0 %v415
      %v817 = vpop.f32.mrb[0].mxu0
      %v818 = vadd.f32 %v588, %v817
      %v819 = vpop.f32.mrb[0].mxu0
      %820 = vmatprep.mubr.f32.mxu0 0.0
      %821 = vmatmul.mubr.f32.gmra.mrb[0].mxu0 %v418
      %v822 = vpop.f32.mrb[0].mxu0
      %v823 = vadd.f32 %v593, %v822
      %v824 = vpop.f32.mrb[0].mxu0
      %825 = vmatprep.mubr.f32.mxu0 0.0
      %826 = vmatmul.mubr.f32.gmra.mrb[0].mxu0 %v421
      %v827 = vpop.f32.mrb[0].mxu0
      %v828 = vadd.f32 %v598, %v827
      %v829 = vpop.f32.mrb[0].mxu0
      %830 = vmatprep.mubr.f32.mxu0 0.0
      %831 = vmatmul.mubr.f32.gmra.mrb[0].mxu0 %v424
      %v832 = vpop.f32.mrb[0].mxu0
      %v833 = vadd.f32 %v603, %v832
      %v834 = vpop.f32.mrb[0].mxu0
      %835 = vmatprep.mubr.f32.mxu0 0.0
      %836 = vmatmul.mubr.f32.gmra.mrb[0].mxu0 %v427
      %v837 = vpop.f32.mrb[0].mxu0
      %v838 = vadd.f32 %v608, %v837
      %v839 = vpop.f32.mrb[0].mxu0
      %840 = vmatprep.mubr.f32.mxu0 0.0
      %841 = vmatmul.mubr.f32.gmra.mrb[0].mxu0 %v430
      %v842 = vpop.f32.mrb[0].mxu0
      %v843 = vadd.f32 %v613, %v842
      %v844 = vpop.f32.mrb[0].mxu0
      %845 = vmatprep.mubr.f32.mxu0 0.0
      %846 = vmatmul.mubr.f32.gmra.mrb[0].mxu0 %v433
      %v847 = vpop.f32.mrb[0].mxu0
      %v848 = vadd.f32 %v618, %v847
      %v849 = vpop.f32.mrb[0].mxu0
      %850 = vmatprep.mubr.f32.mxu0 0.0
      %851 = vmatmul.mubr.f32.gmra.mrb[0].mxu0 %v436
      %v852 = vpop.f32.mrb[0].mxu0
      %v853 = vadd.f32 %v623, %v852
      %v854 = vpop.f32.mrb[0].mxu0
      %855 = vmatprep.mubr.f32.mxu0 0.0
      %856 = vmatmul.mubr.f32.gmra.mrb[0].mxu0 %v439
      %v857 = vpop.f32.mrb[0].mxu0
      %v858 = vadd.f32 %v628, %v857
      %v859 = vpop.f32.mrb[0].mxu0
      %860 = vmatprep.mubr.f32.mxu0 0.0
      %861 = vmatmul.mubr.f32.gmra.mrb[0].mxu0 %v442
      %v862 = vpop.f32.mrb[0].mxu0
      %v863 = vadd.f32 %v633, %v862
      %v864 = vpop.f32.mrb[0].mxu0
      %865 = vmatprep.mubr.f32.mxu0 0.0
      %866 = vmatmul.mubr.f32.gmra.mrb[0].mxu0 %v445
      %v867 = vpop.f32.mrb[0].mxu0
      %v868 = vadd.f32 %v638, %v867
      %v869 = vpop.f32.mrb[0].mxu0
      %870 = vmatprep.mubr.f32.mxu0 0.0
      %871 = vmatmul.mubr.f32.gmra.mrb[0].mxu0 %v448
      %v872 = vpop.f32.mrb[0].mxu0
      %v873 = vadd.f32 %v643, %v872
      %v874 = vpop.f32.mrb[0].mxu0
      %875 = vmatprep.mubr.f32.mxu0 0.0
      %876 = vmatmul.mubr.f32.gmra.mrb[0].mxu0 %v451
      %v877 = vpop.f32.mrb[0].mxu0
      %v878 = vadd.f32 %v648, %v877
      %v879 = vpop.f32.mrb[0].mxu0
      %880 = vmatprep.mubr.f32.mxu0 0.0
      %881 = vmatmul.mubr.f32.gmra.mrb[0].mxu0 %v454
      %v882 = vpop.f32.mrb[0].mxu0
      %v883 = vadd.f32 %v653, %v882
      %v884 = vpop.f32.mrb[0].mxu0
      %885 = vmatprep.mubr.f32.mxu0 0.0
      %886 = vmatmul.mubr.f32.gmra.mrb[0].mxu0 %v457
      %v887 = vpop.f32.mrb[0].mxu0
      %v888 = vadd.f32 %v658, %v887
      %v889 = vpop.f32.mrb[0].mxu0
      %890 = vmatprep.mubr.f32.mxu0 0.0
      %891 = vmatmul.mubr.f32.gmra.mrb[0].mxu0 %v460
      %v892 = vpop.f32.mrb[0].mxu0
      %v893 = vadd.f32 %v663, %v892
      %v894 = vpop.f32.mrb[0].mxu0
      %895 = vmatprep.mubr.f32.mxu0 0.0
      %896 = vmatmul.mubr.f32.gmra.mrb[0].mxu0 %v463
      %v897 = vpop.f32.mrb[0].mxu0
      %v898 = vadd.f32 %v668, %v897
      %v899 = vpop.f32.mrb[0].mxu0
      %900 = vmatprep.mubr.f32.mxu0 0.0
      %901 = vmatmul.mubr.f32.gmra.mrb[0].mxu0 %v466
      %v902 = vpop.f32.mrb[0].mxu0
      %v903 = vadd.f32 %v673, %v902
      %v904 = vpop.f32.mrb[0].mxu0
      %905 = vmatprep.mubr.f32.mxu0 0.0
      %906 = vmatmul.mubr.f32.gmra.mrb[0].mxu0 %v469
      %v907 = vpop.f32.mrb[0].mxu0
      %v908 = vadd.f32 %v678, %v907
      %v909 = vpop.f32.mrb[0].mxu0
      %910 = vmatprep.mubr.f32.mxu0 0.0
      %911 = vmatmul.mubr.f32.gmra.mrb[0].mxu0 %v472
      %v912 = vpop.f32.mrb[0].mxu0
      %v913 = vadd.f32 %v683, %v912
      %v914 = vpop.f32.mrb[0].mxu0
      %915 = vmatprep.mubr.f32.mxu0 0.0
      %916 = vmatmul.mubr.f32.gmra.mrb[0].mxu0 %v475
      %v917 = vpop.f32.mrb[0].mxu0
      %v918 = vadd.f32 %v688, %v917
      %v919 = vpop.f32.mrb[0].mxu0
      %920 = vmatprep.mubr.f32.mxu0 0.0
      %921 = vmatmul.mubr.f32.gmra.mrb[0].mxu0 %v478
      %v922 = vpop.f32.mrb[0].mxu0
      %v923 = vadd.f32 %v693, %v922
      %v924 = vpop.f32.mrb[0].mxu0
      %925 = vmatprep.mubr.f32.mxu0 0.0
      %926 = vmatmul.mubr.f32.gmra.mrb[0].mxu0 %v481
      %v927 = vpop.f32.mrb[0].mxu0
      %v928 = vadd.f32 %v698, %v927
      %v929 = vpop.f32.mrb[0].mxu0
      %930 = vmatprep.mubr.f32.mxu0 0.0
      %931 = vmatmul.mubr.f32.gmra.mrb[0].mxu0 %v484
      %v932 = vpop.f32.mrb[0].mxu0
      %v933 = vadd.f32 %v703, %v932
      %v934 = vpop.f32.mrb[0].mxu0
      %935 = vmatprep.mubr.f32.mxu0 0.0
      %936 = vmatmul.mubr.f32.gmra.mrb[0].mxu0 %v487
      %v937 = vpop.f32.mrb[0].mxu0
      %v938 = vadd.f32 %v708, %v937
      %v939 = vpop.f32.mrb[0].mxu0
      %940 = vmatprep.mubr.f32.mxu0 0.0
      %941 = vmatmul.mubr.f32.gmra.mrb[0].mxu0 %v490
      %v942 = vpop.f32.mrb[0].mxu0
      %v943 = vadd.f32 %v713, %v942
      %v944 = vpop.f32.mrb[0].mxu0
      %945 = vmatprep.mubr.f32.mxu0 0.0
      %946 = vmatmul.mubr.f32.gmra.mrb[0].mxu0 %v493
      %v947 = vpop.f32.mrb[0].mxu0
      %v948 = vadd.f32 %v718, %v947
      %v949 = vpop.f32.mrb[0].mxu0
      %950 = vmatprep.mubr.f32.mxu0 0.0
      %951 = vmatmul.mubr.f32.gmra.mrb[0].mxu0 %v496
      %v952 = vpop.f32.mrb[0].mxu0
      %v953 = vadd.f32 %v723, %v952
      %v954 = vpop.f32.mrb[0].mxu0
      %955 = vmatprep.mubr.f32.mxu0 0.0
      %956 = vmatmul.mubr.f32.gmra.mrb[0].mxu0 %v499
      %v957 = vpop.f32.mrb[0].mxu0
      %v958 = vadd.f32 %v728, %v957
      %v959 = vpop.f32.mrb[0].mxu0
      %960 = vdwg.mxu0
      %961 = vmatprep.subr.mxu0 0.0
      %962 = vmatpush1.msra.mxu0 %v385
      %963 = vmatprep.subr.mxu0 0.0
      %964 = vmatpush1.msra.mxu0 %v386
      %965 = vmatprep.subr.mxu0 0.0
      %966 = vmatpush1.msra.mxu0 %v387
      %967 = vmatprep.subr.mxu0 0.0
      %968 = vmatpush1.msra.mxu0 %v388
      %969 = vmatprep.subr.mxu0 0.0
      %970 = vmatpush1.msra.mxu0 %v389
      %971 = vmatprep.subr.mxu0 0.0
      %972 = vmatpush1.msra.mxu0 %v390
      %973 = vmatprep.subr.mxu0 0.0
      %974 = vmatpush1.msra.mxu0 %v391
      %975 = vmatprep.subr.mxu0 0.0
      %976 = vmatpush1.msra.mxu0 %v392
      %977 = vmatprep.subr.mxu0 0.0
      %978 = vmatpush1.msra.mxu0 %v393
      %979 = vmatprep.subr.mxu0 0.0
      %980 = vmatpush1.msra.mxu0 %v394
      %981 = vmatprep.subr.mxu0 0.0
      %982 = vmatpush1.msra.mxu0 %v395
      %983 = vmatprep.subr.mxu0 0.0
      %984 = vmatpush1.msra.mxu0 %v396
      %985 = vmatprep.subr.mxu0 0.0
      %986 = vmatpush1.msra.mxu0 %v397
      %987 = vmatprep.subr.mxu0 0.0
      %988 = vmatpush1.msra.mxu0 %v398
      %989 = vmatprep.subr.mxu0 0.0
      %990 = vmatpush1.msra.mxu0 %v399
      %991 = vmatprep.subr.mxu0 0.0
      %992 = vmatpush1.msra.mxu0 %v400
      %993 = vmatprep.subr.mxu0 0.0
      %994 = vmatpush1.msra.mxu0 0.0
      %995 = vmatprep.subr.mxu0 0.0
      %996 = vmatpush1.msra.mxu0 0.0
      %997 = vmatprep.subr.mxu0 0.0
      %998 = vmatpush1.msra.mxu0 0.0
      %999 = vmatprep.subr.mxu0 0.0
      %1000 = vmatpush1.msra.mxu0 0.0
      %1001 = vmatprep.subr.mxu0 0.0
      %1002 = vmatpush1.msra.mxu0 0.0
      %1003 = vmatprep.subr.mxu0 0.0
      %1004 = vmatpush1.msra.mxu0 0.0
      %1005 = vmatprep.subr.mxu0 0.0
      %1006 = vmatpush1.msra.mxu0 0.0
      %1007 = vmatprep.subr.mxu0 0.0
      %1008 = vmatpush1.msra.mxu0 0.0
      %1009 = vmatprep.subr.mxu0 0.0
      %1010 = vmatpush1.msra.mxu0 0.0
      %1011 = vmatprep.subr.mxu0 0.0
      %1012 = vmatpush1.msra.mxu0 0.0
      %1013 = vmatprep.subr.mxu0 0.0
      %1014 = vmatpush1.msra.mxu0 0.0
      %1015 = vmatprep.subr.mxu0 0.0
      %1016 = vmatpush1.msra.mxu0 0.0
      %1017 = vmatprep.subr.mxu0 0.0
      %1018 = vmatpush1.msra.mxu0 0.0
      %1019 = vmatprep.subr.mxu0 0.0
      %1020 = vmatpush1.msra.mxu0 0.0
      %1021 = vmatprep.subr.mxu0 0.0
      %1022 = vmatpush1.msra.mxu0 0.0
      %1023 = vmatprep.subr.mxu0 0.0
      %1024 = vmatpush1.msra.mxu0 0.0
      %1025 = vmatprep.mubr.f32.mxu0 0.0
      %1026 = vmatmul.mubr.f32.gmra.mrb[0].mxu0 %v798
      %v1027 = vpop.f32.mrb[0].mxu0
      %v1028 = vadd.f32 0.0, %v1027
      %v1029 = vpop.f32.mrb[0].mxu0
      %1030 = vmatprep.mubr.f32.mxu0 0.0
      %1031 = vmatmul.mubr.f32.gmra.mrb[0].mxu0 %v803
      %v1032 = vpop.f32.mrb[0].mxu0
      %v1033 = vadd.f32 0.0, %v1032
      %v1034 = vpop.f32.mrb[0].mxu0
      %1035 = vmatprep.mubr.f32.mxu0 0.0
      %1036 = vmatmul.mubr.f32.gmra.mrb[0].mxu0 %v808
      %v1037 = vpop.f32.mrb[0].mxu0
      %v1038 = vadd.f32 0.0, %v1037
      %v1039 = vpop.f32.mrb[0].mxu0
      %1040 = vmatprep.mubr.f32.mxu0 0.0
      %1041 = vmatmul.mubr.f32.gmra.mrb[0].mxu0 %v813
      %v1042 = vpop.f32.mrb[0].mxu0
      %v1043 = vadd.f32 0.0, %v1042
      %v1044 = vpop.f32.mrb[0].mxu0
      %1045 = vmatprep.mubr.f32.mxu0 0.0
      %1046 = vmatmul.mubr.f32.gmra.mrb[0].mxu0 %v818
      %v1047 = vpop.f32.mrb[0].mxu0
      %v1048 = vadd.f32 0.0, %v1047
      %v1049 = vpop.f32.mrb[0].mxu0
      %1050 = vmatprep.mubr.f32.mxu0 0.0
      %1051 = vmatmul.mubr.f32.gmra.mrb[0].mxu0 %v823
      %v1052 = vpop.f32.mrb[0].mxu0
      %v1053 = vadd.f32 0.0, %v1052
      %v1054 = vpop.f32.mrb[0].mxu0
      %1055 = vmatprep.mubr.f32.mxu0 0.0
      %1056 = vmatmul.mubr.f32.gmra.mrb[0].mxu0 %v828
      %v1057 = vpop.f32.mrb[0].mxu0
      %v1058 = vadd.f32 0.0, %v1057
      %v1059 = vpop.f32.mrb[0].mxu0
      %1060 = vmatprep.mubr.f32.mxu0 0.0
      %1061 = vmatmul.mubr.f32.gmra.mrb[0].mxu0 %v833
      %v1062 = vpop.f32.mrb[0].mxu0
      %v1063 = vadd.f32 0.0, %v1062
      %v1064 = vpop.f32.mrb[0].mxu0
      %1065 = vmatprep.mubr.f32.mxu0 0.0
      %1066 = vmatmul.mubr.f32.gmra.mrb[0].mxu0 %v838
      %v1067 = vpop.f32.mrb[0].mxu0
      %v1068 = vadd.f32 0.0, %v1067
      %v1069 = vpop.f32.mrb[0].mxu0
      %1070 = vmatprep.mubr.f32.mxu0 0.0
      %1071 = vmatmul.mubr.f32.gmra.mrb[0].mxu0 %v843
      %v1072 = vpop.f32.mrb[0].mxu0
      %v1073 = vadd.f32 0.0, %v1072
      %v1074 = vpop.f32.mrb[0].mxu0
      %1075 = vmatprep.mubr.f32.mxu0 0.0
      %1076 = vmatmul.mubr.f32.gmra.mrb[0].mxu0 %v848
      %v1077 = vpop.f32.mrb[0].mxu0
      %v1078 = vadd.f32 0.0, %v1077
      %v1079 = vpop.f32.mrb[0].mxu0
      %1080 = vmatprep.mubr.f32.mxu0 0.0
      %1081 = vmatmul.mubr.f32.gmra.mrb[0].mxu0 %v853
      %v1082 = vpop.f32.mrb[0].mxu0
      %v1083 = vadd.f32 0.0, %v1082
      %v1084 = vpop.f32.mrb[0].mxu0
      %1085 = vmatprep.mubr.f32.mxu0 0.0
      %1086 = vmatmul.mubr.f32.gmra.mrb[0].mxu0 %v858
      %v1087 = vpop.f32.mrb[0].mxu0
      %v1088 = vadd.f32 0.0, %v1087
      %v1089 = vpop.f32.mrb[0].mxu0
      %1090 = vmatprep.mubr.f32.mxu0 0.0
      %1091 = vmatmul.mubr.f32.gmra.mrb[0].mxu0 %v863
      %v1092 = vpop.f32.mrb[0].mxu0
      %v1093 = vadd.f32 0.0, %v1092
      %v1094 = vpop.f32.mrb[0].mxu0
      %1095 = vmatprep.mubr.f32.mxu0 0.0
      %1096 = vmatmul.mubr.f32.gmra.mrb[0].mxu0 %v868
      %v1097 = vpop.f32.mrb[0].mxu0
      %v1098 = vadd.f32 0.0, %v1097
      %v1099 = vpop.f32.mrb[0].mxu0
      %1100 = vmatprep.mubr.f32.mxu0 0.0
      %1101 = vmatmul.mubr.f32.gmra.mrb[0].mxu0 %v873
      %v1102 = vpop.f32.mrb[0].mxu0
      %v1103 = vadd.f32 0.0, %v1102
      %v1104 = vpop.f32.mrb[0].mxu0
      %1105 = vmatprep.mubr.f32.mxu0 0.0
      %1106 = vmatmul.mubr.f32.gmra.mrb[0].mxu0 %v878
      %v1107 = vpop.f32.mrb[0].mxu0
      %v1108 = vadd.f32 0.0, %v1107
      %v1109 = vpop.f32.mrb[0].mxu0
      %1110 = vmatprep.mubr.f32.mxu0 0.0
      %1111 = vmatmul.mubr.f32.gmra.mrb[0].mxu0 %v883
      %v1112 = vpop.f32.mrb[0].mxu0
      %v1113 = vadd.f32 0.0, %v1112
      %v1114 = vpop.f32.mrb[0].mxu0
      %1115 = vmatprep.mubr.f32.mxu0 0.0
      %1116 = vmatmul.mubr.f32.gmra.mrb[0].mxu0 %v888
      %v1117 = vpop.f32.mrb[0].mxu0
      %v1118 = vadd.f32 0.0, %v1117
      %v1119 = vpop.f32.mrb[0].mxu0
      %1120 = vmatprep.mubr.f32.mxu0 0.0
      %1121 = vmatmul.mubr.f32.gmra.mrb[0].mxu0 %v893
      %v1122 = vpop.f32.mrb[0].mxu0
      %v1123 = vadd.f32 0.0, %v1122
      %v1124 = vpop.f32.mrb[0].mxu0
      %1125 = vmatprep.mubr.f32.mxu0 0.0
      %1126 = vmatmul.mubr.f32.gmra.mrb[0].mxu0 %v898
      %v1127 = vpop.f32.mrb[0].mxu0
      %v1128 = vadd.f32 0.0, %v1127
      %v1129 = vpop.f32.mrb[0].mxu0
      %1130 = vmatprep.mubr.f32.mxu0 0.0
      %1131 = vmatmul.mubr.f32.gmra.mrb[0].mxu0 %v903
      %v1132 = vpop.f32.mrb[0].mxu0
      %v1133 = vadd.f32 0.0, %v1132
      %v1134 = vpop.f32.mrb[0].mxu0
      %1135 = vmatprep.mubr.f32.mxu0 0.0
      %1136 = vmatmul.mubr.f32.gmra.mrb[0].mxu0 %v908
      %v1137 = vpop.f32.mrb[0].mxu0
      %v1138 = vadd.f32 0.0, %v1137
      %v1139 = vpop.f32.mrb[0].mxu0
      %1140 = vmatprep.mubr.f32.mxu0 0.0
      %1141 = vmatmul.mubr.f32.gmra.mrb[0].mxu0 %v913
      %v1142 = vpop.f32.mrb[0].mxu0
      %v1143 = vadd.f32 0.0, %v1142
      %v1144 = vpop.f32.mrb[0].mxu0
      %1145 = vmatprep.mubr.f32.mxu0 0.0
      %1146 = vmatmul.mubr.f32.gmra.mrb[0].mxu0 %v918
      %v1147 = vpop.f32.mrb[0].mxu0
      %v1148 = vadd.f32 0.0, %v1147
      %v1149 = vpop.f32.mrb[0].mxu0
      %1150 = vmatprep.mubr.f32.mxu0 0.0
      %1151 = vmatmul.mubr.f32.gmra.mrb[0].mxu0 %v923
      %v1152 = vpop.f32.mrb[0].mxu0
      %v1153 = vadd.f32 0.0, %v1152
      %v1154 = vpop.f32.mrb[0].mxu0
      %1155 = vmatprep.mubr.f32.mxu0 0.0
      %1156 = vmatmul.mubr.f32.gmra.mrb[0].mxu0 %v928
      %v1157 = vpop.f32.mrb[0].mxu0
      %v1158 = vadd.f32 0.0, %v1157
      %v1159 = vpop.f32.mrb[0].mxu0
      %1160 = vmatprep.mubr.f32.mxu0 0.0
      %1161 = vmatmul.mubr.f32.gmra.mrb[0].mxu0 %v933
      %v1162 = vpop.f32.mrb[0].mxu0
      %v1163 = vadd.f32 0.0, %v1162
      %v1164 = vpop.f32.mrb[0].mxu0
      %1165 = vmatprep.mubr.f32.mxu0 0.0
      %1166 = vmatmul.mubr.f32.gmra.mrb[0].mxu0 %v938
      %v1167 = vpop.f32.mrb[0].mxu0
      %v1168 = vadd.f32 0.0, %v1167
      %v1169 = vpop.f32.mrb[0].mxu0
      %1170 = vmatprep.mubr.f32.mxu0 0.0
      %1171 = vmatmul.mubr.f32.gmra.mrb[0].mxu0 %v943
      %v1172 = vpop.f32.mrb[0].mxu0
      %v1173 = vadd.f32 0.0, %v1172
      %v1174 = vpop.f32.mrb[0].mxu0
      %1175 = vmatprep.mubr.f32.mxu0 0.0
      %1176 = vmatmul.mubr.f32.gmra.mrb[0].mxu0 %v948
      %v1177 = vpop.f32.mrb[0].mxu0
      %v1178 = vadd.f32 0.0, %v1177
      %v1179 = vpop.f32.mrb[0].mxu0
      %1180 = vmatprep.mubr.f32.mxu0 0.0
      %1181 = vmatmul.mubr.f32.gmra.mrb[0].mxu0 %v953
      %v1182 = vpop.f32.mrb[0].mxu0
      %v1183 = vadd.f32 0.0, %v1182
      %v1184 = vpop.f32.mrb[0].mxu0
      %1185 = vmatprep.mubr.f32.mxu0 0.0
      %1186 = vmatmul.mubr.f32.gmra.mrb[0].mxu0 %v958
      %v1187 = vpop.f32.mrb[0].mxu0
      %v1188 = vadd.f32 0.0, %v1187
      %v1189 = vpop.f32.mrb[0].mxu0
      %1190 = vdwg.mxu0
      %1191 = vmatprep.subr.mxu0 0.0
      %1192 = vmatpush1.msra.mxu0 %v250
      %1193 = vmatprep.subr.mxu0 0.0
      %1194 = vmatpush1.msra.mxu0 %v251
      %1195 = vmatprep.subr.mxu0 0.0
      %1196 = vmatpush1.msra.mxu0 %v252
      %1197 = vmatprep.subr.mxu0 0.0
      %1198 = vmatpush1.msra.mxu0 %v253
      %1199 = vmatprep.subr.mxu0 0.0
      %1200 = vmatpush1.msra.mxu0 %v254
      %1201 = vmatprep.subr.mxu0 0.0
      %1202 = vmatpush1.msra.mxu0 %v255
      %1203 = vmatprep.subr.mxu0 0.0
      %1204 = vmatpush1.msra.mxu0 %v256
      %1205 = vmatprep.subr.mxu0 0.0
      %1206 = vmatpush1.msra.mxu0 %v257
      %1207 = vmatprep.subr.mxu0 0.0
      %1208 = vmatpush1.msra.mxu0 %v258
      %1209 = vmatprep.subr.mxu0 0.0
      %1210 = vmatpush1.msra.mxu0 %v259
      %1211 = vmatprep.subr.mxu0 0.0
      %1212 = vmatpush1.msra.mxu0 %v260
      %1213 = vmatprep.subr.mxu0 0.0
      %1214 = vmatpush1.msra.mxu0 %v261
      %1215 = vmatprep.subr.mxu0 0.0
      %1216 = vmatpush1.msra.mxu0 %v262
      %1217 = vmatprep.subr.mxu0 0.0
      %1218 = vmatpush1.msra.mxu0 %v263
      %1219 = vmatprep.subr.mxu0 0.0
      %1220 = vmatpush1.msra.mxu0 %v264
      %1221 = vmatprep.subr.mxu0 0.0
      %1222 = vmatpush1.msra.mxu0 %v265
      %1223 = vmatprep.subr.mxu0 0.0
      %1224 = vmatpush1.msra.mxu0 %v266
      %1225 = vmatprep.subr.mxu0 0.0
      %1226 = vmatpush1.msra.mxu0 %v267
      %1227 = vmatprep.subr.mxu0 0.0
      %1228 = vmatpush1.msra.mxu0 %v268
      %1229 = vmatprep.subr.mxu0 0.0
      %1230 = vmatpush1.msra.mxu0 %v269
      %1231 = vmatprep.subr.mxu0 0.0
      %1232 = vmatpush1.msra.mxu0 %v270
      %1233 = vmatprep.subr.mxu0 0.0
      %1234 = vmatpush1.msra.mxu0 %v271
      %1235 = vmatprep.subr.mxu0 0.0
      %1236 = vmatpush1.msra.mxu0 %v272
      %1237 = vmatprep.subr.mxu0 0.0
      %1238 = vmatpush1.msra.mxu0 %v273
      %1239 = vmatprep.subr.mxu0 0.0
      %1240 = vmatpush1.msra.mxu0 %v274
      %1241 = vmatprep.subr.mxu0 0.0
      %1242 = vmatpush1.msra.mxu0 %v275
      %1243 = vmatprep.subr.mxu0 0.0
      %1244 = vmatpush1.msra.mxu0 %v276
      %1245 = vmatprep.subr.mxu0 0.0
      %1246 = vmatpush1.msra.mxu0 %v277
      %1247 = vmatprep.subr.mxu0 0.0
      %1248 = vmatpush1.msra.mxu0 %v278
      %1249 = vmatprep.subr.mxu0 0.0
      %1250 = vmatpush1.msra.mxu0 %v279
      %1251 = vmatprep.subr.mxu0 0.0
      %1252 = vmatpush1.msra.mxu0 %v280
      %1253 = vmatprep.subr.mxu0 0.0
      %1254 = vmatpush1.msra.mxu0 %v281
      %1255 = vmatprep.mubr.f32.mxu0 %v287
      %1256 = vmatmul.mubr.f32.gmra.mrb[0].mxu0 %v286
      %v1257 = vpop.f32.mrb[0].mxu0
      %v1258 = vadd.f32 0.0, %v1257
      %v1259 = vpop.f32.mrb[0].mxu0
      %1260 = vmatprep.mubr.f32.mxu0 %v290
      %1261 = vmatmul.mubr.f32.gmra.mrb[0].mxu0 %v289
      %v1262 = vpop.f32.mrb[0].mxu0
      %v1263 = vadd.f32 0.0, %v1262
      %v1264 = vpop.f32.mrb[0].mxu0
      %1265 = vmatprep.mubr.f32.mxu0 %v293
      %1266 = vmatmul.mubr.f32.gmra.mrb[0].mxu0 %v292
      %v1267 = vpop.f32.mrb[0].mxu0
      %v1268 = vadd.f32 0.0, %v1267
      %v1269 = vpop.f32.mrb[0].mxu0
      %1270 = vmatprep.mubr.f32.mxu0 %v296
      %1271 = vmatmul.mubr.f32.gmra.mrb[0].mxu0 %v295
      %v1272 = vpop.f32.mrb[0].mxu0
      %v1273 = vadd.f32 0.0, %v1272
      %v1274 = vpop.f32.mrb[0].mxu0
      %1275 = vmatprep.mubr.f32.mxu0 %v299
      %1276 = vmatmul.mubr.f32.gmra.mrb[0].mxu0 %v298
      %v1277 = vpop.f32.mrb[0].mxu0
      %v1278 = vadd.f32 0.0, %v1277
      %v1279 = vpop.f32.mrb[0].mxu0
      %1280 = vmatprep.mubr.f32.mxu0 %v302
      %1281 = vmatmul.mubr.f32.gmra.mrb[0].mxu0 %v301
      %v1282 = vpop.f32.mrb[0].mxu0
      %v1283 = vadd.f32 0.0, %v1282
      %v1284 = vpop.f32.mrb[0].mxu0
      %1285 = vmatprep.mubr.f32.mxu0 %v305
      %1286 = vmatmul.mubr.f32.gmra.mrb[0].mxu0 %v304
      %v1287 = vpop.f32.mrb[0].mxu0
      %v1288 = vadd.f32 0.0, %v1287
      %v1289 = vpop.f32.mrb[0].mxu0
      %1290 = vmatprep.mubr.f32.mxu0 %v308
      %1291 = vmatmul.mubr.f32.gmra.mrb[0].mxu0 %v307
      %v1292 = vpop.f32.mrb[0].mxu0
      %v1293 = vadd.f32 0.0, %v1292
      %v1294 = vpop.f32.mrb[0].mxu0
      %1295 = vmatprep.mubr.f32.mxu0 %v311
      %1296 = vmatmul.mubr.f32.gmra.mrb[0].mxu0 %v310
      %v1297 = vpop.f32.mrb[0].mxu0
      %v1298 = vadd.f32 0.0, %v1297
      %v1299 = vpop.f32.mrb[0].mxu0
      %1300 = vmatprep.mubr.f32.mxu0 %v314
      %1301 = vmatmul.mubr.f32.gmra.mrb[0].mxu0 %v313
      %v1302 = vpop.f32.mrb[0].mxu0
      %v1303 = vadd.f32 0.0, %v1302
      %v1304 = vpop.f32.mrb[0].mxu0
      %1305 = vmatprep.mubr.f32.mxu0 %v317
      %1306 = vmatmul.mubr.f32.gmra.mrb[0].mxu0 %v316
      %v1307 = vpop.f32.mrb[0].mxu0
      %v1308 = vadd.f32 0.0, %v1307
      %v1309 = vpop.f32.mrb[0].mxu0
      %1310 = vmatprep.mubr.f32.mxu0 %v320
      %1311 = vmatmul.mubr.f32.gmra.mrb[0].mxu0 %v319
      %v1312 = vpop.f32.mrb[0].mxu0
      %v1313 = vadd.f32 0.0, %v1312
      %v1314 = vpop.f32.mrb[0].mxu0
      %1315 = vmatprep.mubr.f32.mxu0 %v323
      %1316 = vmatmul.mubr.f32.gmra.mrb[0].mxu0 %v322
      %v1317 = vpop.f32.mrb[0].mxu0
      %v1318 = vadd.f32 0.0, %v1317
      %v1319 = vpop.f32.mrb[0].mxu0
      %1320 = vmatprep.mubr.f32.mxu0 %v326
      %1321 = vmatmul.mubr.f32.gmra.mrb[0].mxu0 %v325
      %v1322 = vpop.f32.mrb[0].mxu0
      %v1323 = vadd.f32 0.0, %v1322
      %v1324 = vpop.f32.mrb[0].mxu0
      %1325 = vmatprep.mubr.f32.mxu0 %v329
      %1326 = vmatmul.mubr.f32.gmra.mrb[0].mxu0 %v328
      %v1327 = vpop.f32.mrb[0].mxu0
      %v1328 = vadd.f32 0.0, %v1327
      %v1329 = vpop.f32.mrb[0].mxu0
      %1330 = vmatprep.mubr.f32.mxu0 %v332
      %1331 = vmatmul.mubr.f32.gmra.mrb[0].mxu0 %v331
      %v1332 = vpop.f32.mrb[0].mxu0
      %v1333 = vadd.f32 0.0, %v1332
      %v1334 = vpop.f32.mrb[0].mxu0
      %1335 = vmatprep.mubr.f32.mxu0 %v335
      %1336 = vmatmul.mubr.f32.gmra.mrb[0].mxu0 %v334
      %v1337 = vpop.f32.mrb[0].mxu0
      %v1338 = vadd.f32 0.0, %v1337
      %v1339 = vpop.f32.mrb[0].mxu0
      %1340 = vmatprep.mubr.f32.mxu0 %v338
      %1341 = vmatmul.mubr.f32.gmra.mrb[0].mxu0 %v337
      %v1342 = vpop.f32.mrb[0].mxu0
      %v1343 = vadd.f32 0.0, %v1342
      %v1344 = vpop.f32.mrb[0].mxu0
      %1345 = vmatprep.mubr.f32.mxu0 %v341
      %1346 = vmatmul.mubr.f32.gmra.mrb[0].mxu0 %v340
      %v1347 = vpop.f32.mrb[0].mxu0
      %v1348 = vadd.f32 0.0, %v1347
      %v1349 = vpop.f32.mrb[0].mxu0
      %1350 = vmatprep.mubr.f32.mxu0 %v344
      %1351 = vmatmul.mubr.f32.gmra.mrb[0].mxu0 %v343
      %v1352 = vpop.f32.mrb[0].mxu0
      %v1353 = vadd.f32 0.0, %v1352
      %v1354 = vpop.f32.mrb[0].mxu0
      %1355 = vmatprep.mubr.f32.mxu0 %v347
      %1356 = vmatmul.mubr.f32.gmra.mrb[0].mxu0 %v346
      %v1357 = vpop.f32.mrb[0].mxu0
      %v1358 = vadd.f32 0.0, %v1357
      %v1359 = vpop.f32.mrb[0].mxu0
      %1360 = vmatprep.mubr.f32.mxu0 %v350
      %1361 = vmatmul.mubr.f32.gmra.mrb[0].mxu0 %v349
      %v1362 = vpop.f32.mrb[0].mxu0
      %v1363 = vadd.f32 0.0, %v1362
      %v1364 = vpop.f32.mrb[0].mxu0
      %1365 = vmatprep.mubr.f32.mxu0 %v353
      %1366 = vmatmul.mubr.f32.gmra.mrb[0].mxu0 %v352
      %v1367 = vpop.f32.mrb[0].mxu0
      %v1368 = vadd.f32 0.0, %v1367
      %v1369 = vpop.f32.mrb[0].mxu0
      %1370 = vmatprep.mubr.f32.mxu0 %v356
      %1371 = vmatmul.mubr.f32.gmra.mrb[0].mxu0 %v355
      %v1372 = vpop.f32.mrb[0].mxu0
      %v1373 = vadd.f32 0.0, %v1372
      %v1374 = vpop.f32.mrb[0].mxu0
      %1375 = vmatprep.mubr.f32.mxu0 %v359
      %1376 = vmatmul.mubr.f32.gmra.mrb[0].mxu0 %v358
      %v1377 = vpop.f32.mrb[0].mxu0
      %v1378 = vadd.f32 0.0, %v1377
      %v1379 = vpop.f32.mrb[0].mxu0
      %1380 = vmatprep.mubr.f32.mxu0 %v362
      %1381 = vmatmul.mubr.f32.gmra.mrb[0].mxu0 %v361
      %v1382 = vpop.f32.mrb[0].mxu0
      %v1383 = vadd.f32 0.0, %v1382
      %v1384 = vpop.f32.mrb[0].mxu0
      %1385 = vmatprep.mubr.f32.mxu0 %v365
      %1386 = vmatmul.mubr.f32.gmra.mrb[0].mxu0 %v364
      %v1387 = vpop.f32.mrb[0].mxu0
      %v1388 = vadd.f32 0.0, %v1387
      %v1389 = vpop.f32.mrb[0].mxu0
      %1390 = vmatprep.mubr.f32.mxu0 %v368
      %1391 = vmatmul.mubr.f32.gmra.mrb[0].mxu0 %v367
      %v1392 = vpop.f32.mrb[0].mxu0
      %v1393 = vadd.f32 0.0, %v1392
      %v1394 = vpop.f32.mrb[0].mxu0
      %1395 = vmatprep.mubr.f32.mxu0 %v371
      %1396 = vmatmul.mubr.f32.gmra.mrb[0].mxu0 %v370
      %v1397 = vpop.f32.mrb[0].mxu0
      %v1398 = vadd.f32 0.0, %v1397
      %v1399 = vpop.f32.mrb[0].mxu0
      %1400 = vmatprep.mubr.f32.mxu0 %v374
      %1401 = vmatmul.mubr.f32.gmra.mrb[0].mxu0 %v373
      %v1402 = vpop.f32.mrb[0].mxu0
      %v1403 = vadd.f32 0.0, %v1402
      %v1404 = vpop.f32.mrb[0].mxu0
      %1405 = vmatprep.mubr.f32.mxu0 %v377
      %1406 = vmatmul.mubr.f32.gmra.mrb[0].mxu0 %v376
      %v1407 = vpop.f32.mrb[0].mxu0
      %v1408 = vadd.f32 0.0, %v1407
      %v1409 = vpop.f32.mrb[0].mxu0
      %1410 = vmatprep.mubr.f32.mxu0 %v380
      %1411 = vmatmul.mubr.f32.gmra.mrb[0].mxu0 %v379
      %v1412 = vpop.f32.mrb[0].mxu0
      %v1413 = vadd.f32 0.0, %v1412
      %v1414 = vpop.f32.mrb[0].mxu0
      %1415 = vmatprep.mubr.f32.mxu0 %v383
      %1416 = vmatmul.mubr.f32.gmra.mrb[0].mxu0 %v382
      %v1417 = vpop.f32.mrb[0].mxu0
      %v1418 = vadd.f32 0.0, %v1417
      %v1419 = vpop.f32.mrb[0].mxu0
      %1420 = vdwg.mxu0
      %1421 = vmatprep.subr.mxu0 0.0
      %1422 = vmatpush1.msra.mxu0 %v282
      %1423 = vmatprep.subr.mxu0 0.0
      %1424 = vmatpush1.msra.mxu0 %v283
      %1425 = vmatprep.subr.mxu0 0.0
      %1426 = vmatpush1.msra.mxu0 %v284
      %1427 = vmatprep.subr.mxu0 0.0
      %1428 = vmatpush1.msra.mxu0 %v285
      %1429 = vmatprep.subr.mxu0 0.0
      %1430 = vmatpush1.msra.mxu0 0.0
      %1431 = vmatprep.subr.mxu0 0.0
      %1432 = vmatpush1.msra.mxu0 0.0
      %1433 = vmatprep.subr.mxu0 0.0
      %1434 = vmatpush1.msra.mxu0 0.0
      %1435 = vmatprep.subr.mxu0 0.0
      %1436 = vmatpush1.msra.mxu0 0.0
      %1437 = vmatprep.subr.mxu0 0.0
      %1438 = vmatpush1.msra.mxu0 0.0
      %1439 = vmatprep.subr.mxu0 0.0
      %1440 = vmatpush1.msra.mxu0 0.0
      %1441 = vmatprep.subr.mxu0 0.0
      %1442 = vmatpush1.msra.mxu0 0.0
      %1443 = vmatprep.subr.mxu0 0.0
      %1444 = vmatpush1.msra.mxu0 0.0
      %1445 = vmatprep.subr.mxu0 0.0
      %1446 = vmatpush1.msra.mxu0 0.0
      %1447 = vmatprep.subr.mxu0 0.0
      %1448 = vmatpush1.msra.mxu0 0.0
      %1449 = vmatprep.subr.mxu0 0.0
      %1450 = vmatpush1.msra.mxu0 0.0
      %1451 = vmatprep.subr.mxu0 0.0
      %1452 = vmatpush1.msra.mxu0 0.0
      %1453 = vmatprep.subr.mxu0 0.0
      %1454 = vmatpush1.msra.mxu0 0.0
      %1455 = vmatprep.subr.mxu0 0.0
      %1456 = vmatpush1.msra.mxu0 0.0
      %1457 = vmatprep.subr.mxu0 0.0
      %1458 = vmatpush1.msra.mxu0 0.0
      %1459 = vmatprep.subr.mxu0 0.0
      %1460 = vmatpush1.msra.mxu0 0.0
      %1461 = vmatprep.subr.mxu0 0.0
      %1462 = vmatpush1.msra.mxu0 0.0
      %1463 = vmatprep.subr.mxu0 0.0
      %1464 = vmatpush1.msra.mxu0 0.0
      %1465 = vmatprep.subr.mxu0 0.0
      %1466 = vmatpush1.msra.mxu0 0.0
      %1467 = vmatprep.subr.mxu0 0.0
      %1468 = vmatpush1.msra.mxu0 0.0
      %1469 = vmatprep.subr.mxu0 0.0
      %1470 = vmatpush1.msra.mxu0 0.0
      %1471 = vmatprep.subr.mxu0 0.0
      %1472 = vmatpush1.msra.mxu0 0.0
      %1473 = vmatprep.subr.mxu0 0.0
      %1474 = vmatpush1.msra.mxu0 0.0
      %1475 = vmatprep.subr.mxu0 0.0
      %1476 = vmatpush1.msra.mxu0 0.0
      %1477 = vmatprep.subr.mxu0 0.0
      %1478 = vmatpush1.msra.mxu0 0.0
      %1479 = vmatprep.subr.mxu0 0.0
      %1480 = vmatpush1.msra.mxu0 0.0
      %1481 = vmatprep.subr.mxu0 0.0
      %1482 = vmatpush1.msra.mxu0 0.0
      %1483 = vmatprep.subr.mxu0 0.0
      %1484 = vmatpush1.msra.mxu0 0.0
      %1485 = vmatprep.mubr.f32.mxu0 0.0
      %1486 = vmatmul.mubr.f32.gmra.mrb[0].mxu0 %v403
      %v1487 = vpop.f32.mrb[0].mxu0
      %v1488 = vadd.f32 %v1258, %v1487
      %v1489 = vpop.f32.mrb[0].mxu0
      %1490 = vmatprep.mubr.f32.mxu0 0.0
      %1491 = vmatmul.mubr.f32.gmra.mrb[0].mxu0 %v406
      %v1492 = vpop.f32.mrb[0].mxu0
      %v1493 = vadd.f32 %v1263, %v1492
      %v1494 = vpop.f32.mrb[0].mxu0
      %1495 = vmatprep.mubr.f32.mxu0 0.0
      %1496 = vmatmul.mubr.f32.gmra.mrb[0].mxu0 %v409
      %v1497 = vpop.f32.mrb[0].mxu0
      %v1498 = vadd.f32 %v1268, %v1497
      %v1499 = vpop.f32.mrb[0].mxu0
      %1500 = vmatprep.mubr.f32.mxu0 0.0
      %1501 = vmatmul.mubr.f32.gmra.mrb[0].mxu0 %v412
      %v1502 = vpop.f32.mrb[0].mxu0
      %v1503 = vadd.f32 %v1273, %v1502
      %v1504 = vpop.f32.mrb[0].mxu0
      %1505 = vmatprep.mubr.f32.mxu0 0.0
      %1506 = vmatmul.mubr.f32.gmra.mrb[0].mxu0 %v415
      %v1507 = vpop.f32.mrb[0].mxu0
      %v1508 = vadd.f32 %v1278, %v1507
      %v1509 = vpop.f32.mrb[0].mxu0
      %1510 = vmatprep.mubr.f32.mxu0 0.0
      %1511 = vmatmul.mubr.f32.gmra.mrb[0].mxu0 %v418
      %v1512 = vpop.f32.mrb[0].mxu0
      %v1513 = vadd.f32 %v1283, %v1512
      %v1514 = vpop.f32.mrb[0].mxu0
      %1515 = vmatprep.mubr.f32.mxu0 0.0
      %1516 = vmatmul.mubr.f32.gmra.mrb[0].mxu0 %v421
      %v1517 = vpop.f32.mrb[0].mxu0
      %v1518 = vadd.f32 %v1288, %v1517
      %v1519 = vpop.f32.mrb[0].mxu0
      %1520 = vmatprep.mubr.f32.mxu0 0.0
      %1521 = vmatmul.mubr.f32.gmra.mrb[0].mxu0 %v424
      %v1522 = vpop.f32.mrb[0].mxu0
      %v1523 = vadd.f32 %v1293, %v1522
      %v1524 = vpop.f32.mrb[0].mxu0
      %1525 = vmatprep.mubr.f32.mxu0 0.0
      %1526 = vmatmul.mubr.f32.gmra.mrb[0].mxu0 %v427
      %v1527 = vpop.f32.mrb[0].mxu0
      %v1528 = vadd.f32 %v1298, %v1527
      %v1529 = vpop.f32.mrb[0].mxu0
      %1530 = vmatprep.mubr.f32.mxu0 0.0
      %1531 = vmatmul.mubr.f32.gmra.mrb[0].mxu0 %v430
      %v1532 = vpop.f32.mrb[0].mxu0
      %v1533 = vadd.f32 %v1303, %v1532
      %v1534 = vpop.f32.mrb[0].mxu0
      %1535 = vmatprep.mubr.f32.mxu0 0.0
      %1536 = vmatmul.mubr.f32.gmra.mrb[0].mxu0 %v433
      %v1537 = vpop.f32.mrb[0].mxu0
      %v1538 = vadd.f32 %v1308, %v1537
      %v1539 = vpop.f32.mrb[0].mxu0
      %1540 = vmatprep.mubr.f32.mxu0 0.0
      %1541 = vmatmul.mubr.f32.gmra.mrb[0].mxu0 %v436
      %v1542 = vpop.f32.mrb[0].mxu0
      %v1543 = vadd.f32 %v1313, %v1542
      %v1544 = vpop.f32.mrb[0].mxu0
      %1545 = vmatprep.mubr.f32.mxu0 0.0
      %1546 = vmatmul.mubr.f32.gmra.mrb[0].mxu0 %v439
      %v1547 = vpop.f32.mrb[0].mxu0
      %v1548 = vadd.f32 %v1318, %v1547
      %v1549 = vpop.f32.mrb[0].mxu0
      %1550 = vmatprep.mubr.f32.mxu0 0.0
      %1551 = vmatmul.mubr.f32.gmra.mrb[0].mxu0 %v442
      %v1552 = vpop.f32.mrb[0].mxu0
      %v1553 = vadd.f32 %v1323, %v1552
      %v1554 = vpop.f32.mrb[0].mxu0
      %1555 = vmatprep.mubr.f32.mxu0 0.0
      %1556 = vmatmul.mubr.f32.gmra.mrb[0].mxu0 %v445
      %v1557 = vpop.f32.mrb[0].mxu0
      %v1558 = vadd.f32 %v1328, %v1557
      %v1559 = vpop.f32.mrb[0].mxu0
      %1560 = vmatprep.mubr.f32.mxu0 0.0
      %1561 = vmatmul.mubr.f32.gmra.mrb[0].mxu0 %v448
      %v1562 = vpop.f32.mrb[0].mxu0
      %v1563 = vadd.f32 %v1333, %v1562
      %v1564 = vpop.f32.mrb[0].mxu0
      %1565 = vmatprep.mubr.f32.mxu0 0.0
      %1566 = vmatmul.mubr.f32.gmra.mrb[0].mxu0 %v451
      %v1567 = vpop.f32.mrb[0].mxu0
      %v1568 = vadd.f32 %v1338, %v1567
      %v1569 = vpop.f32.mrb[0].mxu0
      %1570 = vmatprep.mubr.f32.mxu0 0.0
      %1571 = vmatmul.mubr.f32.gmra.mrb[0].mxu0 %v454
      %v1572 = vpop.f32.mrb[0].mxu0
      %v1573 = vadd.f32 %v1343, %v1572
      %v1574 = vpop.f32.mrb[0].mxu0
      %1575 = vmatprep.mubr.f32.mxu0 0.0
      %1576 = vmatmul.mubr.f32.gmra.mrb[0].mxu0 %v457
      %v1577 = vpop.f32.mrb[0].mxu0
      %v1578 = vadd.f32 %v1348, %v1577
      %v1579 = vpop.f32.mrb[0].mxu0
      %1580 = vmatprep.mubr.f32.mxu0 0.0
      %1581 = vmatmul.mubr.f32.gmra.mrb[0].mxu0 %v460
      %v1582 = vpop.f32.mrb[0].mxu0
      %v1583 = vadd.f32 %v1353, %v1582
      %v1584 = vpop.f32.mrb[0].mxu0
      %1585 = vmatprep.mubr.f32.mxu0 0.0
      %1586 = vmatmul.mubr.f32.gmra.mrb[0].mxu0 %v463
      %v1587 = vpop.f32.mrb[0].mxu0
      %v1588 = vadd.f32 %v1358, %v1587
      %v1589 = vpop.f32.mrb[0].mxu0
      %1590 = vmatprep.mubr.f32.mxu0 0.0
      %1591 = vmatmul.mubr.f32.gmra.mrb[0].mxu0 %v466
      %v1592 = vpop.f32.mrb[0].mxu0
      %v1593 = vadd.f32 %v1363, %v1592
      %v1594 = vpop.f32.mrb[0].mxu0
      %1595 = vmatprep.mubr.f32.mxu0 0.0
      %1596 = vmatmul.mubr.f32.gmra.mrb[0].mxu0 %v469
      %v1597 = vpop.f32.mrb[0].mxu0
      %v1598 = vadd.f32 %v1368, %v1597
      %v1599 = vpop.f32.mrb[0].mxu0
      %1600 = vmatprep.mubr.f32.mxu0 0.0
      %1601 = vmatmul.mubr.f32.gmra.mrb[0].mxu0 %v472
      %v1602 = vpop.f32.mrb[0].mxu0
      %v1603 = vadd.f32 %v1373, %v1602
      %v1604 = vpop.f32.mrb[0].mxu0
      %1605 = vmatprep.mubr.f32.mxu0 0.0
      %1606 = vmatmul.mubr.f32.gmra.mrb[0].mxu0 %v475
      %v1607 = vpop.f32.mrb[0].mxu0
      %v1608 = vadd.f32 %v1378, %v1607
      %v1609 = vpop.f32.mrb[0].mxu0
      %1610 = vmatprep.mubr.f32.mxu0 0.0
      %1611 = vmatmul.mubr.f32.gmra.mrb[0].mxu0 %v478
      %v1612 = vpop.f32.mrb[0].mxu0
      %v1613 = vadd.f32 %v1383, %v1612
      %v1614 = vpop.f32.mrb[0].mxu0
      %1615 = vmatprep.mubr.f32.mxu0 0.0
      %1616 = vmatmul.mubr.f32.gmra.mrb[0].mxu0 %v481
      %v1617 = vpop.f32.mrb[0].mxu0
      %v1618 = vadd.f32 %v1388, %v1617
      %v1619 = vpop.f32.mrb[0].mxu0
      %1620 = vmatprep.mubr.f32.mxu0 0.0
      %1621 = vmatmul.mubr.f32.gmra.mrb[0].mxu0 %v484
      %v1622 = vpop.f32.mrb[0].mxu0
      %v1623 = vadd.f32 %v1393, %v1622
      %v1624 = vpop.f32.mrb[0].mxu0
      %1625 = vmatprep.mubr.f32.mxu0 0.0
      %1626 = vmatmul.mubr.f32.gmra.mrb[0].mxu0 %v487
      %v1627 = vpop.f32.mrb[0].mxu0
      %v1628 = vadd.f32 %v1398, %v1627
      %v1629 = vpop.f32.mrb[0].mxu0
      %1630 = vmatprep.mubr.f32.mxu0 0.0
      %1631 = vmatmul.mubr.f32.gmra.mrb[0].mxu0 %v490
      %v1632 = vpop.f32.mrb[0].mxu0
      %v1633 = vadd.f32 %v1403, %v1632
      %v1634 = vpop.f32.mrb[0].mxu0
      %1635 = vmatprep.mubr.f32.mxu0 0.0
      %1636 = vmatmul.mubr.f32.gmra.mrb[0].mxu0 %v493
      %v1637 = vpop.f32.mrb[0].mxu0
      %v1638 = vadd.f32 %v1408, %v1637
      %v1639 = vpop.f32.mrb[0].mxu0
      %1640 = vmatprep.mubr.f32.mxu0 0.0
      %1641 = vmatmul.mubr.f32.gmra.mrb[0].mxu0 %v496
      %v1642 = vpop.f32.mrb[0].mxu0
      %v1643 = vadd.f32 %v1413, %v1642
      %v1644 = vpop.f32.mrb[0].mxu0
      %1645 = vmatprep.mubr.f32.mxu0 0.0
      %1646 = vmatmul.mubr.f32.gmra.mrb[0].mxu0 %v499
      %v1647 = vpop.f32.mrb[0].mxu0
      %v1648 = vadd.f32 %v1418, %v1647
      %v1649 = vpop.f32.mrb[0].mxu0
      %1650 = vdwg.mxu0
      %1651 = vmatprep.subr.mxu0 0.0
      %1652 = vmatpush1.msra.mxu0 %v385
      %1653 = vmatprep.subr.mxu0 0.0
      %1654 = vmatpush1.msra.mxu0 %v386
      %1655 = vmatprep.subr.mxu0 0.0
      %1656 = vmatpush1.msra.mxu0 %v387
      %1657 = vmatprep.subr.mxu0 0.0
      %1658 = vmatpush1.msra.mxu0 %v388
      %1659 = vmatprep.subr.mxu0 0.0
      %1660 = vmatpush1.msra.mxu0 %v389
      %1661 = vmatprep.subr.mxu0 0.0
      %1662 = vmatpush1.msra.mxu0 %v390
      %1663 = vmatprep.subr.mxu0 0.0
      %1664 = vmatpush1.msra.mxu0 %v391
      %1665 = vmatprep.subr.mxu0 0.0
      %1666 = vmatpush1.msra.mxu0 %v392
      %1667 = vmatprep.subr.mxu0 0.0
      %1668 = vmatpush1.msra.mxu0 %v393
      %1669 = vmatprep.subr.mxu0 0.0
      %1670 = vmatpush1.msra.mxu0 %v394
      %1671 = vmatprep.subr.mxu0 0.0
      %1672 = vmatpush1.msra.mxu0 %v395
      %1673 = vmatprep.subr.mxu0 0.0
      %1674 = vmatpush1.msra.mxu0 %v396
      %1675 = vmatprep.subr.mxu0 0.0
      %1676 = vmatpush1.msra.mxu0 %v397
      %1677 = vmatprep.subr.mxu0 0.0
      %1678 = vmatpush1.msra.mxu0 %v398
      %1679 = vmatprep.subr.mxu0 0.0
      %1680 = vmatpush1.msra.mxu0 %v399
      %1681 = vmatprep.subr.mxu0 0.0
      %1682 = vmatpush1.msra.mxu0 %v400
      %1683 = vmatprep.subr.mxu0 0.0
      %1684 = vmatpush1.msra.mxu0 0.0
      %1685 = vmatprep.subr.mxu0 0.0
      %1686 = vmatpush1.msra.mxu0 0.0
      %1687 = vmatprep.subr.mxu0 0.0
      %1688 = vmatpush1.msra.mxu0 0.0
      %1689 = vmatprep.subr.mxu0 0.0
      %1690 = vmatpush1.msra.mxu0 0.0
      %1691 = vmatprep.subr.mxu0 0.0
      %1692 = vmatpush1.msra.mxu0 0.0
      %1693 = vmatprep.subr.mxu0 0.0
      %1694 = vmatpush1.msra.mxu0 0.0
      %1695 = vmatprep.subr.mxu0 0.0
      %1696 = vmatpush1.msra.mxu0 0.0
      %1697 = vmatprep.subr.mxu0 0.0
      %1698 = vmatpush1.msra.mxu0 0.0
      %1699 = vmatprep.subr.mxu0 0.0
      %1700 = vmatpush1.msra.mxu0 0.0
      %1701 = vmatprep.subr.mxu0 0.0
      %1702 = vmatpush1.msra.mxu0 0.0
      %1703 = vmatprep.subr.mxu0 0.0
      %1704 = vmatpush1.msra.mxu0 0.0
      %1705 = vmatprep.subr.mxu0 0.0
      %1706 = vmatpush1.msra.mxu0 0.0
      %1707 = vmatprep.subr.mxu0 0.0
      %1708 = vmatpush1.msra.mxu0 0.0
      %1709 = vmatprep.subr.mxu0 0.0
      %1710 = vmatpush1.msra.mxu0 0.0
      %1711 = vmatprep.subr.mxu0 0.0
      %1712 = vmatpush1.msra.mxu0 0.0
      %1713 = vmatprep.subr.mxu0 0.0
      %1714 = vmatpush1.msra.mxu0 0.0
      %1715 = vmatprep.mubr.f32.mxu0 0.0
      %1716 = vmatmul.mubr.f32.gmra.mrb[0].mxu0 %v1488
      %v1717 = vpop.f32.mrb[0].mxu0
      %v1718 = vadd.f32 0.0, %v1717
      %v1719 = vpop.f32.mrb[0].mxu0
      %1720 = vmatprep.mubr.f32.mxu0 0.0
      %1721 = vmatmul.mubr.f32.gmra.mrb[0].mxu0 %v1493
      %v1722 = vpop.f32.mrb[0].mxu0
      %v1723 = vadd.f32 0.0, %v1722
      %v1724 = vpop.f32.mrb[0].mxu0
      %1725 = vmatprep.mubr.f32.mxu0 0.0
      %1726 = vmatmul.mubr.f32.gmra.mrb[0].mxu0 %v1498
      %v1727 = vpop.f32.mrb[0].mxu0
      %v1728 = vadd.f32 0.0, %v1727
      %v1729 = vpop.f32.mrb[0].mxu0
      %1730 = vmatprep.mubr.f32.mxu0 0.0
      %1731 = vmatmul.mubr.f32.gmra.mrb[0].mxu0 %v1503
      %v1732 = vpop.f32.mrb[0].mxu0
      %v1733 = vadd.f32 0.0, %v1732
      %v1734 = vpop.f32.mrb[0].mxu0
      %1735 = vmatprep.mubr.f32.mxu0 0.0
      %1736 = vmatmul.mubr.f32.gmra.mrb[0].mxu0 %v1508
      %v1737 = vpop.f32.mrb[0].mxu0
      %v1738 = vadd.f32 0.0, %v1737
      %v1739 = vpop.f32.mrb[0].mxu0
      %1740 = vmatprep.mubr.f32.mxu0 0.0
      %1741 = vmatmul.mubr.f32.gmra.mrb[0].mxu0 %v1513
      %v1742 = vpop.f32.mrb[0].mxu0
      %v1743 = vadd.f32 0.0, %v1742
      %v1744 = vpop.f32.mrb[0].mxu0
      %1745 = vmatprep.mubr.f32.mxu0 0.0
      %1746 = vmatmul.mubr.f32.gmra.mrb[0].mxu0 %v1518
      %v1747 = vpop.f32.mrb[0].mxu0
      %v1748 = vadd.f32 0.0, %v1747
      %v1749 = vpop.f32.mrb[0].mxu0
      %1750 = vmatprep.mubr.f32.mxu0 0.0
      %1751 = vmatmul.mubr.f32.gmra.mrb[0].mxu0 %v1523
      %v1752 = vpop.f32.mrb[0].mxu0
      %v1753 = vadd.f32 0.0, %v1752
      %v1754 = vpop.f32.mrb[0].mxu0
      %1755 = vmatprep.mubr.f32.mxu0 0.0
      %1756 = vmatmul.mubr.f32.gmra.mrb[0].mxu0 %v1528
      %v1757 = vpop.f32.mrb[0].mxu0
      %v1758 = vadd.f32 0.0, %v1757
      %v1759 = vpop.f32.mrb[0].mxu0
      %1760 = vmatprep.mubr.f32.mxu0 0.0
      %1761 = vmatmul.mubr.f32.gmra.mrb[0].mxu0 %v1533
      %v1762 = vpop.f32.mrb[0].mxu0
      %v1763 = vadd.f32 0.0, %v1762
      %v1764 = vpop.f32.mrb[0].mxu0
      %1765 = vmatprep.mubr.f32.mxu0 0.0
      %1766 = vmatmul.mubr.f32.gmra.mrb[0].mxu0 %v1538
      %v1767 = vpop.f32.mrb[0].mxu0
      %v1768 = vadd.f32 0.0, %v1767
      %v1769 = vpop.f32.mrb[0].mxu0
      %1770 = vmatprep.mubr.f32.mxu0 0.0
      %1771 = vmatmul.mubr.f32.gmra.mrb[0].mxu0 %v1543
      %v1772 = vpop.f32.mrb[0].mxu0
      %v1773 = vadd.f32 0.0, %v1772
      %v1774 = vpop.f32.mrb[0].mxu0
      %1775 = vmatprep.mubr.f32.mxu0 0.0
      %1776 = vmatmul.mubr.f32.gmra.mrb[0].mxu0 %v1548
      %v1777 = vpop.f32.mrb[0].mxu0
      %v1778 = vadd.f32 0.0, %v1777
      %v1779 = vpop.f32.mrb[0].mxu0
      %1780 = vmatprep.mubr.f32.mxu0 0.0
      %1781 = vmatmul.mubr.f32.gmra.mrb[0].mxu0 %v1553
      %v1782 = vpop.f32.mrb[0].mxu0
      %v1783 = vadd.f32 0.0, %v1782
      %v1784 = vpop.f32.mrb[0].mxu0
      %1785 = vmatprep.mubr.f32.mxu0 0.0
      %1786 = vmatmul.mubr.f32.gmra.mrb[0].mxu0 %v1558
      %v1787 = vpop.f32.mrb[0].mxu0
      %v1788 = vadd.f32 0.0, %v1787
      %v1789 = vpop.f32.mrb[0].mxu0
      %1790 = vmatprep.mubr.f32.mxu0 0.0
      %1791 = vmatmul.mubr.f32.gmra.mrb[0].mxu0 %v1563
      %v1792 = vpop.f32.mrb[0].mxu0
      %v1793 = vadd.f32 0.0, %v1792
      %v1794 = vpop.f32.mrb[0].mxu0
      %1795 = vmatprep.mubr.f32.mxu0 0.0
      %1796 = vmatmul.mubr.f32.gmra.mrb[0].mxu0 %v1568
      %v1797 = vpop.f32.mrb[0].mxu0
      %v1798 = vadd.f32 0.0, %v1797
      %v1799 = vpop.f32.mrb[0].mxu0
      %1800 = vmatprep.mubr.f32.mxu0 0.0
      %1801 = vmatmul.mubr.f32.gmra.mrb[0].mxu0 %v1573
      %v1802 = vpop.f32.mrb[0].mxu0
      %v1803 = vadd.f32 0.0, %v1802
      %v1804 = vpop.f32.mrb[0].mxu0
      %1805 = vmatprep.mubr.f32.mxu0 0.0
      %1806 = vmatmul.mubr.f32.gmra.mrb[0].mxu0 %v1578
      %v1807 = vpop.f32.mrb[0].mxu0
      %v1808 = vadd.f32 0.0, %v1807
      %v1809 = vpop.f32.mrb[0].mxu0
      %1810 = vmatprep.mubr.f32.mxu0 0.0
      %1811 = vmatmul.mubr.f32.gmra.mrb[0].mxu0 %v1583
      %v1812 = vpop.f32.mrb[0].mxu0
      %v1813 = vadd.f32 0.0, %v1812
      %v1814 = vpop.f32.mrb[0].mxu0
      %1815 = vmatprep.mubr.f32.mxu0 0.0
      %1816 = vmatmul.mubr.f32.gmra.mrb[0].mxu0 %v1588
      %v1817 = vpop.f32.mrb[0].mxu0
      %v1818 = vadd.f32 0.0, %v1817
      %v1819 = vpop.f32.mrb[0].mxu0
      %1820 = vmatprep.mubr.f32.mxu0 0.0
      %1821 = vmatmul.mubr.f32.gmra.mrb[0].mxu0 %v1593
      %v1822 = vpop.f32.mrb[0].mxu0
      %v1823 = vadd.f32 0.0, %v1822
      %v1824 = vpop.f32.mrb[0].mxu0
      %1825 = vmatprep.mubr.f32.mxu0 0.0
      %1826 = vmatmul.mubr.f32.gmra.mrb[0].mxu0 %v1598
      %v1827 = vpop.f32.mrb[0].mxu0
      %v1828 = vadd.f32 0.0, %v1827
      %v1829 = vpop.f32.mrb[0].mxu0
      %1830 = vmatprep.mubr.f32.mxu0 0.0
      %1831 = vmatmul.mubr.f32.gmra.mrb[0].mxu0 %v1603
      %v1832 = vpop.f32.mrb[0].mxu0
      %v1833 = vadd.f32 0.0, %v1832
      %v1834 = vpop.f32.mrb[0].mxu0
      %1835 = vmatprep.mubr.f32.mxu0 0.0
      %1836 = vmatmul.mubr.f32.gmra.mrb[0].mxu0 %v1608
      %v1837 = vpop.f32.mrb[0].mxu0
      %v1838 = vadd.f32 0.0, %v1837
      %v1839 = vpop.f32.mrb[0].mxu0
      %1840 = vmatprep.mubr.f32.mxu0 0.0
      %1841 = vmatmul.mubr.f32.gmra.mrb[0].mxu0 %v1613
      %v1842 = vpop.f32.mrb[0].mxu0
      %v1843 = vadd.f32 0.0, %v1842
      %v1844 = vpop.f32.mrb[0].mxu0
      %1845 = vmatprep.mubr.f32.mxu0 0.0
      %1846 = vmatmul.mubr.f32.gmra.mrb[0].mxu0 %v1618
      %v1847 = vpop.f32.mrb[0].mxu0
      %v1848 = vadd.f32 0.0, %v1847
      %v1849 = vpop.f32.mrb[0].mxu0
      %1850 = vmatprep.mubr.f32.mxu0 0.0
      %1851 = vmatmul.mubr.f32.gmra.mrb[0].mxu0 %v1623
      %v1852 = vpop.f32.mrb[0].mxu0
      %v1853 = vadd.f32 0.0, %v1852
      %v1854 = vpop.f32.mrb[0].mxu0
      %1855 = vmatprep.mubr.f32.mxu0 0.0
      %1856 = vmatmul.mubr.f32.gmra.mrb[0].mxu0 %v1628
      %v1857 = vpop.f32.mrb[0].mxu0
      %v1858 = vadd.f32 0.0, %v1857
      %v1859 = vpop.f32.mrb[0].mxu0
      %1860 = vmatprep.mubr.f32.mxu0 0.0
      %1861 = vmatmul.mubr.f32.gmra.mrb[0].mxu0 %v1633
      %v1862 = vpop.f32.mrb[0].mxu0
      %v1863 = vadd.f32 0.0, %v1862
      %v1864 = vpop.f32.mrb[0].mxu0
      %1865 = vmatprep.mubr.f32.mxu0 0.0
      %1866 = vmatmul.mubr.f32.gmra.mrb[0].mxu0 %v1638
      %v1867 = vpop.f32.mrb[0].mxu0
      %v1868 = vadd.f32 0.0, %v1867
      %v1869 = vpop.f32.mrb[0].mxu0
      %1870 = vmatprep.mubr.f32.mxu0 0.0
      %1871 = vmatmul.mubr.f32.gmra.mrb[0].mxu0 %v1643
      %v1872 = vpop.f32.mrb[0].mxu0
      %v1873 = vadd.f32 0.0, %v1872
      %v1874 = vpop.f32.mrb[0].mxu0
      %1875 = vmatprep.mubr.f32.mxu0 0.0
      %1876 = vmatmul.mubr.f32.gmra.mrb[0].mxu0 %v1648
      %v1877 = vpop.f32.mrb[0].mxu0
      %v1878 = vadd.f32 0.0, %v1877
      %v1879 = vpop.f32.mrb[0].mxu0
      %1880 = vdwg.mxu0
      %v1881 = vmul.f32 %v214, %v214
      %v1882 = vmul.f32 %v215, %v215
      %v1883 = vmul.f32 %v216, %v216
      %v1884 = vmul.f32 %v217, %v217
      %v1885 = vmul.f32 %v218, %v218
      %v1886 = vmul.f32 %v219, %v219
      %v1887 = vmul.f32 %v220, %v220
      %v1888 = vmul.f32 %v221, %v221
      %v1889 = vmul.f32 %v222, %v222
      %v1890 = vmul.f32 %v223, %v223
      %v1891 = vmul.f32 %v224, %v224
      %v1892 = vmul.f32 %v225, %v225
      %v1893 = vmul.f32 %v226, %v226
      %v1894 = vmul.f32 %v227, %v227
      %v1895 = vmul.f32 %v228, %v228
      %v1896 = vmul.f32 %v229, %v229
      %v1897 = vmul.f32 %v230, %v230
      %v1898 = vmul.f32 %v231, %v231
      %v1899 = vmul.f32 %v232, %v232
      %v1900 = vmul.f32 %v233, %v233
      %v1901 = vmul.f32 %v234, %v234
      %v1902 = vmul.f32 %v235, %v235
      %v1903 = vmul.f32 %v236, %v236
      %v1904 = vmul.f32 %v237, %v237
      %v1905 = vmul.f32 %v238, %v238
      %v1906 = vmul.f32 %v239, %v239
      %v1907 = vmul.f32 %v240, %v240
      %v1908 = vmul.f32 %v241, %v241
      %v1909 = vmul.f32 %v242, %v242
      %v1910 = vmul.f32 %v243, %v243
      %v1911 = vmul.f32 %v244, %v244
      %v1912 = vmul.f32 %v245, %v245
      %v1913 = vmul.f32 %v246, %v246
      %v1914 = vmul.f32 %v247, %v247
      %v1915 = vmul.f32 %v248, %v248
      %v1916 = vmul.f32 %v249, %v249
      %1917 = vmatprep.subr.mxu0 0.0
      %1918 = vmatpush1.msra.mxu0 %v1881
      %1919 = vmatprep.subr.mxu0 0.0
      %1920 = vmatpush1.msra.mxu0 %v1882
      %1921 = vmatprep.subr.mxu0 0.0
      %1922 = vmatpush1.msra.mxu0 %v1883
      %1923 = vmatprep.subr.mxu0 0.0
      %1924 = vmatpush1.msra.mxu0 %v1884
      %1925 = vmatprep.subr.mxu0 0.0
      %1926 = vmatpush1.msra.mxu0 %v1885
      %1927 = vmatprep.subr.mxu0 0.0
      %1928 = vmatpush1.msra.mxu0 %v1886
      %1929 = vmatprep.subr.mxu0 0.0
      %1930 = vmatpush1.msra.mxu0 %v1887
      %1931 = vmatprep.subr.mxu0 0.0
      %1932 = vmatpush1.msra.mxu0 %v1888
      %1933 = vmatprep.subr.mxu0 0.0
      %1934 = vmatpush1.msra.mxu0 %v1889
      %1935 = vmatprep.subr.mxu0 0.0
      %1936 = vmatpush1.msra.mxu0 %v1890
      %1937 = vmatprep.subr.mxu0 0.0
      %1938 = vmatpush1.msra.mxu0 %v1891
      %1939 = vmatprep.subr.mxu0 0.0
      %1940 = vmatpush1.msra.mxu0 %v1892
      %1941 = vmatprep.subr.mxu0 0.0
      %1942 = vmatpush1.msra.mxu0 %v1893
      %1943 = vmatprep.subr.mxu0 0.0
      %1944 = vmatpush1.msra.mxu0 %v1894
      %1945 = vmatprep.subr.mxu0 0.0
      %1946 = vmatpush1.msra.mxu0 %v1895
      %1947 = vmatprep.subr.mxu0 0.0
      %1948 = vmatpush1.msra.mxu0 %v1896
      %1949 = vmatprep.subr.mxu0 0.0
      %1950 = vmatpush1.msra.mxu0 %v1897
      %1951 = vmatprep.subr.mxu0 0.0
      %1952 = vmatpush1.msra.mxu0 %v1898
      %1953 = vmatprep.subr.mxu0 0.0
      %1954 = vmatpush1.msra.mxu0 %v1899
      %1955 = vmatprep.subr.mxu0 0.0
      %1956 = vmatpush1.msra.mxu0 %v1900
      %1957 = vmatprep.subr.mxu0 0.0
      %1958 = vmatpush1.msra.mxu0 %v1901
      %1959 = vmatprep.subr.mxu0 0.0
      %1960 = vmatpush1.msra.mxu0 %v1902
      %1961 = vmatprep.subr.mxu0 0.0
      %1962 = vmatpush1.msra.mxu0 %v1903
      %1963 = vmatprep.subr.mxu0 0.0
      %1964 = vmatpush1.msra.mxu0 %v1904
      %1965 = vmatprep.subr.mxu0 0.0
      %1966 = vmatpush1.msra.mxu0 %v1905
      %1967 = vmatprep.subr.mxu0 0.0
      %1968 = vmatpush1.msra.mxu0 %v1906
      %1969 = vmatprep.subr.mxu0 0.0
      %1970 = vmatpush1.msra.mxu0 %v1907
      %1971 = vmatprep.subr.mxu0 0.0
      %1972 = vmatpush1.msra.mxu0 %v1908
      %1973 = vmatprep.subr.mxu0 0.0
      %1974 = vmatpush1.msra.mxu0 %v1909
      %1975 = vmatprep.subr.mxu0 0.0
      %1976 = vmatpush1.msra.mxu0 %v1910
      %1977 = vmatprep.subr.mxu0 0.0
      %1978 = vmatpush1.msra.mxu0 %v1911
      %1979 = vmatprep.subr.mxu0 0.0
      %1980 = vmatpush1.msra.mxu0 %v1912
      %1981 = vmatprep.mubr.f32.mxu0 %v287
      %1982 = vmatmul.mubr.f32.gmra.mrb[0].mxu0 %v286
      %v1983 = vpop.f32.mrb[0].mxu0
      %v1984 = vadd.f32 0.0, %v1983
      %v1985 = vpop.f32.mrb[0].mxu0
      %1986 = vmatprep.mubr.f32.mxu0 %v290
      %1987 = vmatmul.mubr.f32.gmra.mrb[0].mxu0 %v289
      %v1988 = vpop.f32.mrb[0].mxu0
      %v1989 = vadd.f32 0.0, %v1988
      %v1990 = vpop.f32.mrb[0].mxu0
      %1991 = vmatprep.mubr.f32.mxu0 %v293
      %1992 = vmatmul.mubr.f32.gmra.mrb[0].mxu0 %v292
      %v1993 = vpop.f32.mrb[0].mxu0
      %v1994 = vadd.f32 0.0, %v1993
      %v1995 = vpop.f32.mrb[0].mxu0
      %1996 = vmatprep.mubr.f32.mxu0 %v296
      %1997 = vmatmul.mubr.f32.gmra.mrb[0].mxu0 %v295
      %v1998 = vpop.f32.mrb[0].mxu0
      %v1999 = vadd.f32 0.0, %v1998
      %v2000 = vpop.f32.mrb[0].mxu0
      %2001 = vmatprep.mubr.f32.mxu0 %v299
      %2002 = vmatmul.mubr.f32.gmra.mrb[0].mxu0 %v298
      %v2003 = vpop.f32.mrb[0].mxu0
      %v2004 = vadd.f32 0.0, %v2003
      %v2005 = vpop.f32.mrb[0].mxu0
      %2006 = vmatprep.mubr.f32.mxu0 %v302
      %2007 = vmatmul.mubr.f32.gmra.mrb[0].mxu0 %v301
      %v2008 = vpop.f32.mrb[0].mxu0
      %v2009 = vadd.f32 0.0, %v2008
      %v2010 = vpop.f32.mrb[0].mxu0
      %2011 = vmatprep.mubr.f32.mxu0 %v305
      %2012 = vmatmul.mubr.f32.gmra.mrb[0].mxu0 %v304
      %v2013 = vpop.f32.mrb[0].mxu0
      %v2014 = vadd.f32 0.0, %v2013
      %v2015 = vpop.f32.mrb[0].mxu0
      %2016 = vmatprep.mubr.f32.mxu0 %v308
      %2017 = vmatmul.mubr.f32.gmra.mrb[0].mxu0 %v307
      %v2018 = vpop.f32.mrb[0].mxu0
      %v2019 = vadd.f32 0.0, %v2018
      %v2020 = vpop.f32.mrb[0].mxu0
      %2021 = vmatprep.mubr.f32.mxu0 %v311
      %2022 = vmatmul.mubr.f32.gmra.mrb[0].mxu0 %v310
      %v2023 = vpop.f32.mrb[0].mxu0
      %v2024 = vadd.f32 0.0, %v2023
      %v2025 = vpop.f32.mrb[0].mxu0
      %2026 = vmatprep.mubr.f32.mxu0 %v314
      %2027 = vmatmul.mubr.f32.gmra.mrb[0].mxu0 %v313
      %v2028 = vpop.f32.mrb[0].mxu0
      %v2029 = vadd.f32 0.0, %v2028
      %v2030 = vpop.f32.mrb[0].mxu0
      %2031 = vmatprep.mubr.f32.mxu0 %v317
      %2032 = vmatmul.mubr.f32.gmra.mrb[0].mxu0 %v316
      %v2033 = vpop.f32.mrb[0].mxu0
      %v2034 = vadd.f32 0.0, %v2033
      %v2035 = vpop.f32.mrb[0].mxu0
      %2036 = vmatprep.mubr.f32.mxu0 %v320
      %2037 = vmatmul.mubr.f32.gmra.mrb[0].mxu0 %v319
      %v2038 = vpop.f32.mrb[0].mxu0
      %v2039 = vadd.f32 0.0, %v2038
      %v2040 = vpop.f32.mrb[0].mxu0
      %2041 = vmatprep.mubr.f32.mxu0 %v323
      %2042 = vmatmul.mubr.f32.gmra.mrb[0].mxu0 %v322
      %v2043 = vpop.f32.mrb[0].mxu0
      %v2044 = vadd.f32 0.0, %v2043
      %v2045 = vpop.f32.mrb[0].mxu0
      %2046 = vmatprep.mubr.f32.mxu0 %v326
      %2047 = vmatmul.mubr.f32.gmra.mrb[0].mxu0 %v325
      %v2048 = vpop.f32.mrb[0].mxu0
      %v2049 = vadd.f32 0.0, %v2048
      %v2050 = vpop.f32.mrb[0].mxu0
      %2051 = vmatprep.mubr.f32.mxu0 %v329
      %2052 = vmatmul.mubr.f32.gmra.mrb[0].mxu0 %v328
      %v2053 = vpop.f32.mrb[0].mxu0
      %v2054 = vadd.f32 0.0, %v2053
      %v2055 = vpop.f32.mrb[0].mxu0
      %2056 = vmatprep.mubr.f32.mxu0 %v332
      %2057 = vmatmul.mubr.f32.gmra.mrb[0].mxu0 %v331
      %v2058 = vpop.f32.mrb[0].mxu0
      %v2059 = vadd.f32 0.0, %v2058
      %v2060 = vpop.f32.mrb[0].mxu0
      %2061 = vmatprep.mubr.f32.mxu0 %v335
      %2062 = vmatmul.mubr.f32.gmra.mrb[0].mxu0 %v334
      %v2063 = vpop.f32.mrb[0].mxu0
      %v2064 = vadd.f32 0.0, %v2063
      %v2065 = vpop.f32.mrb[0].mxu0
      %2066 = vmatprep.mubr.f32.mxu0 %v338
      %2067 = vmatmul.mubr.f32.gmra.mrb[0].mxu0 %v337
      %v2068 = vpop.f32.mrb[0].mxu0
      %v2069 = vadd.f32 0.0, %v2068
      %v2070 = vpop.f32.mrb[0].mxu0
      %2071 = vmatprep.mubr.f32.mxu0 %v341
      %2072 = vmatmul.mubr.f32.gmra.mrb[0].mxu0 %v340
      %v2073 = vpop.f32.mrb[0].mxu0
      %v2074 = vadd.f32 0.0, %v2073
      %v2075 = vpop.f32.mrb[0].mxu0
      %2076 = vmatprep.mubr.f32.mxu0 %v344
      %2077 = vmatmul.mubr.f32.gmra.mrb[0].mxu0 %v343
      %v2078 = vpop.f32.mrb[0].mxu0
      %v2079 = vadd.f32 0.0, %v2078
      %v2080 = vpop.f32.mrb[0].mxu0
      %2081 = vmatprep.mubr.f32.mxu0 %v347
      %2082 = vmatmul.mubr.f32.gmra.mrb[0].mxu0 %v346
      %v2083 = vpop.f32.mrb[0].mxu0
      %v2084 = vadd.f32 0.0, %v2083
      %v2085 = vpop.f32.mrb[0].mxu0
      %2086 = vmatprep.mubr.f32.mxu0 %v350
      %2087 = vmatmul.mubr.f32.gmra.mrb[0].mxu0 %v349
      %v2088 = vpop.f32.mrb[0].mxu0
      %v2089 = vadd.f32 0.0, %v2088
      %v2090 = vpop.f32.mrb[0].mxu0
      %2091 = vmatprep.mubr.f32.mxu0 %v353
      %2092 = vmatmul.mubr.f32.gmra.mrb[0].mxu0 %v352
      %v2093 = vpop.f32.mrb[0].mxu0
      %v2094 = vadd.f32 0.0, %v2093
      %v2095 = vpop.f32.mrb[0].mxu0
      %2096 = vmatprep.mubr.f32.mxu0 %v356
      %2097 = vmatmul.mubr.f32.gmra.mrb[0].mxu0 %v355
      %v2098 = vpop.f32.mrb[0].mxu0
      %v2099 = vadd.f32 0.0, %v2098
      %v2100 = vpop.f32.mrb[0].mxu0
      %2101 = vmatprep.mubr.f32.mxu0 %v359
      %2102 = vmatmul.mubr.f32.gmra.mrb[0].mxu0 %v358
      %v2103 = vpop.f32.mrb[0].mxu0
      %v2104 = vadd.f32 0.0, %v2103
      %v2105 = vpop.f32.mrb[0].mxu0
      %2106 = vmatprep.mubr.f32.mxu0 %v362
      %2107 = vmatmul.mubr.f32.gmra.mrb[0].mxu0 %v361
      %v2108 = vpop.f32.mrb[0].mxu0
      %v2109 = vadd.f32 0.0, %v2108
      %v2110 = vpop.f32.mrb[0].mxu0
      %2111 = vmatprep.mubr.f32.mxu0 %v365
      %2112 = vmatmul.mubr.f32.gmra.mrb[0].mxu0 %v364
      %v2113 = vpop.f32.mrb[0].mxu0
      %v2114 = vadd.f32 0.0, %v2113
      %v2115 = vpop.f32.mrb[0].mxu0
      %2116 = vmatprep.mubr.f32.mxu0 %v368
      %2117 = vmatmul.mubr.f32.gmra.mrb[0].mxu0 %v367
      %v2118 = vpop.f32.mrb[0].mxu0
      %v2119 = vadd.f32 0.0, %v2118
      %v2120 = vpop.f32.mrb[0].mxu0
      %2121 = vmatprep.mubr.f32.mxu0 %v371
      %2122 = vmatmul.mubr.f32.gmra.mrb[0].mxu0 %v370
      %v2123 = vpop.f32.mrb[0].mxu0
      %v2124 = vadd.f32 0.0, %v2123
      %v2125 = vpop.f32.mrb[0].mxu0
      %2126 = vmatprep.mubr.f32.mxu0 %v374
      %2127 = vmatmul.mubr.f32.gmra.mrb[0].mxu0 %v373
      %v2128 = vpop.f32.mrb[0].mxu0
      %v2129 = vadd.f32 0.0, %v2128
      %v2130 = vpop.f32.mrb[0].mxu0
      %2131 = vmatprep.mubr.f32.mxu0 %v377
      %2132 = vmatmul.mubr.f32.gmra.mrb[0].mxu0 %v376
      %v2133 = vpop.f32.mrb[0].mxu0
      %v2134 = vadd.f32 0.0, %v2133
      %v2135 = vpop.f32.mrb[0].mxu0
      %2136 = vmatprep.mubr.f32.mxu0 %v380
      %2137 = vmatmul.mubr.f32.gmra.mrb[0].mxu0 %v379
      %v2138 = vpop.f32.mrb[0].mxu0
      %v2139 = vadd.f32 0.0, %v2138
      %v2140 = vpop.f32.mrb[0].mxu0
      %2141 = vmatprep.mubr.f32.mxu0 %v383
      %2142 = vmatmul.mubr.f32.gmra.mrb[0].mxu0 %v382
      %v2143 = vpop.f32.mrb[0].mxu0
      %v2144 = vadd.f32 0.0, %v2143
      %v2145 = vpop.f32.mrb[0].mxu0
      %2146 = vdwg.mxu0
      %2147 = vmatprep.subr.mxu0 0.0
      %2148 = vmatpush1.msra.mxu0 %v1913
      %2149 = vmatprep.subr.mxu0 0.0
      %2150 = vmatpush1.msra.mxu0 %v1914
      %2151 = vmatprep.subr.mxu0 0.0
      %2152 = vmatpush1.msra.mxu0 %v1915
      %2153 = vmatprep.subr.mxu0 0.0
      %2154 = vmatpush1.msra.mxu0 %v1916
      %2155 = vmatprep.subr.mxu0 0.0
      %2156 = vmatpush1.msra.mxu0 0.0
      %2157 = vmatprep.subr.mxu0 0.0
      %2158 = vmatpush1.msra.mxu0 0.0
      %2159 = vmatprep.subr.mxu0 0.0
      %2160 = vmatpush1.msra.mxu0 0.0
      %2161 = vmatprep.subr.mxu0 0.0
      %2162 = vmatpush1.msra.mxu0 0.0
      %2163 = vmatprep.subr.mxu0 0.0
      %2164 = vmatpush1.msra.mxu0 0.0
      %2165 = vmatprep.subr.mxu0 0.0
      %2166 = vmatpush1.msra.mxu0 0.0
      %2167 = vmatprep.subr.mxu0 0.0
      %2168 = vmatpush1.msra.mxu0 0.0
      %2169 = vmatprep.subr.mxu0 0.0
      %2170 = vmatpush1.msra.mxu0 0.0
      %2171 = vmatprep.subr.mxu0 0.0
      %2172 = vmatpush1.msra.mxu0 0.0
      %2173 = vmatprep.subr.mxu0 0.0
      %2174 = vmatpush1.msra.mxu0 0.0
      %2175 = vmatprep.subr.mxu0 0.0
      %2176 = vmatpush1.msra.mxu0 0.0
      %2177 = vmatprep.subr.mxu0 0.0
      %2178 = vmatpush1.msra.mxu0 0.0
      %2179 = vmatprep.subr.mxu0 0.0
      %2180 = vmatpush1.msra.mxu0 0.0
      %2181 = vmatprep.subr.mxu0 0.0
      %2182 = vmatpush1.msra.mxu0 0.0
      %2183 = vmatprep.subr.mxu0 0.0
      %2184 = vmatpush1.msra.mxu0 0.0
      %2185 = vmatprep.subr.mxu0 0.0
      %2186 = vmatpush1.msra.mxu0 0.0
      %2187 = vmatprep.subr.mxu0 0.0
      %2188 = vmatpush1.msra.mxu0 0.0
      %2189 = vmatprep.subr.mxu0 0.0
      %2190 = vmatpush1.msra.mxu0 0.0
      %2191 = vmatprep.subr.mxu0 0.0
      %2192 = vmatpush1.msra.mxu0 0.0
      %2193 = vmatprep.subr.mxu0 0.0
      %2194 = vmatpush1.msra.mxu0 0.0
      %2195 = vmatprep.subr.mxu0 0.0
      %2196 = vmatpush1.msra.mxu0 0.0
      %2197 = vmatprep.subr.mxu0 0.0
      %2198 = vmatpush1.msra.mxu0 0.0
      %2199 = vmatprep.subr.mxu0 0.0
      %2200 = vmatpush1.msra.mxu0 0.0
      %2201 = vmatprep.subr.mxu0 0.0
      %2202 = vmatpush1.msra.mxu0 0.0
      %2203 = vmatprep.subr.mxu0 0.0
      %2204 = vmatpush1.msra.mxu0 0.0
      %2205 = vmatprep.subr.mxu0 0.0
      %2206 = vmatpush1.msra.mxu0 0.0
      %2207 = vmatprep.subr.mxu0 0.0
      %2208 = vmatpush1.msra.mxu0 0.0
      %2209 = vmatprep.subr.mxu0 0.0
      %2210 = vmatpush1.msra.mxu0 0.0
      %2211 = vmatprep.mubr.f32.mxu0 0.0
      %2212 = vmatmul.mubr.f32.gmra.mrb[0].mxu0 %v403
      %v2213 = vpop.f32.mrb[0].mxu0
      %v2214 = vadd.f32 %v1984, %v2213
      %v2215 = vpop.f32.mrb[0].mxu0
      %2216 = vmatprep.mubr.f32.mxu0 0.0
      %2217 = vmatmul.mubr.f32.gmra.mrb[0].mxu0 %v406
      %v2218 = vpop.f32.mrb[0].mxu0
      %v2219 = vadd.f32 %v1989, %v2218
      %v2220 = vpop.f32.mrb[0].mxu0
      %2221 = vmatprep.mubr.f32.mxu0 0.0
      %2222 = vmatmul.mubr.f32.gmra.mrb[0].mxu0 %v409
      %v2223 = vpop.f32.mrb[0].mxu0
      %v2224 = vadd.f32 %v1994, %v2223
      %v2225 = vpop.f32.mrb[0].mxu0
      %2226 = vmatprep.mubr.f32.mxu0 0.0
      %2227 = vmatmul.mubr.f32.gmra.mrb[0].mxu0 %v412
      %v2228 = vpop.f32.mrb[0].mxu0
      %v2229 = vadd.f32 %v1999, %v2228
      %v2230 = vpop.f32.mrb[0].mxu0
      %2231 = vmatprep.mubr.f32.mxu0 0.0
      %2232 = vmatmul.mubr.f32.gmra.mrb[0].mxu0 %v415
      %v2233 = vpop.f32.mrb[0].mxu0
      %v2234 = vadd.f32 %v2004, %v2233
      %v2235 = vpop.f32.mrb[0].mxu0
      %2236 = vmatprep.mubr.f32.mxu0 0.0
      %2237 = vmatmul.mubr.f32.gmra.mrb[0].mxu0 %v418
      %v2238 = vpop.f32.mrb[0].mxu0
      %v2239 = vadd.f32 %v2009, %v2238
      %v2240 = vpop.f32.mrb[0].mxu0
      %2241 = vmatprep.mubr.f32.mxu0 0.0
      %2242 = vmatmul.mubr.f32.gmra.mrb[0].mxu0 %v421
      %v2243 = vpop.f32.mrb[0].mxu0
      %v2244 = vadd.f32 %v2014, %v2243
      %v2245 = vpop.f32.mrb[0].mxu0
      %2246 = vmatprep.mubr.f32.mxu0 0.0
      %2247 = vmatmul.mubr.f32.gmra.mrb[0].mxu0 %v424
      %v2248 = vpop.f32.mrb[0].mxu0
      %v2249 = vadd.f32 %v2019, %v2248
      %v2250 = vpop.f32.mrb[0].mxu0
      %2251 = vmatprep.mubr.f32.mxu0 0.0
      %2252 = vmatmul.mubr.f32.gmra.mrb[0].mxu0 %v427
      %v2253 = vpop.f32.mrb[0].mxu0
      %v2254 = vadd.f32 %v2024, %v2253
      %v2255 = vpop.f32.mrb[0].mxu0
      %2256 = vmatprep.mubr.f32.mxu0 0.0
      %2257 = vmatmul.mubr.f32.gmra.mrb[0].mxu0 %v430
      %v2258 = vpop.f32.mrb[0].mxu0
      %v2259 = vadd.f32 %v2029, %v2258
      %v2260 = vpop.f32.mrb[0].mxu0
      %2261 = vmatprep.mubr.f32.mxu0 0.0
      %2262 = vmatmul.mubr.f32.gmra.mrb[0].mxu0 %v433
      %v2263 = vpop.f32.mrb[0].mxu0
      %v2264 = vadd.f32 %v2034, %v2263
      %v2265 = vpop.f32.mrb[0].mxu0
      %2266 = vmatprep.mubr.f32.mxu0 0.0
      %2267 = vmatmul.mubr.f32.gmra.mrb[0].mxu0 %v436
      %v2268 = vpop.f32.mrb[0].mxu0
      %v2269 = vadd.f32 %v2039, %v2268
      %v2270 = vpop.f32.mrb[0].mxu0
      %2271 = vmatprep.mubr.f32.mxu0 0.0
      %2272 = vmatmul.mubr.f32.gmra.mrb[0].mxu0 %v439
      %v2273 = vpop.f32.mrb[0].mxu0
      %v2274 = vadd.f32 %v2044, %v2273
      %v2275 = vpop.f32.mrb[0].mxu0
      %2276 = vmatprep.mubr.f32.mxu0 0.0
      %2277 = vmatmul.mubr.f32.gmra.mrb[0].mxu0 %v442
      %v2278 = vpop.f32.mrb[0].mxu0
      %v2279 = vadd.f32 %v2049, %v2278
      %v2280 = vpop.f32.mrb[0].mxu0
      %2281 = vmatprep.mubr.f32.mxu0 0.0
      %2282 = vmatmul.mubr.f32.gmra.mrb[0].mxu0 %v445
      %v2283 = vpop.f32.mrb[0].mxu0
      %v2284 = vadd.f32 %v2054, %v2283
      %v2285 = vpop.f32.mrb[0].mxu0
      %2286 = vmatprep.mubr.f32.mxu0 0.0
      %2287 = vmatmul.mubr.f32.gmra.mrb[0].mxu0 %v448
      %v2288 = vpop.f32.mrb[0].mxu0
      %v2289 = vadd.f32 %v2059, %v2288
      %v2290 = vpop.f32.mrb[0].mxu0
      %2291 = vmatprep.mubr.f32.mxu0 0.0
      %2292 = vmatmul.mubr.f32.gmra.mrb[0].mxu0 %v451
      %v2293 = vpop.f32.mrb[0].mxu0
      %v2294 = vadd.f32 %v2064, %v2293
      %v2295 = vpop.f32.mrb[0].mxu0
      %2296 = vmatprep.mubr.f32.mxu0 0.0
      %2297 = vmatmul.mubr.f32.gmra.mrb[0].mxu0 %v454
      %v2298 = vpop.f32.mrb[0].mxu0
      %v2299 = vadd.f32 %v2069, %v2298
      %v2300 = vpop.f32.mrb[0].mxu0
      %2301 = vmatprep.mubr.f32.mxu0 0.0
      %2302 = vmatmul.mubr.f32.gmra.mrb[0].mxu0 %v457
      %v2303 = vpop.f32.mrb[0].mxu0
      %v2304 = vadd.f32 %v2074, %v2303
      %v2305 = vpop.f32.mrb[0].mxu0
      %2306 = vmatprep.mubr.f32.mxu0 0.0
      %2307 = vmatmul.mubr.f32.gmra.mrb[0].mxu0 %v460
      %v2308 = vpop.f32.mrb[0].mxu0
      %v2309 = vadd.f32 %v2079, %v2308
      %v2310 = vpop.f32.mrb[0].mxu0
      %2311 = vmatprep.mubr.f32.mxu0 0.0
      %2312 = vmatmul.mubr.f32.gmra.mrb[0].mxu0 %v463
      %v2313 = vpop.f32.mrb[0].mxu0
      %v2314 = vadd.f32 %v2084, %v2313
      %v2315 = vpop.f32.mrb[0].mxu0
      %2316 = vmatprep.mubr.f32.mxu0 0.0
      %2317 = vmatmul.mubr.f32.gmra.mrb[0].mxu0 %v466
      %v2318 = vpop.f32.mrb[0].mxu0
      %v2319 = vadd.f32 %v2089, %v2318
      %v2320 = vpop.f32.mrb[0].mxu0
      %2321 = vmatprep.mubr.f32.mxu0 0.0
      %2322 = vmatmul.mubr.f32.gmra.mrb[0].mxu0 %v469
      %v2323 = vpop.f32.mrb[0].mxu0
      %v2324 = vadd.f32 %v2094, %v2323
      %v2325 = vpop.f32.mrb[0].mxu0
      %2326 = vmatprep.mubr.f32.mxu0 0.0
      %2327 = vmatmul.mubr.f32.gmra.mrb[0].mxu0 %v472
      %v2328 = vpop.f32.mrb[0].mxu0
      %v2329 = vadd.f32 %v2099, %v2328
      %v2330 = vpop.f32.mrb[0].mxu0
      %2331 = vmatprep.mubr.f32.mxu0 0.0
      %2332 = vmatmul.mubr.f32.gmra.mrb[0].mxu0 %v475
      %v2333 = vpop.f32.mrb[0].mxu0
      %v2334 = vadd.f32 %v2104, %v2333
      %v2335 = vpop.f32.mrb[0].mxu0
      %2336 = vmatprep.mubr.f32.mxu0 0.0
      %2337 = vmatmul.mubr.f32.gmra.mrb[0].mxu0 %v478
      %v2338 = vpop.f32.mrb[0].mxu0
      %v2339 = vadd.f32 %v2109, %v2338
      %v2340 = vpop.f32.mrb[0].mxu0
      %2341 = vmatprep.mubr.f32.mxu0 0.0
      %2342 = vmatmul.mubr.f32.gmra.mrb[0].mxu0 %v481
      %v2343 = vpop.f32.mrb[0].mxu0
      %v2344 = vadd.f32 %v2114, %v2343
      %v2345 = vpop.f32.mrb[0].mxu0
      %2346 = vmatprep.mubr.f32.mxu0 0.0
      %2347 = vmatmul.mubr.f32.gmra.mrb[0].mxu0 %v484
      %v2348 = vpop.f32.mrb[0].mxu0
      %v2349 = vadd.f32 %v2119, %v2348
      %v2350 = vpop.f32.mrb[0].mxu0
      %2351 = vmatprep.mubr.f32.mxu0 0.0
      %2352 = vmatmul.mubr.f32.gmra.mrb[0].mxu0 %v487
      %v2353 = vpop.f32.mrb[0].mxu0
      %v2354 = vadd.f32 %v2124, %v2353
      %v2355 = vpop.f32.mrb[0].mxu0
      %2356 = vmatprep.mubr.f32.mxu0 0.0
      %2357 = vmatmul.mubr.f32.gmra.mrb[0].mxu0 %v490
      %v2358 = vpop.f32.mrb[0].mxu0
      %v2359 = vadd.f32 %v2129, %v2358
      %v2360 = vpop.f32.mrb[0].mxu0
      %2361 = vmatprep.mubr.f32.mxu0 0.0
      %2362 = vmatmul.mubr.f32.gmra.mrb[0].mxu0 %v493
      %v2363 = vpop.f32.mrb[0].mxu0
      %v2364 = vadd.f32 %v2134, %v2363
      %v2365 = vpop.f32.mrb[0].mxu0
      %2366 = vmatprep.mubr.f32.mxu0 0.0
      %2367 = vmatmul.mubr.f32.gmra.mrb[0].mxu0 %v496
      %v2368 = vpop.f32.mrb[0].mxu0
      %v2369 = vadd.f32 %v2139, %v2368
      %v2370 = vpop.f32.mrb[0].mxu0
      %2371 = vmatprep.mubr.f32.mxu0 0.0
      %2372 = vmatmul.mubr.f32.gmra.mrb[0].mxu0 %v499
      %v2373 = vpop.f32.mrb[0].mxu0
      %v2374 = vadd.f32 %v2144, %v2373
      %v2375 = vpop.f32.mrb[0].mxu0
      %2376 = vdwg.mxu0
      %v2377 = vmul.f32 %v250, %v250
      %v2378 = vmul.f32 %v251, %v251
      %v2379 = vmul.f32 %v252, %v252
      %v2380 = vmul.f32 %v253, %v253
      %v2381 = vmul.f32 %v254, %v254
      %v2382 = vmul.f32 %v255, %v255
      %v2383 = vmul.f32 %v256, %v256
      %v2384 = vmul.f32 %v257, %v257
      %v2385 = vmul.f32 %v258, %v258
      %v2386 = vmul.f32 %v259, %v259
      %v2387 = vmul.f32 %v260, %v260
      %v2388 = vmul.f32 %v261, %v261
      %v2389 = vmul.f32 %v262, %v262
      %v2390 = vmul.f32 %v263, %v263
      %v2391 = vmul.f32 %v264, %v264
      %v2392 = vmul.f32 %v265, %v265
      %v2393 = vmul.f32 %v266, %v266
      %v2394 = vmul.f32 %v267, %v267
      %v2395 = vmul.f32 %v268, %v268
      %v2396 = vmul.f32 %v269, %v269
      %v2397 = vmul.f32 %v270, %v270
      %v2398 = vmul.f32 %v271, %v271
      %v2399 = vmul.f32 %v272, %v272
      %v2400 = vmul.f32 %v273, %v273
      %v2401 = vmul.f32 %v274, %v274
      %v2402 = vmul.f32 %v275, %v275
      %v2403 = vmul.f32 %v276, %v276
      %v2404 = vmul.f32 %v277, %v277
      %v2405 = vmul.f32 %v278, %v278
      %v2406 = vmul.f32 %v279, %v279
      %v2407 = vmul.f32 %v280, %v280
      %v2408 = vmul.f32 %v281, %v281
      %v2409 = vmul.f32 %v282, %v282
      %v2410 = vmul.f32 %v283, %v283
      %v2411 = vmul.f32 %v284, %v284
      %v2412 = vmul.f32 %v285, %v285
      %2413 = vmatprep.subr.mxu0 0.0
      %2414 = vmatpush1.msra.mxu0 %v2377
      %2415 = vmatprep.subr.mxu0 0.0
      %2416 = vmatpush1.msra.mxu0 %v2378
      %2417 = vmatprep.subr.mxu0 0.0
      %2418 = vmatpush1.msra.mxu0 %v2379
      %2419 = vmatprep.subr.mxu0 0.0
      %2420 = vmatpush1.msra.mxu0 %v2380
      %2421 = vmatprep.subr.mxu0 0.0
      %2422 = vmatpush1.msra.mxu0 %v2381
      %2423 = vmatprep.subr.mxu0 0.0
      %2424 = vmatpush1.msra.mxu0 %v2382
      %2425 = vmatprep.subr.mxu0 0.0
      %2426 = vmatpush1.msra.mxu0 %v2383
      %2427 = vmatprep.subr.mxu0 0.0
      %2428 = vmatpush1.msra.mxu0 %v2384
      %2429 = vmatprep.subr.mxu0 0.0
      %2430 = vmatpush1.msra.mxu0 %v2385
      %2431 = vmatprep.subr.mxu0 0.0
      %2432 = vmatpush1.msra.mxu0 %v2386
      %2433 = vmatprep.subr.mxu0 0.0
      %2434 = vmatpush1.msra.mxu0 %v2387
      %2435 = vmatprep.subr.mxu0 0.0
      %2436 = vmatpush1.msra.mxu0 %v2388
      %2437 = vmatprep.subr.mxu0 0.0
      %2438 = vmatpush1.msra.mxu0 %v2389
      %2439 = vmatprep.subr.mxu0 0.0
      %2440 = vmatpush1.msra.mxu0 %v2390
      %2441 = vmatprep.subr.mxu0 0.0
      %2442 = vmatpush1.msra.mxu0 %v2391
      %2443 = vmatprep.subr.mxu0 0.0
      %2444 = vmatpush1.msra.mxu0 %v2392
      %2445 = vmatprep.subr.mxu0 0.0
      %2446 = vmatpush1.msra.mxu0 %v2393
      %2447 = vmatprep.subr.mxu0 0.0
      %2448 = vmatpush1.msra.mxu0 %v2394
      %2449 = vmatprep.subr.mxu0 0.0
      %2450 = vmatpush1.msra.mxu0 %v2395
      %2451 = vmatprep.subr.mxu0 0.0
      %2452 = vmatpush1.msra.mxu0 %v2396
      %2453 = vmatprep.subr.mxu0 0.0
      %2454 = vmatpush1.msra.mxu0 %v2397
      %2455 = vmatprep.subr.mxu0 0.0
      %2456 = vmatpush1.msra.mxu0 %v2398
      %2457 = vmatprep.subr.mxu0 0.0
      %2458 = vmatpush1.msra.mxu0 %v2399
      %2459 = vmatprep.subr.mxu0 0.0
      %2460 = vmatpush1.msra.mxu0 %v2400
      %2461 = vmatprep.subr.mxu0 0.0
      %2462 = vmatpush1.msra.mxu0 %v2401
      %2463 = vmatprep.subr.mxu0 0.0
      %2464 = vmatpush1.msra.mxu0 %v2402
      %2465 = vmatprep.subr.mxu0 0.0
      %2466 = vmatpush1.msra.mxu0 %v2403
      %2467 = vmatprep.subr.mxu0 0.0
      %2468 = vmatpush1.msra.mxu0 %v2404
      %2469 = vmatprep.subr.mxu0 0.0
      %2470 = vmatpush1.msra.mxu0 %v2405
      %2471 = vmatprep.subr.mxu0 0.0
      %2472 = vmatpush1.msra.mxu0 %v2406
      %2473 = vmatprep.subr.mxu0 0.0
      %2474 = vmatpush1.msra.mxu0 %v2407
      %2475 = vmatprep.subr.mxu0 0.0
      %2476 = vmatpush1.msra.mxu0 %v2408
      %2477 = vmatprep.mubr.f32.mxu0 %v287
      %2478 = vmatmul.mubr.f32.gmra.mrb[0].mxu0 %v286
      %v2479 = vpop.f32.mrb[0].mxu0
      %v2480 = vadd.f32 0.0, %v2479
      %v2481 = vpop.f32.mrb[0].mxu0
      %2482 = vmatprep.mubr.f32.mxu0 %v290
      %2483 = vmatmul.mubr.f32.gmra.mrb[0].mxu0 %v289
      %v2484 = vpop.f32.mrb[0].mxu0
      %v2485 = vadd.f32 0.0, %v2484
      %v2486 = vpop.f32.mrb[0].mxu0
      %2487 = vmatprep.mubr.f32.mxu0 %v293
      %2488 = vmatmul.mubr.f32.gmra.mrb[0].mxu0 %v292
      %v2489 = vpop.f32.mrb[0].mxu0
      %v2490 = vadd.f32 0.0, %v2489
      %v2491 = vpop.f32.mrb[0].mxu0
      %2492 = vmatprep.mubr.f32.mxu0 %v296
      %2493 = vmatmul.mubr.f32.gmra.mrb[0].mxu0 %v295
      %v2494 = vpop.f32.mrb[0].mxu0
      %v2495 = vadd.f32 0.0, %v2494
      %v2496 = vpop.f32.mrb[0].mxu0
      %2497 = vmatprep.mubr.f32.mxu0 %v299
      %2498 = vmatmul.mubr.f32.gmra.mrb[0].mxu0 %v298
      %v2499 = vpop.f32.mrb[0].mxu0
      %v2500 = vadd.f32 0.0, %v2499
      %v2501 = vpop.f32.mrb[0].mxu0
      %2502 = vmatprep.mubr.f32.mxu0 %v302
      %2503 = vmatmul.mubr.f32.gmra.mrb[0].mxu0 %v301
      %v2504 = vpop.f32.mrb[0].mxu0
      %v2505 = vadd.f32 0.0, %v2504
      %v2506 = vpop.f32.mrb[0].mxu0
      %2507 = vmatprep.mubr.f32.mxu0 %v305
      %2508 = vmatmul.mubr.f32.gmra.mrb[0].mxu0 %v304
      %v2509 = vpop.f32.mrb[0].mxu0
      %v2510 = vadd.f32 0.0, %v2509
      %v2511 = vpop.f32.mrb[0].mxu0
      %2512 = vmatprep.mubr.f32.mxu0 %v308
      %2513 = vmatmul.mubr.f32.gmra.mrb[0].mxu0 %v307
      %v2514 = vpop.f32.mrb[0].mxu0
      %v2515 = vadd.f32 0.0, %v2514
      %v2516 = vpop.f32.mrb[0].mxu0
      %2517 = vmatprep.mubr.f32.mxu0 %v311
      %2518 = vmatmul.mubr.f32.gmra.mrb[0].mxu0 %v310
      %v2519 = vpop.f32.mrb[0].mxu0
      %v2520 = vadd.f32 0.0, %v2519
      %v2521 = vpop.f32.mrb[0].mxu0
      %2522 = vmatprep.mubr.f32.mxu0 %v314
      %2523 = vmatmul.mubr.f32.gmra.mrb[0].mxu0 %v313
      %v2524 = vpop.f32.mrb[0].mxu0
      %v2525 = vadd.f32 0.0, %v2524
      %v2526 = vpop.f32.mrb[0].mxu0
      %2527 = vmatprep.mubr.f32.mxu0 %v317
      %2528 = vmatmul.mubr.f32.gmra.mrb[0].mxu0 %v316
      %v2529 = vpop.f32.mrb[0].mxu0
      %v2530 = vadd.f32 0.0, %v2529
      %v2531 = vpop.f32.mrb[0].mxu0
      %2532 = vmatprep.mubr.f32.mxu0 %v320
      %2533 = vmatmul.mubr.f32.gmra.mrb[0].mxu0 %v319
      %v2534 = vpop.f32.mrb[0].mxu0
      %v2535 = vadd.f32 0.0, %v2534
      %v2536 = vpop.f32.mrb[0].mxu0
      %2537 = vmatprep.mubr.f32.mxu0 %v323
      %2538 = vmatmul.mubr.f32.gmra.mrb[0].mxu0 %v322
      %v2539 = vpop.f32.mrb[0].mxu0
      %v2540 = vadd.f32 0.0, %v2539
      %v2541 = vpop.f32.mrb[0].mxu0
      %2542 = vmatprep.mubr.f32.mxu0 %v326
      %2543 = vmatmul.mubr.f32.gmra.mrb[0].mxu0 %v325
      %v2544 = vpop.f32.mrb[0].mxu0
      %v2545 = vadd.f32 0.0, %v2544
      %v2546 = vpop.f32.mrb[0].mxu0
      %2547 = vmatprep.mubr.f32.mxu0 %v329
      %2548 = vmatmul.mubr.f32.gmra.mrb[0].mxu0 %v328
      %v2549 = vpop.f32.mrb[0].mxu0
      %v2550 = vadd.f32 0.0, %v2549
      %v2551 = vpop.f32.mrb[0].mxu0
      %2552 = vmatprep.mubr.f32.mxu0 %v332
      %2553 = vmatmul.mubr.f32.gmra.mrb[0].mxu0 %v331
      %v2554 = vpop.f32.mrb[0].mxu0
      %v2555 = vadd.f32 0.0, %v2554
      %v2556 = vpop.f32.mrb[0].mxu0
      %2557 = vmatprep.mubr.f32.mxu0 %v335
      %2558 = vmatmul.mubr.f32.gmra.mrb[0].mxu0 %v334
      %v2559 = vpop.f32.mrb[0].mxu0
      %v2560 = vadd.f32 0.0, %v2559
      %v2561 = vpop.f32.mrb[0].mxu0
      %2562 = vmatprep.mubr.f32.mxu0 %v338
      %2563 = vmatmul.mubr.f32.gmra.mrb[0].mxu0 %v337
      %v2564 = vpop.f32.mrb[0].mxu0
      %v2565 = vadd.f32 0.0, %v2564
      %v2566 = vpop.f32.mrb[0].mxu0
      %2567 = vmatprep.mubr.f32.mxu0 %v341
      %2568 = vmatmul.mubr.f32.gmra.mrb[0].mxu0 %v340
      %v2569 = vpop.f32.mrb[0].mxu0
      %v2570 = vadd.f32 0.0, %v2569
      %v2571 = vpop.f32.mrb[0].mxu0
      %2572 = vmatprep.mubr.f32.mxu0 %v344
      %2573 = vmatmul.mubr.f32.gmra.mrb[0].mxu0 %v343
      %v2574 = vpop.f32.mrb[0].mxu0
      %v2575 = vadd.f32 0.0, %v2574
      %v2576 = vpop.f32.mrb[0].mxu0
      %2577 = vmatprep.mubr.f32.mxu0 %v347
      %2578 = vmatmul.mubr.f32.gmra.mrb[0].mxu0 %v346
      %v2579 = vpop.f32.mrb[0].mxu0
      %v2580 = vadd.f32 0.0, %v2579
      %v2581 = vpop.f32.mrb[0].mxu0
      %2582 = vmatprep.mubr.f32.mxu0 %v350
      %2583 = vmatmul.mubr.f32.gmra.mrb[0].mxu0 %v349
      %v2584 = vpop.f32.mrb[0].mxu0
      %v2585 = vadd.f32 0.0, %v2584
      %v2586 = vpop.f32.mrb[0].mxu0
      %2587 = vmatprep.mubr.f32.mxu0 %v353
      %2588 = vmatmul.mubr.f32.gmra.mrb[0].mxu0 %v352
      %v2589 = vpop.f32.mrb[0].mxu0
      %v2590 = vadd.f32 0.0, %v2589
      %v2591 = vpop.f32.mrb[0].mxu0
      %2592 = vmatprep.mubr.f32.mxu0 %v356
      %2593 = vmatmul.mubr.f32.gmra.mrb[0].mxu0 %v355
      %v2594 = vpop.f32.mrb[0].mxu0
      %v2595 = vadd.f32 0.0, %v2594
      %v2596 = vpop.f32.mrb[0].mxu0
      %2597 = vmatprep.mubr.f32.mxu0 %v359
      %2598 = vmatmul.mubr.f32.gmra.mrb[0].mxu0 %v358
      %v2599 = vpop.f32.mrb[0].mxu0
      %v2600 = vadd.f32 0.0, %v2599
      %v2601 = vpop.f32.mrb[0].mxu0
      %2602 = vmatprep.mubr.f32.mxu0 %v362
      %2603 = vmatmul.mubr.f32.gmra.mrb[0].mxu0 %v361
      %v2604 = vpop.f32.mrb[0].mxu0
      %v2605 = vadd.f32 0.0, %v2604
      %v2606 = vpop.f32.mrb[0].mxu0
      %2607 = vmatprep.mubr.f32.mxu0 %v365
      %2608 = vmatmul.mubr.f32.gmra.mrb[0].mxu0 %v364
      %v2609 = vpop.f32.mrb[0].mxu0
      %v2610 = vadd.f32 0.0, %v2609
      %v2611 = vpop.f32.mrb[0].mxu0
      %2612 = vmatprep.mubr.f32.mxu0 %v368
      %2613 = vmatmul.mubr.f32.gmra.mrb[0].mxu0 %v367
      %v2614 = vpop.f32.mrb[0].mxu0
      %v2615 = vadd.f32 0.0, %v2614
      %v2616 = vpop.f32.mrb[0].mxu0
      %2617 = vmatprep.mubr.f32.mxu0 %v371
      %2618 = vmatmul.mubr.f32.gmra.mrb[0].mxu0 %v370
      %v2619 = vpop.f32.mrb[0].mxu0
      %v2620 = vadd.f32 0.0, %v2619
      %v2621 = vpop.f32.mrb[0].mxu0
      %2622 = vmatprep.mubr.f32.mxu0 %v374
      %2623 = vmatmul.mubr.f32.gmra.mrb[0].mxu0 %v373
      %v2624 = vpop.f32.mrb[0].mxu0
      %v2625 = vadd.f32 0.0, %v2624
      %v2626 = vpop.f32.mrb[0].mxu0
      %2627 = vmatprep.mubr.f32.mxu0 %v377
      %2628 = vmatmul.mubr.f32.gmra.mrb[0].mxu0 %v376
      %v2629 = vpop.f32.mrb[0].mxu0
      %v2630 = vadd.f32 0.0, %v2629
      %v2631 = vpop.f32.mrb[0].mxu0
      %2632 = vmatprep.mubr.f32.mxu0 %v380
      %2633 = vmatmul.mubr.f32.gmra.mrb[0].mxu0 %v379
      %v2634 = vpop.f32.mrb[0].mxu0
      %v2635 = vadd.f32 0.0, %v2634
      %v2636 = vpop.f32.mrb[0].mxu0
      %2637 = vmatprep.mubr.f32.mxu0 %v383
      %2638 = vmatmul.mubr.f32.gmra.mrb[0].mxu0 %v382
      %v2639 = vpop.f32.mrb[0].mxu0
      %v2640 = vadd.f32 0.0, %v2639
      %v2641 = vpop.f32.mrb[0].mxu0
      %2642 = vdwg.mxu0
      %2643 = vmatprep.subr.mxu0 0.0
      %2644 = vmatpush1.msra.mxu0 %v2409
      %2645 = vmatprep.subr.mxu0 0.0
      %2646 = vmatpush1.msra.mxu0 %v2410
      %2647 = vmatprep.subr.mxu0 0.0
      %2648 = vmatpush1.msra.mxu0 %v2411
      %2649 = vmatprep.subr.mxu0 0.0
      %2650 = vmatpush1.msra.mxu0 %v2412
      %2651 = vmatprep.subr.mxu0 0.0
      %2652 = vmatpush1.msra.mxu0 0.0
      %2653 = vmatprep.subr.mxu0 0.0
      %2654 = vmatpush1.msra.mxu0 0.0
      %2655 = vmatprep.subr.mxu0 0.0
      %2656 = vmatpush1.msra.mxu0 0.0
      %2657 = vmatprep.subr.mxu0 0.0
      %2658 = vmatpush1.msra.mxu0 0.0
      %2659 = vmatprep.subr.mxu0 0.0
      %2660 = vmatpush1.msra.mxu0 0.0
      %2661 = vmatprep.subr.mxu0 0.0
      %2662 = vmatpush1.msra.mxu0 0.0
      %2663 = vmatprep.subr.mxu0 0.0
      %2664 = vmatpush1.msra.mxu0 0.0
      %2665 = vmatprep.subr.mxu0 0.0
      %2666 = vmatpush1.msra.mxu0 0.0
      %2667 = vmatprep.subr.mxu0 0.0
      %2668 = vmatpush1.msra.mxu0 0.0
      %2669 = vmatprep.subr.mxu0 0.0
      %2670 = vmatpush1.msra.mxu0 0.0
      %2671 = vmatprep.subr.mxu0 0.0
      %2672 = vmatpush1.msra.mxu0 0.0
      %2673 = vmatprep.subr.mxu0 0.0
      %2674 = vmatpush1.msra.mxu0 0.0
      %2675 = vmatprep.subr.mxu0 0.0
      %2676 = vmatpush1.msra.mxu0 0.0
      %2677 = vmatprep.subr.mxu0 0.0
      %2678 = vmatpush1.msra.mxu0 0.0
      %2679 = vmatprep.subr.mxu0 0.0
      %2680 = vmatpush1.msra.mxu0 0.0
      %2681 = vmatprep.subr.mxu0 0.0
      %2682 = vmatpush1.msra.mxu0 0.0
      %2683 = vmatprep.subr.mxu0 0.0
      %2684 = vmatpush1.msra.mxu0 0.0
      %2685 = vmatprep.subr.mxu0 0.0
      %2686 = vmatpush1.msra.mxu0 0.0
      %2687 = vmatprep.subr.mxu0 0.0
      %2688 = vmatpush1.msra.mxu0 0.0
      %2689 = vmatprep.subr.mxu0 0.0
      %2690 = vmatpush1.msra.mxu0 0.0
      %2691 = vmatprep.subr.mxu0 0.0
      %2692 = vmatpush1.msra.mxu0 0.0
      %2693 = vmatprep.subr.mxu0 0.0
      %2694 = vmatpush1.msra.mxu0 0.0
      %2695 = vmatprep.subr.mxu0 0.0
      %2696 = vmatpush1.msra.mxu0 0.0
      %2697 = vmatprep.subr.mxu0 0.0
      %2698 = vmatpush1.msra.mxu0 0.0
      %2699 = vmatprep.subr.mxu0 0.0
      %2700 = vmatpush1.msra.mxu0 0.0
      %2701 = vmatprep.subr.mxu0 0.0
      %2702 = vmatpush1.msra.mxu0 0.0
      %2703 = vmatprep.subr.mxu0 0.0
      %2704 = vmatpush1.msra.mxu0 0.0
      %2705 = vmatprep.subr.mxu0 0.0
      %2706 = vmatpush1.msra.mxu0 0.0
      %2707 = vmatprep.mubr.f32.mxu0 0.0
      %2708 = vmatmul.mubr.f32.gmra.mrb[0].mxu0 %v403
      %v2709 = vpop.f32.mrb[0].mxu0
      %v2710 = vadd.f32 %v2480, %v2709
      %v2711 = vpop.f32.mrb[0].mxu0
      %2712 = vmatprep.mubr.f32.mxu0 0.0
      %2713 = vmatmul.mubr.f32.gmra.mrb[0].mxu0 %v406
      %v2714 = vpop.f32.mrb[0].mxu0
      %v2715 = vadd.f32 %v2485, %v2714
      %v2716 = vpop.f32.mrb[0].mxu0
      %2717 = vmatprep.mubr.f32.mxu0 0.0
      %2718 = vmatmul.mubr.f32.gmra.mrb[0].mxu0 %v409
      %v2719 = vpop.f32.mrb[0].mxu0
      %v2720 = vadd.f32 %v2490, %v2719
      %v2721 = vpop.f32.mrb[0].mxu0
      %2722 = vmatprep.mubr.f32.mxu0 0.0
      %2723 = vmatmul.mubr.f32.gmra.mrb[0].mxu0 %v412
      %v2724 = vpop.f32.mrb[0].mxu0
      %v2725 = vadd.f32 %v2495, %v2724
      %v2726 = vpop.f32.mrb[0].mxu0
      %2727 = vmatprep.mubr.f32.mxu0 0.0
      %2728 = vmatmul.mubr.f32.gmra.mrb[0].mxu0 %v415
      %v2729 = vpop.f32.mrb[0].mxu0
      %v2730 = vadd.f32 %v2500, %v2729
      %v2731 = vpop.f32.mrb[0].mxu0
      %2732 = vmatprep.mubr.f32.mxu0 0.0
      %2733 = vmatmul.mubr.f32.gmra.mrb[0].mxu0 %v418
      %v2734 = vpop.f32.mrb[0].mxu0
      %v2735 = vadd.f32 %v2505, %v2734
      %v2736 = vpop.f32.mrb[0].mxu0
      %2737 = vmatprep.mubr.f32.mxu0 0.0
      %2738 = vmatmul.mubr.f32.gmra.mrb[0].mxu0 %v421
      %v2739 = vpop.f32.mrb[0].mxu0
      %v2740 = vadd.f32 %v2510, %v2739
      %v2741 = vpop.f32.mrb[0].mxu0
      %2742 = vmatprep.mubr.f32.mxu0 0.0
      %2743 = vmatmul.mubr.f32.gmra.mrb[0].mxu0 %v424
      %v2744 = vpop.f32.mrb[0].mxu0
      %v2745 = vadd.f32 %v2515, %v2744
      %v2746 = vpop.f32.mrb[0].mxu0
      %2747 = vmatprep.mubr.f32.mxu0 0.0
      %2748 = vmatmul.mubr.f32.gmra.mrb[0].mxu0 %v427
      %v2749 = vpop.f32.mrb[0].mxu0
      %v2750 = vadd.f32 %v2520, %v2749
      %v2751 = vpop.f32.mrb[0].mxu0
      %2752 = vmatprep.mubr.f32.mxu0 0.0
      %2753 = vmatmul.mubr.f32.gmra.mrb[0].mxu0 %v430
      %v2754 = vpop.f32.mrb[0].mxu0
      %v2755 = vadd.f32 %v2525, %v2754
      %v2756 = vpop.f32.mrb[0].mxu0
      %2757 = vmatprep.mubr.f32.mxu0 0.0
      %2758 = vmatmul.mubr.f32.gmra.mrb[0].mxu0 %v433
      %v2759 = vpop.f32.mrb[0].mxu0
      %v2760 = vadd.f32 %v2530, %v2759
      %v2761 = vpop.f32.mrb[0].mxu0
      %2762 = vmatprep.mubr.f32.mxu0 0.0
      %2763 = vmatmul.mubr.f32.gmra.mrb[0].mxu0 %v436
      %v2764 = vpop.f32.mrb[0].mxu0
      %v2765 = vadd.f32 %v2535, %v2764
      %v2766 = vpop.f32.mrb[0].mxu0
      %2767 = vmatprep.mubr.f32.mxu0 0.0
      %2768 = vmatmul.mubr.f32.gmra.mrb[0].mxu0 %v439
      %v2769 = vpop.f32.mrb[0].mxu0
      %v2770 = vadd.f32 %v2540, %v2769
      %v2771 = vpop.f32.mrb[0].mxu0
      %2772 = vmatprep.mubr.f32.mxu0 0.0
      %2773 = vmatmul.mubr.f32.gmra.mrb[0].mxu0 %v442
      %v2774 = vpop.f32.mrb[0].mxu0
      %v2775 = vadd.f32 %v2545, %v2774
      %v2776 = vpop.f32.mrb[0].mxu0
      %2777 = vmatprep.mubr.f32.mxu0 0.0
      %2778 = vmatmul.mubr.f32.gmra.mrb[0].mxu0 %v445
      %v2779 = vpop.f32.mrb[0].mxu0
      %v2780 = vadd.f32 %v2550, %v2779
      %v2781 = vpop.f32.mrb[0].mxu0
      %2782 = vmatprep.mubr.f32.mxu0 0.0
      %2783 = vmatmul.mubr.f32.gmra.mrb[0].mxu0 %v448
      %v2784 = vpop.f32.mrb[0].mxu0
      %v2785 = vadd.f32 %v2555, %v2784
      %v2786 = vpop.f32.mrb[0].mxu0
      %2787 = vmatprep.mubr.f32.mxu0 0.0
      %2788 = vmatmul.mubr.f32.gmra.mrb[0].mxu0 %v451
      %v2789 = vpop.f32.mrb[0].mxu0
      %v2790 = vadd.f32 %v2560, %v2789
      %v2791 = vpop.f32.mrb[0].mxu0
      %2792 = vmatprep.mubr.f32.mxu0 0.0
      %2793 = vmatmul.mubr.f32.gmra.mrb[0].mxu0 %v454
      %v2794 = vpop.f32.mrb[0].mxu0
      %v2795 = vadd.f32 %v2565, %v2794
      %v2796 = vpop.f32.mrb[0].mxu0
      %2797 = vmatprep.mubr.f32.mxu0 0.0
      %2798 = vmatmul.mubr.f32.gmra.mrb[0].mxu0 %v457
      %v2799 = vpop.f32.mrb[0].mxu0
      %v2800 = vadd.f32 %v2570, %v2799
      %v2801 = vpop.f32.mrb[0].mxu0
      %2802 = vmatprep.mubr.f32.mxu0 0.0
      %2803 = vmatmul.mubr.f32.gmra.mrb[0].mxu0 %v460
      %v2804 = vpop.f32.mrb[0].mxu0
      %v2805 = vadd.f32 %v2575, %v2804
      %v2806 = vpop.f32.mrb[0].mxu0
      %2807 = vmatprep.mubr.f32.mxu0 0.0
      %2808 = vmatmul.mubr.f32.gmra.mrb[0].mxu0 %v463
      %v2809 = vpop.f32.mrb[0].mxu0
      %v2810 = vadd.f32 %v2580, %v2809
      %v2811 = vpop.f32.mrb[0].mxu0
      %2812 = vmatprep.mubr.f32.mxu0 0.0
      %2813 = vmatmul.mubr.f32.gmra.mrb[0].mxu0 %v466
      %v2814 = vpop.f32.mrb[0].mxu0
      %v2815 = vadd.f32 %v2585, %v2814
      %v2816 = vpop.f32.mrb[0].mxu0
      %2817 = vmatprep.mubr.f32.mxu0 0.0
      %2818 = vmatmul.mubr.f32.gmra.mrb[0].mxu0 %v469
      %v2819 = vpop.f32.mrb[0].mxu0
      %v2820 = vadd.f32 %v2590, %v2819
      %v2821 = vpop.f32.mrb[0].mxu0
      %2822 = vmatprep.mubr.f32.mxu0 0.0
      %2823 = vmatmul.mubr.f32.gmra.mrb[0].mxu0 %v472
      %v2824 = vpop.f32.mrb[0].mxu0
      %v2825 = vadd.f32 %v2595, %v2824
      %v2826 = vpop.f32.mrb[0].mxu0
      %2827 = vmatprep.mubr.f32.mxu0 0.0
      %2828 = vmatmul.mubr.f32.gmra.mrb[0].mxu0 %v475
      %v2829 = vpop.f32.mrb[0].mxu0
      %v2830 = vadd.f32 %v2600, %v2829
      %v2831 = vpop.f32.mrb[0].mxu0
      %2832 = vmatprep.mubr.f32.mxu0 0.0
      %2833 = vmatmul.mubr.f32.gmra.mrb[0].mxu0 %v478
      %v2834 = vpop.f32.mrb[0].mxu0
      %v2835 = vadd.f32 %v2605, %v2834
      %v2836 = vpop.f32.mrb[0].mxu0
      %2837 = vmatprep.mubr.f32.mxu0 0.0
      %2838 = vmatmul.mubr.f32.gmra.mrb[0].mxu0 %v481
      %v2839 = vpop.f32.mrb[0].mxu0
      %v2840 = vadd.f32 %v2610, %v2839
      %v2841 = vpop.f32.mrb[0].mxu0
      %2842 = vmatprep.mubr.f32.mxu0 0.0
      %2843 = vmatmul.mubr.f32.gmra.mrb[0].mxu0 %v484
      %v2844 = vpop.f32.mrb[0].mxu0
      %v2845 = vadd.f32 %v2615, %v2844
      %v2846 = vpop.f32.mrb[0].mxu0
      %2847 = vmatprep.mubr.f32.mxu0 0.0
      %2848 = vmatmul.mubr.f32.gmra.mrb[0].mxu0 %v487
      %v2849 = vpop.f32.mrb[0].mxu0
      %v2850 = vadd.f32 %v2620, %v2849
      %v2851 = vpop.f32.mrb[0].mxu0
      %2852 = vmatprep.mubr.f32.mxu0 0.0
      %2853 = vmatmul.mubr.f32.gmra.mrb[0].mxu0 %v490
      %v2854 = vpop.f32.mrb[0].mxu0
      %v2855 = vadd.f32 %v2625, %v2854
      %v2856 = vpop.f32.mrb[0].mxu0
      %2857 = vmatprep.mubr.f32.mxu0 0.0
      %2858 = vmatmul.mubr.f32.gmra.mrb[0].mxu0 %v493
      %v2859 = vpop.f32.mrb[0].mxu0
      %v2860 = vadd.f32 %v2630, %v2859
      %v2861 = vpop.f32.mrb[0].mxu0
      %2862 = vmatprep.mubr.f32.mxu0 0.0
      %2863 = vmatmul.mubr.f32.gmra.mrb[0].mxu0 %v496
      %v2864 = vpop.f32.mrb[0].mxu0
      %v2865 = vadd.f32 %v2635, %v2864
      %v2866 = vpop.f32.mrb[0].mxu0
      %2867 = vmatprep.mubr.f32.mxu0 0.0
      %2868 = vmatmul.mubr.f32.gmra.mrb[0].mxu0 %v499
      %v2869 = vpop.f32.mrb[0].mxu0
      %v2870 = vadd.f32 %v2640, %v2869
      %v2871 = vpop.f32.mrb[0].mxu0
      %2872 = vdwg.mxu0
      %2873 = vmatprep.subr.mxu0 0.0
      %2874 = vmatpush1.msra.mxu0 %v385
      %2875 = vmatprep.subr.mxu0 0.0
      %2876 = vmatpush1.msra.mxu0 %v386
      %2877 = vmatprep.subr.mxu0 0.0
      %2878 = vmatpush1.msra.mxu0 %v387
      %2879 = vmatprep.subr.mxu0 0.0
      %2880 = vmatpush1.msra.mxu0 %v388
      %2881 = vmatprep.subr.mxu0 0.0
      %2882 = vmatpush1.msra.mxu0 %v389
      %2883 = vmatprep.subr.mxu0 0.0
      %2884 = vmatpush1.msra.mxu0 %v390
      %2885 = vmatprep.subr.mxu0 0.0
      %2886 = vmatpush1.msra.mxu0 %v391
      %2887 = vmatprep.subr.mxu0 0.0
      %2888 = vmatpush1.msra.mxu0 %v392
      %2889 = vmatprep.subr.mxu0 0.0
      %2890 = vmatpush1.msra.mxu0 %v393
      %2891 = vmatprep.subr.mxu0 0.0
      %2892 = vmatpush1.msra.mxu0 %v394
      %2893 = vmatprep.subr.mxu0 0.0
      %2894 = vmatpush1.msra.mxu0 %v395
      %2895 = vmatprep.subr.mxu0 0.0
      %2896 = vmatpush1.msra.mxu0 %v396
      %2897 = vmatprep.subr.mxu0 0.0
      %2898 = vmatpush1.msra.mxu0 %v397
      %2899 = vmatprep.subr.mxu0 0.0
      %2900 = vmatpush1.msra.mxu0 %v398
      %2901 = vmatprep.subr.mxu0 0.0
      %2902 = vmatpush1.msra.mxu0 %v399
      %2903 = vmatprep.subr.mxu0 0.0
      %2904 = vmatpush1.msra.mxu0 %v400
      %2905 = vmatprep.subr.mxu0 0.0
      %2906 = vmatpush1.msra.mxu0 0.0
      %2907 = vmatprep.subr.mxu0 0.0
      %2908 = vmatpush1.msra.mxu0 0.0
      %2909 = vmatprep.subr.mxu0 0.0
      %2910 = vmatpush1.msra.mxu0 0.0
      %2911 = vmatprep.subr.mxu0 0.0
      %2912 = vmatpush1.msra.mxu0 0.0
      %2913 = vmatprep.subr.mxu0 0.0
      %2914 = vmatpush1.msra.mxu0 0.0
      %2915 = vmatprep.subr.mxu0 0.0
      %2916 = vmatpush1.msra.mxu0 0.0
      %2917 = vmatprep.subr.mxu0 0.0
      %2918 = vmatpush1.msra.mxu0 0.0
      %2919 = vmatprep.subr.mxu0 0.0
      %2920 = vmatpush1.msra.mxu0 0.0
      %2921 = vmatprep.subr.mxu0 0.0
      %2922 = vmatpush1.msra.mxu0 0.0
      %2923 = vmatprep.subr.mxu0 0.0
      %2924 = vmatpush1.msra.mxu0 0.0
      %2925 = vmatprep.subr.mxu0 0.0
      %2926 = vmatpush1.msra.mxu0 0.0
      %2927 = vmatprep.subr.mxu0 0.0
      %2928 = vmatpush1.msra.mxu0 0.0
      %2929 = vmatprep.subr.mxu0 0.0
      %2930 = vmatpush1.msra.mxu0 0.0
      %2931 = vmatprep.subr.mxu0 0.0
      %2932 = vmatpush1.msra.mxu0 0.0
      %2933 = vmatprep.subr.mxu0 0.0
      %2934 = vmatpush1.msra.mxu0 0.0
      %2935 = vmatprep.subr.mxu0 0.0
      %2936 = vmatpush1.msra.mxu0 0.0
      %2937 = vmatprep.mubr.f32.mxu0 0.0
      %2938 = vmatmul.mubr.f32.gmra.mrb[0].mxu0 %v2710
      %v2939 = vpop.f32.mrb[0].mxu0
      %v2940 = vadd.f32 0.0, %v2939
      %v2941 = vpop.f32.mrb[0].mxu0
      %2942 = vmatprep.mubr.f32.mxu0 0.0
      %2943 = vmatmul.mubr.f32.gmra.mrb[0].mxu0 %v2715
      %v2944 = vpop.f32.mrb[0].mxu0
      %v2945 = vadd.f32 0.0, %v2944
      %v2946 = vpop.f32.mrb[0].mxu0
      %2947 = vmatprep.mubr.f32.mxu0 0.0
      %2948 = vmatmul.mubr.f32.gmra.mrb[0].mxu0 %v2720
      %v2949 = vpop.f32.mrb[0].mxu0
      %v2950 = vadd.f32 0.0, %v2949
      %v2951 = vpop.f32.mrb[0].mxu0
      %2952 = vmatprep.mubr.f32.mxu0 0.0
      %2953 = vmatmul.mubr.f32.gmra.mrb[0].mxu0 %v2725
      %v2954 = vpop.f32.mrb[0].mxu0
      %v2955 = vadd.f32 0.0, %v2954
      %v2956 = vpop.f32.mrb[0].mxu0
      %2957 = vmatprep.mubr.f32.mxu0 0.0
      %2958 = vmatmul.mubr.f32.gmra.mrb[0].mxu0 %v2730
      %v2959 = vpop.f32.mrb[0].mxu0
      %v2960 = vadd.f32 0.0, %v2959
      %v2961 = vpop.f32.mrb[0].mxu0
      %2962 = vmatprep.mubr.f32.mxu0 0.0
      %2963 = vmatmul.mubr.f32.gmra.mrb[0].mxu0 %v2735
      %v2964 = vpop.f32.mrb[0].mxu0
      %v2965 = vadd.f32 0.0, %v2964
      %v2966 = vpop.f32.mrb[0].mxu0
      %2967 = vmatprep.mubr.f32.mxu0 0.0
      %2968 = vmatmul.mubr.f32.gmra.mrb[0].mxu0 %v2740
      %v2969 = vpop.f32.mrb[0].mxu0
      %v2970 = vadd.f32 0.0, %v2969
      %v2971 = vpop.f32.mrb[0].mxu0
      %2972 = vmatprep.mubr.f32.mxu0 0.0
      %2973 = vmatmul.mubr.f32.gmra.mrb[0].mxu0 %v2745
      %v2974 = vpop.f32.mrb[0].mxu0
      %v2975 = vadd.f32 0.0, %v2974
      %v2976 = vpop.f32.mrb[0].mxu0
      %2977 = vmatprep.mubr.f32.mxu0 0.0
      %2978 = vmatmul.mubr.f32.gmra.mrb[0].mxu0 %v2750
      %v2979 = vpop.f32.mrb[0].mxu0
      %v2980 = vadd.f32 0.0, %v2979
      %v2981 = vpop.f32.mrb[0].mxu0
      %2982 = vmatprep.mubr.f32.mxu0 0.0
      %2983 = vmatmul.mubr.f32.gmra.mrb[0].mxu0 %v2755
      %v2984 = vpop.f32.mrb[0].mxu0
      %v2985 = vadd.f32 0.0, %v2984
      %v2986 = vpop.f32.mrb[0].mxu0
      %2987 = vmatprep.mubr.f32.mxu0 0.0
      %2988 = vmatmul.mubr.f32.gmra.mrb[0].mxu0 %v2760
      %v2989 = vpop.f32.mrb[0].mxu0
      %v2990 = vadd.f32 0.0, %v2989
      %v2991 = vpop.f32.mrb[0].mxu0
      %2992 = vmatprep.mubr.f32.mxu0 0.0
      %2993 = vmatmul.mubr.f32.gmra.mrb[0].mxu0 %v2765
      %v2994 = vpop.f32.mrb[0].mxu0
      %v2995 = vadd.f32 0.0, %v2994
      %v2996 = vpop.f32.mrb[0].mxu0
      %2997 = vmatprep.mubr.f32.mxu0 0.0
      %2998 = vmatmul.mubr.f32.gmra.mrb[0].mxu0 %v2770
      %v2999 = vpop.f32.mrb[0].mxu0
      %v3000 = vadd.f32 0.0, %v2999
      %v3001 = vpop.f32.mrb[0].mxu0
      %3002 = vmatprep.mubr.f32.mxu0 0.0
      %3003 = vmatmul.mubr.f32.gmra.mrb[0].mxu0 %v2775
      %v3004 = vpop.f32.mrb[0].mxu0
      %v3005 = vadd.f32 0.0, %v3004
      %v3006 = vpop.f32.mrb[0].mxu0
      %3007 = vmatprep.mubr.f32.mxu0 0.0
      %3008 = vmatmul.mubr.f32.gmra.mrb[0].mxu0 %v2780
      %v3009 = vpop.f32.mrb[0].mxu0
      %v3010 = vadd.f32 0.0, %v3009
      %v3011 = vpop.f32.mrb[0].mxu0
      %3012 = vmatprep.mubr.f32.mxu0 0.0
      %3013 = vmatmul.mubr.f32.gmra.mrb[0].mxu0 %v2785
      %v3014 = vpop.f32.mrb[0].mxu0
      %v3015 = vadd.f32 0.0, %v3014
      %v3016 = vpop.f32.mrb[0].mxu0
      %3017 = vmatprep.mubr.f32.mxu0 0.0
      %3018 = vmatmul.mubr.f32.gmra.mrb[0].mxu0 %v2790
      %v3019 = vpop.f32.mrb[0].mxu0
      %v3020 = vadd.f32 0.0, %v3019
      %v3021 = vpop.f32.mrb[0].mxu0
      %3022 = vmatprep.mubr.f32.mxu0 0.0
      %3023 = vmatmul.mubr.f32.gmra.mrb[0].mxu0 %v2795
      %v3024 = vpop.f32.mrb[0].mxu0
      %v3025 = vadd.f32 0.0, %v3024
      %v3026 = vpop.f32.mrb[0].mxu0
      %3027 = vmatprep.mubr.f32.mxu0 0.0
      %3028 = vmatmul.mubr.f32.gmra.mrb[0].mxu0 %v2800
      %v3029 = vpop.f32.mrb[0].mxu0
      %v3030 = vadd.f32 0.0, %v3029
      %v3031 = vpop.f32.mrb[0].mxu0
      %3032 = vmatprep.mubr.f32.mxu0 0.0
      %3033 = vmatmul.mubr.f32.gmra.mrb[0].mxu0 %v2805
      %v3034 = vpop.f32.mrb[0].mxu0
      %v3035 = vadd.f32 0.0, %v3034
      %v3036 = vpop.f32.mrb[0].mxu0
      %3037 = vmatprep.mubr.f32.mxu0 0.0
      %3038 = vmatmul.mubr.f32.gmra.mrb[0].mxu0 %v2810
      %v3039 = vpop.f32.mrb[0].mxu0
      %v3040 = vadd.f32 0.0, %v3039
      %v3041 = vpop.f32.mrb[0].mxu0
      %3042 = vmatprep.mubr.f32.mxu0 0.0
      %3043 = vmatmul.mubr.f32.gmra.mrb[0].mxu0 %v2815
      %v3044 = vpop.f32.mrb[0].mxu0
      %v3045 = vadd.f32 0.0, %v3044
      %v3046 = vpop.f32.mrb[0].mxu0
      %3047 = vmatprep.mubr.f32.mxu0 0.0
      %3048 = vmatmul.mubr.f32.gmra.mrb[0].mxu0 %v2820
      %v3049 = vpop.f32.mrb[0].mxu0
      %v3050 = vadd.f32 0.0, %v3049
      %v3051 = vpop.f32.mrb[0].mxu0
      %3052 = vmatprep.mubr.f32.mxu0 0.0
      %3053 = vmatmul.mubr.f32.gmra.mrb[0].mxu0 %v2825
      %v3054 = vpop.f32.mrb[0].mxu0
      %v3055 = vadd.f32 0.0, %v3054
      %v3056 = vpop.f32.mrb[0].mxu0
      %3057 = vmatprep.mubr.f32.mxu0 0.0
      %3058 = vmatmul.mubr.f32.gmra.mrb[0].mxu0 %v2830
      %v3059 = vpop.f32.mrb[0].mxu0
      %v3060 = vadd.f32 0.0, %v3059
      %v3061 = vpop.f32.mrb[0].mxu0
      %3062 = vmatprep.mubr.f32.mxu0 0.0
      %3063 = vmatmul.mubr.f32.gmra.mrb[0].mxu0 %v2835
      %v3064 = vpop.f32.mrb[0].mxu0
      %v3065 = vadd.f32 0.0, %v3064
      %v3066 = vpop.f32.mrb[0].mxu0
      %3067 = vmatprep.mubr.f32.mxu0 0.0
      %3068 = vmatmul.mubr.f32.gmra.mrb[0].mxu0 %v2840
      %v3069 = vpop.f32.mrb[0].mxu0
      %v3070 = vadd.f32 0.0, %v3069
      %v3071 = vpop.f32.mrb[0].mxu0
      %3072 = vmatprep.mubr.f32.mxu0 0.0
      %3073 = vmatmul.mubr.f32.gmra.mrb[0].mxu0 %v2845
      %v3074 = vpop.f32.mrb[0].mxu0
      %v3075 = vadd.f32 0.0, %v3074
      %v3076 = vpop.f32.mrb[0].mxu0
      %3077 = vmatprep.mubr.f32.mxu0 0.0
      %3078 = vmatmul.mubr.f32.gmra.mrb[0].mxu0 %v2850
      %v3079 = vpop.f32.mrb[0].mxu0
      %v3080 = vadd.f32 0.0, %v3079
      %v3081 = vpop.f32.mrb[0].mxu0
      %3082 = vmatprep.mubr.f32.mxu0 0.0
      %3083 = vmatmul.mubr.f32.gmra.mrb[0].mxu0 %v2855
      %v3084 = vpop.f32.mrb[0].mxu0
      %v3085 = vadd.f32 0.0, %v3084
      %v3086 = vpop.f32.mrb[0].mxu0
      %3087 = vmatprep.mubr.f32.mxu0 0.0
      %3088 = vmatmul.mubr.f32.gmra.mrb[0].mxu0 %v2860
      %v3089 = vpop.f32.mrb[0].mxu0
      %v3090 = vadd.f32 0.0, %v3089
      %v3091 = vpop.f32.mrb[0].mxu0
      %3092 = vmatprep.mubr.f32.mxu0 0.0
      %3093 = vmatmul.mubr.f32.gmra.mrb[0].mxu0 %v2865
      %v3094 = vpop.f32.mrb[0].mxu0
      %v3095 = vadd.f32 0.0, %v3094
      %v3096 = vpop.f32.mrb[0].mxu0
      %3097 = vmatprep.mubr.f32.mxu0 0.0
      %3098 = vmatmul.mubr.f32.gmra.mrb[0].mxu0 %v2870
      %v3099 = vpop.f32.mrb[0].mxu0
      %v3100 = vadd.f32 0.0, %v3099
      %v3101 = vpop.f32.mrb[0].mxu0
      %3102 = vdwg.mxu0
      %v3103 = vmul.f32 %v214, %v250
      %v3104 = vmul.f32 %v215, %v251
      %v3105 = vmul.f32 %v216, %v252
      %v3106 = vmul.f32 %v217, %v253
      %v3107 = vmul.f32 %v218, %v254
      %v3108 = vmul.f32 %v219, %v255
      %v3109 = vmul.f32 %v220, %v256
      %v3110 = vmul.f32 %v221, %v257
      %v3111 = vmul.f32 %v222, %v258
      %v3112 = vmul.f32 %v223, %v259
      %v3113 = vmul.f32 %v224, %v260
      %v3114 = vmul.f32 %v225, %v261
      %v3115 = vmul.f32 %v226, %v262
      %v3116 = vmul.f32 %v227, %v263
      %v3117 = vmul.f32 %v228, %v264
      %v3118 = vmul.f32 %v229, %v265
      %v3119 = vmul.f32 %v230, %v266
      %v3120 = vmul.f32 %v231, %v267
      %v3121 = vmul.f32 %v232, %v268
      %v3122 = vmul.f32 %v233, %v269
      %v3123 = vmul.f32 %v234, %v270
      %v3124 = vmul.f32 %v235, %v271
      %v3125 = vmul.f32 %v236, %v272
      %v3126 = vmul.f32 %v237, %v273
      %v3127 = vmul.f32 %v238, %v274
      %v3128 = vmul.f32 %v239, %v275
      %v3129 = vmul.f32 %v240, %v276
      %v3130 = vmul.f32 %v241, %v277
      %v3131 = vmul.f32 %v242, %v278
      %v3132 = vmul.f32 %v243, %v279
      %v3133 = vmul.f32 %v244, %v280
      %v3134 = vmul.f32 %v245, %v281
      %v3135 = vmul.f32 %v246, %v282
      %v3136 = vmul.f32 %v247, %v283
      %v3137 = vmul.f32 %v248, %v284
      %v3138 = vmul.f32 %v249, %v285
      %3139 = vmatprep.subr.mxu0 0.0
      %3140 = vmatpush1.msra.mxu0 %v3103
      %3141 = vmatprep.subr.mxu0 0.0
      %3142 = vmatpush1.msra.mxu0 %v3104
      %3143 = vmatprep.subr.mxu0 0.0
      %3144 = vmatpush1.msra.mxu0 %v3105
      %3145 = vmatprep.subr.mxu0 0.0
      %3146 = vmatpush1.msra.mxu0 %v3106
      %3147 = vmatprep.subr.mxu0 0.0
      %3148 = vmatpush1.msra.mxu0 %v3107
      %3149 = vmatprep.subr.mxu0 0.0
      %3150 = vmatpush1.msra.mxu0 %v3108
      %3151 = vmatprep.subr.mxu0 0.0
      %3152 = vmatpush1.msra.mxu0 %v3109
      %3153 = vmatprep.subr.mxu0 0.0
      %3154 = vmatpush1.msra.mxu0 %v3110
      %3155 = vmatprep.subr.mxu0 0.0
      %3156 = vmatpush1.msra.mxu0 %v3111
      %3157 = vmatprep.subr.mxu0 0.0
      %3158 = vmatpush1.msra.mxu0 %v3112
      %3159 = vmatprep.subr.mxu0 0.0
      %3160 = vmatpush1.msra.mxu0 %v3113
      %3161 = vmatprep.subr.mxu0 0.0
      %3162 = vmatpush1.msra.mxu0 %v3114
      %3163 = vmatprep.subr.mxu0 0.0
      %3164 = vmatpush1.msra.mxu0 %v3115
      %3165 = vmatprep.subr.mxu0 0.0
      %3166 = vmatpush1.msra.mxu0 %v3116
      %3167 = vmatprep.subr.mxu0 0.0
      %3168 = vmatpush1.msra.mxu0 %v3117
      %3169 = vmatprep.subr.mxu0 0.0
      %3170 = vmatpush1.msra.mxu0 %v3118
      %3171 = vmatprep.subr.mxu0 0.0
      %3172 = vmatpush1.msra.mxu0 %v3119
      %3173 = vmatprep.subr.mxu0 0.0
      %3174 = vmatpush1.msra.mxu0 %v3120
      %3175 = vmatprep.subr.mxu0 0.0
      %3176 = vmatpush1.msra.mxu0 %v3121
      %3177 = vmatprep.subr.mxu0 0.0
      %3178 = vmatpush1.msra.mxu0 %v3122
      %3179 = vmatprep.subr.mxu0 0.0
      %3180 = vmatpush1.msra.mxu0 %v3123
      %3181 = vmatprep.subr.mxu0 0.0
      %3182 = vmatpush1.msra.mxu0 %v3124
      %3183 = vmatprep.subr.mxu0 0.0
      %3184 = vmatpush1.msra.mxu0 %v3125
      %3185 = vmatprep.subr.mxu0 0.0
      %3186 = vmatpush1.msra.mxu0 %v3126
      %3187 = vmatprep.subr.mxu0 0.0
      %3188 = vmatpush1.msra.mxu0 %v3127
      %3189 = vmatprep.subr.mxu0 0.0
      %3190 = vmatpush1.msra.mxu0 %v3128
      %3191 = vmatprep.subr.mxu0 0.0
      %3192 = vmatpush1.msra.mxu0 %v3129
      %3193 = vmatprep.subr.mxu0 0.0
      %3194 = vmatpush1.msra.mxu0 %v3130
      %3195 = vmatprep.subr.mxu0 0.0
      %3196 = vmatpush1.msra.mxu0 %v3131
      %3197 = vmatprep.subr.mxu0 0.0
      %3198 = vmatpush1.msra.mxu0 %v3132
      %3199 = vmatprep.subr.mxu0 0.0
      %3200 = vmatpush1.msra.mxu0 %v3133
      %3201 = vmatprep.subr.mxu0 0.0
      %3202 = vmatpush1.msra.mxu0 %v3134
      %3203 = vmatprep.mubr.f32.mxu0 %v287
      %3204 = vmatmul.mubr.f32.gmra.mrb[0].mxu0 %v286
      %v3205 = vpop.f32.mrb[0].mxu0
      %v3206 = vadd.f32 0.0, %v3205
      %v3207 = vpop.f32.mrb[0].mxu0
      %3208 = vmatprep.mubr.f32.mxu0 %v290
      %3209 = vmatmul.mubr.f32.gmra.mrb[0].mxu0 %v289
      %v3210 = vpop.f32.mrb[0].mxu0
      %v3211 = vadd.f32 0.0, %v3210
      %v3212 = vpop.f32.mrb[0].mxu0
      %3213 = vmatprep.mubr.f32.mxu0 %v293
      %3214 = vmatmul.mubr.f32.gmra.mrb[0].mxu0 %v292
      %v3215 = vpop.f32.mrb[0].mxu0
      %v3216 = vadd.f32 0.0, %v3215
      %v3217 = vpop.f32.mrb[0].mxu0
      %3218 = vmatprep.mubr.f32.mxu0 %v296
      %3219 = vmatmul.mubr.f32.gmra.mrb[0].mxu0 %v295
      %v3220 = vpop.f32.mrb[0].mxu0
      %v3221 = vadd.f32 0.0, %v3220
      %v3222 = vpop.f32.mrb[0].mxu0
      %3223 = vmatprep.mubr.f32.mxu0 %v299
      %3224 = vmatmul.mubr.f32.gmra.mrb[0].mxu0 %v298
      %v3225 = vpop.f32.mrb[0].mxu0
      %v3226 = vadd.f32 0.0, %v3225
      %v3227 = vpop.f32.mrb[0].mxu0
      %3228 = vmatprep.mubr.f32.mxu0 %v302
      %3229 = vmatmul.mubr.f32.gmra.mrb[0].mxu0 %v301
      %v3230 = vpop.f32.mrb[0].mxu0
      %v3231 = vadd.f32 0.0, %v3230
      %v3232 = vpop.f32.mrb[0].mxu0
      %3233 = vmatprep.mubr.f32.mxu0 %v305
      %3234 = vmatmul.mubr.f32.gmra.mrb[0].mxu0 %v304
      %v3235 = vpop.f32.mrb[0].mxu0
      %v3236 = vadd.f32 0.0, %v3235
      %v3237 = vpop.f32.mrb[0].mxu0
      %3238 = vmatprep.mubr.f32.mxu0 %v308
      %3239 = vmatmul.mubr.f32.gmra.mrb[0].mxu0 %v307
      %v3240 = vpop.f32.mrb[0].mxu0
      %v3241 = vadd.f32 0.0, %v3240
      %v3242 = vpop.f32.mrb[0].mxu0
      %3243 = vmatprep.mubr.f32.mxu0 %v311
      %3244 = vmatmul.mubr.f32.gmra.mrb[0].mxu0 %v310
      %v3245 = vpop.f32.mrb[0].mxu0
      %v3246 = vadd.f32 0.0, %v3245
      %v3247 = vpop.f32.mrb[0].mxu0
      %3248 = vmatprep.mubr.f32.mxu0 %v314
      %3249 = vmatmul.mubr.f32.gmra.mrb[0].mxu0 %v313
      %v3250 = vpop.f32.mrb[0].mxu0
      %v3251 = vadd.f32 0.0, %v3250
      %v3252 = vpop.f32.mrb[0].mxu0
      %3253 = vmatprep.mubr.f32.mxu0 %v317
      %3254 = vmatmul.mubr.f32.gmra.mrb[0].mxu0 %v316
      %v3255 = vpop.f32.mrb[0].mxu0
      %v3256 = vadd.f32 0.0, %v3255
      %v3257 = vpop.f32.mrb[0].mxu0
      %3258 = vmatprep.mubr.f32.mxu0 %v320
      %3259 = vmatmul.mubr.f32.gmra.mrb[0].mxu0 %v319
      %v3260 = vpop.f32.mrb[0].mxu0
      %v3261 = vadd.f32 0.0, %v3260
      %v3262 = vpop.f32.mrb[0].mxu0
      %3263 = vmatprep.mubr.f32.mxu0 %v323
      %3264 = vmatmul.mubr.f32.gmra.mrb[0].mxu0 %v322
      %v3265 = vpop.f32.mrb[0].mxu0
      %v3266 = vadd.f32 0.0, %v3265
      %v3267 = vpop.f32.mrb[0].mxu0
      %3268 = vmatprep.mubr.f32.mxu0 %v326
      %3269 = vmatmul.mubr.f32.gmra.mrb[0].mxu0 %v325
      %v3270 = vpop.f32.mrb[0].mxu0
      %v3271 = vadd.f32 0.0, %v3270
      %v3272 = vpop.f32.mrb[0].mxu0
      %3273 = vmatprep.mubr.f32.mxu0 %v329
      %3274 = vmatmul.mubr.f32.gmra.mrb[0].mxu0 %v328
      %v3275 = vpop.f32.mrb[0].mxu0
      %v3276 = vadd.f32 0.0, %v3275
      %v3277 = vpop.f32.mrb[0].mxu0
      %3278 = vmatprep.mubr.f32.mxu0 %v332
      %3279 = vmatmul.mubr.f32.gmra.mrb[0].mxu0 %v331
      %v3280 = vpop.f32.mrb[0].mxu0
      %v3281 = vadd.f32 0.0, %v3280
      %v3282 = vpop.f32.mrb[0].mxu0
      %3283 = vmatprep.mubr.f32.mxu0 %v335
      %3284 = vmatmul.mubr.f32.gmra.mrb[0].mxu0 %v334
      %v3285 = vpop.f32.mrb[0].mxu0
      %v3286 = vadd.f32 0.0, %v3285
      %v3287 = vpop.f32.mrb[0].mxu0
      %3288 = vmatprep.mubr.f32.mxu0 %v338
      %3289 = vmatmul.mubr.f32.gmra.mrb[0].mxu0 %v337
      %v3290 = vpop.f32.mrb[0].mxu0
      %v3291 = vadd.f32 0.0, %v3290
      %v3292 = vpop.f32.mrb[0].mxu0
      %3293 = vmatprep.mubr.f32.mxu0 %v341
      %3294 = vmatmul.mubr.f32.gmra.mrb[0].mxu0 %v340
      %v3295 = vpop.f32.mrb[0].mxu0
      %v3296 = vadd.f32 0.0, %v3295
      %v3297 = vpop.f32.mrb[0].mxu0
      %3298 = vmatprep.mubr.f32.mxu0 %v344
      %3299 = vmatmul.mubr.f32.gmra.mrb[0].mxu0 %v343
      %v3300 = vpop.f32.mrb[0].mxu0
      %v3301 = vadd.f32 0.0, %v3300
      %v3302 = vpop.f32.mrb[0].mxu0
      %3303 = vmatprep.mubr.f32.mxu0 %v347
      %3304 = vmatmul.mubr.f32.gmra.mrb[0].mxu0 %v346
      %v3305 = vpop.f32.mrb[0].mxu0
      %v3306 = vadd.f32 0.0, %v3305
      %v3307 = vpop.f32.mrb[0].mxu0
      %3308 = vmatprep.mubr.f32.mxu0 %v350
      %3309 = vmatmul.mubr.f32.gmra.mrb[0].mxu0 %v349
      %v3310 = vpop.f32.mrb[0].mxu0
      %v3311 = vadd.f32 0.0, %v3310
      %v3312 = vpop.f32.mrb[0].mxu0
      %3313 = vmatprep.mubr.f32.mxu0 %v353
      %3314 = vmatmul.mubr.f32.gmra.mrb[0].mxu0 %v352
      %v3315 = vpop.f32.mrb[0].mxu0
      %v3316 = vadd.f32 0.0, %v3315
      %v3317 = vpop.f32.mrb[0].mxu0
      %3318 = vmatprep.mubr.f32.mxu0 %v356
      %3319 = vmatmul.mubr.f32.gmra.mrb[0].mxu0 %v355
      %v3320 = vpop.f32.mrb[0].mxu0
      %v3321 = vadd.f32 0.0, %v3320
      %v3322 = vpop.f32.mrb[0].mxu0
      %3323 = vmatprep.mubr.f32.mxu0 %v359
      %3324 = vmatmul.mubr.f32.gmra.mrb[0].mxu0 %v358
      %v3325 = vpop.f32.mrb[0].mxu0
      %v3326 = vadd.f32 0.0, %v3325
      %v3327 = vpop.f32.mrb[0].mxu0
      %3328 = vmatprep.mubr.f32.mxu0 %v362
      %3329 = vmatmul.mubr.f32.gmra.mrb[0].mxu0 %v361
      %v3330 = vpop.f32.mrb[0].mxu0
      %v3331 = vadd.f32 0.0, %v3330
      %v3332 = vpop.f32.mrb[0].mxu0
      %3333 = vmatprep.mubr.f32.mxu0 %v365
      %3334 = vmatmul.mubr.f32.gmra.mrb[0].mxu0 %v364
      %v3335 = vpop.f32.mrb[0].mxu0
      %v3336 = vadd.f32 0.0, %v3335
      %v3337 = vpop.f32.mrb[0].mxu0
      %3338 = vmatprep.mubr.f32.mxu0 %v368
      %3339 = vmatmul.mubr.f32.gmra.mrb[0].mxu0 %v367
      %v3340 = vpop.f32.mrb[0].mxu0
      %v3341 = vadd.f32 0.0, %v3340
      %v3342 = vpop.f32.mrb[0].mxu0
      %3343 = vmatprep.mubr.f32.mxu0 %v371
      %3344 = vmatmul.mubr.f32.gmra.mrb[0].mxu0 %v370
      %v3345 = vpop.f32.mrb[0].mxu0
      %v3346 = vadd.f32 0.0, %v3345
      %v3347 = vpop.f32.mrb[0].mxu0
      %3348 = vmatprep.mubr.f32.mxu0 %v374
      %3349 = vmatmul.mubr.f32.gmra.mrb[0].mxu0 %v373
      %v3350 = vpop.f32.mrb[0].mxu0
      %v3351 = vadd.f32 0.0, %v3350
      %v3352 = vpop.f32.mrb[0].mxu0
      %3353 = vmatprep.mubr.f32.mxu0 %v377
      %3354 = vmatmul.mubr.f32.gmra.mrb[0].mxu0 %v376
      %v3355 = vpop.f32.mrb[0].mxu0
      %v3356 = vadd.f32 0.0, %v3355
      %v3357 = vpop.f32.mrb[0].mxu0
      %3358 = vmatprep.mubr.f32.mxu0 %v380
      %3359 = vmatmul.mubr.f32.gmra.mrb[0].mxu0 %v379
      %v3360 = vpop.f32.mrb[0].mxu0
      %v3361 = vadd.f32 0.0, %v3360
      %v3362 = vpop.f32.mrb[0].mxu0
      %3363 = vmatprep.mubr.f32.mxu0 %v383
      %3364 = vmatmul.mubr.f32.gmra.mrb[0].mxu0 %v382
      %v3365 = vpop.f32.mrb[0].mxu0
      %v3366 = vadd.f32 0.0, %v3365
      %v3367 = vpop.f32.mrb[0].mxu0
      %3368 = vdwg.mxu0
      %3369 = vmatprep.subr.mxu0 0.0
      %3370 = vmatpush1.msra.mxu0 %v3135
      %3371 = vmatprep.subr.mxu0 0.0
      %3372 = vmatpush1.msra.mxu0 %v3136
      %3373 = vmatprep.subr.mxu0 0.0
      %3374 = vmatpush1.msra.mxu0 %v3137
      %3375 = vmatprep.subr.mxu0 0.0
      %3376 = vmatpush1.msra.mxu0 %v3138
      %3377 = vmatprep.subr.mxu0 0.0
      %3378 = vmatpush1.msra.mxu0 0.0
      %3379 = vmatprep.subr.mxu0 0.0
      %3380 = vmatpush1.msra.mxu0 0.0
      %3381 = vmatprep.subr.mxu0 0.0
      %3382 = vmatpush1.msra.mxu0 0.0
      %3383 = vmatprep.subr.mxu0 0.0
      %3384 = vmatpush1.msra.mxu0 0.0
      %3385 = vmatprep.subr.mxu0 0.0
      %3386 = vmatpush1.msra.mxu0 0.0
      %3387 = vmatprep.subr.mxu0 0.0
      %3388 = vmatpush1.msra.mxu0 0.0
      %3389 = vmatprep.subr.mxu0 0.0
      %3390 = vmatpush1.msra.mxu0 0.0
      %3391 = vmatprep.subr.mxu0 0.0
      %3392 = vmatpush1.msra.mxu0 0.0
      %3393 = vmatprep.subr.mxu0 0.0
      %3394 = vmatpush1.msra.mxu0 0.0
      %3395 = vmatprep.subr.mxu0 0.0
      %3396 = vmatpush1.msra.mxu0 0.0
      %3397 = vmatprep.subr.mxu0 0.0
      %3398 = vmatpush1.msra.mxu0 0.0
      %3399 = vmatprep.subr.mxu0 0.0
      %3400 = vmatpush1.msra.mxu0 0.0
      %3401 = vmatprep.subr.mxu0 0.0
      %3402 = vmatpush1.msra.mxu0 0.0
      %3403 = vmatprep.subr.mxu0 0.0
      %3404 = vmatpush1.msra.mxu0 0.0
      %3405 = vmatprep.subr.mxu0 0.0
      %3406 = vmatpush1.msra.mxu0 0.0
      %3407 = vmatprep.subr.mxu0 0.0
      %3408 = vmatpush1.msra.mxu0 0.0
      %3409 = vmatprep.subr.mxu0 0.0
      %3410 = vmatpush1.msra.mxu0 0.0
      %3411 = vmatprep.subr.mxu0 0.0
      %3412 = vmatpush1.msra.mxu0 0.0
      %3413 = vmatprep.subr.mxu0 0.0
      %3414 = vmatpush1.msra.mxu0 0.0
      %3415 = vmatprep.subr.mxu0 0.0
      %3416 = vmatpush1.msra.mxu0 0.0
      %3417 = vmatprep.subr.mxu0 0.0
      %3418 = vmatpush1.msra.mxu0 0.0
      %3419 = vmatprep.subr.mxu0 0.0
      %3420 = vmatpush1.msra.mxu0 0.0
      %3421 = vmatprep.subr.mxu0 0.0
      %3422 = vmatpush1.msra.mxu0 0.0
      %3423 = vmatprep.subr.mxu0 0.0
      %3424 = vmatpush1.msra.mxu0 0.0
      %3425 = vmatprep.subr.mxu0 0.0
      %3426 = vmatpush1.msra.mxu0 0.0
      %3427 = vmatprep.subr.mxu0 0.0
      %3428 = vmatpush1.msra.mxu0 0.0
      %3429 = vmatprep.subr.mxu0 0.0
      %3430 = vmatpush1.msra.mxu0 0.0
      %3431 = vmatprep.subr.mxu0 0.0
      %3432 = vmatpush1.msra.mxu0 0.0
      %3433 = vmatprep.mubr.f32.mxu0 0.0
      %3434 = vmatmul.mubr.f32.gmra.mrb[0].mxu0 %v403
      %v3435 = vpop.f32.mrb[0].mxu0
      %v3436 = vadd.f32 %v3206, %v3435
      %v3437 = vpop.f32.mrb[0].mxu0
      %3438 = vmatprep.mubr.f32.mxu0 0.0
      %3439 = vmatmul.mubr.f32.gmra.mrb[0].mxu0 %v406
      %v3440 = vpop.f32.mrb[0].mxu0
      %v3441 = vadd.f32 %v3211, %v3440
      %v3442 = vpop.f32.mrb[0].mxu0
      %3443 = vmatprep.mubr.f32.mxu0 0.0
      %3444 = vmatmul.mubr.f32.gmra.mrb[0].mxu0 %v409
      %v3445 = vpop.f32.mrb[0].mxu0
      %v3446 = vadd.f32 %v3216, %v3445
      %v3447 = vpop.f32.mrb[0].mxu0
      %3448 = vmatprep.mubr.f32.mxu0 0.0
      %3449 = vmatmul.mubr.f32.gmra.mrb[0].mxu0 %v412
      %v3450 = vpop.f32.mrb[0].mxu0
      %v3451 = vadd.f32 %v3221, %v3450
      %v3452 = vpop.f32.mrb[0].mxu0
      %3453 = vmatprep.mubr.f32.mxu0 0.0
      %3454 = vmatmul.mubr.f32.gmra.mrb[0].mxu0 %v415
      %v3455 = vpop.f32.mrb[0].mxu0
      %v3456 = vadd.f32 %v3226, %v3455
      %v3457 = vpop.f32.mrb[0].mxu0
      %3458 = vmatprep.mubr.f32.mxu0 0.0
      %3459 = vmatmul.mubr.f32.gmra.mrb[0].mxu0 %v418
      %v3460 = vpop.f32.mrb[0].mxu0
      %v3461 = vadd.f32 %v3231, %v3460
      %v3462 = vpop.f32.mrb[0].mxu0
      %3463 = vmatprep.mubr.f32.mxu0 0.0
      %3464 = vmatmul.mubr.f32.gmra.mrb[0].mxu0 %v421
      %v3465 = vpop.f32.mrb[0].mxu0
      %v3466 = vadd.f32 %v3236, %v3465
      %v3467 = vpop.f32.mrb[0].mxu0
      %3468 = vmatprep.mubr.f32.mxu0 0.0
      %3469 = vmatmul.mubr.f32.gmra.mrb[0].mxu0 %v424
      %v3470 = vpop.f32.mrb[0].mxu0
      %v3471 = vadd.f32 %v3241, %v3470
      %v3472 = vpop.f32.mrb[0].mxu0
      %3473 = vmatprep.mubr.f32.mxu0 0.0
      %3474 = vmatmul.mubr.f32.gmra.mrb[0].mxu0 %v427
      %v3475 = vpop.f32.mrb[0].mxu0
      %v3476 = vadd.f32 %v3246, %v3475
      %v3477 = vpop.f32.mrb[0].mxu0
      %3478 = vmatprep.mubr.f32.mxu0 0.0
      %3479 = vmatmul.mubr.f32.gmra.mrb[0].mxu0 %v430
      %v3480 = vpop.f32.mrb[0].mxu0
      %v3481 = vadd.f32 %v3251, %v3480
      %v3482 = vpop.f32.mrb[0].mxu0
      %3483 = vmatprep.mubr.f32.mxu0 0.0
      %3484 = vmatmul.mubr.f32.gmra.mrb[0].mxu0 %v433
      %v3485 = vpop.f32.mrb[0].mxu0
      %v3486 = vadd.f32 %v3256, %v3485
      %v3487 = vpop.f32.mrb[0].mxu0
      %3488 = vmatprep.mubr.f32.mxu0 0.0
      %3489 = vmatmul.mubr.f32.gmra.mrb[0].mxu0 %v436
      %v3490 = vpop.f32.mrb[0].mxu0
      %v3491 = vadd.f32 %v3261, %v3490
      %v3492 = vpop.f32.mrb[0].mxu0
      %3493 = vmatprep.mubr.f32.mxu0 0.0
      %3494 = vmatmul.mubr.f32.gmra.mrb[0].mxu0 %v439
      %v3495 = vpop.f32.mrb[0].mxu0
      %v3496 = vadd.f32 %v3266, %v3495
      %v3497 = vpop.f32.mrb[0].mxu0
      %3498 = vmatprep.mubr.f32.mxu0 0.0
      %3499 = vmatmul.mubr.f32.gmra.mrb[0].mxu0 %v442
      %v3500 = vpop.f32.mrb[0].mxu0
      %v3501 = vadd.f32 %v3271, %v3500
      %v3502 = vpop.f32.mrb[0].mxu0
      %3503 = vmatprep.mubr.f32.mxu0 0.0
      %3504 = vmatmul.mubr.f32.gmra.mrb[0].mxu0 %v445
      %v3505 = vpop.f32.mrb[0].mxu0
      %v3506 = vadd.f32 %v3276, %v3505
      %v3507 = vpop.f32.mrb[0].mxu0
      %3508 = vmatprep.mubr.f32.mxu0 0.0
      %3509 = vmatmul.mubr.f32.gmra.mrb[0].mxu0 %v448
      %v3510 = vpop.f32.mrb[0].mxu0
      %v3511 = vadd.f32 %v3281, %v3510
      %v3512 = vpop.f32.mrb[0].mxu0
      %3513 = vmatprep.mubr.f32.mxu0 0.0
      %3514 = vmatmul.mubr.f32.gmra.mrb[0].mxu0 %v451
      %v3515 = vpop.f32.mrb[0].mxu0
      %v3516 = vadd.f32 %v3286, %v3515
      %v3517 = vpop.f32.mrb[0].mxu0
      %3518 = vmatprep.mubr.f32.mxu0 0.0
      %3519 = vmatmul.mubr.f32.gmra.mrb[0].mxu0 %v454
      %v3520 = vpop.f32.mrb[0].mxu0
      %v3521 = vadd.f32 %v3291, %v3520
      %v3522 = vpop.f32.mrb[0].mxu0
      %3523 = vmatprep.mubr.f32.mxu0 0.0
      %3524 = vmatmul.mubr.f32.gmra.mrb[0].mxu0 %v457
      %v3525 = vpop.f32.mrb[0].mxu0
      %v3526 = vadd.f32 %v3296, %v3525
      %v3527 = vpop.f32.mrb[0].mxu0
      %3528 = vmatprep.mubr.f32.mxu0 0.0
      %3529 = vmatmul.mubr.f32.gmra.mrb[0].mxu0 %v460
      %v3530 = vpop.f32.mrb[0].mxu0
      %v3531 = vadd.f32 %v3301, %v3530
      %v3532 = vpop.f32.mrb[0].mxu0
      %3533 = vmatprep.mubr.f32.mxu0 0.0
      %3534 = vmatmul.mubr.f32.gmra.mrb[0].mxu0 %v463
      %v3535 = vpop.f32.mrb[0].mxu0
      %v3536 = vadd.f32 %v3306, %v3535
      %v3537 = vpop.f32.mrb[0].mxu0
      %3538 = vmatprep.mubr.f32.mxu0 0.0
      %3539 = vmatmul.mubr.f32.gmra.mrb[0].mxu0 %v466
      %v3540 = vpop.f32.mrb[0].mxu0
      %v3541 = vadd.f32 %v3311, %v3540
      %v3542 = vpop.f32.mrb[0].mxu0
      %3543 = vmatprep.mubr.f32.mxu0 0.0
      %3544 = vmatmul.mubr.f32.gmra.mrb[0].mxu0 %v469
      %v3545 = vpop.f32.mrb[0].mxu0
      %v3546 = vadd.f32 %v3316, %v3545
      %v3547 = vpop.f32.mrb[0].mxu0
      %3548 = vmatprep.mubr.f32.mxu0 0.0
      %3549 = vmatmul.mubr.f32.gmra.mrb[0].mxu0 %v472
      %v3550 = vpop.f32.mrb[0].mxu0
      %v3551 = vadd.f32 %v3321, %v3550
      %v3552 = vpop.f32.mrb[0].mxu0
      %3553 = vmatprep.mubr.f32.mxu0 0.0
      %3554 = vmatmul.mubr.f32.gmra.mrb[0].mxu0 %v475
      %v3555 = vpop.f32.mrb[0].mxu0
      %v3556 = vadd.f32 %v3326, %v3555
      %v3557 = vpop.f32.mrb[0].mxu0
      %3558 = vmatprep.mubr.f32.mxu0 0.0
      %3559 = vmatmul.mubr.f32.gmra.mrb[0].mxu0 %v478
      %v3560 = vpop.f32.mrb[0].mxu0
      %v3561 = vadd.f32 %v3331, %v3560
      %v3562 = vpop.f32.mrb[0].mxu0
      %3563 = vmatprep.mubr.f32.mxu0 0.0
      %3564 = vmatmul.mubr.f32.gmra.mrb[0].mxu0 %v481
      %v3565 = vpop.f32.mrb[0].mxu0
      %v3566 = vadd.f32 %v3336, %v3565
      %v3567 = vpop.f32.mrb[0].mxu0
      %3568 = vmatprep.mubr.f32.mxu0 0.0
      %3569 = vmatmul.mubr.f32.gmra.mrb[0].mxu0 %v484
      %v3570 = vpop.f32.mrb[0].mxu0
      %v3571 = vadd.f32 %v3341, %v3570
      %v3572 = vpop.f32.mrb[0].mxu0
      %3573 = vmatprep.mubr.f32.mxu0 0.0
      %3574 = vmatmul.mubr.f32.gmra.mrb[0].mxu0 %v487
      %v3575 = vpop.f32.mrb[0].mxu0
      %v3576 = vadd.f32 %v3346, %v3575
      %v3577 = vpop.f32.mrb[0].mxu0
      %3578 = vmatprep.mubr.f32.mxu0 0.0
      %3579 = vmatmul.mubr.f32.gmra.mrb[0].mxu0 %v490
      %v3580 = vpop.f32.mrb[0].mxu0
      %v3581 = vadd.f32 %v3351, %v3580
      %v3582 = vpop.f32.mrb[0].mxu0
      %3583 = vmatprep.mubr.f32.mxu0 0.0
      %3584 = vmatmul.mubr.f32.gmra.mrb[0].mxu0 %v493
      %v3585 = vpop.f32.mrb[0].mxu0
      %v3586 = vadd.f32 %v3356, %v3585
      %v3587 = vpop.f32.mrb[0].mxu0
      %3588 = vmatprep.mubr.f32.mxu0 0.0
      %3589 = vmatmul.mubr.f32.gmra.mrb[0].mxu0 %v496
      %v3590 = vpop.f32.mrb[0].mxu0
      %v3591 = vadd.f32 %v3361, %v3590
      %v3592 = vpop.f32.mrb[0].mxu0
      %3593 = vmatprep.mubr.f32.mxu0 0.0
      %3594 = vmatmul.mubr.f32.gmra.mrb[0].mxu0 %v499
      %v3595 = vpop.f32.mrb[0].mxu0
      %v3596 = vadd.f32 %v3366, %v3595
      %v3597 = vpop.f32.mrb[0].mxu0
      %3598 = vdwg.mxu0
      %3599 = vmatprep.subr.mxu0 0.0
      %3600 = vmatpush1.msra.mxu0 %v385
      %3601 = vmatprep.subr.mxu0 0.0
      %3602 = vmatpush1.msra.mxu0 %v386
      %3603 = vmatprep.subr.mxu0 0.0
      %3604 = vmatpush1.msra.mxu0 %v387
      %3605 = vmatprep.subr.mxu0 0.0
      %3606 = vmatpush1.msra.mxu0 %v388
      %3607 = vmatprep.subr.mxu0 0.0
      %3608 = vmatpush1.msra.mxu0 %v389
      %3609 = vmatprep.subr.mxu0 0.0
      %3610 = vmatpush1.msra.mxu0 %v390
      %3611 = vmatprep.subr.mxu0 0.0
      %3612 = vmatpush1.msra.mxu0 %v391
      %3613 = vmatprep.subr.mxu0 0.0
      %3614 = vmatpush1.msra.mxu0 %v392
      %3615 = vmatprep.subr.mxu0 0.0
      %3616 = vmatpush1.msra.mxu0 %v393
      %3617 = vmatprep.subr.mxu0 0.0
      %3618 = vmatpush1.msra.mxu0 %v394
      %3619 = vmatprep.subr.mxu0 0.0
      %3620 = vmatpush1.msra.mxu0 %v395
      %3621 = vmatprep.subr.mxu0 0.0
      %3622 = vmatpush1.msra.mxu0 %v396
      %3623 = vmatprep.subr.mxu0 0.0
      %3624 = vmatpush1.msra.mxu0 %v397
      %3625 = vmatprep.subr.mxu0 0.0
      %3626 = vmatpush1.msra.mxu0 %v398
      %3627 = vmatprep.subr.mxu0 0.0
      %3628 = vmatpush1.msra.mxu0 %v399
      %3629 = vmatprep.subr.mxu0 0.0
      %3630 = vmatpush1.msra.mxu0 %v400
      %3631 = vmatprep.subr.mxu0 0.0
      %3632 = vmatpush1.msra.mxu0 0.0
      %3633 = vmatprep.subr.mxu0 0.0
      %3634 = vmatpush1.msra.mxu0 0.0
      %3635 = vmatprep.subr.mxu0 0.0
      %3636 = vmatpush1.msra.mxu0 0.0
      %3637 = vmatprep.subr.mxu0 0.0
      %3638 = vmatpush1.msra.mxu0 0.0
      %3639 = vmatprep.subr.mxu0 0.0
      %3640 = vmatpush1.msra.mxu0 0.0
      %3641 = vmatprep.subr.mxu0 0.0
      %3642 = vmatpush1.msra.mxu0 0.0
      %3643 = vmatprep.subr.mxu0 0.0
      %3644 = vmatpush1.msra.mxu0 0.0
      %3645 = vmatprep.subr.mxu0 0.0
      %3646 = vmatpush1.msra.mxu0 0.0
      %3647 = vmatprep.subr.mxu0 0.0
      %3648 = vmatpush1.msra.mxu0 0.0
      %3649 = vmatprep.subr.mxu0 0.0
      %3650 = vmatpush1.msra.mxu0 0.0
      %3651 = vmatprep.subr.mxu0 0.0
      %3652 = vmatpush1.msra.mxu0 0.0
      %3653 = vmatprep.subr.mxu0 0.0
      %3654 = vmatpush1.msra.mxu0 0.0
      %3655 = vmatprep.subr.mxu0 0.0
      %3656 = vmatpush1.msra.mxu0 0.0
      %3657 = vmatprep.subr.mxu0 0.0
      %3658 = vmatpush1.msra.mxu0 0.0
      %3659 = vmatprep.subr.mxu0 0.0
      %3660 = vmatpush1.msra.mxu0 0.0
      %3661 = vmatprep.subr.mxu0 0.0
      %3662 = vmatpush1.msra.mxu0 0.0
      %3663 = vmatprep.mubr.f32.mxu0 0.0
      %3664 = vmatmul.mubr.f32.gmra.mrb[0].mxu0 %v3436
      %v3665 = vpop.f32.mrb[0].mxu0
      %v3666 = vadd.f32 0.0, %v3665
      %v3667 = vpop.f32.mrb[0].mxu0
      %3668 = vmatprep.mubr.f32.mxu0 0.0
      %3669 = vmatmul.mubr.f32.gmra.mrb[0].mxu0 %v3441
      %v3670 = vpop.f32.mrb[0].mxu0
      %v3671 = vadd.f32 0.0, %v3670
      %v3672 = vpop.f32.mrb[0].mxu0
      %3673 = vmatprep.mubr.f32.mxu0 0.0
      %3674 = vmatmul.mubr.f32.gmra.mrb[0].mxu0 %v3446
      %v3675 = vpop.f32.mrb[0].mxu0
      %v3676 = vadd.f32 0.0, %v3675
      %v3677 = vpop.f32.mrb[0].mxu0
      %3678 = vmatprep.mubr.f32.mxu0 0.0
      %3679 = vmatmul.mubr.f32.gmra.mrb[0].mxu0 %v3451
      %v3680 = vpop.f32.mrb[0].mxu0
      %v3681 = vadd.f32 0.0, %v3680
      %v3682 = vpop.f32.mrb[0].mxu0
      %3683 = vmatprep.mubr.f32.mxu0 0.0
      %3684 = vmatmul.mubr.f32.gmra.mrb[0].mxu0 %v3456
      %v3685 = vpop.f32.mrb[0].mxu0
      %v3686 = vadd.f32 0.0, %v3685
      %v3687 = vpop.f32.mrb[0].mxu0
      %3688 = vmatprep.mubr.f32.mxu0 0.0
      %3689 = vmatmul.mubr.f32.gmra.mrb[0].mxu0 %v3461
      %v3690 = vpop.f32.mrb[0].mxu0
      %v3691 = vadd.f32 0.0, %v3690
      %v3692 = vpop.f32.mrb[0].mxu0
      %3693 = vmatprep.mubr.f32.mxu0 0.0
      %3694 = vmatmul.mubr.f32.gmra.mrb[0].mxu0 %v3466
      %v3695 = vpop.f32.mrb[0].mxu0
      %v3696 = vadd.f32 0.0, %v3695
      %v3697 = vpop.f32.mrb[0].mxu0
      %3698 = vmatprep.mubr.f32.mxu0 0.0
      %3699 = vmatmul.mubr.f32.gmra.mrb[0].mxu0 %v3471
      %v3700 = vpop.f32.mrb[0].mxu0
      %v3701 = vadd.f32 0.0, %v3700
      %v3702 = vpop.f32.mrb[0].mxu0
      %3703 = vmatprep.mubr.f32.mxu0 0.0
      %3704 = vmatmul.mubr.f32.gmra.mrb[0].mxu0 %v3476
      %v3705 = vpop.f32.mrb[0].mxu0
      %v3706 = vadd.f32 0.0, %v3705
      %v3707 = vpop.f32.mrb[0].mxu0
      %3708 = vmatprep.mubr.f32.mxu0 0.0
      %3709 = vmatmul.mubr.f32.gmra.mrb[0].mxu0 %v3481
      %v3710 = vpop.f32.mrb[0].mxu0
      %v3711 = vadd.f32 0.0, %v3710
      %v3712 = vpop.f32.mrb[0].mxu0
      %3713 = vmatprep.mubr.f32.mxu0 0.0
      %3714 = vmatmul.mubr.f32.gmra.mrb[0].mxu0 %v3486
      %v3715 = vpop.f32.mrb[0].mxu0
      %v3716 = vadd.f32 0.0, %v3715
      %v3717 = vpop.f32.mrb[0].mxu0
      %3718 = vmatprep.mubr.f32.mxu0 0.0
      %3719 = vmatmul.mubr.f32.gmra.mrb[0].mxu0 %v3491
      %v3720 = vpop.f32.mrb[0].mxu0
      %v3721 = vadd.f32 0.0, %v3720
      %v3722 = vpop.f32.mrb[0].mxu0
      %3723 = vmatprep.mubr.f32.mxu0 0.0
      %3724 = vmatmul.mubr.f32.gmra.mrb[0].mxu0 %v3496
      %v3725 = vpop.f32.mrb[0].mxu0
      %v3726 = vadd.f32 0.0, %v3725
      %v3727 = vpop.f32.mrb[0].mxu0
      %3728 = vmatprep.mubr.f32.mxu0 0.0
      %3729 = vmatmul.mubr.f32.gmra.mrb[0].mxu0 %v3501
      %v3730 = vpop.f32.mrb[0].mxu0
      %v3731 = vadd.f32 0.0, %v3730
      %v3732 = vpop.f32.mrb[0].mxu0
      %3733 = vmatprep.mubr.f32.mxu0 0.0
      %3734 = vmatmul.mubr.f32.gmra.mrb[0].mxu0 %v3506
      %v3735 = vpop.f32.mrb[0].mxu0
      %v3736 = vadd.f32 0.0, %v3735
      %v3737 = vpop.f32.mrb[0].mxu0
      %3738 = vmatprep.mubr.f32.mxu0 0.0
      %3739 = vmatmul.mubr.f32.gmra.mrb[0].mxu0 %v3511
      %v3740 = vpop.f32.mrb[0].mxu0
      %v3741 = vadd.f32 0.0, %v3740
      %v3742 = vpop.f32.mrb[0].mxu0
      %3743 = vmatprep.mubr.f32.mxu0 0.0
      %3744 = vmatmul.mubr.f32.gmra.mrb[0].mxu0 %v3516
      %v3745 = vpop.f32.mrb[0].mxu0
      %v3746 = vadd.f32 0.0, %v3745
      %v3747 = vpop.f32.mrb[0].mxu0
      %3748 = vmatprep.mubr.f32.mxu0 0.0
      %3749 = vmatmul.mubr.f32.gmra.mrb[0].mxu0 %v3521
      %v3750 = vpop.f32.mrb[0].mxu0
      %v3751 = vadd.f32 0.0, %v3750
      %v3752 = vpop.f32.mrb[0].mxu0
      %3753 = vmatprep.mubr.f32.mxu0 0.0
      %3754 = vmatmul.mubr.f32.gmra.mrb[0].mxu0 %v3526
      %v3755 = vpop.f32.mrb[0].mxu0
      %v3756 = vadd.f32 0.0, %v3755
      %v3757 = vpop.f32.mrb[0].mxu0
      %3758 = vmatprep.mubr.f32.mxu0 0.0
      %3759 = vmatmul.mubr.f32.gmra.mrb[0].mxu0 %v3531
      %v3760 = vpop.f32.mrb[0].mxu0
      %v3761 = vadd.f32 0.0, %v3760
      %v3762 = vpop.f32.mrb[0].mxu0
      %3763 = vmatprep.mubr.f32.mxu0 0.0
      %3764 = vmatmul.mubr.f32.gmra.mrb[0].mxu0 %v3536
      %v3765 = vpop.f32.mrb[0].mxu0
      %v3766 = vadd.f32 0.0, %v3765
      %v3767 = vpop.f32.mrb[0].mxu0
      %3768 = vmatprep.mubr.f32.mxu0 0.0
      %3769 = vmatmul.mubr.f32.gmra.mrb[0].mxu0 %v3541
      %v3770 = vpop.f32.mrb[0].mxu0
      %v3771 = vadd.f32 0.0, %v3770
      %v3772 = vpop.f32.mrb[0].mxu0
      %3773 = vmatprep.mubr.f32.mxu0 0.0
      %3774 = vmatmul.mubr.f32.gmra.mrb[0].mxu0 %v3546
      %v3775 = vpop.f32.mrb[0].mxu0
      %v3776 = vadd.f32 0.0, %v3775
      %v3777 = vpop.f32.mrb[0].mxu0
      %3778 = vmatprep.mubr.f32.mxu0 0.0
      %3779 = vmatmul.mubr.f32.gmra.mrb[0].mxu0 %v3551
      %v3780 = vpop.f32.mrb[0].mxu0
      %v3781 = vadd.f32 0.0, %v3780
      %v3782 = vpop.f32.mrb[0].mxu0
      %3783 = vmatprep.mubr.f32.mxu0 0.0
      %3784 = vmatmul.mubr.f32.gmra.mrb[0].mxu0 %v3556
      %v3785 = vpop.f32.mrb[0].mxu0
      %v3786 = vadd.f32 0.0, %v3785
      %v3787 = vpop.f32.mrb[0].mxu0
      %3788 = vmatprep.mubr.f32.mxu0 0.0
      %3789 = vmatmul.mubr.f32.gmra.mrb[0].mxu0 %v3561
      %v3790 = vpop.f32.mrb[0].mxu0
      %v3791 = vadd.f32 0.0, %v3790
      %v3792 = vpop.f32.mrb[0].mxu0
      %3793 = vmatprep.mubr.f32.mxu0 0.0
      %3794 = vmatmul.mubr.f32.gmra.mrb[0].mxu0 %v3566
      %v3795 = vpop.f32.mrb[0].mxu0
      %v3796 = vadd.f32 0.0, %v3795
      %v3797 = vpop.f32.mrb[0].mxu0
      %3798 = vmatprep.mubr.f32.mxu0 0.0
      %3799 = vmatmul.mubr.f32.gmra.mrb[0].mxu0 %v3571
      %v3800 = vpop.f32.mrb[0].mxu0
      %v3801 = vadd.f32 0.0, %v3800
      %v3802 = vpop.f32.mrb[0].mxu0
      %3803 = vmatprep.mubr.f32.mxu0 0.0
      %3804 = vmatmul.mubr.f32.gmra.mrb[0].mxu0 %v3576
      %v3805 = vpop.f32.mrb[0].mxu0
      %v3806 = vadd.f32 0.0, %v3805
      %v3807 = vpop.f32.mrb[0].mxu0
      %3808 = vmatprep.mubr.f32.mxu0 0.0
      %3809 = vmatmul.mubr.f32.gmra.mrb[0].mxu0 %v3581
      %v3810 = vpop.f32.mrb[0].mxu0
      %v3811 = vadd.f32 0.0, %v3810
      %v3812 = vpop.f32.mrb[0].mxu0
      %3813 = vmatprep.mubr.f32.mxu0 0.0
      %3814 = vmatmul.mubr.f32.gmra.mrb[0].mxu0 %v3586
      %v3815 = vpop.f32.mrb[0].mxu0
      %v3816 = vadd.f32 0.0, %v3815
      %v3817 = vpop.f32.mrb[0].mxu0
      %3818 = vmatprep.mubr.f32.mxu0 0.0
      %3819 = vmatmul.mubr.f32.gmra.mrb[0].mxu0 %v3591
      %v3820 = vpop.f32.mrb[0].mxu0
      %v3821 = vadd.f32 0.0, %v3820
      %v3822 = vpop.f32.mrb[0].mxu0
      %3823 = vmatprep.mubr.f32.mxu0 0.0
      %3824 = vmatmul.mubr.f32.gmra.mrb[0].mxu0 %v3596
      %v3825 = vpop.f32.mrb[0].mxu0
      %v3826 = vadd.f32 0.0, %v3825
      %v3827 = vpop.f32.mrb[0].mxu0
      %3828 = vdwg.mxu0
      %v3829 = vmul.f32 %v1028, %v1718
      %v3830 = vmul.f32 %v1033, %v1723
      %v3831 = vmul.f32 %v1038, %v1728
      %v3832 = vmul.f32 %v1043, %v1733
      %v3833 = vmul.f32 %v1048, %v1738
      %v3834 = vmul.f32 %v1053, %v1743
      %v3835 = vmul.f32 %v1058, %v1748
      %v3836 = vmul.f32 %v1063, %v1753
      %v3837 = vmul.f32 %v1068, %v1758
      %v3838 = vmul.f32 %v1073, %v1763
      %v3839 = vmul.f32 %v1078, %v1768
      %v3840 = vmul.f32 %v1083, %v1773
      %v3841 = vmul.f32 %v1088, %v1778
      %v3842 = vmul.f32 %v1093, %v1783
      %v3843 = vmul.f32 %v1098, %v1788
      %v3844 = vmul.f32 %v1103, %v1793
      %v3845 = vmul.f32 %v1108, %v1798
      %v3846 = vmul.f32 %v1113, %v1803
      %v3847 = vmul.f32 %v1118, %v1808
      %v3848 = vmul.f32 %v1123, %v1813
      %v3849 = vmul.f32 %v1128, %v1818
      %v3850 = vmul.f32 %v1133, %v1823
      %v3851 = vmul.f32 %v1138, %v1828
      %v3852 = vmul.f32 %v1143, %v1833
      %v3853 = vmul.f32 %v1148, %v1838
      %v3854 = vmul.f32 %v1153, %v1843
      %v3855 = vmul.f32 %v1158, %v1848
      %v3856 = vmul.f32 %v1163, %v1853
      %v3857 = vmul.f32 %v1168, %v1858
      %v3858 = vmul.f32 %v1173, %v1863
      %v3859 = vmul.f32 %v1178, %v1868
      %v3860 = vmul.f32 %v1183, %v1873
      %v3861 = vmul.f32 %v1188, %v1878
      %v3862 = vmul.f32 %v1028, %v1028
      %v3863 = vmul.f32 %v1033, %v1033
      %v3864 = vmul.f32 %v1038, %v1038
      %v3865 = vmul.f32 %v1043, %v1043
      %v3866 = vmul.f32 %v1048, %v1048
      %v3867 = vmul.f32 %v1053, %v1053
      %v3868 = vmul.f32 %v1058, %v1058
      %v3869 = vmul.f32 %v1063, %v1063
      %v3870 = vmul.f32 %v1068, %v1068
      %v3871 = vmul.f32 %v1073, %v1073
      %v3872 = vmul.f32 %v1078, %v1078
      %v3873 = vmul.f32 %v1083, %v1083
      %v3874 = vmul.f32 %v1088, %v1088
      %v3875 = vmul.f32 %v1093, %v1093
      %v3876 = vmul.f32 %v1098, %v1098
      %v3877 = vmul.f32 %v1103, %v1103
      %v3878 = vmul.f32 %v1108, %v1108
      %v3879 = vmul.f32 %v1113, %v1113
      %v3880 = vmul.f32 %v1118, %v1118
      %v3881 = vmul.f32 %v1123, %v1123
      %v3882 = vmul.f32 %v1128, %v1128
      %v3883 = vmul.f32 %v1133, %v1133
      %v3884 = vmul.f32 %v1138, %v1138
      %v3885 = vmul.f32 %v1143, %v1143
      %v3886 = vmul.f32 %v1148, %v1148
      %v3887 = vmul.f32 %v1153, %v1153
      %v3888 = vmul.f32 %v1158, %v1158
      %v3889 = vmul.f32 %v1163, %v1163
      %v3890 = vmul.f32 %v1168, %v1168
      %v3891 = vmul.f32 %v1173, %v1173
      %v3892 = vmul.f32 %v1178, %v1178
      %v3893 = vmul.f32 %v1183, %v1183
      %v3894 = vmul.f32 %v1188, %v1188
      %v3895 = vmul.f32 %v1718, %v1718
      %v3896 = vmul.f32 %v1723, %v1723
      %v3897 = vmul.f32 %v1728, %v1728
      %v3898 = vmul.f32 %v1733, %v1733
      %v3899 = vmul.f32 %v1738, %v1738
      %v3900 = vmul.f32 %v1743, %v1743
      %v3901 = vmul.f32 %v1748, %v1748
      %v3902 = vmul.f32 %v1753, %v1753
      %v3903 = vmul.f32 %v1758, %v1758
      %v3904 = vmul.f32 %v1763, %v1763
      %v3905 = vmul.f32 %v1768, %v1768
      %v3906 = vmul.f32 %v1773, %v1773
      %v3907 = vmul.f32 %v1778, %v1778
      %v3908 = vmul.f32 %v1783, %v1783
      %v3909 = vmul.f32 %v1788, %v1788
      %v3910 = vmul.f32 %v1793, %v1793
      %v3911 = vmul.f32 %v1798, %v1798
      %v3912 = vmul.f32 %v1803, %v1803
      %v3913 = vmul.f32 %v1808, %v1808
      %v3914 = vmul.f32 %v1813, %v1813
      %v3915 = vmul.f32 %v1818, %v1818
      %v3916 = vmul.f32 %v1823, %v1823
      %v3917 = vmul.f32 %v1828, %v1828
      %v3918 = vmul.f32 %v1833, %v1833
      %v3919 = vmul.f32 %v1838, %v1838
      %v3920 = vmul.f32 %v1843, %v1843
      %v3921 = vmul.f32 %v1848, %v1848
      %v3922 = vmul.f32 %v1853, %v1853
      %v3923 = vmul.f32 %v1858, %v1858
      %v3924 = vmul.f32 %v1863, %v1863
      %v3925 = vmul.f32 %v1868, %v1868
      %v3926 = vmul.f32 %v1873, %v1873
      %v3927 = vmul.f32 %v1878, %v1878
      %v3928 = vadd.f32 %v3862, %v3895
      %v3929 = vadd.f32 %v3863, %v3896
      %v3930 = vadd.f32 %v3864, %v3897
      %v3931 = vadd.f32 %v3865, %v3898
      %v3932 = vadd.f32 %v3866, %v3899
      %v3933 = vadd.f32 %v3867, %v3900
      %v3934 = vadd.f32 %v3868, %v3901
      %v3935 = vadd.f32 %v3869, %v3902
      %v3936 = vadd.f32 %v3870, %v3903
      %v3937 = vadd.f32 %v3871, %v3904
      %v3938 = vadd.f32 %v3872, %v3905
      %v3939 = vadd.f32 %v3873, %v3906
      %v3940 = vadd.f32 %v3874, %v3907
      %v3941 = vadd.f32 %v3875, %v3908
      %v3942 = vadd.f32 %v3876, %v3909
      %v3943 = vadd.f32 %v3877, %v3910
      %v3944 = vadd.f32 %v3878, %v3911
      %v3945 = vadd.f32 %v3879, %v3912
      %v3946 = vadd.f32 %v3880, %v3913
      %v3947 = vadd.f32 %v3881, %v3914
      %v3948 = vadd.f32 %v3882, %v3915
      %v3949 = vadd.f32 %v3883, %v3916
      %v3950 = vadd.f32 %v3884, %v3917
      %v3951 = vadd.f32 %v3885, %v3918
      %v3952 = vadd.f32 %v3886, %v3919
      %v3953 = vadd.f32 %v3887, %v3920
      %v3954 = vadd.f32 %v3888, %v3921
      %v3955 = vadd.f32 %v3889, %v3922
      %v3956 = vadd.f32 %v3890, %v3923
      %v3957 = vadd.f32 %v3891, %v3924
      %v3958 = vadd.f32 %v3892, %v3925
      %v3959 = vadd.f32 %v3893, %v3926
      %v3960 = vadd.f32 %v3894, %v3927
      %v3961 = vmul.f32 %v3829, 2.0
      %v3962 = vmul.f32 %v3830, 2.0
      %v3963 = vmul.f32 %v3831, 2.0
      %v3964 = vmul.f32 %v3832, 2.0
      %v3965 = vmul.f32 %v3833, 2.0
      %v3966 = vmul.f32 %v3834, 2.0
      %v3967 = vmul.f32 %v3835, 2.0
      %v3968 = vmul.f32 %v3836, 2.0
      %v3969 = vmul.f32 %v3837, 2.0
      %v3970 = vmul.f32 %v3838, 2.0
      %v3971 = vmul.f32 %v3839, 2.0
      %v3972 = vmul.f32 %v3840, 2.0
      %v3973 = vmul.f32 %v3841, 2.0
      %v3974 = vmul.f32 %v3842, 2.0
      %v3975 = vmul.f32 %v3843, 2.0
      %v3976 = vmul.f32 %v3844, 2.0
      %v3977 = vmul.f32 %v3845, 2.0
      %v3978 = vmul.f32 %v3846, 2.0
      %v3979 = vmul.f32 %v3847, 2.0
      %v3980 = vmul.f32 %v3848, 2.0
      %v3981 = vmul.f32 %v3849, 2.0
      %v3982 = vmul.f32 %v3850, 2.0
      %v3983 = vmul.f32 %v3851, 2.0
      %v3984 = vmul.f32 %v3852, 2.0
      %v3985 = vmul.f32 %v3853, 2.0
      %v3986 = vmul.f32 %v3854, 2.0
      %v3987 = vmul.f32 %v3855, 2.0
      %v3988 = vmul.f32 %v3856, 2.0
      %v3989 = vmul.f32 %v3857, 2.0
      %v3990 = vmul.f32 %v3858, 2.0
      %v3991 = vmul.f32 %v3859, 2.0
      %v3992 = vmul.f32 %v3860, 2.0
      %v3993 = vmul.f32 %v3861, 2.0
      %v3994 = vadd.f32 %v3961, 0.0001
      %v3995 = vadd.f32 %v3962, 0.0001
      %v3996 = vadd.f32 %v3963, 0.0001
      %v3997 = vadd.f32 %v3964, 0.0001
      %v3998 = vadd.f32 %v3965, 0.0001
      %v3999 = vadd.f32 %v3966, 0.0001
      %v4000 = vadd.f32 %v3967, 0.0001
      %v4001 = vadd.f32 %v3968, 0.0001
      %v4002 = vadd.f32 %v3969, 0.0001
      %v4003 = vadd.f32 %v3970, 0.0001
      %v4004 = vadd.f32 %v3971, 0.0001
      %v4005 = vadd.f32 %v3972, 0.0001
      %v4006 = vadd.f32 %v3973, 0.0001
      %v4007 = vadd.f32 %v3974, 0.0001
      %v4008 = vadd.f32 %v3975, 0.0001
      %v4009 = vadd.f32 %v3976, 0.0001
      %v4010 = vadd.f32 %v3977, 0.0001
      %v4011 = vadd.f32 %v3978, 0.0001
      %v4012 = vadd.f32 %v3979, 0.0001
      %v4013 = vadd.f32 %v3980, 0.0001
      %v4014 = vadd.f32 %v3981, 0.0001
      %v4015 = vadd.f32 %v3982, 0.0001
      %v4016 = vadd.f32 %v3983, 0.0001
      %v4017 = vadd.f32 %v3984, 0.0001
      %v4018 = vadd.f32 %v3985, 0.0001
      %v4019 = vadd.f32 %v3986, 0.0001
      %v4020 = vadd.f32 %v3987, 0.0001
      %v4021 = vadd.f32 %v3988, 0.0001
      %v4022 = vadd.f32 %v3989, 0.0001
      %v4023 = vadd.f32 %v3990, 0.0001
      %v4024 = vadd.f32 %v3991, 0.0001
      %v4025 = vadd.f32 %v3992, 0.0001
      %v4026 = vadd.f32 %v3993, 0.0001
      %v4027 = vsub.f32 %v3666, %v3829
      %v4028 = vsub.f32 %v3671, %v3830
      %v4029 = vsub.f32 %v3676, %v3831
      %v4030 = vsub.f32 %v3681, %v3832
      %v4031 = vsub.f32 %v3686, %v3833
      %v4032 = vsub.f32 %v3691, %v3834
      %v4033 = vsub.f32 %v3696, %v3835
      %v4034 = vsub.f32 %v3701, %v3836
      %v4035 = vsub.f32 %v3706, %v3837
      %v4036 = vsub.f32 %v3711, %v3838
      %v4037 = vsub.f32 %v3716, %v3839
      %v4038 = vsub.f32 %v3721, %v3840
      %v4039 = vsub.f32 %v3726, %v3841
      %v4040 = vsub.f32 %v3731, %v3842
      %v4041 = vsub.f32 %v3736, %v3843
      %v4042 = vsub.f32 %v3741, %v3844
      %v4043 = vsub.f32 %v3746, %v3845
      %v4044 = vsub.f32 %v3751, %v3846
      %v4045 = vsub.f32 %v3756, %v3847
      %v4046 = vsub.f32 %v3761, %v3848
      %v4047 = vsub.f32 %v3766, %v3849
      %v4048 = vsub.f32 %v3771, %v3850
      %v4049 = vsub.f32 %v3776, %v3851
      %v4050 = vsub.f32 %v3781, %v3852
      %v4051 = vsub.f32 %v3786, %v3853
      %v4052 = vsub.f32 %v3791, %v3854
      %v4053 = vsub.f32 %v3796, %v3855
      %v4054 = vsub.f32 %v3801, %v3856
      %v4055 = vsub.f32 %v3806, %v3857
      %v4056 = vsub.f32 %v3811, %v3858
      %v4057 = vsub.f32 %v3816, %v3859
      %v4058 = vsub.f32 %v3821, %v3860
      %v4059 = vsub.f32 %v3826, %v3861
      %v4060 = vmul.f32 %v4027, 2.0
      %v4061 = vmul.f32 %v4028, 2.0
      %v4062 = vmul.f32 %v4029, 2.0
      %v4063 = vmul.f32 %v4030, 2.0
      %v4064 = vmul.f32 %v4031, 2.0
      %v4065 = vmul.f32 %v4032, 2.0
      %v4066 = vmul.f32 %v4033, 2.0
      %v4067 = vmul.f32 %v4034, 2.0
      %v4068 = vmul.f32 %v4035, 2.0
      %v4069 = vmul.f32 %v4036, 2.0
      %v4070 = vmul.f32 %v4037, 2.0
      %v4071 = vmul.f32 %v4038, 2.0
      %v4072 = vmul.f32 %v4039, 2.0
      %v4073 = vmul.f32 %v4040, 2.0
      %v4074 = vmul.f32 %v4041, 2.0
      %v4075 = vmul.f32 %v4042, 2.0
      %v4076 = vmul.f32 %v4043, 2.0
      %v4077 = vmul.f32 %v4044, 2.0
      %v4078 = vmul.f32 %v4045, 2.0
      %v4079 = vmul.f32 %v4046, 2.0
      %v4080 = vmul.f32 %v4047, 2.0
      %v4081 = vmul.f32 %v4048, 2.0
      %v4082 = vmul.f32 %v4049, 2.0
      %v4083 = vmul.f32 %v4050, 2.0
      %v4084 = vmul.f32 %v4051, 2.0
      %v4085 = vmul.f32 %v4052, 2.0
      %v4086 = vmul.f32 %v4053, 2.0
      %v4087 = vmul.f32 %v4054, 2.0
      %v4088 = vmul.f32 %v4055, 2.0
      %v4089 = vmul.f32 %v4056, 2.0
      %v4090 = vmul.f32 %v4057, 2.0
      %v4091 = vmul.f32 %v4058, 2.0
      %v4092 = vmul.f32 %v4059, 2.0
      %v4093 = vadd.f32 %v4060, 0.0009
      %v4094 = vadd.f32 %v4061, 0.0009
      %v4095 = vadd.f32 %v4062, 0.0009
      %v4096 = vadd.f32 %v4063, 0.0009
      %v4097 = vadd.f32 %v4064, 0.0009
      %v4098 = vadd.f32 %v4065, 0.0009
      %v4099 = vadd.f32 %v4066, 0.0009
      %v4100 = vadd.f32 %v4067, 0.0009
      %v4101 = vadd.f32 %v4068, 0.0009
      %v4102 = vadd.f32 %v4069, 0.0009
      %v4103 = vadd.f32 %v4070, 0.0009
      %v4104 = vadd.f32 %v4071, 0.0009
      %v4105 = vadd.f32 %v4072, 0.0009
      %v4106 = vadd.f32 %v4073, 0.0009
      %v4107 = vadd.f32 %v4074, 0.0009
      %v4108 = vadd.f32 %v4075, 0.0009
      %v4109 = vadd.f32 %v4076, 0.0009
      %v4110 = vadd.f32 %v4077, 0.0009
      %v4111 = vadd.f32 %v4078, 0.0009
      %v4112 = vadd.f32 %v4079, 0.0009
      %v4113 = vadd.f32 %v4080, 0.0009
      %v4114 = vadd.f32 %v4081, 0.0009
      %v4115 = vadd.f32 %v4082, 0.0009
      %v4116 = vadd.f32 %v4083, 0.0009
      %v4117 = vadd.f32 %v4084, 0.0009
      %v4118 = vadd.f32 %v4085, 0.0009
      %v4119 = vadd.f32 %v4086, 0.0009
      %v4120 = vadd.f32 %v4087, 0.0009
      %v4121 = vadd.f32 %v4088, 0.0009
      %v4122 = vadd.f32 %v4089, 0.0009
      %v4123 = vadd.f32 %v4090, 0.0009
      %v4124 = vadd.f32 %v4091, 0.0009
      %v4125 = vadd.f32 %v4092, 0.0009
      %v4126 = vmul.f32 %v3994, %v4093
      %v4127 = vmul.f32 %v3995, %v4094
      %v4128 = vmul.f32 %v3996, %v4095
      %v4129 = vmul.f32 %v3997, %v4096
      %v4130 = vmul.f32 %v3998, %v4097
      %v4131 = vmul.f32 %v3999, %v4098
      %v4132 = vmul.f32 %v4000, %v4099
      %v4133 = vmul.f32 %v4001, %v4100
      %v4134 = vmul.f32 %v4002, %v4101
      %v4135 = vmul.f32 %v4003, %v4102
      %v4136 = vmul.f32 %v4004, %v4103
      %v4137 = vmul.f32 %v4005, %v4104
      %v4138 = vmul.f32 %v4006, %v4105
      %v4139 = vmul.f32 %v4007, %v4106
      %v4140 = vmul.f32 %v4008, %v4107
      %v4141 = vmul.f32 %v4009, %v4108
      %v4142 = vmul.f32 %v4010, %v4109
      %v4143 = vmul.f32 %v4011, %v4110
      %v4144 = vmul.f32 %v4012, %v4111
      %v4145 = vmul.f32 %v4013, %v4112
      %v4146 = vmul.f32 %v4014, %v4113
      %v4147 = vmul.f32 %v4015, %v4114
      %v4148 = vmul.f32 %v4016, %v4115
      %v4149 = vmul.f32 %v4017, %v4116
      %v4150 = vmul.f32 %v4018, %v4117
      %v4151 = vmul.f32 %v4019, %v4118
      %v4152 = vmul.f32 %v4020, %v4119
      %v4153 = vmul.f32 %v4021, %v4120
      %v4154 = vmul.f32 %v4022, %v4121
      %v4155 = vmul.f32 %v4023, %v4122
      %v4156 = vmul.f32 %v4024, %v4123
      %v4157 = vmul.f32 %v4025, %v4124
      %v4158 = vmul.f32 %v4026, %v4125
      %v4159 = vadd.f32 %v3928, 0.0001
      %v4160 = vadd.f32 %v3929, 0.0001
      %v4161 = vadd.f32 %v3930, 0.0001
      %v4162 = vadd.f32 %v3931, 0.0001
      %v4163 = vadd.f32 %v3932, 0.0001
      %v4164 = vadd.f32 %v3933, 0.0001
      %v4165 = vadd.f32 %v3934, 0.0001
      %v4166 = vadd.f32 %v3935, 0.0001
      %v4167 = vadd.f32 %v3936, 0.0001
      %v4168 = vadd.f32 %v3937, 0.0001
      %v4169 = vadd.f32 %v3938, 0.0001
      %v4170 = vadd.f32 %v3939, 0.0001
      %v4171 = vadd.f32 %v3940, 0.0001
      %v4172 = vadd.f32 %v3941, 0.0001
      %v4173 = vadd.f32 %v3942, 0.0001
      %v4174 = vadd.f32 %v3943, 0.0001
      %v4175 = vadd.f32 %v3944, 0.0001
      %v4176 = vadd.f32 %v3945, 0.0001
      %v4177 = vadd.f32 %v3946, 0.0001
      %v4178 = vadd.f32 %v3947, 0.0001
      %v4179 = vadd.f32 %v3948, 0.0001
      %v4180 = vadd.f32 %v3949, 0.0001
      %v4181 = vadd.f32 %v3950, 0.0001
      %v4182 = vadd.f32 %v3951, 0.0001
      %v4183 = vadd.f32 %v3952, 0.0001
      %v4184 = vadd.f32 %v3953, 0.0001
      %v4185 = vadd.f32 %v3954, 0.0001
      %v4186 = vadd.f32 %v3955, 0.0001
      %v4187 = vadd.f32 %v3956, 0.0001
      %v4188 = vadd.f32 %v3957, 0.0001
      %v4189 = vadd.f32 %v3958, 0.0001
      %v4190 = vadd.f32 %v3959, 0.0001
      %v4191 = vadd.f32 %v3960, 0.0001
      %4192 = vmatprep.subr.mxu0 0.0
      %4193 = vmatpush1.msra.mxu0 %v385
      %4194 = vmatprep.subr.mxu0 0.0
      %4195 = vmatpush1.msra.mxu0 %v386
      %4196 = vmatprep.subr.mxu0 0.0
      %4197 = vmatpush1.msra.mxu0 %v387
      %4198 = vmatprep.subr.mxu0 0.0
      %4199 = vmatpush1.msra.mxu0 %v388
      %4200 = vmatprep.subr.mxu0 0.0
      %4201 = vmatpush1.msra.mxu0 %v389
      %4202 = vmatprep.subr.mxu0 0.0
      %4203 = vmatpush1.msra.mxu0 %v390
      %4204 = vmatprep.subr.mxu0 0.0
      %4205 = vmatpush1.msra.mxu0 %v391
      %4206 = vmatprep.subr.mxu0 0.0
      %4207 = vmatpush1.msra.mxu0 %v392
      %4208 = vmatprep.subr.mxu0 0.0
      %4209 = vmatpush1.msra.mxu0 %v393
      %4210 = vmatprep.subr.mxu0 0.0
      %4211 = vmatpush1.msra.mxu0 %v394
      %4212 = vmatprep.subr.mxu0 0.0
      %4213 = vmatpush1.msra.mxu0 %v395
      %4214 = vmatprep.subr.mxu0 0.0
      %4215 = vmatpush1.msra.mxu0 %v396
      %4216 = vmatprep.subr.mxu0 0.0
      %4217 = vmatpush1.msra.mxu0 %v397
      %4218 = vmatprep.subr.mxu0 0.0
      %4219 = vmatpush1.msra.mxu0 %v398
      %4220 = vmatprep.subr.mxu0 0.0
      %4221 = vmatpush1.msra.mxu0 %v399
      %4222 = vmatprep.subr.mxu0 0.0
      %4223 = vmatpush1.msra.mxu0 %v400
      %4224 = vmatprep.subr.mxu0 0.0
      %4225 = vmatpush1.msra.mxu0 0.0
      %4226 = vmatprep.subr.mxu0 0.0
      %4227 = vmatpush1.msra.mxu0 0.0
      %4228 = vmatprep.subr.mxu0 0.0
      %4229 = vmatpush1.msra.mxu0 0.0
      %4230 = vmatprep.subr.mxu0 0.0
      %4231 = vmatpush1.msra.mxu0 0.0
      %4232 = vmatprep.subr.mxu0 0.0
      %4233 = vmatpush1.msra.mxu0 0.0
      %4234 = vmatprep.subr.mxu0 0.0
      %4235 = vmatpush1.msra.mxu0 0.0
      %4236 = vmatprep.subr.mxu0 0.0
      %4237 = vmatpush1.msra.mxu0 0.0
      %4238 = vmatprep.subr.mxu0 0.0
      %4239 = vmatpush1.msra.mxu0 0.0
      %4240 = vmatprep.subr.mxu0 0.0
      %4241 = vmatpush1.msra.mxu0 0.0
      %4242 = vmatprep.subr.mxu0 0.0
      %4243 = vmatpush1.msra.mxu0 0.0
      %4244 = vmatprep.subr.mxu0 0.0
      %4245 = vmatpush1.msra.mxu0 0.0
      %4246 = vmatprep.subr.mxu0 0.0
      %4247 = vmatpush1.msra.mxu0 0.0
      %4248 = vmatprep.subr.mxu0 0.0
      %4249 = vmatpush1.msra.mxu0 0.0
      %4250 = vmatprep.subr.mxu0 0.0
      %4251 = vmatpush1.msra.mxu0 0.0
      %4252 = vmatprep.subr.mxu0 0.0
      %4253 = vmatpush1.msra.mxu0 0.0
      %4254 = vmatprep.subr.mxu0 0.0
      %4255 = vmatpush1.msra.mxu0 0.0
      %4256 = vmatprep.mubr.f32.mxu0 0.0
      %4257 = vmatmul.mubr.f32.gmra.mrb[0].mxu0 %v2214
      %v4258 = vpop.f32.mrb[0].mxu0
      %v4259 = vadd.f32 %v2940, %v4258
      %v4260 = vpop.f32.mrb[0].mxu0
      %4261 = vmatprep.mubr.f32.mxu0 0.0
      %4262 = vmatmul.mubr.f32.gmra.mrb[0].mxu0 %v2219
      %v4263 = vpop.f32.mrb[0].mxu0
      %v4264 = vadd.f32 %v2945, %v4263
      %v4265 = vpop.f32.mrb[0].mxu0
      %4266 = vmatprep.mubr.f32.mxu0 0.0
      %4267 = vmatmul.mubr.f32.gmra.mrb[0].mxu0 %v2224
      %v4268 = vpop.f32.mrb[0].mxu0
      %v4269 = vadd.f32 %v2950, %v4268
      %v4270 = vpop.f32.mrb[0].mxu0
      %4271 = vmatprep.mubr.f32.mxu0 0.0
      %4272 = vmatmul.mubr.f32.gmra.mrb[0].mxu0 %v2229
      %v4273 = vpop.f32.mrb[0].mxu0
      %v4274 = vadd.f32 %v2955, %v4273
      %v4275 = vpop.f32.mrb[0].mxu0
      %4276 = vmatprep.mubr.f32.mxu0 0.0
      %4277 = vmatmul.mubr.f32.gmra.mrb[0].mxu0 %v2234
      %v4278 = vpop.f32.mrb[0].mxu0
      %v4279 = vadd.f32 %v2960, %v4278
      %v4280 = vpop.f32.mrb[0].mxu0
      %4281 = vmatprep.mubr.f32.mxu0 0.0
      %4282 = vmatmul.mubr.f32.gmra.mrb[0].mxu0 %v2239
      %v4283 = vpop.f32.mrb[0].mxu0
      %v4284 = vadd.f32 %v2965, %v4283
      %v4285 = vpop.f32.mrb[0].mxu0
      %4286 = vmatprep.mubr.f32.mxu0 0.0
      %4287 = vmatmul.mubr.f32.gmra.mrb[0].mxu0 %v2244
      %v4288 = vpop.f32.mrb[0].mxu0
      %v4289 = vadd.f32 %v2970, %v4288
      %v4290 = vpop.f32.mrb[0].mxu0
      %4291 = vmatprep.mubr.f32.mxu0 0.0
      %4292 = vmatmul.mubr.f32.gmra.mrb[0].mxu0 %v2249
      %v4293 = vpop.f32.mrb[0].mxu0
      %v4294 = vadd.f32 %v2975, %v4293
      %v4295 = vpop.f32.mrb[0].mxu0
      %4296 = vmatprep.mubr.f32.mxu0 0.0
      %4297 = vmatmul.mubr.f32.gmra.mrb[0].mxu0 %v2254
      %v4298 = vpop.f32.mrb[0].mxu0
      %v4299 = vadd.f32 %v2980, %v4298
      %v4300 = vpop.f32.mrb[0].mxu0
      %4301 = vmatprep.mubr.f32.mxu0 0.0
      %4302 = vmatmul.mubr.f32.gmra.mrb[0].mxu0 %v2259
      %v4303 = vpop.f32.mrb[0].mxu0
      %v4304 = vadd.f32 %v2985, %v4303
      %v4305 = vpop.f32.mrb[0].mxu0
      %4306 = vmatprep.mubr.f32.mxu0 0.0
      %4307 = vmatmul.mubr.f32.gmra.mrb[0].mxu0 %v2264
      %v4308 = vpop.f32.mrb[0].mxu0
      %v4309 = vadd.f32 %v2990, %v4308
      %v4310 = vpop.f32.mrb[0].mxu0
      %4311 = vmatprep.mubr.f32.mxu0 0.0
      %4312 = vmatmul.mubr.f32.gmra.mrb[0].mxu0 %v2269
      %v4313 = vpop.f32.mrb[0].mxu0
      %v4314 = vadd.f32 %v2995, %v4313
      %v4315 = vpop.f32.mrb[0].mxu0
      %4316 = vmatprep.mubr.f32.mxu0 0.0
      %4317 = vmatmul.mubr.f32.gmra.mrb[0].mxu0 %v2274
      %v4318 = vpop.f32.mrb[0].mxu0
      %v4319 = vadd.f32 %v3000, %v4318
      %v4320 = vpop.f32.mrb[0].mxu0
      %4321 = vmatprep.mubr.f32.mxu0 0.0
      %4322 = vmatmul.mubr.f32.gmra.mrb[0].mxu0 %v2279
      %v4323 = vpop.f32.mrb[0].mxu0
      %v4324 = vadd.f32 %v3005, %v4323
      %v4325 = vpop.f32.mrb[0].mxu0
      %4326 = vmatprep.mubr.f32.mxu0 0.0
      %4327 = vmatmul.mubr.f32.gmra.mrb[0].mxu0 %v2284
      %v4328 = vpop.f32.mrb[0].mxu0
      %v4329 = vadd.f32 %v3010, %v4328
      %v4330 = vpop.f32.mrb[0].mxu0
      %4331 = vmatprep.mubr.f32.mxu0 0.0
      %4332 = vmatmul.mubr.f32.gmra.mrb[0].mxu0 %v2289
      %v4333 = vpop.f32.mrb[0].mxu0
      %v4334 = vadd.f32 %v3015, %v4333
      %v4335 = vpop.f32.mrb[0].mxu0
      %4336 = vmatprep.mubr.f32.mxu0 0.0
      %4337 = vmatmul.mubr.f32.gmra.mrb[0].mxu0 %v2294
      %v4338 = vpop.f32.mrb[0].mxu0
      %v4339 = vadd.f32 %v3020, %v4338
      %v4340 = vpop.f32.mrb[0].mxu0
      %4341 = vmatprep.mubr.f32.mxu0 0.0
      %4342 = vmatmul.mubr.f32.gmra.mrb[0].mxu0 %v2299
      %v4343 = vpop.f32.mrb[0].mxu0
      %v4344 = vadd.f32 %v3025, %v4343
      %v4345 = vpop.f32.mrb[0].mxu0
      %4346 = vmatprep.mubr.f32.mxu0 0.0
      %4347 = vmatmul.mubr.f32.gmra.mrb[0].mxu0 %v2304
      %v4348 = vpop.f32.mrb[0].mxu0
      %v4349 = vadd.f32 %v3030, %v4348
      %v4350 = vpop.f32.mrb[0].mxu0
      %4351 = vmatprep.mubr.f32.mxu0 0.0
      %4352 = vmatmul.mubr.f32.gmra.mrb[0].mxu0 %v2309
      %v4353 = vpop.f32.mrb[0].mxu0
      %v4354 = vadd.f32 %v3035, %v4353
      %v4355 = vpop.f32.mrb[0].mxu0
      %4356 = vmatprep.mubr.f32.mxu0 0.0
      %4357 = vmatmul.mubr.f32.gmra.mrb[0].mxu0 %v2314
      %v4358 = vpop.f32.mrb[0].mxu0
      %v4359 = vadd.f32 %v3040, %v4358
      %v4360 = vpop.f32.mrb[0].mxu0
      %4361 = vmatprep.mubr.f32.mxu0 0.0
      %4362 = vmatmul.mubr.f32.gmra.mrb[0].mxu0 %v2319
      %v4363 = vpop.f32.mrb[0].mxu0
      %v4364 = vadd.f32 %v3045, %v4363
      %v4365 = vpop.f32.mrb[0].mxu0
      %4366 = vmatprep.mubr.f32.mxu0 0.0
      %4367 = vmatmul.mubr.f32.gmra.mrb[0].mxu0 %v2324
      %v4368 = vpop.f32.mrb[0].mxu0
      %v4369 = vadd.f32 %v3050, %v4368
      %v4370 = vpop.f32.mrb[0].mxu0
      %4371 = vmatprep.mubr.f32.mxu0 0.0
      %4372 = vmatmul.mubr.f32.gmra.mrb[0].mxu0 %v2329
      %v4373 = vpop.f32.mrb[0].mxu0
      %v4374 = vadd.f32 %v3055, %v4373
      %v4375 = vpop.f32.mrb[0].mxu0
      %4376 = vmatprep.mubr.f32.mxu0 0.0
      %4377 = vmatmul.mubr.f32.gmra.mrb[0].mxu0 %v2334
      %v4378 = vpop.f32.mrb[0].mxu0
      %v4379 = vadd.f32 %v3060, %v4378
      %v4380 = vpop.f32.mrb[0].mxu0
      %4381 = vmatprep.mubr.f32.mxu0 0.0
      %4382 = vmatmul.mubr.f32.gmra.mrb[0].mxu0 %v2339
      %v4383 = vpop.f32.mrb[0].mxu0
      %v4384 = vadd.f32 %v3065, %v4383
      %v4385 = vpop.f32.mrb[0].mxu0
      %4386 = vmatprep.mubr.f32.mxu0 0.0
      %4387 = vmatmul.mubr.f32.gmra.mrb[0].mxu0 %v2344
      %v4388 = vpop.f32.mrb[0].mxu0
      %v4389 = vadd.f32 %v3070, %v4388
      %v4390 = vpop.f32.mrb[0].mxu0
      %4391 = vmatprep.mubr.f32.mxu0 0.0
      %4392 = vmatmul.mubr.f32.gmra.mrb[0].mxu0 %v2349
      %v4393 = vpop.f32.mrb[0].mxu0
      %v4394 = vadd.f32 %v3075, %v4393
      %v4395 = vpop.f32.mrb[0].mxu0
      %4396 = vmatprep.mubr.f32.mxu0 0.0
      %4397 = vmatmul.mubr.f32.gmra.mrb[0].mxu0 %v2354
      %v4398 = vpop.f32.mrb[0].mxu0
      %v4399 = vadd.f32 %v3080, %v4398
      %v4400 = vpop.f32.mrb[0].mxu0
      %4401 = vmatprep.mubr.f32.mxu0 0.0
      %4402 = vmatmul.mubr.f32.gmra.mrb[0].mxu0 %v2359
      %v4403 = vpop.f32.mrb[0].mxu0
      %v4404 = vadd.f32 %v3085, %v4403
      %v4405 = vpop.f32.mrb[0].mxu0
      %4406 = vmatprep.mubr.f32.mxu0 0.0
      %4407 = vmatmul.mubr.f32.gmra.mrb[0].mxu0 %v2364
      %v4408 = vpop.f32.mrb[0].mxu0
      %v4409 = vadd.f32 %v3090, %v4408
      %v4410 = vpop.f32.mrb[0].mxu0
      %4411 = vmatprep.mubr.f32.mxu0 0.0
      %4412 = vmatmul.mubr.f32.gmra.mrb[0].mxu0 %v2369
      %v4413 = vpop.f32.mrb[0].mxu0
      %v4414 = vadd.f32 %v3095, %v4413
      %v4415 = vpop.f32.mrb[0].mxu0
      %4416 = vmatprep.mubr.f32.mxu0 0.0
      %4417 = vmatmul.mubr.f32.gmra.mrb[0].mxu0 %v2374
      %v4418 = vpop.f32.mrb[0].mxu0
      %v4419 = vadd.f32 %v3100, %v4418
      %v4420 = vpop.f32.mrb[0].mxu0
      %4421 = vdwg.mxu0
      %v4422 = vsub.f32 %v4259, %v3928
      %v4423 = vsub.f32 %v4264, %v3929
      %v4424 = vsub.f32 %v4269, %v3930
      %v4425 = vsub.f32 %v4274, %v3931
      %v4426 = vsub.f32 %v4279, %v3932
      %v4427 = vsub.f32 %v4284, %v3933
      %v4428 = vsub.f32 %v4289, %v3934
      %v4429 = vsub.f32 %v4294, %v3935
      %v4430 = vsub.f32 %v4299, %v3936
      %v4431 = vsub.f32 %v4304, %v3937
      %v4432 = vsub.f32 %v4309, %v3938
      %v4433 = vsub.f32 %v4314, %v3939
      %v4434 = vsub.f32 %v4319, %v3940
      %v4435 = vsub.f32 %v4324, %v3941
      %v4436 = vsub.f32 %v4329, %v3942
      %v4437 = vsub.f32 %v4334, %v3943
      %v4438 = vsub.f32 %v4339, %v3944
      %v4439 = vsub.f32 %v4344, %v3945
      %v4440 = vsub.f32 %v4349, %v3946
      %v4441 = vsub.f32 %v4354, %v3947
      %v4442 = vsub.f32 %v4359, %v3948
      %v4443 = vsub.f32 %v4364, %v3949
      %v4444 = vsub.f32 %v4369, %v3950
      %v4445 = vsub.f32 %v4374, %v3951
      %v4446 = vsub.f32 %v4379, %v3952
      %v4447 = vsub.f32 %v4384, %v3953
      %v4448 = vsub.f32 %v4389, %v3954
      %v4449 = vsub.f32 %v4394, %v3955
      %v4450 = vsub.f32 %v4399, %v3956
      %v4451 = vsub.f32 %v4404, %v3957
      %v4452 = vsub.f32 %v4409, %v3958
      %v4453 = vsub.f32 %v4414, %v3959
      %v4454 = vsub.f32 %v4419, %v3960
      %v4455 = vadd.f32 %v4422, 0.0009
      %v4456 = vadd.f32 %v4423, 0.0009
      %v4457 = vadd.f32 %v4424, 0.0009
      %v4458 = vadd.f32 %v4425, 0.0009
      %v4459 = vadd.f32 %v4426, 0.0009
      %v4460 = vadd.f32 %v4427, 0.0009
      %v4461 = vadd.f32 %v4428, 0.0009
      %v4462 = vadd.f32 %v4429, 0.0009
      %v4463 = vadd.f32 %v4430, 0.0009
      %v4464 = vadd.f32 %v4431, 0.0009
      %v4465 = vadd.f32 %v4432, 0.0009
      %v4466 = vadd.f32 %v4433, 0.0009
      %v4467 = vadd.f32 %v4434, 0.0009
      %v4468 = vadd.f32 %v4435, 0.0009
      %v4469 = vadd.f32 %v4436, 0.0009
      %v4470 = vadd.f32 %v4437, 0.0009
      %v4471 = vadd.f32 %v4438, 0.0009
      %v4472 = vadd.f32 %v4439, 0.0009
      %v4473 = vadd.f32 %v4440, 0.0009
      %v4474 = vadd.f32 %v4441, 0.0009
      %v4475 = vadd.f32 %v4442, 0.0009
      %v4476 = vadd.f32 %v4443, 0.0009
      %v4477 = vadd.f32 %v4444, 0.0009
      %v4478 = vadd.f32 %v4445, 0.0009
      %v4479 = vadd.f32 %v4446, 0.0009
      %v4480 = vadd.f32 %v4447, 0.0009
      %v4481 = vadd.f32 %v4448, 0.0009
      %v4482 = vadd.f32 %v4449, 0.0009
      %v4483 = vadd.f32 %v4450, 0.0009
      %v4484 = vadd.f32 %v4451, 0.0009
      %v4485 = vadd.f32 %v4452, 0.0009
      %v4486 = vadd.f32 %v4453, 0.0009
      %v4487 = vadd.f32 %v4454, 0.0009
      %v4488 = vmul.f32 %v4159, %v4455
      %v4489 = vmul.f32 %v4160, %v4456
      %v4490 = vmul.f32 %v4161, %v4457
      %v4491 = vmul.f32 %v4162, %v4458
      %v4492 = vmul.f32 %v4163, %v4459
      %v4493 = vmul.f32 %v4164, %v4460
      %v4494 = vmul.f32 %v4165, %v4461
      %v4495 = vmul.f32 %v4166, %v4462
      %v4496 = vmul.f32 %v4167, %v4463
      %v4497 = vmul.f32 %v4168, %v4464
      %v4498 = vmul.f32 %v4169, %v4465
      %v4499 = vmul.f32 %v4170, %v4466
      %v4500 = vmul.f32 %v4171, %v4467
      %v4501 = vmul.f32 %v4172, %v4468
      %v4502 = vmul.f32 %v4173, %v4469
      %v4503 = vmul.f32 %v4174, %v4470
      %v4504 = vmul.f32 %v4175, %v4471
      %v4505 = vmul.f32 %v4176, %v4472
      %v4506 = vmul.f32 %v4177, %v4473
      %v4507 = vmul.f32 %v4178, %v4474
      %v4508 = vmul.f32 %v4179, %v4475
      %v4509 = vmul.f32 %v4180, %v4476
      %v4510 = vmul.f32 %v4181, %v4477
      %v4511 = vmul.f32 %v4182, %v4478
      %v4512 = vmul.f32 %v4183, %v4479
      %v4513 = vmul.f32 %v4184, %v4480
      %v4514 = vmul.f32 %v4185, %v4481
      %v4515 = vmul.f32 %v4186, %v4482
      %v4516 = vmul.f32 %v4187, %v4483
      %v4517 = vmul.f32 %v4188, %v4484
      %v4518 = vmul.f32 %v4189, %v4485
      %v4519 = vmul.f32 %v4190, %v4486
      %v4520 = vmul.f32 %v4191, %v4487
      %v4521 = vrcp.pop %v4488
      %v4522 = vrcp.pop %v4489
      %v4523 = vrcp.pop %v4490
      %v4524 = vrcp.pop %v4491
      %v4525 = vrcp.pop %v4492
      %v4526 = vrcp.pop %v4493
      %v4527 = vrcp.pop %v4494
      %v4528 = vrcp.pop %v4495
      %v4529 = vrcp.pop %v4496
      %v4530 = vrcp.pop %v4497
      %v4531 = vrcp.pop %v4498
      %v4532 = vrcp.pop %v4499
      %v4533 = vrcp.pop %v4500
      %v4534 = vrcp.pop %v4501
      %v4535 = vrcp.pop %v4502
      %v4536 = vrcp.pop %v4503
      %v4537 = vrcp.pop %v4504
      %v4538 = vrcp.pop %v4505
      %v4539 = vrcp.pop %v4506
      %v4540 = vrcp.pop %v4507
      %v4541 = vrcp.pop %v4508
      %v4542 = vrcp.pop %v4509
      %v4543 = vrcp.pop %v4510
      %v4544 = vrcp.pop %v4511
      %v4545 = vrcp.pop %v4512
      %v4546 = vrcp.pop %v4513
      %v4547 = vrcp.pop %v4514
      %v4548 = vrcp.pop %v4515
      %v4549 = vrcp.pop %v4516
      %v4550 = vrcp.pop %v4517
      %v4551 = vrcp.pop %v4518
      %v4552 = vrcp.pop %v4519
      %v4553 = vrcp.pop %v4520
      %v4554 = vmul.f32 %v4488, %v4521
      %v4555 = vmul.f32 %v4489, %v4522
      %v4556 = vmul.f32 %v4490, %v4523
      %v4557 = vmul.f32 %v4491, %v4524
      %v4558 = vmul.f32 %v4492, %v4525
      %v4559 = vmul.f32 %v4493, %v4526
      %v4560 = vmul.f32 %v4494, %v4527
      %v4561 = vmul.f32 %v4495, %v4528
      %v4562 = vmul.f32 %v4496, %v4529
      %v4563 = vmul.f32 %v4497, %v4530
      %v4564 = vmul.f32 %v4498, %v4531
      %v4565 = vmul.f32 %v4499, %v4532
      %v4566 = vmul.f32 %v4500, %v4533
      %v4567 = vmul.f32 %v4501, %v4534
      %v4568 = vmul.f32 %v4502, %v4535
      %v4569 = vmul.f32 %v4503, %v4536
      %v4570 = vmul.f32 %v4504, %v4537
      %v4571 = vmul.f32 %v4505, %v4538
      %v4572 = vmul.f32 %v4506, %v4539
      %v4573 = vmul.f32 %v4507, %v4540
      %v4574 = vmul.f32 %v4508, %v4541
      %v4575 = vmul.f32 %v4509, %v4542
      %v4576 = vmul.f32 %v4510, %v4543
      %v4577 = vmul.f32 %v4511, %v4544
      %v4578 = vmul.f32 %v4512, %v4545
      %v4579 = vmul.f32 %v4513, %v4546
      %v4580 = vmul.f32 %v4514, %v4547
      %v4581 = vmul.f32 %v4515, %v4548
      %v4582 = vmul.f32 %v4516, %v4549
      %v4583 = vmul.f32 %v4517, %v4550
      %v4584 = vmul.f32 %v4518, %v4551
      %v4585 = vmul.f32 %v4519, %v4552
      %v4586 = vmul.f32 %v4520, %v4553
      %v4587 = vsub.f32 2.0, %v4554
      %v4588 = vsub.f32 2.0, %v4555
      %v4589 = vsub.f32 2.0, %v4556
      %v4590 = vsub.f32 2.0, %v4557
      %v4591 = vsub.f32 2.0, %v4558
      %v4592 = vsub.f32 2.0, %v4559
      %v4593 = vsub.f32 2.0, %v4560
      %v4594 = vsub.f32 2.0, %v4561
      %v4595 = vsub.f32 2.0, %v4562
      %v4596 = vsub.f32 2.0, %v4563
      %v4597 = vsub.f32 2.0, %v4564
      %v4598 = vsub.f32 2.0, %v4565
      %v4599 = vsub.f32 2.0, %v4566
      %v4600 = vsub.f32 2.0, %v4567
      %v4601 = vsub.f32 2.0, %v4568
      %v4602 = vsub.f32 2.0, %v4569
      %v4603 = vsub.f32 2.0, %v4570
      %v4604 = vsub.f32 2.0, %v4571
      %v4605 = vsub.f32 2.0, %v4572
      %v4606 = vsub.f32 2.0, %v4573
      %v4607 = vsub.f32 2.0, %v4574
      %v4608 = vsub.f32 2.0, %v4575
      %v4609 = vsub.f32 2.0, %v4576
      %v4610 = vsub.f32 2.0, %v4577
      %v4611 = vsub.f32 2.0, %v4578
      %v4612 = vsub.f32 2.0, %v4579
      %v4613 = vsub.f32 2.0, %v4580
      %v4614 = vsub.f32 2.0, %v4581
      %v4615 = vsub.f32 2.0, %v4582
      %v4616 = vsub.f32 2.0, %v4583
      %v4617 = vsub.f32 2.0, %v4584
      %v4618 = vsub.f32 2.0, %v4585
      %v4619 = vsub.f32 2.0, %v4586
      %v4620 = vmul.f32 %v4521, %v4587
      %v4621 = vmul.f32 %v4522, %v4588
      %v4622 = vmul.f32 %v4523, %v4589
      %v4623 = vmul.f32 %v4524, %v4590
      %v4624 = vmul.f32 %v4525, %v4591
      %v4625 = vmul.f32 %v4526, %v4592
      %v4626 = vmul.f32 %v4527, %v4593
      %v4627 = vmul.f32 %v4528, %v4594
      %v4628 = vmul.f32 %v4529, %v4595
      %v4629 = vmul.f32 %v4530, %v4596
      %v4630 = vmul.f32 %v4531, %v4597
      %v4631 = vmul.f32 %v4532, %v4598
      %v4632 = vmul.f32 %v4533, %v4599
      %v4633 = vmul.f32 %v4534, %v4600
      %v4634 = vmul.f32 %v4535, %v4601
      %v4635 = vmul.f32 %v4536, %v4602
      %v4636 = vmul.f32 %v4537, %v4603
      %v4637 = vmul.f32 %v4538, %v4604
      %v4638 = vmul.f32 %v4539, %v4605
      %v4639 = vmul.f32 %v4540, %v4606
      %v4640 = vmul.f32 %v4541, %v4607
      %v4641 = vmul.f32 %v4542, %v4608
      %v4642 = vmul.f32 %v4543, %v4609
      %v4643 = vmul.f32 %v4544, %v4610
      %v4644 = vmul.f32 %v4545, %v4611
      %v4645 = vmul.f32 %v4546, %v4612
      %v4646 = vmul.f32 %v4547, %v4613
      %v4647 = vmul.f32 %v4548, %v4614
      %v4648 = vmul.f32 %v4549, %v4615
      %v4649 = vmul.f32 %v4550, %v4616
      %v4650 = vmul.f32 %v4551, %v4617
      %v4651 = vmul.f32 %v4552, %v4618
      %v4652 = vmul.f32 %v4553, %v4619
      %v4653 = vmul.f32 %v4126, %v4620
      %v4654 = vmul.f32 %v4127, %v4621
      %v4655 = vmul.f32 %v4128, %v4622
      %v4656 = vmul.f32 %v4129, %v4623
      %v4657 = vmul.f32 %v4130, %v4624
      %v4658 = vmul.f32 %v4131, %v4625
      %v4659 = vmul.f32 %v4132, %v4626
      %v4660 = vmul.f32 %v4133, %v4627
      %v4661 = vmul.f32 %v4134, %v4628
      %v4662 = vmul.f32 %v4135, %v4629
      %v4663 = vmul.f32 %v4136, %v4630
      %v4664 = vmul.f32 %v4137, %v4631
      %v4665 = vmul.f32 %v4138, %v4632
      %v4666 = vmul.f32 %v4139, %v4633
      %v4667 = vmul.f32 %v4140, %v4634
      %v4668 = vmul.f32 %v4141, %v4635
      %v4669 = vmul.f32 %v4142, %v4636
      %v4670 = vmul.f32 %v4143, %v4637
      %v4671 = vmul.f32 %v4144, %v4638
      %v4672 = vmul.f32 %v4145, %v4639
      %v4673 = vmul.f32 %v4146, %v4640
      %v4674 = vmul.f32 %v4147, %v4641
      %v4675 = vmul.f32 %v4148, %v4642
      %v4676 = vmul.f32 %v4149, %v4643
      %v4677 = vmul.f32 %v4150, %v4644
      %v4678 = vmul.f32 %v4151, %v4645
      %v4679 = vmul.f32 %v4152, %v4646
      %v4680 = vmul.f32 %v4153, %v4647
      %v4681 = vmul.f32 %v4154, %v4648
      %v4682 = vmul.f32 %v4155, %v4649
      %v4683 = vmul.f32 %v4156, %v4650
      %v4684 = vmul.f32 %v4157, %v4651
      %v4685 = vmul.f32 %v4158, %v4652
      %v4686 = vadd.f32 %v4653, %v4654
      %v4687 = vadd.f32 %v4686, %v4655
      %v4688 = vadd.f32 %v4687, %v4656
      %v4689 = vadd.f32 %v4688, %v4657
      %v4690 = vadd.f32 %v4689, %v4658
      %v4691 = vadd.f32 %v4690, %v4659
      %v4692 = vadd.f32 %v4691, %v4660
      %v4693 = vadd.f32 %v4692, %v4661
      %v4694 = vadd.f32 %v4693, %v4662
      %v4695 = vadd.f32 %v4694, %v4663
      %v4696 = vadd.f32 %v4695, %v4664
      %v4697 = vadd.f32 %v4696, %v4665
      %v4698 = vadd.f32 %v4697, %v4666
      %v4699 = vadd.f32 %v4698, %v4667
      %v4700 = vadd.f32 %v4699, %v4668
      %v4701 = vadd.f32 %v4700, %v4669
      %v4702 = vadd.f32 %v4701, %v4670
      %v4703 = vadd.f32 %v4702, %v4671
      %v4704 = vadd.f32 %v4703, %v4672
      %v4705 = vadd.f32 %v4704, %v4673
      %v4706 = vadd.f32 %v4705, %v4674
      %v4707 = vadd.f32 %v4706, %v4675
      %v4708 = vadd.f32 %v4707, %v4676
      %v4709 = vadd.f32 %v4708, %v4677
      %v4710 = vadd.f32 %v4709, %v4678
      %v4711 = vadd.f32 %v4710, %v4679
      %v4712 = vadd.f32 %v4711, %v4680
      %v4713 = vadd.f32 %v4712, %v4681
      %v4714 = vadd.f32 %v4713, %v4682
      %v4715 = vadd.f32 %v4714, %v4683
      %v4716 = vadd.f32 %v4715, %v4684
      %v4717 = vadd.f32 %v4716, %v4685
      %4718 = vadd.xlane.f32.xlu0 %v4717
      %v4719 = vpop.xlane.xlu0 %4718
      %v4720 = vrot.slane %v4719, 4
      %v4721 = vadd.f32 %v4719, %v4720
      %v4722 = vrot.slane %v4721, 2
      %v4723 = vadd.f32 %v4721, %v4722
      %v4724 = vrot.slane %v4723, 1
      %v4725 = vadd.f32 %v4723, %v4724
      %s4726 = vtos %v4725
      %v4727 = vstv %s4726
      %v4728 = vrcp.pop 8.999999e-08
      %v4729 = vmul.f32 %v4728, 8.999999e-08
      %v4730 = vsub.f32 2.0, %v4729
      %v4731 = vmul.f32 %v4728, %v4730
      %v4732 = vmul.f32 %v4731, 8.999999e-08
      %v4733 = vmul.f32 %v4732, 11604.0
      %v4734 = vsub.f32 %v4727, %v4733
      %v4735 = vmul.f32 %v4734, 4.5069406e-05
      %vm4736 = vcmask 0
      %4737 = vst.msk [vmem:[%s213] sm:$0x1] %vm4736, %v4735
      %p4738 = scmp.lt.s32.totalorder %s15, 1
      %s4739 = scalar_select %p4738, %s15, 1
      %s4740 = scalar_lea.vmem %s4, %s4739
      // Predicated region
      $region37: #{_ssim_batched.1} parent=35 // pred_check
        %p4741 = pneg %p127
      $region38: #{_ssim_batched.1} parent=35 // pred_check_branch
        %4743 = sbr.rel (%p4741) target = $region40
      $region39: #{_ssim_batched.1} parent=35 // pred_region
        _
      $region40: #{_ssim_batched.1} parent=35 // pred_fallthru
        _
    $region36: #{_ssim_batched.1} parent=5 // pred_fallthru
      _
    %p4744 = scmp.le.s32.totalorder 2, %s10
    // Predicated region
    $region41: #{_ssim_batched.1} parent=5 // pred_check
      %p4745 = pneg %p4744
    $region42: #{_ssim_batched.1} parent=5 // pred_check_branch
      %4747 = sbr.rel (%p4745) target = $region44
    $region43: #{_ssim_batched.1} parent=5 // pred_region
      %s4748 = ssub.s32 %s10, 2
      // Predicated region
      $region45: #{_ssim_batched.1} parent=43 // pred_check
        %p4749 = pneg %p133
      $region46: #{_ssim_batched.1} parent=43 // pred_check_branch
        %4751 = sbr.rel (%p4749) target = $region48
      $region47: #{_ssim_batched.1} parent=43 // pred_region
        %p4752 = scmp.lt.s32.totalorder %s16, 1
        %s4753 = scalar_select %p4752, %s16, 1
        %s4754 = scalar_lea.vmem %s4, %s4753
      $region48: #{_ssim_batched.1} parent=43 // pred_fallthru
        _
    $region44: #{_ssim_batched.1} parent=5 // pred_fallthru
      _
  $region6: #{_ssim_batched.1} parent=0 // loop_footer
    %s14 = sadd.s32 1, %s10
  $region7: #{_ssim_batched.1} parent=0 // loop_footer_branch
    %9 = sbr.rel target = $region3
  $region8: #{_ssim_batched.1} parent=0 // loop_exit
    _

</llo_original>
